<compile_context>
chip_gen: v5e
topology: v5e:2x2
jax: 0.10.0
libtpu: 0.0.40
codegen_flags: <defaults>
</compile_context>

<pallas_src>
import functools

import jax
import jax.numpy as jnp
from jax import lax
from jax.experimental import pallas as pl
from jax.experimental.pallas import tpu as pltpu


# ----------------------- fused conv-stack Pallas kernel --------------------- #

def _conv_stack_kernel(x_ref, w_ref, s_ref, b_ref, o_ref, buf_a, buf_b,
                       *, H, W, CP, L, relu_flags):
    """All conv layers of the DnCNN stack for one batch element.

    x_ref: (1, H, W, CP) f32     input (channels zero-padded to CP)
    w_ref: (L, 9*CP, CP) bf16    stacked im2col conv weights
    s_ref: (L, 1, CP) f32        folded-BN scale per layer
    b_ref: (L, 1, CP) f32        folded-BN bias per layer
    o_ref: (1, H, W, CP) f32     output of the last conv (channels padded)
    buf_a, buf_b: (H+2, W+2, CP) f32 VMEM ping-pong buffers with zero halo
    """
    # Zero halo (and everything else) once per grid step.
    buf_a[...] = jnp.zeros_like(buf_a)
    buf_b[...] = jnp.zeros_like(buf_b)
    buf_a[1:H + 1, 1:W + 1, :] = x_ref[0]

    bufs = (buf_a, buf_b)
    for l in range(L):
        src = bufs[l % 2]
        # im2col: 9 shifted slabs concatenated along channels -> (H*W, 9*CP)
        slabs = [src[dy:dy + H, dx:dx + W, :].astype(jnp.bfloat16)
                 for dy in range(3) for dx in range(3)]
        patch = jnp.concatenate(slabs, axis=-1).reshape(H * W, 9 * CP)
        y = jnp.dot(patch, w_ref[l], preferred_element_type=jnp.float32)
        y = y * s_ref[l] + b_ref[l]               # folded BN (f32 epilogue)
        if relu_flags[l]:
            y = jnp.maximum(y, 0.0)
        y = y.reshape(H, W, CP)
        if l == L - 1:
            o_ref[0] = y
        else:
            bufs[(l + 1) % 2][1:H + 1, 1:W + 1, :] = y


def conv_stack(x, w_all, s_all, b_all, relu_flags):
    """x: (N, H, W, CP) f32.  Returns (N, H, W, CP) f32."""
    N, H, W, CP = x.shape
    L = w_all.shape[0]
    kernel = functools.partial(_conv_stack_kernel, H=H, W=W, CP=CP, L=L,
                               relu_flags=relu_flags)
    return pl.pallas_call(
        kernel,
        out_shape=jax.ShapeDtypeStruct((N, H, W, CP), jnp.float32),
        grid_spec=pltpu.PrefetchScalarGridSpec(
            num_scalar_prefetch=0,
            grid=(N,),
            in_specs=[
                pl.BlockSpec((1, H, W, CP), lambda n: (n, 0, 0, 0)),
                pl.BlockSpec((L, 9 * CP, CP), lambda n: (0, 0, 0)),
                pl.BlockSpec((L, 1, CP), lambda n: (0, 0, 0)),
                pl.BlockSpec((L, 1, CP), lambda n: (0, 0, 0)),
            ],
            out_specs=pl.BlockSpec((1, H, W, CP), lambda n: (n, 0, 0, 0)),
            scratch_shapes=[pltpu.VMEM((H + 2, W + 2, CP), jnp.float32),
                            pltpu.VMEM((H + 2, W + 2, CP), jnp.float32)],
        ),
        compiler_params=pltpu.CompilerParams(
            dimension_semantics=("parallel",)),
    )(x, w_all, s_all, b_all)


# ------------------- ConvTranspose2d (phase decomposition) ------------------ #

def _upconv_kernel(x_ref, w_ref, b_ref, o_ref, xb, *, H, W, CP):
    """ConvTranspose2d(stride=2, pad=1, out_pad=1) via sub-pixel phases.

    x_ref: (1, H, W, CP) f32
    w_ref: (4*CP, 4*CP) bf16   rows = 4 taps [x(i,j), x(i,j+1), x(i+1,j),
                               x(i+1,j+1)] * CP, cols = 4 phases * CP
    b_ref: (1, CP) f32
    o_ref: (4, H, W, CP) f32   phase-major output (phase = 2*pr + pc)
    xb:    (H+1, W+1, CP) f32  VMEM scratch with zero bottom/right border
    """
    xb[...] = jnp.zeros_like(xb)
    xb[0:H, 0:W, :] = x_ref[0]
    slabs = [xb[0:H, 0:W, :], xb[0:H, 1:W + 1, :],
             xb[1:H + 1, 0:W, :], xb[1:H + 1, 1:W + 1, :]]
    patch = jnp.concatenate(
        [s.astype(jnp.bfloat16) for s in slabs], axis=-1).reshape(H * W, 4 * CP)
    y = jnp.dot(patch, w_ref[...], preferred_element_type=jnp.float32)
    for p in range(4):
        ph = y[:, p * CP:(p + 1) * CP] + b_ref[...]
        o_ref[p] = ph.reshape(H, W, CP)


def upconv2x(x, wcat, bias):
    """x: (N, H, W, CP) f32 -> (N, 2H, 2W, CP) f32."""
    N, H, W, CP = x.shape
    kernel = functools.partial(_upconv_kernel, H=H, W=W, CP=CP)
    ph = pl.pallas_call(
        kernel,
        out_shape=jax.ShapeDtypeStruct((4 * N, H, W, CP), jnp.float32),
        grid_spec=pltpu.PrefetchScalarGridSpec(
            num_scalar_prefetch=0,
            grid=(N,),
            in_specs=[
                pl.BlockSpec((1, H, W, CP), lambda n: (n, 0, 0, 0)),
                pl.BlockSpec((4 * CP, 4 * CP), lambda n: (0, 0)),
                pl.BlockSpec((1, CP), lambda n: (0, 0)),
            ],
            out_specs=pl.BlockSpec((4, H, W, CP), lambda n: (n, 0, 0, 0)),
            scratch_shapes=[pltpu.VMEM((H + 1, W + 1, CP), jnp.float32)],
        ),
        compiler_params=pltpu.CompilerParams(
            dimension_semantics=("parallel",)),
    )(x, wcat, bias)
    # phase-major -> spatially interleaved (tiny wrapper op on final output)
    ph = ph.reshape(N, 2, 2, H, W, CP)
    return ph.transpose(0, 3, 1, 4, 2, 5).reshape(N, 2 * H, 2 * W, CP)


# --------------------------- parameter init -------------------------------- #

def _kaiming_normal(key, shape, fan_in):
    std = (2.0 / fan_in) ** 0.5
    return std * jax.random.normal(key, shape, jnp.float32)


def init_dncnn_params(key, channels, num_of_layers, up_scale):
    eps = 1e-5
    keys = jax.random.split(key, num_of_layers + 2 * up_scale)
    params = {"convs": [], "upconvs": []}

    # first conv: 3 -> channels (HWIO)
    params["convs"].append(_kaiming_normal(keys[0], (3, 3, 3, channels),
                                           fan_in=3 * 9))
    # middle convs: channels -> channels
    for i in range(num_of_layers - 2):
        params["convs"].append(_kaiming_normal(keys[1 + i],
                                               (3, 3, channels, channels),
                                               fan_in=channels * 9))
    # last conv: channels -> 3
    params["convs"].append(_kaiming_normal(keys[num_of_layers - 1],
                                           (3, 3, channels, 3),
                                           fan_in=channels * 9))

    # BatchNorm (inference; gamma=1, beta=0, mean=0, var=1) folded
    params["bn_scale"] = jnp.full((channels,), 1.0 / jnp.sqrt(1.0 + eps),
                                  jnp.float32)
    params["bn_bias"] = jnp.zeros((channels,), jnp.float32)

    # ConvTranspose2d(3, 3, 3, stride=2, padding=1, output_padding=1) layers
    for i in range(up_scale):
        kw, kb = keys[num_of_layers + 2 * i], keys[num_of_layers + 2 * i + 1]
        wt = _kaiming_normal(kw, (3, 3, 3, 3), fan_in=3 * 9)  # (Cin,Cout,kh,kw)
        # equivalent direct-conv weight: flip spatial dims, move to HWIO
        w_eq = jnp.flip(jnp.flip(wt, axis=2), axis=3)
        w_eq = jnp.transpose(w_eq, (2, 3, 0, 1))              # (kh,kw,Cin,Cout)
        b = 0.05 * jax.random.normal(kb, (3,), jnp.float32)
        params["upconvs"].append((w_eq, b))
    return params


# ----------------------- kernel-ready parameter packing --------------------- #

def _pack_conv_stack(params, CP):
    L = len(params["convs"])
    w_list, s_list, b_list, relu = [], [], [], []
    for l, w in enumerate(params["convs"]):
        _, _, cin, cout = w.shape
        wp = jnp.zeros((3, 3, CP, CP), jnp.float32).at[:, :, :cin, :cout].set(w)
        w_list.append(wp.reshape(9 * CP, CP))
        if 0 < l < L - 1:
            s, b = params["bn_scale"], params["bn_bias"]
        else:
            s, b = jnp.ones((CP,), jnp.float32), jnp.zeros((CP,), jnp.float32)
        s_list.append(s.reshape(1, CP))
        b_list.append(b.reshape(1, CP))
        relu.append(l < L - 1)
    w_all = jnp.stack(w_list).astype(jnp.bfloat16)   # (L, 9*CP, CP)
    s_all = jnp.stack(s_list)                        # (L, 1, CP)
    b_all = jnp.stack(b_list)                        # (L, 1, CP)
    return w_all, s_all, b_all, tuple(relu)


def _pack_upconv(w_eq, b, CP):
    """Pack ConvTranspose weight into the 4-tap x 4-phase block matrix."""
    wp = jnp.zeros((3, 3, CP, CP), jnp.float32).at[:, :, :3, :3].set(w_eq)
    blk = jnp.zeros((4, 4, CP, CP), jnp.float32)
    # taps: t0=(i,j), t1=(i,j+1), t2=(i+1,j), t3=(i+1,j+1)
    # phases: p0=(0,0), p1=(0,1), p2=(1,0), p3=(1,1)  (out pixel 2i+pr, 2j+pc)
    blk = blk.at[0, 0].set(wp[1, 1])
    blk = blk.at[0, 1].set(wp[1, 0]).at[1, 1].set(wp[1, 2])
    blk = blk.at[0, 2].set(wp[0, 1]).at[2, 2].set(wp[2, 1])
    blk = blk.at[0, 3].set(wp[0, 0]).at[1, 3].set(wp[0, 2])
    blk = blk.at[2, 3].set(wp[2, 0]).at[3, 3].set(wp[2, 2])
    wcat = jnp.transpose(blk, (0, 2, 1, 3)).reshape(4 * CP, 4 * CP)
    bp = jnp.zeros((1, CP), jnp.float32).at[0, :3].set(b)
    return wcat.astype(jnp.bfloat16), bp


# ------------------------------- forward ----------------------------------- #

def dncnn_forward(params, x_nchw, channels, num_of_layers, up_scale):
    CP = channels
    x = jnp.transpose(x_nchw, (0, 2, 3, 1)).astype(jnp.float32)   # NCHW -> NHWC
    x = jnp.pad(x, ((0, 0), (0, 0), (0, 0), (0, CP - 3)))          # C: 3 -> CP

    w_all, s_all, b_all, relu_flags = _pack_conv_stack(params, CP)
    x = conv_stack(x, w_all, s_all, b_all, relu_flags)             # (N,H,W,CP)

    for (w_eq, b) in params["upconvs"]:
        wcat, bp = _pack_upconv(w_eq, b, CP)
        x = upconv2x(x, wcat, bp)                                  # (N,2H,2W,CP)

    x = x[..., :3]
    return jnp.transpose(x, (0, 3, 1, 2))                          # NHWC -> NCHW


# ----------------------------- pure-JAX ref --------------------------------- #

def dncnn_ref(params, x_nchw, channels, num_of_layers, up_scale):
    dn = ("NHWC", "HWIO", "NHWC")
    x = jnp.transpose(x_nchw, (0, 2, 3, 1)).astype(jnp.float32)
    x = lax.conv_general_dilated(x, params["convs"][0], (1, 1),
                                 ((1, 1), (1, 1)), dimension_numbers=dn)
    x = jnp.maximum(x, 0.0)
    for i in range(num_of_layers - 2):
        x = lax.conv_general_dilated(x, params["convs"][1 + i], (1, 1),
                                     ((1, 1), (1, 1)), dimension_numbers=dn)
        x = x * params["bn_scale"] + params["bn_bias"]
        x = jnp.maximum(x, 0.0)
    x = lax.conv_general_dilated(x, params["convs"][-1], (1, 1),
                                 ((1, 1), (1, 1)), dimension_numbers=dn)
    for (w_eq, b) in params["upconvs"]:
        x = lax.conv_general_dilated(x, w_eq, (1, 1), ((1, 2), (1, 2)),
                                     lhs_dilation=(2, 2),
                                     dimension_numbers=dn) + b
    return jnp.transpose(x, (0, 3, 1, 2))


# ---------------------------------- main ------------------------------------ #

if __name__ == "__main__":
    # Small, config-consistent sizes: start_channels=32, depth=4, up_scale=1.
    CHANNELS, DEPTH, UP_SCALE = 32, 4, 1
    key = jax.random.PRNGKey(0)
    k_params, k_x = jax.random.split(key)

    params = init_dncnn_params(k_params, CHANNELS, DEPTH, UP_SCALE)
    x = jax.random.normal(k_x, (2, 3, 16, 16), jnp.float32)  # NCHW like PyTorch

    fwd = jax.jit(dncnn_forward, static_argnums=(2, 3, 4))
    out = jax.block_until_ready(fwd(params, x, CHANNELS, DEPTH, UP_SCALE))
    ref = jax.block_until_ready(dncnn_ref(params, x, CHANNELS, DEPTH, UP_SCALE))

    assert out.shape == (2, 3, 32, 32), out.shape
    # bf16 matmul operands (f32 accumulation) vs f32 reference -> loose tol.
    assert jnp.allclose(out, ref, atol=5e-2, rtol=5e-2), \
        float(jnp.max(jnp.abs(out - ref)))

    print("KERNEL_OK")
</pallas_src>

<mosaic_0001>
module attributes {stable_mosaic.version = 11 : i64} {
  func.func @_conv_stack_kernel(%arg0: i32, %arg1: memref<1x16x16x32xf32, #tpu.memory_space<vmem>>, %arg2: memref<4x288x32xbf16, #tpu.memory_space<vmem>>, %arg3: memref<4x1x32xf32, #tpu.memory_space<vmem>>, %arg4: memref<4x1x32xf32, #tpu.memory_space<vmem>>, %arg5: memref<1x16x16x32xf32, #tpu.memory_space<vmem>>, %arg6: memref<18x18x32xf32, #tpu.memory_space<vmem>>, %arg7: memref<18x18x32xf32, #tpu.memory_space<vmem>>) attributes {dimension_semantics = [#tpu.dimension_semantics<parallel>], iteration_bounds = array<i64: 2>, scalar_prefetch = 0 : i64, scratch_operands = 2 : i64, tpu.core_type = #tpu.core_type<tc>, window_params = [{transform_indices = @transform_0, window_bounds = array<i64: 1, 16, 16, 32>}, {pipeline_mode = #tpu.pipeline_mode<synchronous>, transform_indices = @transform_1, window_bounds = array<i64: 4, 288, 32>}, {pipeline_mode = #tpu.pipeline_mode<synchronous>, transform_indices = @transform_2, window_bounds = array<i64: 4, 1, 32>}, {pipeline_mode = #tpu.pipeline_mode<synchronous>, transform_indices = @transform_3, window_bounds = array<i64: 4, 1, 32>}, {transform_indices = @transform_4, window_bounds = array<i64: 1, 16, 16, 32>}]} {
    %cst = arith.constant 0.000000e+00 : f32
    %0 = vector.broadcast %cst : f32 to vector<18x18x32xf32>
    %c0 = arith.constant 0 : index
    %c0_0 = arith.constant 0 : index
    %c0_1 = arith.constant 0 : index
    %1 = vector.load %arg6[%c0, %c0_0, %c0_1] : memref<18x18x32xf32, #tpu.memory_space<vmem>>, vector<18x18x32xf32>
    tpu.vector_store %arg6[%c0, %c0_0, %c0_1], %0 {strides = array<i32>} : memref<18x18x32xf32, #tpu.memory_space<vmem>>, vector<18x18x32xf32>,
    %cst_2 = arith.constant 0.000000e+00 : f32
    %2 = vector.broadcast %cst_2 : f32 to vector<18x18x32xf32>
    %c0_3 = arith.constant 0 : index
    %c0_4 = arith.constant 0 : index
    %c0_5 = arith.constant 0 : index
    %3 = vector.load %arg7[%c0_3, %c0_4, %c0_5] : memref<18x18x32xf32, #tpu.memory_space<vmem>>, vector<18x18x32xf32>
    tpu.vector_store %arg7[%c0_3, %c0_4, %c0_5], %2 {strides = array<i32>} : memref<18x18x32xf32, #tpu.memory_space<vmem>>, vector<18x18x32xf32>,
    %c0_6 = arith.constant 0 : index
    %c0_7 = arith.constant 0 : index
    %c0_8 = arith.constant 0 : index
    %c0_9 = arith.constant 0 : index
    %4 = vector.load %arg1[%c0_6, %c0_7, %c0_8, %c0_9] : memref<1x16x16x32xf32, #tpu.memory_space<vmem>>, vector<1x16x16x32xf32>
    %5 = vector.shape_cast %4 : vector<1x16x16x32xf32> to vector<16x16x32xf32>
    %c1 = arith.constant 1 : index
    %c1_10 = arith.constant 1 : index
    %c0_11 = arith.constant 0 : index
    %6 = vector.load %arg6[%c1, %c1_10, %c0_11] : memref<18x18x32xf32, #tpu.memory_space<vmem>>, vector<16x16x32xf32>
    tpu.vector_store %arg6[%c1, %c1_10, %c0_11], %5 {strides = array<i32>} : memref<18x18x32xf32, #tpu.memory_space<vmem>>, vector<16x16x32xf32>,
    %c0_12 = arith.constant 0 : index
    %c0_13 = arith.constant 0 : index
    %c0_14 = arith.constant 0 : index
    %7 = vector.load %arg6[%c0_12, %c0_13, %c0_14] : memref<18x18x32xf32, #tpu.memory_space<vmem>>, vector<16x16x32xf32>
    %8 = arith.truncf %7 : vector<16x16x32xf32> to vector<16x16x32xbf16>
    %c0_15 = arith.constant 0 : index
    %c1_16 = arith.constant 1 : index
    %c0_17 = arith.constant 0 : index
    %9 = vector.load %arg6[%c0_15, %c1_16, %c0_17] : memref<18x18x32xf32, #tpu.memory_space<vmem>>, vector<16x16x32xf32>
    %10 = arith.truncf %9 : vector<16x16x32xf32> to vector<16x16x32xbf16>
    %c0_18 = arith.constant 0 : index
    %c2 = arith.constant 2 : index
    %c0_19 = arith.constant 0 : index
    %11 = vector.load %arg6[%c0_18, %c2, %c0_19] : memref<18x18x32xf32, #tpu.memory_space<vmem>>, vector<16x16x32xf32>
    %12 = arith.truncf %11 : vector<16x16x32xf32> to vector<16x16x32xbf16>
    %c1_20 = arith.constant 1 : index
    %c0_21 = arith.constant 0 : index
    %c0_22 = arith.constant 0 : index
    %13 = vector.load %arg6[%c1_20, %c0_21, %c0_22] : memref<18x18x32xf32, #tpu.memory_space<vmem>>, vector<16x16x32xf32>
    %14 = arith.truncf %13 : vector<16x16x32xf32> to vector<16x16x32xbf16>
    %c1_23 = arith.constant 1 : index
    %c1_24 = arith.constant 1 : index
    %c0_25 = arith.constant 0 : index
    %15 = vector.load %arg6[%c1_23, %c1_24, %c0_25] : memref<18x18x32xf32, #tpu.memory_space<vmem>>, vector<16x16x32xf32>
    %16 = arith.truncf %15 : vector<16x16x32xf32> to vector<16x16x32xbf16>
    %c1_26 = arith.constant 1 : index
    %c2_27 = arith.constant 2 : index
    %c0_28 = arith.constant 0 : index
    %17 = vector.load %arg6[%c1_26, %c2_27, %c0_28] : memref<18x18x32xf32, #tpu.memory_space<vmem>>, vector<16x16x32xf32>
    %18 = arith.truncf %17 : vector<16x16x32xf32> to vector<16x16x32xbf16>
    %c2_29 = arith.constant 2 : index
    %c0_30 = arith.constant 0 : index
    %c0_31 = arith.constant 0 : index
    %19 = vector.load %arg6[%c2_29, %c0_30, %c0_31] : memref<18x18x32xf32, #tpu.memory_space<vmem>>, vector<16x16x32xf32>
    %20 = arith.truncf %19 : vector<16x16x32xf32> to vector<16x16x32xbf16>
    %c2_32 = arith.constant 2 : index
    %c1_33 = arith.constant 1 : index
    %c0_34 = arith.constant 0 : index
    %21 = vector.load %arg6[%c2_32, %c1_33, %c0_34] : memref<18x18x32xf32, #tpu.memory_space<vmem>>, vector<16x16x32xf32>
    %22 = arith.truncf %21 : vector<16x16x32xf32> to vector<16x16x32xbf16>
    %c2_35 = arith.constant 2 : index
    %c2_36 = arith.constant 2 : index
    %c0_37 = arith.constant 0 : index
    %23 = vector.load %arg6[%c2_35, %c2_36, %c0_37] : memref<18x18x32xf32, #tpu.memory_space<vmem>>, vector<16x16x32xf32>
    %24 = arith.truncf %23 : vector<16x16x32xf32> to vector<16x16x32xbf16>
    %25 = tpu.concatenate %8, %10, %12, %14, %16, %18, %20, %22, %24 in 2 : vector<16x16x32xbf16>, vector<16x16x32xbf16>, vector<16x16x32xbf16>, vector<16x16x32xbf16>, vector<16x16x32xbf16>, vector<16x16x32xbf16>, vector<16x16x32xbf16>, vector<16x16x32xbf16>, vector<16x16x32xbf16> -> vector<16x16x288xbf16>
    %26 = vector.shape_cast %25 : vector<16x16x288xbf16> to vector<256x288xbf16>
    %c0_38 = arith.constant 0 : index
    %c0_39 = arith.constant 0 : index
    %c0_40 = arith.constant 0 : index
    %27 = vector.load %arg2[%c0_38, %c0_39, %c0_40] : memref<4x288x32xbf16, #tpu.memory_space<vmem>>, vector<1x288x32xbf16>
    %28 = vector.shape_cast %27 : vector<1x288x32xbf16> to vector<288x32xbf16>
    %cst_41 = arith.constant dense<0.000000e+00> : vector<256x32xf32>
    %29 = tpu.matmul %26, %28, %cst_41 {dimension_numbers = #tpu.dot_dimension_numbers<[1], [0], [0], [1], [0, 0, 1, 1], [], []>} : vector<256x288xbf16>, vector<288x32xbf16>, vector<256x32xf32> -> vector<256x32xf32>
    %c0_42 = arith.constant 0 : index
    %c0_43 = arith.constant 0 : index
    %c0_44 = arith.constant 0 : index
    %30 = vector.load %arg3[%c0_42, %c0_43, %c0_44] : memref<4x1x32xf32, #tpu.memory_space<vmem>>, vector<1x1x32xf32>
    %31 = vector.shape_cast %30 : vector<1x1x32xf32> to vector<1x32xf32>
    %32 = vector.broadcast %31 : vector<1x32xf32> to vector<256x32xf32>
    %33 = arith.mulf %29, %32 : vector<256x32xf32>
    %c0_45 = arith.constant 0 : index
    %c0_46 = arith.constant 0 : index
    %c0_47 = arith.constant 0 : index
    %34 = vector.load %arg4[%c0_45, %c0_46, %c0_47] : memref<4x1x32xf32, #tpu.memory_space<vmem>>, vector<1x1x32xf32>
    %35 = vector.shape_cast %34 : vector<1x1x32xf32> to vector<1x32xf32>
    %36 = vector.broadcast %35 : vector<1x32xf32> to vector<256x32xf32>
    %37 = arith.addf %33, %36 : vector<256x32xf32>
    %cst_48 = arith.constant 0.000000e+00 : f32
    %38 = vector.broadcast %cst_48 : f32 to vector<256x32xf32>
    %39 = arith.maximumf %37, %38 : vector<256x32xf32>
    %40 = vector.shape_cast %39 : vector<256x32xf32> to vector<16x16x32xf32>
    %c1_49 = arith.constant 1 : index
    %c1_50 = arith.constant 1 : index
    %c0_51 = arith.constant 0 : index
    %41 = vector.load %arg7[%c1_49, %c1_50, %c0_51] : memref<18x18x32xf32, #tpu.memory_space<vmem>>, vector<16x16x32xf32>
    tpu.vector_store %arg7[%c1_49, %c1_50, %c0_51], %40 {strides = array<i32>} : memref<18x18x32xf32, #tpu.memory_space<vmem>>, vector<16x16x32xf32>,
    %c0_52 = arith.constant 0 : index
    %c0_53 = arith.constant 0 : index
    %c0_54 = arith.constant 0 : index
    %42 = vector.load %arg7[%c0_52, %c0_53, %c0_54] : memref<18x18x32xf32, #tpu.memory_space<vmem>>, vector<16x16x32xf32>
    %43 = arith.truncf %42 : vector<16x16x32xf32> to vector<16x16x32xbf16>
    %c0_55 = arith.constant 0 : index
    %c1_56 = arith.constant 1 : index
    %c0_57 = arith.constant 0 : index
    %44 = vector.load %arg7[%c0_55, %c1_56, %c0_57] : memref<18x18x32xf32, #tpu.memory_space<vmem>>, vector<16x16x32xf32>
    %45 = arith.truncf %44 : vector<16x16x32xf32> to vector<16x16x32xbf16>
    %c0_58 = arith.constant 0 : index
    %c2_59 = arith.constant 2 : index
    %c0_60 = arith.constant 0 : index
    %46 = vector.load %arg7[%c0_58, %c2_59, %c0_60] : memref<18x18x32xf32, #tpu.memory_space<vmem>>, vector<16x16x32xf32>
    %47 = arith.truncf %46 : vector<16x16x32xf32> to vector<16x16x32xbf16>
    %c1_61 = arith.constant 1 : index
    %c0_62 = arith.constant 0 : index
    %c0_63 = arith.constant 0 : index
    %48 = vector.load %arg7[%c1_61, %c0_62, %c0_63] : memref<18x18x32xf32, #tpu.memory_space<vmem>>, vector<16x16x32xf32>
    %49 = arith.truncf %48 : vector<16x16x32xf32> to vector<16x16x32xbf16>
    %c1_64 = arith.constant 1 : index
    %c1_65 = arith.constant 1 : index
    %c0_66 = arith.constant 0 : index
    %50 = vector.load %arg7[%c1_64, %c1_65, %c0_66] : memref<18x18x32xf32, #tpu.memory_space<vmem>>, vector<16x16x32xf32>
    %51 = arith.truncf %50 : vector<16x16x32xf32> to vector<16x16x32xbf16>
    %c1_67 = arith.constant 1 : index
    %c2_68 = arith.constant 2 : index
    %c0_69 = arith.constant 0 : index
    %52 = vector.load %arg7[%c1_67, %c2_68, %c0_69] : memref<18x18x32xf32, #tpu.memory_space<vmem>>, vector<16x16x32xf32>
    %53 = arith.truncf %52 : vector<16x16x32xf32> to vector<16x16x32xbf16>
    %c2_70 = arith.constant 2 : index
    %c0_71 = arith.constant 0 : index
    %c0_72 = arith.constant 0 : index
    %54 = vector.load %arg7[%c2_70, %c0_71, %c0_72] : memref<18x18x32xf32, #tpu.memory_space<vmem>>, vector<16x16x32xf32>
    %55 = arith.truncf %54 : vector<16x16x32xf32> to vector<16x16x32xbf16>
    %c2_73 = arith.constant 2 : index
    %c1_74 = arith.constant 1 : index
    %c0_75 = arith.constant 0 : index
    %56 = vector.load %arg7[%c2_73, %c1_74, %c0_75] : memref<18x18x32xf32, #tpu.memory_space<vmem>>, vector<16x16x32xf32>
    %57 = arith.truncf %56 : vector<16x16x32xf32> to vector<16x16x32xbf16>
    %c2_76 = arith.constant 2 : index
    %c2_77 = arith.constant 2 : index
    %c0_78 = arith.constant 0 : index
    %58 = vector.load %arg7[%c2_76, %c2_77, %c0_78] : memref<18x18x32xf32, #tpu.memory_space<vmem>>, vector<16x16x32xf32>
    %59 = arith.truncf %58 : vector<16x16x32xf32> to vector<16x16x32xbf16>
    %60 = tpu.concatenate %43, %45, %47, %49, %51, %53, %55, %57, %59 in 2 : vector<16x16x32xbf16>, vector<16x16x32xbf16>, vector<16x16x32xbf16>, vector<16x16x32xbf16>, vector<16x16x32xbf16>, vector<16x16x32xbf16>, vector<16x16x32xbf16>, vector<16x16x32xbf16>, vector<16x16x32xbf16> -> vector<16x16x288xbf16>
    %61 = vector.shape_cast %60 : vector<16x16x288xbf16> to vector<256x288xbf16>
    %c1_79 = arith.constant 1 : index
    %c0_80 = arith.constant 0 : index
    %c0_81 = arith.constant 0 : index
    %62 = vector.load %arg2[%c1_79, %c0_80, %c0_81] : memref<4x288x32xbf16, #tpu.memory_space<vmem>>, vector<1x288x32xbf16>
    %63 = vector.shape_cast %62 : vector<1x288x32xbf16> to vector<288x32xbf16>
    %cst_82 = arith.constant dense<0.000000e+00> : vector<256x32xf32>
    %64 = tpu.matmul %61, %63, %cst_82 {dimension_numbers = #tpu.dot_dimension_numbers<[1], [0], [0], [1], [0, 0, 1, 1], [], []>} : vector<256x288xbf16>, vector<288x32xbf16>, vector<256x32xf32> -> vector<256x32xf32>
    %c1_83 = arith.constant 1 : index
    %c0_84 = arith.constant 0 : index
    %c0_85 = arith.constant 0 : index
    %65 = vector.load %arg3[%c1_83, %c0_84, %c0_85] : memref<4x1x32xf32, #tpu.memory_space<vmem>>, vector<1x1x32xf32>
    %66 = vector.shape_cast %65 : vector<1x1x32xf32> to vector<1x32xf32>
    %67 = vector.broadcast %66 : vector<1x32xf32> to vector<256x32xf32>
    %68 = arith.mulf %64, %67 : vector<256x32xf32>
    %c1_86 = arith.constant 1 : index
    %c0_87 = arith.constant 0 : index
    %c0_88 = arith.constant 0 : index
    %69 = vector.load %arg4[%c1_86, %c0_87, %c0_88] : memref<4x1x32xf32, #tpu.memory_space<vmem>>, vector<1x1x32xf32>
    %70 = vector.shape_cast %69 : vector<1x1x32xf32> to vector<1x32xf32>
    %71 = vector.broadcast %70 : vector<1x32xf32> to vector<256x32xf32>
    %72 = arith.addf %68, %71 : vector<256x32xf32>
    %cst_89 = arith.constant 0.000000e+00 : f32
    %73 = vector.broadcast %cst_89 : f32 to vector<256x32xf32>
    %74 = arith.maximumf %72, %73 : vector<256x32xf32>
    %75 = vector.shape_cast %74 : vector<256x32xf32> to vector<16x16x32xf32>
    %c1_90 = arith.constant 1 : index
    %c1_91 = arith.constant 1 : index
    %c0_92 = arith.constant 0 : index
    %76 = vector.load %arg6[%c1_90, %c1_91, %c0_92] : memref<18x18x32xf32, #tpu.memory_space<vmem>>, vector<16x16x32xf32>
    tpu.vector_store %arg6[%c1_90, %c1_91, %c0_92], %75 {strides = array<i32>} : memref<18x18x32xf32, #tpu.memory_space<vmem>>, vector<16x16x32xf32>,
    %c0_93 = arith.constant 0 : index
    %c0_94 = arith.constant 0 : index
    %c0_95 = arith.constant 0 : index
    %77 = vector.load %arg6[%c0_93, %c0_94, %c0_95] : memref<18x18x32xf32, #tpu.memory_space<vmem>>, vector<16x16x32xf32>
    %78 = arith.truncf %77 : vector<16x16x32xf32> to vector<16x16x32xbf16>
    %c0_96 = arith.constant 0 : index
    %c1_97 = arith.constant 1 : index
    %c0_98 = arith.constant 0 : index
    %79 = vector.load %arg6[%c0_96, %c1_97, %c0_98] : memref<18x18x32xf32, #tpu.memory_space<vmem>>, vector<16x16x32xf32>
    %80 = arith.truncf %79 : vector<16x16x32xf32> to vector<16x16x32xbf16>
    %c0_99 = arith.constant 0 : index
    %c2_100 = arith.constant 2 : index
    %c0_101 = arith.constant 0 : index
    %81 = vector.load %arg6[%c0_99, %c2_100, %c0_101] : memref<18x18x32xf32, #tpu.memory_space<vmem>>, vector<16x16x32xf32>
    %82 = arith.truncf %81 : vector<16x16x32xf32> to vector<16x16x32xbf16>
    %c1_102 = arith.constant 1 : index
    %c0_103 = arith.constant 0 : index
    %c0_104 = arith.constant 0 : index
    %83 = vector.load %arg6[%c1_102, %c0_103, %c0_104] : memref<18x18x32xf32, #tpu.memory_space<vmem>>, vector<16x16x32xf32>
    %84 = arith.truncf %83 : vector<16x16x32xf32> to vector<16x16x32xbf16>
    %c1_105 = arith.constant 1 : index
    %c1_106 = arith.constant 1 : index
    %c0_107 = arith.constant 0 : index
    %85 = vector.load %arg6[%c1_105, %c1_106, %c0_107] : memref<18x18x32xf32, #tpu.memory_space<vmem>>, vector<16x16x32xf32>
    %86 = arith.truncf %85 : vector<16x16x32xf32> to vector<16x16x32xbf16>
    %c1_108 = arith.constant 1 : index
    %c2_109 = arith.constant 2 : index
    %c0_110 = arith.constant 0 : index
    %87 = vector.load %arg6[%c1_108, %c2_109, %c0_110] : memref<18x18x32xf32, #tpu.memory_space<vmem>>, vector<16x16x32xf32>
    %88 = arith.truncf %87 : vector<16x16x32xf32> to vector<16x16x32xbf16>
    %c2_111 = arith.constant 2 : index
    %c0_112 = arith.constant 0 : index
    %c0_113 = arith.constant 0 : index
    %89 = vector.load %arg6[%c2_111, %c0_112, %c0_113] : memref<18x18x32xf32, #tpu.memory_space<vmem>>, vector<16x16x32xf32>
    %90 = arith.truncf %89 : vector<16x16x32xf32> to vector<16x16x32xbf16>
    %c2_114 = arith.constant 2 : index
    %c1_115 = arith.constant 1 : index
    %c0_116 = arith.constant 0 : index
    %91 = vector.load %arg6[%c2_114, %c1_115, %c0_116] : memref<18x18x32xf32, #tpu.memory_space<vmem>>, vector<16x16x32xf32>
    %92 = arith.truncf %91 : vector<16x16x32xf32> to vector<16x16x32xbf16>
    %c2_117 = arith.constant 2 : index
    %c2_118 = arith.constant 2 : index
    %c0_119 = arith.constant 0 : index
    %93 = vector.load %arg6[%c2_117, %c2_118, %c0_119] : memref<18x18x32xf32, #tpu.memory_space<vmem>>, vector<16x16x32xf32>
    %94 = arith.truncf %93 : vector<16x16x32xf32> to vector<16x16x32xbf16>
    %95 = tpu.concatenate %78, %80, %82, %84, %86, %88, %90, %92, %94 in 2 : vector<16x16x32xbf16>, vector<16x16x32xbf16>, vector<16x16x32xbf16>, vector<16x16x32xbf16>, vector<16x16x32xbf16>, vector<16x16x32xbf16>, vector<16x16x32xbf16>, vector<16x16x32xbf16>, vector<16x16x32xbf16> -> vector<16x16x288xbf16>
    %96 = vector.shape_cast %95 : vector<16x16x288xbf16> to vector<256x288xbf16>
    %c2_120 = arith.constant 2 : index
    %c0_121 = arith.constant 0 : index
    %c0_122 = arith.constant 0 : index
    %97 = vector.load %arg2[%c2_120, %c0_121, %c0_122] : memref<4x288x32xbf16, #tpu.memory_space<vmem>>, vector<1x288x32xbf16>
    %98 = vector.shape_cast %97 : vector<1x288x32xbf16> to vector<288x32xbf16>
    %cst_123 = arith.constant dense<0.000000e+00> : vector<256x32xf32>
    %99 = tpu.matmul %96, %98, %cst_123 {dimension_numbers = #tpu.dot_dimension_numbers<[1], [0], [0], [1], [0, 0, 1, 1], [], []>} : vector<256x288xbf16>, vector<288x32xbf16>, vector<256x32xf32> -> vector<256x32xf32>
    %c2_124 = arith.constant 2 : index
    %c0_125 = arith.constant 0 : index
    %c0_126 = arith.constant 0 : index
    %100 = vector.load %arg3[%c2_124, %c0_125, %c0_126] : memref<4x1x32xf32, #tpu.memory_space<vmem>>, vector<1x1x32xf32>
    %101 = vector.shape_cast %100 : vector<1x1x32xf32> to vector<1x32xf32>
    %102 = vector.broadcast %101 : vector<1x32xf32> to vector<256x32xf32>
    %103 = arith.mulf %99, %102 : vector<256x32xf32>
    %c2_127 = arith.constant 2 : index
    %c0_128 = arith.constant 0 : index
    %c0_129 = arith.constant 0 : index
    %104 = vector.load %arg4[%c2_127, %c0_128, %c0_129] : memref<4x1x32xf32, #tpu.memory_space<vmem>>, vector<1x1x32xf32>
    %105 = vector.shape_cast %104 : vector<1x1x32xf32> to vector<1x32xf32>
    %106 = vector.broadcast %105 : vector<1x32xf32> to vector<256x32xf32>
    %107 = arith.addf %103, %106 : vector<256x32xf32>
    %cst_130 = arith.constant 0.000000e+00 : f32
    %108 = vector.broadcast %cst_130 : f32 to vector<256x32xf32>
    %109 = arith.maximumf %107, %108 : vector<256x32xf32>
    %110 = vector.shape_cast %109 : vector<256x32xf32> to vector<16x16x32xf32>
    %c1_131 = arith.constant 1 : index
    %c1_132 = arith.constant 1 : index
    %c0_133 = arith.constant 0 : index
    %111 = vector.load %arg7[%c1_131, %c1_132, %c0_133] : memref<18x18x32xf32, #tpu.memory_space<vmem>>, vector<16x16x32xf32>
    tpu.vector_store %arg7[%c1_131, %c1_132, %c0_133], %110 {strides = array<i32>} : memref<18x18x32xf32, #tpu.memory_space<vmem>>, vector<16x16x32xf32>,
    %c0_134 = arith.constant 0 : index
    %c0_135 = arith.constant 0 : index
    %c0_136 = arith.constant 0 : index
    %112 = vector.load %arg7[%c0_134, %c0_135, %c0_136] : memref<18x18x32xf32, #tpu.memory_space<vmem>>, vector<16x16x32xf32>
    %113 = arith.truncf %112 : vector<16x16x32xf32> to vector<16x16x32xbf16>
    %c0_137 = arith.constant 0 : index
    %c1_138 = arith.constant 1 : index
    %c0_139 = arith.constant 0 : index
    %114 = vector.load %arg7[%c0_137, %c1_138, %c0_139] : memref<18x18x32xf32, #tpu.memory_space<vmem>>, vector<16x16x32xf32>
    %115 = arith.truncf %114 : vector<16x16x32xf32> to vector<16x16x32xbf16>
    %c0_140 = arith.constant 0 : index
    %c2_141 = arith.constant 2 : index
    %c0_142 = arith.constant 0 : index
    %116 = vector.load %arg7[%c0_140, %c2_141, %c0_142] : memref<18x18x32xf32, #tpu.memory_space<vmem>>, vector<16x16x32xf32>
    %117 = arith.truncf %116 : vector<16x16x32xf32> to vector<16x16x32xbf16>
    %c1_143 = arith.constant 1 : index
    %c0_144 = arith.constant 0 : index
    %c0_145 = arith.constant 0 : index
    %118 = vector.load %arg7[%c1_143, %c0_144, %c0_145] : memref<18x18x32xf32, #tpu.memory_space<vmem>>, vector<16x16x32xf32>
    %119 = arith.truncf %118 : vector<16x16x32xf32> to vector<16x16x32xbf16>
    %c1_146 = arith.constant 1 : index
    %c1_147 = arith.constant 1 : index
    %c0_148 = arith.constant 0 : index
    %120 = vector.load %arg7[%c1_146, %c1_147, %c0_148] : memref<18x18x32xf32, #tpu.memory_space<vmem>>, vector<16x16x32xf32>
    %121 = arith.truncf %120 : vector<16x16x32xf32> to vector<16x16x32xbf16>
    %c1_149 = arith.constant 1 : index
    %c2_150 = arith.constant 2 : index
    %c0_151 = arith.constant 0 : index
    %122 = vector.load %arg7[%c1_149, %c2_150, %c0_151] : memref<18x18x32xf32, #tpu.memory_space<vmem>>, vector<16x16x32xf32>
    %123 = arith.truncf %122 : vector<16x16x32xf32> to vector<16x16x32xbf16>
    %c2_152 = arith.constant 2 : index
    %c0_153 = arith.constant 0 : index
    %c0_154 = arith.constant 0 : index
    %124 = vector.load %arg7[%c2_152, %c0_153, %c0_154] : memref<18x18x32xf32, #tpu.memory_space<vmem>>, vector<16x16x32xf32>
    %125 = arith.truncf %124 : vector<16x16x32xf32> to vector<16x16x32xbf16>
    %c2_155 = arith.constant 2 : index
    %c1_156 = arith.constant 1 : index
    %c0_157 = arith.constant 0 : index
    %126 = vector.load %arg7[%c2_155, %c1_156, %c0_157] : memref<18x18x32xf32, #tpu.memory_space<vmem>>, vector<16x16x32xf32>
    %127 = arith.truncf %126 : vector<16x16x32xf32> to vector<16x16x32xbf16>
    %c2_158 = arith.constant 2 : index
    %c2_159 = arith.constant 2 : index
    %c0_160 = arith.constant 0 : index
    %128 = vector.load %arg7[%c2_158, %c2_159, %c0_160] : memref<18x18x32xf32, #tpu.memory_space<vmem>>, vector<16x16x32xf32>
    %129 = arith.truncf %128 : vector<16x16x32xf32> to vector<16x16x32xbf16>
    %130 = tpu.concatenate %113, %115, %117, %119, %121, %123, %125, %127, %129 in 2 : vector<16x16x32xbf16>, vector<16x16x32xbf16>, vector<16x16x32xbf16>, vector<16x16x32xbf16>, vector<16x16x32xbf16>, vector<16x16x32xbf16>, vector<16x16x32xbf16>, vector<16x16x32xbf16>, vector<16x16x32xbf16> -> vector<16x16x288xbf16>
    %131 = vector.shape_cast %130 : vector<16x16x288xbf16> to vector<256x288xbf16>
    %c3 = arith.constant 3 : index
    %c0_161 = arith.constant 0 : index
    %c0_162 = arith.constant 0 : index
    %132 = vector.load %arg2[%c3, %c0_161, %c0_162] : memref<4x288x32xbf16, #tpu.memory_space<vmem>>, vector<1x288x32xbf16>
    %133 = vector.shape_cast %132 : vector<1x288x32xbf16> to vector<288x32xbf16>
    %cst_163 = arith.constant dense<0.000000e+00> : vector<256x32xf32>
    %134 = tpu.matmul %131, %133, %cst_163 {dimension_numbers = #tpu.dot_dimension_numbers<[1], [0], [0], [1], [0, 0, 1, 1], [], []>} : vector<256x288xbf16>, vector<288x32xbf16>, vector<256x32xf32> -> vector<256x32xf32>
    %c3_164 = arith.constant 3 : index
    %c0_165 = arith.constant 0 : index
    %c0_166 = arith.constant 0 : index
    %135 = vector.load %arg3[%c3_164, %c0_165, %c0_166] : memref<4x1x32xf32, #tpu.memory_space<vmem>>, vector<1x1x32xf32>
    %136 = vector.shape_cast %135 : vector<1x1x32xf32> to vector<1x32xf32>
    %137 = vector.broadcast %136 : vector<1x32xf32> to vector<256x32xf32>
    %138 = arith.mulf %134, %137 : vector<256x32xf32>
    %c3_167 = arith.constant 3 : index
    %c0_168 = arith.constant 0 : index
    %c0_169 = arith.constant 0 : index
    %139 = vector.load %arg4[%c3_167, %c0_168, %c0_169] : memref<4x1x32xf32, #tpu.memory_space<vmem>>, vector<1x1x32xf32>
    %140 = vector.shape_cast %139 : vector<1x1x32xf32> to vector<1x32xf32>
    %141 = vector.broadcast %140 : vector<1x32xf32> to vector<256x32xf32>
    %142 = arith.addf %138, %141 : vector<256x32xf32>
    %143 = vector.shape_cast %142 : vector<256x32xf32> to vector<16x16x32xf32>
    %c0_170 = arith.constant 0 : index
    %c0_171 = arith.constant 0 : index
    %c0_172 = arith.constant 0 : index
    %c0_173 = arith.constant 0 : index
    %144 = vector.load %arg5[%c0_170, %c0_171, %c0_172, %c0_173] : memref<1x16x16x32xf32, #tpu.memory_space<vmem>>, vector<1x16x16x32xf32>
    %145 = vector.shape_cast %144 : vector<1x16x16x32xf32> to vector<16x16x32xf32>
    %146 = vector.shape_cast %143 : vector<16x16x32xf32> to vector<1x16x16x32xf32>
    tpu.vector_store %arg5[%c0_170, %c0_171, %c0_172, %c0_173], %146 {strides = array<i32>} : memref<1x16x16x32xf32, #tpu.memory_space<vmem>>, vector<1x16x16x32xf32>,
    return
  }
  func.func @transform_0(%arg0: i32) -> (i32, i32, i32, i32) {
    %c0_i32 = arith.constant 0 : i32
    %c0_i32_0 = arith.constant 0 : i32
    %c0_i32_1 = arith.constant 0 : i32
    %c0_i32_2 = arith.constant 0 : i32
    return %arg0, %c0_i32, %c0_i32_0, %c0_i32_1 : i32, i32, i32, i32
  }
  func.func @transform_1(%arg0: i32) -> (i32, i32, i32) {
    %c0_i32 = arith.constant 0 : i32
    %c0_i32_0 = arith.constant 0 : i32
    %c0_i32_1 = arith.constant 0 : i32
    %c0_i32_2 = arith.constant 0 : i32
    return %c0_i32, %c0_i32_0, %c0_i32_1 : i32, i32, i32
  }
  func.func @transform_2(%arg0: i32) -> (i32, i32, i32) {
    %c0_i32 = arith.constant 0 : i32
    %c0_i32_0 = arith.constant 0 : i32
    %c0_i32_1 = arith.constant 0 : i32
    %c0_i32_2 = arith.constant 0 : i32
    return %c0_i32, %c0_i32_0, %c0_i32_1 : i32, i32, i32
  }
  func.func @transform_3(%arg0: i32) -> (i32, i32, i32) {
    %c0_i32 = arith.constant 0 : i32
    %c0_i32_0 = arith.constant 0 : i32
    %c0_i32_1 = arith.constant 0 : i32
    %c0_i32_2 = arith.constant 0 : i32
    return %c0_i32, %c0_i32_0, %c0_i32_1 : i32, i32, i32
  }
  func.func @transform_4(%arg0: i32) -> (i32, i32, i32, i32) {
    %c0_i32 = arith.constant 0 : i32
    %c0_i32_0 = arith.constant 0 : i32
    %c0_i32_1 = arith.constant 0 : i32
    %c0_i32_2 = arith.constant 0 : i32
    return %arg0, %c0_i32, %c0_i32_0, %c0_i32_1 : i32, i32, i32, i32
  }
}

module attributes {stable_mosaic.version = 11 : i64} {
  func.func @_upconv_kernel(%arg0: i32, %arg1: memref<1x16x16x32xf32, #tpu.memory_space<vmem>>, %arg2: memref<128x128xbf16, #tpu.memory_space<vmem>>, %arg3: memref<1x32xf32, #tpu.memory_space<vmem>>, %arg4: memref<4x16x16x32xf32, #tpu.memory_space<vmem>>, %arg5: memref<17x17x32xf32, #tpu.memory_space<vmem>>) attributes {dimension_semantics = [#tpu.dimension_semantics<parallel>], iteration_bounds = array<i64: 2>, scalar_prefetch = 0 : i64, scratch_operands = 1 : i64, tpu.core_type = #tpu.core_type<tc>, window_params = [{transform_indices = @transform_0, window_bounds = array<i64: 1, 16, 16, 32>}, {pipeline_mode = #tpu.pipeline_mode<synchronous>, transform_indices = @transform_1, window_bounds = array<i64: 128, 128>}, {pipeline_mode = #tpu.pipeline_mode<synchronous>, transform_indices = @transform_2, window_bounds = array<i64: 1, 32>}, {transform_indices = @transform_3, window_bounds = array<i64: 4, 16, 16, 32>}]} {
    %cst = arith.constant 0.000000e+00 : f32
    %0 = vector.broadcast %cst : f32 to vector<17x17x32xf32>
    %c0 = arith.constant 0 : index
    %c0_0 = arith.constant 0 : index
    %c0_1 = arith.constant 0 : index
    %1 = vector.load %arg5[%c0, %c0_0, %c0_1] : memref<17x17x32xf32, #tpu.memory_space<vmem>>, vector<17x17x32xf32>
    tpu.vector_store %arg5[%c0, %c0_0, %c0_1], %0 {strides = array<i32>} : memref<17x17x32xf32, #tpu.memory_space<vmem>>, vector<17x17x32xf32>,
    %c0_2 = arith.constant 0 : index
    %c0_3 = arith.constant 0 : index
    %c0_4 = arith.constant 0 : index
    %c0_5 = arith.constant 0 : index
    %2 = vector.load %arg1[%c0_2, %c0_3, %c0_4, %c0_5] : memref<1x16x16x32xf32, #tpu.memory_space<vmem>>, vector<1x16x16x32xf32>
    %3 = vector.shape_cast %2 : vector<1x16x16x32xf32> to vector<16x16x32xf32>
    %c0_6 = arith.constant 0 : index
    %c0_7 = arith.constant 0 : index
    %c0_8 = arith.constant 0 : index
    %4 = vector.load %arg5[%c0_6, %c0_7, %c0_8] : memref<17x17x32xf32, #tpu.memory_space<vmem>>, vector<16x16x32xf32>
    tpu.vector_store %arg5[%c0_6, %c0_7, %c0_8], %3 {strides = array<i32>} : memref<17x17x32xf32, #tpu.memory_space<vmem>>, vector<16x16x32xf32>,
    %c0_9 = arith.constant 0 : index
    %c0_10 = arith.constant 0 : index
    %c0_11 = arith.constant 0 : index
    %5 = vector.load %arg5[%c0_9, %c0_10, %c0_11] : memref<17x17x32xf32, #tpu.memory_space<vmem>>, vector<16x16x32xf32>
    %c0_12 = arith.constant 0 : index
    %c1 = arith.constant 1 : index
    %c0_13 = arith.constant 0 : index
    %6 = vector.load %arg5[%c0_12, %c1, %c0_13] : memref<17x17x32xf32, #tpu.memory_space<vmem>>, vector<16x16x32xf32>
    %c1_14 = arith.constant 1 : index
    %c0_15 = arith.constant 0 : index
    %c0_16 = arith.constant 0 : index
    %7 = vector.load %arg5[%c1_14, %c0_15, %c0_16] : memref<17x17x32xf32, #tpu.memory_space<vmem>>, vector<16x16x32xf32>
    %c1_17 = arith.constant 1 : index
    %c1_18 = arith.constant 1 : index
    %c0_19 = arith.constant 0 : index
    %8 = vector.load %arg5[%c1_17, %c1_18, %c0_19] : memref<17x17x32xf32, #tpu.memory_space<vmem>>, vector<16x16x32xf32>
    %9 = arith.truncf %5 : vector<16x16x32xf32> to vector<16x16x32xbf16>
    %10 = arith.truncf %6 : vector<16x16x32xf32> to vector<16x16x32xbf16>
    %11 = arith.truncf %7 : vector<16x16x32xf32> to vector<16x16x32xbf16>
    %12 = arith.truncf %8 : vector<16x16x32xf32> to vector<16x16x32xbf16>
    %13 = tpu.concatenate %9, %10, %11, %12 in 2 : vector<16x16x32xbf16>, vector<16x16x32xbf16>, vector<16x16x32xbf16>, vector<16x16x32xbf16> -> vector<16x16x128xbf16>
    %14 = vector.shape_cast %13 : vector<16x16x128xbf16> to vector<256x128xbf16>
    %c0_20 = arith.constant 0 : index
    %c0_21 = arith.constant 0 : index
    %15 = vector.load %arg2[%c0_20, %c0_21] : memref<128x128xbf16, #tpu.memory_space<vmem>>, vector<128x128xbf16>
    %cst_22 = arith.constant dense<0.000000e+00> : vector<256x128xf32>
    %16 = tpu.matmul %14, %15, %cst_22 {dimension_numbers = #tpu.dot_dimension_numbers<[1], [0], [0], [1], [0, 0, 1, 1], [], []>} : vector<256x128xbf16>, vector<128x128xbf16>, vector<256x128xf32> -> vector<256x128xf32>
    %17 = vector.extract_strided_slice %16 {offsets = [0, 0], sizes = [256, 32], strides = [1, 1]} : vector<256x128xf32> to vector<256x32xf32>
    %c0_23 = arith.constant 0 : index
    %c0_24 = arith.constant 0 : index
    %18 = vector.load %arg3[%c0_23, %c0_24] : memref<1x32xf32, #tpu.memory_space<vmem>>, vector<1x32xf32>
    %19 = vector.broadcast %18 : vector<1x32xf32> to vector<256x32xf32>
    %20 = arith.addf %17, %19 : vector<256x32xf32>
    %21 = vector.shape_cast %20 : vector<256x32xf32> to vector<16x16x32xf32>
    %c0_25 = arith.constant 0 : index
    %c0_26 = arith.constant 0 : index
    %c0_27 = arith.constant 0 : index
    %c0_28 = arith.constant 0 : index
    %22 = vector.load %arg4[%c0_25, %c0_26, %c0_27, %c0_28] : memref<4x16x16x32xf32, #tpu.memory_space<vmem>>, vector<1x16x16x32xf32>
    %23 = vector.shape_cast %22 : vector<1x16x16x32xf32> to vector<16x16x32xf32>
    %24 = vector.shape_cast %21 : vector<16x16x32xf32> to vector<1x16x16x32xf32>
    tpu.vector_store %arg4[%c0_25, %c0_26, %c0_27, %c0_28], %24 {strides = array<i32>} : memref<4x16x16x32xf32, #tpu.memory_space<vmem>>, vector<1x16x16x32xf32>,
    %25 = vector.extract_strided_slice %16 {offsets = [0, 32], sizes = [256, 32], strides = [1, 1]} : vector<256x128xf32> to vector<256x32xf32>
    %c0_29 = arith.constant 0 : index
    %c0_30 = arith.constant 0 : index
    %26 = vector.load %arg3[%c0_29, %c0_30] : memref<1x32xf32, #tpu.memory_space<vmem>>, vector<1x32xf32>
    %27 = vector.broadcast %26 : vector<1x32xf32> to vector<256x32xf32>
    %28 = arith.addf %25, %27 : vector<256x32xf32>
    %29 = vector.shape_cast %28 : vector<256x32xf32> to vector<16x16x32xf32>
    %c1_31 = arith.constant 1 : index
    %c0_32 = arith.constant 0 : index
    %c0_33 = arith.constant 0 : index
    %c0_34 = arith.constant 0 : index
    %30 = vector.load %arg4[%c1_31, %c0_32, %c0_33, %c0_34] : memref<4x16x16x32xf32, #tpu.memory_space<vmem>>, vector<1x16x16x32xf32>
    %31 = vector.shape_cast %30 : vector<1x16x16x32xf32> to vector<16x16x32xf32>
    %32 = vector.shape_cast %29 : vector<16x16x32xf32> to vector<1x16x16x32xf32>
    tpu.vector_store %arg4[%c1_31, %c0_32, %c0_33, %c0_34], %32 {strides = array<i32>} : memref<4x16x16x32xf32, #tpu.memory_space<vmem>>, vector<1x16x16x32xf32>,
    %33 = vector.extract_strided_slice %16 {offsets = [0, 64], sizes = [256, 32], strides = [1, 1]} : vector<256x128xf32> to vector<256x32xf32>
    %c0_35 = arith.constant 0 : index
    %c0_36 = arith.constant 0 : index
    %34 = vector.load %arg3[%c0_35, %c0_36] : memref<1x32xf32, #tpu.memory_space<vmem>>, vector<1x32xf32>
    %35 = vector.broadcast %34 : vector<1x32xf32> to vector<256x32xf32>
    %36 = arith.addf %33, %35 : vector<256x32xf32>
    %37 = vector.shape_cast %36 : vector<256x32xf32> to vector<16x16x32xf32>
    %c2 = arith.constant 2 : index
    %c0_37 = arith.constant 0 : index
    %c0_38 = arith.constant 0 : index
    %c0_39 = arith.constant 0 : index
    %38 = vector.load %arg4[%c2, %c0_37, %c0_38, %c0_39] : memref<4x16x16x32xf32, #tpu.memory_space<vmem>>, vector<1x16x16x32xf32>
    %39 = vector.shape_cast %38 : vector<1x16x16x32xf32> to vector<16x16x32xf32>
    %40 = vector.shape_cast %37 : vector<16x16x32xf32> to vector<1x16x16x32xf32>
    tpu.vector_store %arg4[%c2, %c0_37, %c0_38, %c0_39], %40 {strides = array<i32>} : memref<4x16x16x32xf32, #tpu.memory_space<vmem>>, vector<1x16x16x32xf32>,
    %41 = vector.extract_strided_slice %16 {offsets = [0, 96], sizes = [256, 32], strides = [1, 1]} : vector<256x128xf32> to vector<256x32xf32>
    %c0_40 = arith.constant 0 : index
    %c0_41 = arith.constant 0 : index
    %42 = vector.load %arg3[%c0_40, %c0_41] : memref<1x32xf32, #tpu.memory_space<vmem>>, vector<1x32xf32>
    %43 = vector.broadcast %42 : vector<1x32xf32> to vector<256x32xf32>
    %44 = arith.addf %41, %43 : vector<256x32xf32>
    %45 = vector.shape_cast %44 : vector<256x32xf32> to vector<16x16x32xf32>
    %c3 = arith.constant 3 : index
    %c0_42 = arith.constant 0 : index
    %c0_43 = arith.constant 0 : index
    %c0_44 = arith.constant 0 : index
    %46 = vector.load %arg4[%c3, %c0_42, %c0_43, %c0_44] : memref<4x16x16x32xf32, #tpu.memory_space<vmem>>, vector<1x16x16x32xf32>
    %47 = vector.shape_cast %46 : vector<1x16x16x32xf32> to vector<16x16x32xf32>
    %48 = vector.shape_cast %45 : vector<16x16x32xf32> to vector<1x16x16x32xf32>
    tpu.vector_store %arg4[%c3, %c0_42, %c0_43, %c0_44], %48 {strides = array<i32>} : memref<4x16x16x32xf32, #tpu.memory_space<vmem>>, vector<1x16x16x32xf32>,
    return
  }
  func.func @transform_0(%arg0: i32) -> (i32, i32, i32, i32) {
    %c0_i32 = arith.constant 0 : i32
    %c0_i32_0 = arith.constant 0 : i32
    %c0_i32_1 = arith.constant 0 : i32
    %c0_i32_2 = arith.constant 0 : i32
    return %arg0, %c0_i32, %c0_i32_0, %c0_i32_1 : i32, i32, i32, i32
  }
  func.func @transform_1(%arg0: i32) -> (i32, i32) {
    %c0_i32 = arith.constant 0 : i32
    %c0_i32_0 = arith.constant 0 : i32
    %c0_i32_1 = arith.constant 0 : i32
    return %c0_i32, %c0_i32_0 : i32, i32
  }
  func.func @transform_2(%arg0: i32) -> (i32, i32) {
    %c0_i32 = arith.constant 0 : i32
    %c0_i32_0 = arith.constant 0 : i32
    %c0_i32_1 = arith.constant 0 : i32
    return %c0_i32, %c0_i32_0 : i32, i32
  }
  func.func @transform_3(%arg0: i32) -> (i32, i32, i32, i32) {
    %c0_i32 = arith.constant 0 : i32
    %c0_i32_0 = arith.constant 0 : i32
    %c0_i32_1 = arith.constant 0 : i32
    %c0_i32_2 = arith.constant 0 : i32
    return %arg0, %c0_i32, %c0_i32_0, %c0_i32_1 : i32, i32, i32, i32
  }
}

</mosaic_0001>

<llo_original>
// kernel: dncnn_forward.3
$region0: #{dncnn_forward.3}
  #allocation0 [shape = 'u32[]', space=smem, size = 0x4, offset = 0x4, fixed_abs, tag = 'smem constant byte address 0x4 - core index']
  #allocation1 [shape = 'u32[72,128]{1,0:T(1,128)}', space=vmem, size = 0x9000, scoped, tag = 'internal scratch']
  #allocation2 [shape = 'f32[17,17,32]{2,1,0:T(8,128)}', space=vmem, size = 0x33000, scoped, tag = 'scratch operand']
  %s0 = inlined_call_operand.vmem [shape: f32[2,16,16,32], index: 0, kind: input, shape index: {}]
  %s1 = inlined_call_operand.vmem [shape: bf16[128,128], index: 1, kind: input, shape index: {}]
  %s2 = inlined_call_operand.vmem [shape: f32[1,32], index: 2, kind: input, shape index: {}]
  %s3 = inlined_call_operand.vmem [shape: f32[8,16,16,32], index: 3, kind: output, shape index: {}]
  %s4 = sld [smem:[#allocation0]]
  $region45: #{dncnn_forward.3} parent=0
    _
  %s6 = ssub.s32 1, %s4
  %s7 = scalar_select 0, %s6, %s4
  loop: start=0, step=1, limit=4
  $region2: #{dncnn_forward.3} parent=0 // loop_pre_header
    _
  $region3: #{dncnn_forward.3} parent=0 // loop_header
    %s9 = sphi 0, %s13
    %p10 = scmp.ge.s32.totalorder %s9, 4
    %s19 = sphi 0, %s21
    %s22 = sphi 0, %s19
    %s23 = sphi 0, %s22
    %s39 = sphi 0, %s23
    %s43 = sphi 0, %s43
    %s45 = sphi 0, %s43
    %s46 = sphi 0, %s45
    %s60 = sphi 0, %s46
    %s64 = sphi 0, %s64
    %s66 = sphi 0, %s64
    %s67 = sphi 0, %s66
    %s81 = sphi 0, %s67
    %s87 = sphi 0, %s89
    %s90 = sphi 0, %s87
    %s91 = sphi 0, %s90
    %s107 = sphi 0, %s91
  $region4: #{dncnn_forward.3} parent=0 // loop_header_branch
    %12 = sbr.rel (%p10) target = $region8
  $region5: #{dncnn_forward.3} parent=0 // loop_body
    %s14 = ssub.s32 %s9, 1
    %s15 = ssub.s32 %s9, 2
    %s16 = sadd.s32 %s9, 1
    %s17 = ssub.s32 %s9, %s16
    %p18 = scmp.eq.s32.totalorder %s17, 0
    %s20 = sadd.s32 %s19, 1
    %s21 = scalar_select %p18, %s19, %s20
    %p24 = pneg %p18
    %p25 = scmp.eq.s32.totalorder %s9, 1
    %p26 = por %p24, %p25
    %p27 = scmp.ne.s32.totalorder %s19, %s22
    %p28 = scmp.eq.s32.totalorder %s9, 0
    %p29 = por %p27, %p28
    %p30 = scmp.ne.s32.totalorder %s19, %s22
    %p31 = scmp.eq.s32.totalorder %s14, 1
    %p32 = por %p30, %p31
    %p33 = scmp.ne.s32.totalorder %s22, %s23
    %p34 = scmp.eq.s32.totalorder %s14, 0
    %p35 = por %p33, %p34
    %p36 = scmp.ne.s32.totalorder %s22, %s23
    %p37 = scmp.eq.s32.totalorder %s15, 1
    %p38 = por %p36, %p37
    %p40 = scmp.ne.s32.totalorder %s23, %s39
    %p41 = scmp.eq.s32.totalorder %s15, 0
    %p42 = por %p40, %p41
    %s44 = sadd.s32 %s43, 1
    %p47 = scmp.eq.s32.totalorder %s9, 1
    %p48 = scmp.ne.s32.totalorder %s43, %s45
    %p49 = scmp.eq.s32.totalorder %s9, 0
    %p50 = por %p48, %p49
    %p51 = scmp.ne.s32.totalorder %s43, %s45
    %p52 = scmp.eq.s32.totalorder %s14, 1
    %p53 = por %p51, %p52
    %p54 = scmp.ne.s32.totalorder %s45, %s46
    %p55 = scmp.eq.s32.totalorder %s14, 0
    %p56 = por %p54, %p55
    %p57 = scmp.ne.s32.totalorder %s45, %s46
    %p58 = scmp.eq.s32.totalorder %s15, 1
    %p59 = por %p57, %p58
    %p61 = scmp.ne.s32.totalorder %s46, %s60
    %p62 = scmp.eq.s32.totalorder %s15, 0
    %p63 = por %p61, %p62
    %s65 = sadd.s32 %s64, 1
    %p68 = scmp.eq.s32.totalorder %s9, 1
    %p69 = scmp.ne.s32.totalorder %s64, %s66
    %p70 = scmp.eq.s32.totalorder %s9, 0
    %p71 = por %p69, %p70
    %p72 = scmp.ne.s32.totalorder %s64, %s66
    %p73 = scmp.eq.s32.totalorder %s14, 1
    %p74 = por %p72, %p73
    %p75 = scmp.ne.s32.totalorder %s66, %s67
    %p76 = scmp.eq.s32.totalorder %s14, 0
    %p77 = por %p75, %p76
    %p78 = scmp.ne.s32.totalorder %s66, %s67
    %p79 = scmp.eq.s32.totalorder %s15, 1
    %p80 = por %p78, %p79
    %p82 = scmp.ne.s32.totalorder %s67, %s81
    %p83 = scmp.eq.s32.totalorder %s15, 0
    %p84 = por %p82, %p83
    %s85 = ssub.s32 %s9, %s16
    %p86 = scmp.eq.s32.totalorder %s85, 0
    %s88 = sadd.s32 %s87, 1
    %s89 = scalar_select %p86, %s87, %s88
    %p92 = pneg %p86
    %p93 = scmp.eq.s32.totalorder %s9, 1
    %p94 = por %p92, %p93
    %p95 = scmp.ne.s32.totalorder %s87, %s90
    %p96 = scmp.eq.s32.totalorder %s9, 0
    %p97 = por %p95, %p96
    %p98 = scmp.ne.s32.totalorder %s87, %s90
    %p99 = scmp.eq.s32.totalorder %s14, 1
    %p100 = por %p98, %p99
    %p101 = scmp.ne.s32.totalorder %s90, %s91
    %p102 = scmp.eq.s32.totalorder %s14, 0
    %p103 = por %p101, %p102
    %p104 = scmp.ne.s32.totalorder %s90, %s91
    %p105 = scmp.eq.s32.totalorder %s15, 1
    %p106 = por %p104, %p105
    %p108 = scmp.ne.s32.totalorder %s91, %s107
    %p109 = scmp.eq.s32.totalorder %s15, 0
    %p110 = por %p108, %p109
    %p111 = scmp.le.s32.totalorder 1, %s9
    %p112 = scmp.lt.s32.totalorder %s9, 3
    %p113 = pnand %p111, %p112
    %p114 = pneg %p113
    // Predicated region
    $region9: #{dncnn_forward.3} parent=5 // pred_check
      _
    $region10: #{dncnn_forward.3} parent=5 // pred_check_branch
      %116 = sbr.rel (%p113) target = $region12
    $region11: #{dncnn_forward.3} parent=5 // pred_region
      %s117 = ssub.s32 %s9, 1
      // Predicated region
      $region13: #{dncnn_forward.3} parent=11 // pred_check
        %p118 = pneg %p56
      $region14: #{dncnn_forward.3} parent=11 // pred_check_branch
        %120 = sbr.rel (%p118) target = $region16
      $region15: #{dncnn_forward.3} parent=11 // pred_region
        _
      $region16: #{dncnn_forward.3} parent=11 // pred_fallthru
        _
      // Predicated region
      $region17: #{dncnn_forward.3} parent=11 // pred_check
        %p121 = pneg %p77
      $region18: #{dncnn_forward.3} parent=11 // pred_check_branch
        %123 = sbr.rel (%p121) target = $region20
      $region19: #{dncnn_forward.3} parent=11 // pred_region
        _
      $region20: #{dncnn_forward.3} parent=11 // pred_fallthru
        _
    $region12: #{dncnn_forward.3} parent=5 // pred_fallthru
      _
    %p124 = scmp.lt.s32.totalorder %s9, 2
    // Predicated region
    $region21: #{dncnn_forward.3} parent=5 // pred_check
      %p125 = pneg %p124
    $region22: #{dncnn_forward.3} parent=5 // pred_check_branch
      %127 = sbr.rel (%p125) target = $region24
    $region23: #{dncnn_forward.3} parent=5 // pred_region
      // Predicated region
      $region25: #{dncnn_forward.3} parent=23 // pred_check
        %p128 = pneg %p29
      $region26: #{dncnn_forward.3} parent=23 // pred_check_branch
        %130 = sbr.rel (%p128) target = $region28
      $region27: #{dncnn_forward.3} parent=23 // pred_region
        %p131 = scmp.lt.s32.totalorder %s9, 1
        %s132 = scalar_select %p131, %s9, 1
        %s133 = smul.addr %s132, 32
        %s134 = smul.addr %s133, 8
        %s135 = scalar_lea.vmem %s0, %s134
      $region28: #{dncnn_forward.3} parent=23 // pred_fallthru
        _
    $region24: #{dncnn_forward.3} parent=5 // pred_fallthru
      _
    %p136 = scmp.le.s32.totalorder 1, %s9
    %p137 = scmp.lt.s32.totalorder %s9, 3
    %p138 = pnand %p136, %p137
    %p139 = pneg %p138
    // Predicated region
    $region29: #{dncnn_forward.3} parent=5 // pred_check
      _
    $region30: #{dncnn_forward.3} parent=5 // pred_check_branch
      %141 = sbr.rel (%p138) target = $region32
    $region31: #{dncnn_forward.3} parent=5 // pred_region
      %s142 = ssub.s32 %s9, 1
      %p143 = scmp.lt.s32.totalorder %s14, 1
      %s144 = scalar_select %p143, %s14, 1
      %s145 = smul.addr %s144, 32
      %s146 = smul.addr %s145, 8
      %s147 = scalar_lea.vmem %s0, %s146
      %p148 = pneg %p35
      %p149 = pneg %p32
      %p150 = pneg %p56
      %p151 = pneg %p53
      %p152 = pneg %p77
      %p153 = pneg %p74
      %p154 = pneg %p103
      %p155 = pneg %p100
      %s156 = smul.u32 4, %s14
      %p157 = scmp.lt.s32.totalorder %s156, 7
      %s158 = scalar_select %p157, %s156, 7
      %s159 = smul.addr %s158, 32
      %s160 = smul.addr %s159, 8
      %s161 = scalar_lea.vmem %s3, %s160
      %p162 = scmp.lt.s32.totalorder %s14, 1
      %s163 = scalar_select %p162, %s14, 1
      %s164 = smul.addr %s163, 32
      %s165 = smul.addr %s164, 8
      %s166 = scalar_lea.vmem %s0, %s165
      %s167 = smul.u32 4, %s14
      %p168 = scmp.lt.s32.totalorder %s167, 7
      %s169 = scalar_select %p168, %s167, 7
      %s170 = smul.addr %s169, 32
      %s171 = smul.addr %s170, 8
      %s172 = scalar_lea.vmem %s3, %s171
      %s173 = smul.u32 4, %s14
      %vm174 = vcmask 261120
      %175 = vst.msk [vmem:[#allocation2] sm:$0xff] %vm174, 0.0
      %176 = vst.msk [vmem:[#allocation2 + $0x8] sm:$0xff] %vm174, 0.0
      %vm177 = vcmask 253952
      %178 = vst.msk [vmem:[#allocation2 + $0x10] sm:$0x1] %vm177, 0.0
      %179 = vst.msk [vmem:[#allocation2 + $0x18] sm:$0xff] %vm174, 0.0
      %180 = vst.msk [vmem:[#allocation2 + $0x20] sm:$0xff] %vm174, 0.0
      %181 = vst.msk [vmem:[#allocation2 + $0x28] sm:$0x1] %vm177, 0.0
      %182 = vst.msk [vmem:[#allocation2 + $0x30] sm:$0xff] %vm174, 0.0
      %183 = vst.msk [vmem:[#allocation2 + $0x38] sm:$0xff] %vm174, 0.0
      %184 = vst.msk [vmem:[#allocation2 + $0x40] sm:$0x1] %vm177, 0.0
      %185 = vst.msk [vmem:[#allocation2 + $0x48] sm:$0xff] %vm174, 0.0
      %186 = vst.msk [vmem:[#allocation2 + $0x50] sm:$0xff] %vm174, 0.0
      %187 = vst.msk [vmem:[#allocation2 + $0x58] sm:$0x1] %vm177, 0.0
      %188 = vst.msk [vmem:[#allocation2 + $0x60] sm:$0xff] %vm174, 0.0
      %189 = vst.msk [vmem:[#allocation2 + $0x68] sm:$0xff] %vm174, 0.0
      %190 = vst.msk [vmem:[#allocation2 + $0x70] sm:$0x1] %vm177, 0.0
      %191 = vst.msk [vmem:[#allocation2 + $0x78] sm:$0xff] %vm174, 0.0
      %192 = vst.msk [vmem:[#allocation2 + $0x80] sm:$0xff] %vm174, 0.0
      %193 = vst.msk [vmem:[#allocation2 + $0x88] sm:$0x1] %vm177, 0.0
      %194 = vst.msk [vmem:[#allocation2 + $0x90] sm:$0xff] %vm174, 0.0
      %195 = vst.msk [vmem:[#allocation2 + $0x98] sm:$0xff] %vm174, 0.0
      %196 = vst.msk [vmem:[#allocation2 + $0xa0] sm:$0x1] %vm177, 0.0
      %197 = vst.msk [vmem:[#allocation2 + $0xa8] sm:$0xff] %vm174, 0.0
      %198 = vst.msk [vmem:[#allocation2 + $0xb0] sm:$0xff] %vm174, 0.0
      %199 = vst.msk [vmem:[#allocation2 + $0xb8] sm:$0x1] %vm177, 0.0
      %200 = vst.msk [vmem:[#allocation2 + $0xc0] sm:$0xff] %vm174, 0.0
      %201 = vst.msk [vmem:[#allocation2 + $0xc8] sm:$0xff] %vm174, 0.0
      %202 = vst.msk [vmem:[#allocation2 + $0xd0] sm:$0x1] %vm177, 0.0
      %203 = vst.msk [vmem:[#allocation2 + $0xd8] sm:$0xff] %vm174, 0.0
      %204 = vst.msk [vmem:[#allocation2 + $0xe0] sm:$0xff] %vm174, 0.0
      %205 = vst.msk [vmem:[#allocation2 + $0xe8] sm:$0x1] %vm177, 0.0
      %206 = vst.msk [vmem:[#allocation2 + $0xf0] sm:$0xff] %vm174, 0.0
      %207 = vst.msk [vmem:[#allocation2 + $0xf8] sm:$0xff] %vm174, 0.0
      %208 = vst.msk [vmem:[#allocation2 + $0x100] sm:$0x1] %vm177, 0.0
      %209 = vst.msk [vmem:[#allocation2 + $0x108] sm:$0xff] %vm174, 0.0
      %210 = vst.msk [vmem:[#allocation2 + $0x110] sm:$0xff] %vm174, 0.0
      %211 = vst.msk [vmem:[#allocation2 + $0x118] sm:$0x1] %vm177, 0.0
      %212 = vst.msk [vmem:[#allocation2 + $0x120] sm:$0xff] %vm174, 0.0
      %213 = vst.msk [vmem:[#allocation2 + $0x128] sm:$0xff] %vm174, 0.0
      %214 = vst.msk [vmem:[#allocation2 + $0x130] sm:$0x1] %vm177, 0.0
      %215 = vst.msk [vmem:[#allocation2 + $0x138] sm:$0xff] %vm174, 0.0
      %216 = vst.msk [vmem:[#allocation2 + $0x140] sm:$0xff] %vm174, 0.0
      %217 = vst.msk [vmem:[#allocation2 + $0x148] sm:$0x1] %vm177, 0.0
      %218 = vst.msk [vmem:[#allocation2 + $0x150] sm:$0xff] %vm174, 0.0
      %219 = vst.msk [vmem:[#allocation2 + $0x158] sm:$0xff] %vm174, 0.0
      %220 = vst.msk [vmem:[#allocation2 + $0x160] sm:$0x1] %vm177, 0.0
      %221 = vst.msk [vmem:[#allocation2 + $0x168] sm:$0xff] %vm174, 0.0
      %222 = vst.msk [vmem:[#allocation2 + $0x170] sm:$0xff] %vm174, 0.0
      %223 = vst.msk [vmem:[#allocation2 + $0x178] sm:$0x1] %vm177, 0.0
      %224 = vst.msk [vmem:[#allocation2 + $0x180] sm:$0xff] %vm174, 0.0
      %225 = vst.msk [vmem:[#allocation2 + $0x188] sm:$0xff] %vm174, 0.0
      %226 = vst.msk [vmem:[#allocation2 + $0x190] sm:$0x1] %vm177, 0.0
      %v227 = vld [vmem:[%s166] sm:$0xff]
      %v228 = vld [vmem:[%s166 + $0x8] sm:$0xff]
      %v229 = vld [vmem:[%s166 + $0x10] sm:$0xff]
      %v230 = vld [vmem:[%s166 + $0x18] sm:$0xff]
      %v231 = vld [vmem:[%s166 + $0x20] sm:$0xff]
      %v232 = vld [vmem:[%s166 + $0x28] sm:$0xff]
      %v233 = vld [vmem:[%s166 + $0x30] sm:$0xff]
      %v234 = vld [vmem:[%s166 + $0x38] sm:$0xff]
      %v235 = vld [vmem:[%s166 + $0x40] sm:$0xff]
      %v236 = vld [vmem:[%s166 + $0x48] sm:$0xff]
      %v237 = vld [vmem:[%s166 + $0x50] sm:$0xff]
      %v238 = vld [vmem:[%s166 + $0x58] sm:$0xff]
      %v239 = vld [vmem:[%s166 + $0x60] sm:$0xff]
      %v240 = vld [vmem:[%s166 + $0x68] sm:$0xff]
      %v241 = vld [vmem:[%s166 + $0x70] sm:$0xff]
      %v242 = vld [vmem:[%s166 + $0x78] sm:$0xff]
      %v243 = vld [vmem:[%s166 + $0x80] sm:$0xff]
      %v244 = vld [vmem:[%s166 + $0x88] sm:$0xff]
      %v245 = vld [vmem:[%s166 + $0x90] sm:$0xff]
      %v246 = vld [vmem:[%s166 + $0x98] sm:$0xff]
      %v247 = vld [vmem:[%s166 + $0xa0] sm:$0xff]
      %v248 = vld [vmem:[%s166 + $0xa8] sm:$0xff]
      %v249 = vld [vmem:[%s166 + $0xb0] sm:$0xff]
      %v250 = vld [vmem:[%s166 + $0xb8] sm:$0xff]
      %v251 = vld [vmem:[%s166 + $0xc0] sm:$0xff]
      %v252 = vld [vmem:[%s166 + $0xc8] sm:$0xff]
      %v253 = vld [vmem:[%s166 + $0xd0] sm:$0xff]
      %v254 = vld [vmem:[%s166 + $0xd8] sm:$0xff]
      %v255 = vld [vmem:[%s166 + $0xe0] sm:$0xff]
      %v256 = vld [vmem:[%s166 + $0xe8] sm:$0xff]
      %v257 = vld [vmem:[%s166 + $0xf0] sm:$0xff]
      %v258 = vld [vmem:[%s166 + $0xf8] sm:$0xff]
      %259 = vst.msk [vmem:[#allocation2] sm:$0xff] %vm174, %v227
      %260 = vst.msk [vmem:[#allocation2 + $0x8] sm:$0xff] %vm174, %v228
      %261 = vst.msk [vmem:[#allocation2 + $0x18] sm:$0xff] %vm174, %v229
      %262 = vst.msk [vmem:[#allocation2 + $0x20] sm:$0xff] %vm174, %v230
      %263 = vst.msk [vmem:[#allocation2 + $0x30] sm:$0xff] %vm174, %v231
      %264 = vst.msk [vmem:[#allocation2 + $0x38] sm:$0xff] %vm174, %v232
      %265 = vst.msk [vmem:[#allocation2 + $0x48] sm:$0xff] %vm174, %v233
      %266 = vst.msk [vmem:[#allocation2 + $0x50] sm:$0xff] %vm174, %v234
      %267 = vst.msk [vmem:[#allocation2 + $0x60] sm:$0xff] %vm174, %v235
      %268 = vst.msk [vmem:[#allocation2 + $0x68] sm:$0xff] %vm174, %v236
      %269 = vst.msk [vmem:[#allocation2 + $0x78] sm:$0xff] %vm174, %v237
      %270 = vst.msk [vmem:[#allocation2 + $0x80] sm:$0xff] %vm174, %v238
      %271 = vst.msk [vmem:[#allocation2 + $0x90] sm:$0xff] %vm174, %v239
      %272 = vst.msk [vmem:[#allocation2 + $0x98] sm:$0xff] %vm174, %v240
      %273 = vst.msk [vmem:[#allocation2 + $0xa8] sm:$0xff] %vm174, %v241
      %274 = vst.msk [vmem:[#allocation2 + $0xb0] sm:$0xff] %vm174, %v242
      %275 = vst.msk [vmem:[#allocation2 + $0xc0] sm:$0xff] %vm174, %v243
      %276 = vst.msk [vmem:[#allocation2 + $0xc8] sm:$0xff] %vm174, %v244
      %277 = vst.msk [vmem:[#allocation2 + $0xd8] sm:$0xff] %vm174, %v245
      %278 = vst.msk [vmem:[#allocation2 + $0xe0] sm:$0xff] %vm174, %v246
      %279 = vst.msk [vmem:[#allocation2 + $0xf0] sm:$0xff] %vm174, %v247
      %280 = vst.msk [vmem:[#allocation2 + $0xf8] sm:$0xff] %vm174, %v248
      %281 = vst.msk [vmem:[#allocation2 + $0x108] sm:$0xff] %vm174, %v249
      %282 = vst.msk [vmem:[#allocation2 + $0x110] sm:$0xff] %vm174, %v250
      %283 = vst.msk [vmem:[#allocation2 + $0x120] sm:$0xff] %vm174, %v251
      %284 = vst.msk [vmem:[#allocation2 + $0x128] sm:$0xff] %vm174, %v252
      %285 = vst.msk [vmem:[#allocation2 + $0x138] sm:$0xff] %vm174, %v253
      %286 = vst.msk [vmem:[#allocation2 + $0x140] sm:$0xff] %vm174, %v254
      %287 = vst.msk [vmem:[#allocation2 + $0x150] sm:$0xff] %vm174, %v255
      %288 = vst.msk [vmem:[#allocation2 + $0x158] sm:$0xff] %vm174, %v256
      %289 = vst.msk [vmem:[#allocation2 + $0x168] sm:$0xff] %vm174, %v257
      %290 = vst.msk [vmem:[#allocation2 + $0x170] sm:$0xff] %vm174, %v258
      %v291 = vld [vmem:[#allocation2] sm:$0xff]
      %v292 = vld [vmem:[#allocation2 + $0x8] sm:$0xff]
      %v293 = vld [vmem:[#allocation2 + $0x18] sm:$0xff]
      %v294 = vld [vmem:[#allocation2 + $0x20] sm:$0xff]
      %v295 = vld [vmem:[#allocation2 + $0x30] sm:$0xff]
      %v296 = vld [vmem:[#allocation2 + $0x38] sm:$0xff]
      %v297 = vld [vmem:[#allocation2 + $0x48] sm:$0xff]
      %v298 = vld [vmem:[#allocation2 + $0x50] sm:$0xff]
      %v299 = vld [vmem:[#allocation2 + $0x60] sm:$0xff]
      %v300 = vld [vmem:[#allocation2 + $0x68] sm:$0xff]
      %v301 = vld [vmem:[#allocation2 + $0x78] sm:$0xff]
      %v302 = vld [vmem:[#allocation2 + $0x80] sm:$0xff]
      %v303 = vld [vmem:[#allocation2 + $0x90] sm:$0xff]
      %v304 = vld [vmem:[#allocation2 + $0x98] sm:$0xff]
      %v305 = vld [vmem:[#allocation2 + $0xa8] sm:$0xff]
      %v306 = vld [vmem:[#allocation2 + $0xb0] sm:$0xff]
      %v307 = vld [vmem:[#allocation2 + $0xc0] sm:$0xff]
      %v308 = vld [vmem:[#allocation2 + $0xc8] sm:$0xff]
      %v309 = vld [vmem:[#allocation2 + $0xd8] sm:$0xff]
      %v310 = vld [vmem:[#allocation2 + $0xe0] sm:$0xff]
      %v311 = vld [vmem:[#allocation2 + $0xf0] sm:$0xff]
      %v312 = vld [vmem:[#allocation2 + $0xf8] sm:$0xff]
      %v313 = vld [vmem:[#allocation2 + $0x108] sm:$0xff]
      %v314 = vld [vmem:[#allocation2 + $0x110] sm:$0xff]
      %v315 = vld [vmem:[#allocation2 + $0x120] sm:$0xff]
      %v316 = vld [vmem:[#allocation2 + $0x128] sm:$0xff]
      %v317 = vld [vmem:[#allocation2 + $0x138] sm:$0xff]
      %v318 = vld [vmem:[#allocation2 + $0x140] sm:$0xff]
      %v319 = vld [vmem:[#allocation2 + $0x150] sm:$0xff]
      %v320 = vld [vmem:[#allocation2 + $0x158] sm:$0xff]
      %v321 = vld [vmem:[#allocation2 + $0x168] sm:$0xff]
      %v322 = vld [vmem:[#allocation2 + $0x170] sm:$0xff]
      %v323 = vld [vmem:[#allocation2 + $0x1] sm:$0xff]
      %v324 = vld [vmem:[#allocation2 + $0x9] sm:$0xff]
      %v325 = vld [vmem:[#allocation2 + $0x19] sm:$0xff]
      %v326 = vld [vmem:[#allocation2 + $0x21] sm:$0xff]
      %v327 = vld [vmem:[#allocation2 + $0x31] sm:$0xff]
      %v328 = vld [vmem:[#allocation2 + $0x39] sm:$0xff]
      %v329 = vld [vmem:[#allocation2 + $0x49] sm:$0xff]
      %v330 = vld [vmem:[#allocation2 + $0x51] sm:$0xff]
      %v331 = vld [vmem:[#allocation2 + $0x61] sm:$0xff]
      %v332 = vld [vmem:[#allocation2 + $0x69] sm:$0xff]
      %v333 = vld [vmem:[#allocation2 + $0x79] sm:$0xff]
      %v334 = vld [vmem:[#allocation2 + $0x81] sm:$0xff]
      %v335 = vld [vmem:[#allocation2 + $0x91] sm:$0xff]
      %v336 = vld [vmem:[#allocation2 + $0x99] sm:$0xff]
      %v337 = vld [vmem:[#allocation2 + $0xa9] sm:$0xff]
      %v338 = vld [vmem:[#allocation2 + $0xb1] sm:$0xff]
      %v339 = vld [vmem:[#allocation2 + $0xc1] sm:$0xff]
      %v340 = vld [vmem:[#allocation2 + $0xc9] sm:$0xff]
      %v341 = vld [vmem:[#allocation2 + $0xd9] sm:$0xff]
      %v342 = vld [vmem:[#allocation2 + $0xe1] sm:$0xff]
      %v343 = vld [vmem:[#allocation2 + $0xf1] sm:$0xff]
      %v344 = vld [vmem:[#allocation2 + $0xf9] sm:$0xff]
      %v345 = vld [vmem:[#allocation2 + $0x109] sm:$0xff]
      %v346 = vld [vmem:[#allocation2 + $0x111] sm:$0xff]
      %v347 = vld [vmem:[#allocation2 + $0x121] sm:$0xff]
      %v348 = vld [vmem:[#allocation2 + $0x129] sm:$0xff]
      %v349 = vld [vmem:[#allocation2 + $0x139] sm:$0xff]
      %v350 = vld [vmem:[#allocation2 + $0x141] sm:$0xff]
      %v351 = vld [vmem:[#allocation2 + $0x151] sm:$0xff]
      %v352 = vld [vmem:[#allocation2 + $0x159] sm:$0xff]
      %v353 = vld [vmem:[#allocation2 + $0x169] sm:$0xff]
      %v354 = vld [vmem:[#allocation2 + $0x171] sm:$0xff]
      %s355 = scalar_lea.vmem [#allocation2], 24
      %v356 = vld [vmem:[%s355] sm:$0xff]
      %v357 = vld [vmem:[%s355 + $0x8] sm:$0xff]
      %v358 = vld [vmem:[%s355 + $0x18] sm:$0xff]
      %v359 = vld [vmem:[%s355 + $0x20] sm:$0xff]
      %v360 = vld [vmem:[%s355 + $0x30] sm:$0xff]
      %v361 = vld [vmem:[%s355 + $0x38] sm:$0xff]
      %v362 = vld [vmem:[%s355 + $0x48] sm:$0xff]
      %v363 = vld [vmem:[%s355 + $0x50] sm:$0xff]
      %v364 = vld [vmem:[%s355 + $0x60] sm:$0xff]
      %v365 = vld [vmem:[%s355 + $0x68] sm:$0xff]
      %v366 = vld [vmem:[%s355 + $0x78] sm:$0xff]
      %v367 = vld [vmem:[%s355 + $0x80] sm:$0xff]
      %v368 = vld [vmem:[%s355 + $0x90] sm:$0xff]
      %v369 = vld [vmem:[%s355 + $0x98] sm:$0xff]
      %v370 = vld [vmem:[%s355 + $0xa8] sm:$0xff]
      %v371 = vld [vmem:[%s355 + $0xb0] sm:$0xff]
      %v372 = vld [vmem:[%s355 + $0xc0] sm:$0xff]
      %v373 = vld [vmem:[%s355 + $0xc8] sm:$0xff]
      %v374 = vld [vmem:[%s355 + $0xd8] sm:$0xff]
      %v375 = vld [vmem:[%s355 + $0xe0] sm:$0xff]
      %v376 = vld [vmem:[%s355 + $0xf0] sm:$0xff]
      %v377 = vld [vmem:[%s355 + $0xf8] sm:$0xff]
      %v378 = vld [vmem:[%s355 + $0x108] sm:$0xff]
      %v379 = vld [vmem:[%s355 + $0x110] sm:$0xff]
      %v380 = vld [vmem:[%s355 + $0x120] sm:$0xff]
      %v381 = vld [vmem:[%s355 + $0x128] sm:$0xff]
      %v382 = vld [vmem:[%s355 + $0x138] sm:$0xff]
      %v383 = vld [vmem:[%s355 + $0x140] sm:$0xff]
      %v384 = vld [vmem:[%s355 + $0x150] sm:$0xff]
      %v385 = vld [vmem:[%s355 + $0x158] sm:$0xff]
      %v386 = vld [vmem:[%s355 + $0x168] sm:$0xff]
      %v387 = vld [vmem:[%s355 + $0x170] sm:$0xff]
      %v388 = vld [vmem:[%s355 + $0x1] sm:$0xff]
      %v389 = vld [vmem:[%s355 + $0x9] sm:$0xff]
      %v390 = vld [vmem:[%s355 + $0x19] sm:$0xff]
      %v391 = vld [vmem:[%s355 + $0x21] sm:$0xff]
      %v392 = vld [vmem:[%s355 + $0x31] sm:$0xff]
      %v393 = vld [vmem:[%s355 + $0x39] sm:$0xff]
      %v394 = vld [vmem:[%s355 + $0x49] sm:$0xff]
      %v395 = vld [vmem:[%s355 + $0x51] sm:$0xff]
      %v396 = vld [vmem:[%s355 + $0x61] sm:$0xff]
      %v397 = vld [vmem:[%s355 + $0x69] sm:$0xff]
      %v398 = vld [vmem:[%s355 + $0x79] sm:$0xff]
      %v399 = vld [vmem:[%s355 + $0x81] sm:$0xff]
      %v400 = vld [vmem:[%s355 + $0x91] sm:$0xff]
      %v401 = vld [vmem:[%s355 + $0x99] sm:$0xff]
      %v402 = vld [vmem:[%s355 + $0xa9] sm:$0xff]
      %v403 = vld [vmem:[%s355 + $0xb1] sm:$0xff]
      %v404 = vld [vmem:[%s355 + $0xc1] sm:$0xff]
      %v405 = vld [vmem:[%s355 + $0xc9] sm:$0xff]
      %v406 = vld [vmem:[%s355 + $0xd9] sm:$0xff]
      %v407 = vld [vmem:[%s355 + $0xe1] sm:$0xff]
      %v408 = vld [vmem:[%s355 + $0xf1] sm:$0xff]
      %v409 = vld [vmem:[%s355 + $0xf9] sm:$0xff]
      %v410 = vld [vmem:[%s355 + $0x109] sm:$0xff]
      %v411 = vld [vmem:[%s355 + $0x111] sm:$0xff]
      %v412 = vld [vmem:[%s355 + $0x121] sm:$0xff]
      %v413 = vld [vmem:[%s355 + $0x129] sm:$0xff]
      %v414 = vld [vmem:[%s355 + $0x139] sm:$0xff]
      %v415 = vld [vmem:[%s355 + $0x141] sm:$0xff]
      %v416 = vld [vmem:[%s355 + $0x151] sm:$0xff]
      %v417 = vld [vmem:[%s355 + $0x159] sm:$0xff]
      %v418 = vld [vmem:[%s355 + $0x169] sm:$0xff]
      %v419 = vld [vmem:[%s355 + $0x171] sm:$0xff]
      %v420 = vpack.c.bf16 %v291, %v291
      %v421 = vpack.c.bf16 %v292, %v292
      %v422 = vpack.c.bf16 %v293, %v293
      %v423 = vpack.c.bf16 %v294, %v294
      %v424 = vpack.c.bf16 %v295, %v295
      %v425 = vpack.c.bf16 %v296, %v296
      %v426 = vpack.c.bf16 %v297, %v297
      %v427 = vpack.c.bf16 %v298, %v298
      %v428 = vpack.c.bf16 %v299, %v299
      %v429 = vpack.c.bf16 %v300, %v300
      %v430 = vpack.c.bf16 %v301, %v301
      %v431 = vpack.c.bf16 %v302, %v302
      %v432 = vpack.c.bf16 %v303, %v303
      %v433 = vpack.c.bf16 %v304, %v304
      %v434 = vpack.c.bf16 %v305, %v305
      %v435 = vpack.c.bf16 %v306, %v306
      %v436 = vpack.c.bf16 %v307, %v307
      %v437 = vpack.c.bf16 %v308, %v308
      %v438 = vpack.c.bf16 %v309, %v309
      %v439 = vpack.c.bf16 %v310, %v310
      %v440 = vpack.c.bf16 %v311, %v311
      %v441 = vpack.c.bf16 %v312, %v312
      %v442 = vpack.c.bf16 %v313, %v313
      %v443 = vpack.c.bf16 %v314, %v314
      %v444 = vpack.c.bf16 %v315, %v315
      %v445 = vpack.c.bf16 %v316, %v316
      %v446 = vpack.c.bf16 %v317, %v317
      %v447 = vpack.c.bf16 %v318, %v318
      %v448 = vpack.c.bf16 %v319, %v319
      %v449 = vpack.c.bf16 %v320, %v320
      %v450 = vpack.c.bf16 %v321, %v321
      %v451 = vpack.c.bf16 %v322, %v322
      %v452 = vpack.c.bf16 %v323, %v323
      %v453 = vpack.c.bf16 %v324, %v324
      %v454 = vpack.c.bf16 %v325, %v325
      %v455 = vpack.c.bf16 %v326, %v326
      %v456 = vpack.c.bf16 %v327, %v327
      %v457 = vpack.c.bf16 %v328, %v328
      %v458 = vpack.c.bf16 %v329, %v329
      %v459 = vpack.c.bf16 %v330, %v330
      %v460 = vpack.c.bf16 %v331, %v331
      %v461 = vpack.c.bf16 %v332, %v332
      %v462 = vpack.c.bf16 %v333, %v333
      %v463 = vpack.c.bf16 %v334, %v334
      %v464 = vpack.c.bf16 %v335, %v335
      %v465 = vpack.c.bf16 %v336, %v336
      %v466 = vpack.c.bf16 %v337, %v337
      %v467 = vpack.c.bf16 %v338, %v338
      %v468 = vpack.c.bf16 %v339, %v339
      %v469 = vpack.c.bf16 %v340, %v340
      %v470 = vpack.c.bf16 %v341, %v341
      %v471 = vpack.c.bf16 %v342, %v342
      %v472 = vpack.c.bf16 %v343, %v343
      %v473 = vpack.c.bf16 %v344, %v344
      %v474 = vpack.c.bf16 %v345, %v345
      %v475 = vpack.c.bf16 %v346, %v346
      %v476 = vpack.c.bf16 %v347, %v347
      %v477 = vpack.c.bf16 %v348, %v348
      %v478 = vpack.c.bf16 %v349, %v349
      %v479 = vpack.c.bf16 %v350, %v350
      %v480 = vpack.c.bf16 %v351, %v351
      %v481 = vpack.c.bf16 %v352, %v352
      %v482 = vpack.c.bf16 %v353, %v353
      %v483 = vpack.c.bf16 %v354, %v354
      %v484 = vpack.c.bf16 %v356, %v356
      %v485 = vpack.c.bf16 %v357, %v357
      %v486 = vpack.c.bf16 %v358, %v358
      %v487 = vpack.c.bf16 %v359, %v359
      %v488 = vpack.c.bf16 %v360, %v360
      %v489 = vpack.c.bf16 %v361, %v361
      %v490 = vpack.c.bf16 %v362, %v362
      %v491 = vpack.c.bf16 %v363, %v363
      %v492 = vpack.c.bf16 %v364, %v364
      %v493 = vpack.c.bf16 %v365, %v365
      %v494 = vpack.c.bf16 %v366, %v366
      %v495 = vpack.c.bf16 %v367, %v367
      %v496 = vpack.c.bf16 %v368, %v368
      %v497 = vpack.c.bf16 %v369, %v369
      %v498 = vpack.c.bf16 %v370, %v370
      %v499 = vpack.c.bf16 %v371, %v371
      %v500 = vpack.c.bf16 %v372, %v372
      %v501 = vpack.c.bf16 %v373, %v373
      %v502 = vpack.c.bf16 %v374, %v374
      %v503 = vpack.c.bf16 %v375, %v375
      %v504 = vpack.c.bf16 %v376, %v376
      %v505 = vpack.c.bf16 %v377, %v377
      %v506 = vpack.c.bf16 %v378, %v378
      %v507 = vpack.c.bf16 %v379, %v379
      %v508 = vpack.c.bf16 %v380, %v380
      %v509 = vpack.c.bf16 %v381, %v381
      %v510 = vpack.c.bf16 %v382, %v382
      %v511 = vpack.c.bf16 %v383, %v383
      %v512 = vpack.c.bf16 %v384, %v384
      %v513 = vpack.c.bf16 %v385, %v385
      %v514 = vpack.c.bf16 %v386, %v386
      %v515 = vpack.c.bf16 %v387, %v387
      %v516 = vpack.c.bf16 %v388, %v388
      %v517 = vpack.c.bf16 %v389, %v389
      %v518 = vpack.c.bf16 %v390, %v390
      %v519 = vpack.c.bf16 %v391, %v391
      %v520 = vpack.c.bf16 %v392, %v392
      %v521 = vpack.c.bf16 %v393, %v393
      %v522 = vpack.c.bf16 %v394, %v394
      %v523 = vpack.c.bf16 %v395, %v395
      %v524 = vpack.c.bf16 %v396, %v396
      %v525 = vpack.c.bf16 %v397, %v397
      %v526 = vpack.c.bf16 %v398, %v398
      %v527 = vpack.c.bf16 %v399, %v399
      %v528 = vpack.c.bf16 %v400, %v400
      %v529 = vpack.c.bf16 %v401, %v401
      %v530 = vpack.c.bf16 %v402, %v402
      %v531 = vpack.c.bf16 %v403, %v403
      %v532 = vpack.c.bf16 %v404, %v404
      %v533 = vpack.c.bf16 %v405, %v405
      %v534 = vpack.c.bf16 %v406, %v406
      %v535 = vpack.c.bf16 %v407, %v407
      %v536 = vpack.c.bf16 %v408, %v408
      %v537 = vpack.c.bf16 %v409, %v409
      %v538 = vpack.c.bf16 %v410, %v410
      %v539 = vpack.c.bf16 %v411, %v411
      %v540 = vpack.c.bf16 %v412, %v412
      %v541 = vpack.c.bf16 %v413, %v413
      %v542 = vpack.c.bf16 %v414, %v414
      %v543 = vpack.c.bf16 %v415, %v415
      %v544 = vpack.c.bf16 %v416, %v416
      %v545 = vpack.c.bf16 %v417, %v417
      %v546 = vpack.c.bf16 %v418, %v418
      %v547 = vpack.c.bf16 %v419, %v419
      %v580 = vunpack.c.l.b16 %v420
      %v581 = vunpack.c.l.b16 %v421
      %v582 = vunpack.c.l.b16 %v422
      %v583 = vunpack.c.l.b16 %v423
      %v584 = vunpack.c.l.b16 %v424
      %v585 = vunpack.c.l.b16 %v425
      %v586 = vunpack.c.l.b16 %v426
      %v587 = vunpack.c.l.b16 %v427
      %v588 = vunpack.c.l.b16 %v428
      %v589 = vunpack.c.l.b16 %v429
      %v590 = vunpack.c.l.b16 %v430
      %v591 = vunpack.c.l.b16 %v431
      %v592 = vunpack.c.l.b16 %v432
      %v593 = vunpack.c.l.b16 %v433
      %v594 = vunpack.c.l.b16 %v434
      %v595 = vunpack.c.l.b16 %v435
      %v596 = vunpack.c.l.b16 %v436
      %v597 = vunpack.c.l.b16 %v437
      %v598 = vunpack.c.l.b16 %v438
      %v599 = vunpack.c.l.b16 %v439
      %v600 = vunpack.c.l.b16 %v440
      %v601 = vunpack.c.l.b16 %v441
      %v602 = vunpack.c.l.b16 %v442
      %v603 = vunpack.c.l.b16 %v443
      %v604 = vunpack.c.l.b16 %v444
      %v605 = vunpack.c.l.b16 %v445
      %v606 = vunpack.c.l.b16 %v446
      %v607 = vunpack.c.l.b16 %v447
      %v608 = vunpack.c.l.b16 %v448
      %v609 = vunpack.c.l.b16 %v449
      %v610 = vunpack.c.l.b16 %v450
      %v611 = vunpack.c.l.b16 %v451
      %v612 = vpack.c.b16 %v581, %v580
      %v613 = vpack.c.b16 %v583, %v582
      %v614 = vpack.c.b16 %v585, %v584
      %v615 = vpack.c.b16 %v587, %v586
      %v616 = vpack.c.b16 %v589, %v588
      %v617 = vpack.c.b16 %v591, %v590
      %v618 = vpack.c.b16 %v593, %v592
      %v619 = vpack.c.b16 %v595, %v594
      %v620 = vpack.c.b16 %v597, %v596
      %v621 = vpack.c.b16 %v599, %v598
      %v622 = vpack.c.b16 %v601, %v600
      %v623 = vpack.c.b16 %v603, %v602
      %v624 = vpack.c.b16 %v605, %v604
      %v625 = vpack.c.b16 %v607, %v606
      %v626 = vpack.c.b16 %v609, %v608
      %v627 = vpack.c.b16 %v611, %v610
      %v660 = vunpack.c.l.b16 %v452
      %v661 = vunpack.c.l.b16 %v453
      %v662 = vunpack.c.l.b16 %v454
      %v663 = vunpack.c.l.b16 %v455
      %v664 = vunpack.c.l.b16 %v456
      %v665 = vunpack.c.l.b16 %v457
      %v666 = vunpack.c.l.b16 %v458
      %v667 = vunpack.c.l.b16 %v459
      %v668 = vunpack.c.l.b16 %v460
      %v669 = vunpack.c.l.b16 %v461
      %v670 = vunpack.c.l.b16 %v462
      %v671 = vunpack.c.l.b16 %v463
      %v672 = vunpack.c.l.b16 %v464
      %v673 = vunpack.c.l.b16 %v465
      %v674 = vunpack.c.l.b16 %v466
      %v675 = vunpack.c.l.b16 %v467
      %v676 = vunpack.c.l.b16 %v468
      %v677 = vunpack.c.l.b16 %v469
      %v678 = vunpack.c.l.b16 %v470
      %v679 = vunpack.c.l.b16 %v471
      %v680 = vunpack.c.l.b16 %v472
      %v681 = vunpack.c.l.b16 %v473
      %v682 = vunpack.c.l.b16 %v474
      %v683 = vunpack.c.l.b16 %v475
      %v684 = vunpack.c.l.b16 %v476
      %v685 = vunpack.c.l.b16 %v477
      %v686 = vunpack.c.l.b16 %v478
      %v687 = vunpack.c.l.b16 %v479
      %v688 = vunpack.c.l.b16 %v480
      %v689 = vunpack.c.l.b16 %v481
      %v690 = vunpack.c.l.b16 %v482
      %v691 = vunpack.c.l.b16 %v483
      %v692 = vpack.c.b16 %v661, %v660
      %v693 = vpack.c.b16 %v663, %v662
      %v694 = vpack.c.b16 %v665, %v664
      %v695 = vpack.c.b16 %v667, %v666
      %v696 = vpack.c.b16 %v669, %v668
      %v697 = vpack.c.b16 %v671, %v670
      %v698 = vpack.c.b16 %v673, %v672
      %v699 = vpack.c.b16 %v675, %v674
      %v700 = vpack.c.b16 %v677, %v676
      %v701 = vpack.c.b16 %v679, %v678
      %v702 = vpack.c.b16 %v681, %v680
      %v703 = vpack.c.b16 %v683, %v682
      %v704 = vpack.c.b16 %v685, %v684
      %v705 = vpack.c.b16 %v687, %v686
      %v706 = vpack.c.b16 %v689, %v688
      %v707 = vpack.c.b16 %v691, %v690
      %708 = vrot.lane.b32.xlu0 %v692, 32
      %v709 = vpop.permute.xlu0 %708
      %710 = vrot.lane.b32.xlu0 %v693, 32
      %v711 = vpop.permute.xlu0 %710
      %712 = vrot.lane.b32.xlu0 %v694, 32
      %v713 = vpop.permute.xlu0 %712
      %714 = vrot.lane.b32.xlu0 %v695, 32
      %v715 = vpop.permute.xlu0 %714
      %716 = vrot.lane.b32.xlu0 %v696, 32
      %v717 = vpop.permute.xlu0 %716
      %718 = vrot.lane.b32.xlu0 %v697, 32
      %v719 = vpop.permute.xlu0 %718
      %720 = vrot.lane.b32.xlu0 %v698, 32
      %v721 = vpop.permute.xlu0 %720
      %722 = vrot.lane.b32.xlu0 %v699, 32
      %v723 = vpop.permute.xlu0 %722
      %724 = vrot.lane.b32.xlu0 %v700, 32
      %v725 = vpop.permute.xlu0 %724
      %726 = vrot.lane.b32.xlu0 %v701, 32
      %v727 = vpop.permute.xlu0 %726
      %728 = vrot.lane.b32.xlu0 %v702, 32
      %v729 = vpop.permute.xlu0 %728
      %730 = vrot.lane.b32.xlu0 %v703, 32
      %v731 = vpop.permute.xlu0 %730
      %732 = vrot.lane.b32.xlu0 %v704, 32
      %v733 = vpop.permute.xlu0 %732
      %734 = vrot.lane.b32.xlu0 %v705, 32
      %v735 = vpop.permute.xlu0 %734
      %736 = vrot.lane.b32.xlu0 %v706, 32
      %v737 = vpop.permute.xlu0 %736
      %738 = vrot.lane.b32.xlu0 %v707, 32
      %v739 = vpop.permute.xlu0 %738
      %v772 = vunpack.c.l.b16 %v484
      %v773 = vunpack.c.l.b16 %v485
      %v774 = vunpack.c.l.b16 %v486
      %v775 = vunpack.c.l.b16 %v487
      %v776 = vunpack.c.l.b16 %v488
      %v777 = vunpack.c.l.b16 %v489
      %v778 = vunpack.c.l.b16 %v490
      %v779 = vunpack.c.l.b16 %v491
      %v780 = vunpack.c.l.b16 %v492
      %v781 = vunpack.c.l.b16 %v493
      %v782 = vunpack.c.l.b16 %v494
      %v783 = vunpack.c.l.b16 %v495
      %v784 = vunpack.c.l.b16 %v496
      %v785 = vunpack.c.l.b16 %v497
      %v786 = vunpack.c.l.b16 %v498
      %v787 = vunpack.c.l.b16 %v499
      %v788 = vunpack.c.l.b16 %v500
      %v789 = vunpack.c.l.b16 %v501
      %v790 = vunpack.c.l.b16 %v502
      %v791 = vunpack.c.l.b16 %v503
      %v792 = vunpack.c.l.b16 %v504
      %v793 = vunpack.c.l.b16 %v505
      %v794 = vunpack.c.l.b16 %v506
      %v795 = vunpack.c.l.b16 %v507
      %v796 = vunpack.c.l.b16 %v508
      %v797 = vunpack.c.l.b16 %v509
      %v798 = vunpack.c.l.b16 %v510
      %v799 = vunpack.c.l.b16 %v511
      %v800 = vunpack.c.l.b16 %v512
      %v801 = vunpack.c.l.b16 %v513
      %v802 = vunpack.c.l.b16 %v514
      %v803 = vunpack.c.l.b16 %v515
      %v804 = vpack.c.b16 %v773, %v772
      %v805 = vpack.c.b16 %v775, %v774
      %v806 = vpack.c.b16 %v777, %v776
      %v807 = vpack.c.b16 %v779, %v778
      %v808 = vpack.c.b16 %v781, %v780
      %v809 = vpack.c.b16 %v783, %v782
      %v810 = vpack.c.b16 %v785, %v784
      %v811 = vpack.c.b16 %v787, %v786
      %v812 = vpack.c.b16 %v789, %v788
      %v813 = vpack.c.b16 %v791, %v790
      %v814 = vpack.c.b16 %v793, %v792
      %v815 = vpack.c.b16 %v795, %v794
      %v816 = vpack.c.b16 %v797, %v796
      %v817 = vpack.c.b16 %v799, %v798
      %v818 = vpack.c.b16 %v801, %v800
      %v819 = vpack.c.b16 %v803, %v802
      %820 = vrot.lane.b32.xlu0 %v804, 64
      %v821 = vpop.permute.xlu0 %820
      %822 = vrot.lane.b32.xlu0 %v805, 64
      %v823 = vpop.permute.xlu0 %822
      %824 = vrot.lane.b32.xlu0 %v806, 64
      %v825 = vpop.permute.xlu0 %824
      %826 = vrot.lane.b32.xlu0 %v807, 64
      %v827 = vpop.permute.xlu0 %826
      %828 = vrot.lane.b32.xlu0 %v808, 64
      %v829 = vpop.permute.xlu0 %828
      %830 = vrot.lane.b32.xlu0 %v809, 64
      %v831 = vpop.permute.xlu0 %830
      %832 = vrot.lane.b32.xlu0 %v810, 64
      %v833 = vpop.permute.xlu0 %832
      %834 = vrot.lane.b32.xlu0 %v811, 64
      %v835 = vpop.permute.xlu0 %834
      %836 = vrot.lane.b32.xlu0 %v812, 64
      %v837 = vpop.permute.xlu0 %836
      %838 = vrot.lane.b32.xlu0 %v813, 64
      %v839 = vpop.permute.xlu0 %838
      %840 = vrot.lane.b32.xlu0 %v814, 64
      %v841 = vpop.permute.xlu0 %840
      %842 = vrot.lane.b32.xlu0 %v815, 64
      %v843 = vpop.permute.xlu0 %842
      %844 = vrot.lane.b32.xlu0 %v816, 64
      %v845 = vpop.permute.xlu0 %844
      %846 = vrot.lane.b32.xlu0 %v817, 64
      %v847 = vpop.permute.xlu0 %846
      %848 = vrot.lane.b32.xlu0 %v818, 64
      %v849 = vpop.permute.xlu0 %848
      %850 = vrot.lane.b32.xlu0 %v819, 64
      %v851 = vpop.permute.xlu0 %850
      %v884 = vunpack.c.l.b16 %v516
      %v885 = vunpack.c.l.b16 %v517
      %v886 = vunpack.c.l.b16 %v518
      %v887 = vunpack.c.l.b16 %v519
      %v888 = vunpack.c.l.b16 %v520
      %v889 = vunpack.c.l.b16 %v521
      %v890 = vunpack.c.l.b16 %v522
      %v891 = vunpack.c.l.b16 %v523
      %v892 = vunpack.c.l.b16 %v524
      %v893 = vunpack.c.l.b16 %v525
      %v894 = vunpack.c.l.b16 %v526
      %v895 = vunpack.c.l.b16 %v527
      %v896 = vunpack.c.l.b16 %v528
      %v897 = vunpack.c.l.b16 %v529
      %v898 = vunpack.c.l.b16 %v530
      %v899 = vunpack.c.l.b16 %v531
      %v900 = vunpack.c.l.b16 %v532
      %v901 = vunpack.c.l.b16 %v533
      %v902 = vunpack.c.l.b16 %v534
      %v903 = vunpack.c.l.b16 %v535
      %v904 = vunpack.c.l.b16 %v536
      %v905 = vunpack.c.l.b16 %v537
      %v906 = vunpack.c.l.b16 %v538
      %v907 = vunpack.c.l.b16 %v539
      %v908 = vunpack.c.l.b16 %v540
      %v909 = vunpack.c.l.b16 %v541
      %v910 = vunpack.c.l.b16 %v542
      %v911 = vunpack.c.l.b16 %v543
      %v912 = vunpack.c.l.b16 %v544
      %v913 = vunpack.c.l.b16 %v545
      %v914 = vunpack.c.l.b16 %v546
      %v915 = vunpack.c.l.b16 %v547
      %v916 = vpack.c.b16 %v885, %v884
      %v917 = vpack.c.b16 %v887, %v886
      %v918 = vpack.c.b16 %v889, %v888
      %v919 = vpack.c.b16 %v891, %v890
      %v920 = vpack.c.b16 %v893, %v892
      %v921 = vpack.c.b16 %v895, %v894
      %v922 = vpack.c.b16 %v897, %v896
      %v923 = vpack.c.b16 %v899, %v898
      %v924 = vpack.c.b16 %v901, %v900
      %v925 = vpack.c.b16 %v903, %v902
      %v926 = vpack.c.b16 %v905, %v904
      %v927 = vpack.c.b16 %v907, %v906
      %v928 = vpack.c.b16 %v909, %v908
      %v929 = vpack.c.b16 %v911, %v910
      %v930 = vpack.c.b16 %v913, %v912
      %v931 = vpack.c.b16 %v915, %v914
      %932 = vrot.lane.b32.xlu0 %v916, 96
      %v933 = vpop.permute.xlu0 %932
      %934 = vrot.lane.b32.xlu0 %v917, 96
      %v935 = vpop.permute.xlu0 %934
      %936 = vrot.lane.b32.xlu0 %v918, 96
      %v937 = vpop.permute.xlu0 %936
      %938 = vrot.lane.b32.xlu0 %v919, 96
      %v939 = vpop.permute.xlu0 %938
      %940 = vrot.lane.b32.xlu0 %v920, 96
      %v941 = vpop.permute.xlu0 %940
      %942 = vrot.lane.b32.xlu0 %v921, 96
      %v943 = vpop.permute.xlu0 %942
      %944 = vrot.lane.b32.xlu0 %v922, 96
      %v945 = vpop.permute.xlu0 %944
      %946 = vrot.lane.b32.xlu0 %v923, 96
      %v947 = vpop.permute.xlu0 %946
      %948 = vrot.lane.b32.xlu0 %v924, 96
      %v949 = vpop.permute.xlu0 %948
      %950 = vrot.lane.b32.xlu0 %v925, 96
      %v951 = vpop.permute.xlu0 %950
      %952 = vrot.lane.b32.xlu0 %v926, 96
      %v953 = vpop.permute.xlu0 %952
      %954 = vrot.lane.b32.xlu0 %v927, 96
      %v955 = vpop.permute.xlu0 %954
      %956 = vrot.lane.b32.xlu0 %v928, 96
      %v957 = vpop.permute.xlu0 %956
      %958 = vrot.lane.b32.xlu0 %v929, 96
      %v959 = vpop.permute.xlu0 %958
      %960 = vrot.lane.b32.xlu0 %v930, 96
      %v961 = vpop.permute.xlu0 %960
      %962 = vrot.lane.b32.xlu0 %v931, 96
      %v963 = vpop.permute.xlu0 %962
      %v966 = vsel %vm174, %v612, %v709
      %v969 = vsel %vm174, %v613, %v711
      %v972 = vsel %vm174, %v614, %v713
      %v975 = vsel %vm174, %v615, %v715
      %v978 = vsel %vm174, %v616, %v717
      %v981 = vsel %vm174, %v617, %v719
      %v984 = vsel %vm174, %v618, %v721
      %v987 = vsel %vm174, %v619, %v723
      %v990 = vsel %vm174, %v620, %v725
      %v993 = vsel %vm174, %v621, %v727
      %v996 = vsel %vm174, %v622, %v729
      %v999 = vsel %vm174, %v623, %v731
      %v1002 = vsel %vm174, %v624, %v733
      %v1005 = vsel %vm174, %v625, %v735
      %v1008 = vsel %vm174, %v626, %v737
      %v1011 = vsel %vm174, %v627, %v739
      %vm1012 = vcmask 523264
      %v1014 = vsel %vm1012, %v966, %v821
      %v1016 = vsel %vm1012, %v969, %v823
      %v1018 = vsel %vm1012, %v972, %v825
      %v1020 = vsel %vm1012, %v975, %v827
      %v1022 = vsel %vm1012, %v978, %v829
      %v1024 = vsel %vm1012, %v981, %v831
      %v1026 = vsel %vm1012, %v984, %v833
      %v1028 = vsel %vm1012, %v987, %v835
      %v1030 = vsel %vm1012, %v990, %v837
      %v1032 = vsel %vm1012, %v993, %v839
      %v1034 = vsel %vm1012, %v996, %v841
      %v1036 = vsel %vm1012, %v999, %v843
      %v1038 = vsel %vm1012, %v1002, %v845
      %v1040 = vsel %vm1012, %v1005, %v847
      %v1042 = vsel %vm1012, %v1008, %v849
      %v1044 = vsel %vm1012, %v1011, %v851
      %vm1045 = vcmask 785408
      %v1047 = vsel %vm1045, %v1014, %v933
      %v1050 = vsel %vm1045, %v1016, %v935
      %v1053 = vsel %vm1045, %v1018, %v937
      %v1056 = vsel %vm1045, %v1020, %v939
      %v1059 = vsel %vm1045, %v1022, %v941
      %v1062 = vsel %vm1045, %v1024, %v943
      %v1065 = vsel %vm1045, %v1026, %v945
      %v1068 = vsel %vm1045, %v1028, %v947
      %v1071 = vsel %vm1045, %v1030, %v949
      %v1074 = vsel %vm1045, %v1032, %v951
      %v1077 = vsel %vm1045, %v1034, %v953
      %v1080 = vsel %vm1045, %v1036, %v955
      %v1083 = vsel %vm1045, %v1038, %v957
      %v1086 = vsel %vm1045, %v1040, %v959
      %v1089 = vsel %vm1045, %v1042, %v961
      %v1092 = vsel %vm1045, %v1044, %v963
      %v1094 = vld [vmem:[%s1] sm:$0xf]
      %v1095 = vld [vmem:[%s1 + $0x4] sm:$0xf]
      %v1096 = vld [vmem:[%s1 + $0x8] sm:$0xf]
      %v1097 = vld [vmem:[%s1 + $0xc] sm:$0xf]
      %v1098 = vld [vmem:[%s1 + $0x10] sm:$0xf]
      %v1099 = vld [vmem:[%s1 + $0x14] sm:$0xf]
      %v1100 = vld [vmem:[%s1 + $0x18] sm:$0xf]
      %v1101 = vld [vmem:[%s1 + $0x1c] sm:$0xf]
      %v1102 = vld [vmem:[%s1 + $0x20] sm:$0xf]
      %v1103 = vld [vmem:[%s1 + $0x24] sm:$0xf]
      %v1104 = vld [vmem:[%s1 + $0x28] sm:$0xf]
      %v1105 = vld [vmem:[%s1 + $0x2c] sm:$0xf]
      %v1106 = vld [vmem:[%s1 + $0x30] sm:$0xf]
      %v1107 = vld [vmem:[%s1 + $0x34] sm:$0xf]
      %v1108 = vld [vmem:[%s1 + $0x38] sm:$0xf]
      %v1109 = vld [vmem:[%s1 + $0x3c] sm:$0xf]
      %v1126 = vunpack.c.l.b16 %v1094
      %v1127 = vunpack.c.l.b16 %v1095
      %v1128 = vunpack.c.l.b16 %v1096
      %v1129 = vunpack.c.l.b16 %v1097
      %v1130 = vunpack.c.l.b16 %v1098
      %v1131 = vunpack.c.l.b16 %v1099
      %v1132 = vunpack.c.l.b16 %v1100
      %v1133 = vunpack.c.l.b16 %v1101
      %v1134 = vunpack.c.l.b16 %v1102
      %v1135 = vunpack.c.l.b16 %v1103
      %v1136 = vunpack.c.l.b16 %v1104
      %v1137 = vunpack.c.l.b16 %v1105
      %v1138 = vunpack.c.l.b16 %v1106
      %v1139 = vunpack.c.l.b16 %v1107
      %v1140 = vunpack.c.l.b16 %v1108
      %v1141 = vunpack.c.l.b16 %v1109
      %v1142 = vpack.c.b16 %v1127, %v1126
      %v1143 = vpack.c.b16 %v1129, %v1128
      %v1144 = vpack.c.b16 %v1131, %v1130
      %v1145 = vpack.c.b16 %v1133, %v1132
      %v1146 = vpack.c.b16 %v1135, %v1134
      %v1147 = vpack.c.b16 %v1137, %v1136
      %v1148 = vpack.c.b16 %v1139, %v1138
      %v1149 = vpack.c.b16 %v1141, %v1140
      %1158 = vmatpush.bf16.msra.mxu0 %v1149
      %1159 = vmatpush.bf16.msra.mxu0 %v1148
      %1160 = vmatpush.bf16.msra.mxu0 %v1147
      %1161 = vmatpush.bf16.msra.mxu0 %v1146
      %1162 = vmatpush.bf16.msra.mxu0 %v1145
      %1163 = vmatpush.bf16.msra.mxu0 %v1144
      %1164 = vmatpush.bf16.msra.mxu0 %v1143
      %1165 = vmatpush.bf16.msra.mxu0 %v1142
      %1166 = vmatmul.bf16.gmra.mxu0 %v1047
      %v1167 = vpop.f32.mrf.mxu0
      %v1168 = vadd.f32 0.0, %v1167
      %v1169 = vpop.f32.mrf.mxu0
      %v1170 = vadd.f32 0.0, %v1169
      %1171 = vmatmul.bf16.gmra.mxu0 %v1050
      %v1172 = vpop.f32.mrf.mxu0
      %v1173 = vadd.f32 0.0, %v1172
      %v1174 = vpop.f32.mrf.mxu0
      %v1175 = vadd.f32 0.0, %v1174
      %1176 = vmatmul.bf16.gmra.mxu0 %v1053
      %v1177 = vpop.f32.mrf.mxu0
      %v1178 = vadd.f32 0.0, %v1177
      %v1179 = vpop.f32.mrf.mxu0
      %v1180 = vadd.f32 0.0, %v1179
      %1181 = vmatmul.bf16.gmra.mxu0 %v1056
      %v1182 = vpop.f32.mrf.mxu0
      %v1183 = vadd.f32 0.0, %v1182
      %v1184 = vpop.f32.mrf.mxu0
      %v1185 = vadd.f32 0.0, %v1184
      %1186 = vmatmul.bf16.gmra.mxu0 %v1059
      %v1187 = vpop.f32.mrf.mxu0
      %v1188 = vadd.f32 0.0, %v1187
      %v1189 = vpop.f32.mrf.mxu0
      %v1190 = vadd.f32 0.0, %v1189
      %1191 = vmatmul.bf16.gmra.mxu0 %v1062
      %v1192 = vpop.f32.mrf.mxu0
      %v1193 = vadd.f32 0.0, %v1192
      %v1194 = vpop.f32.mrf.mxu0
      %v1195 = vadd.f32 0.0, %v1194
      %1196 = vmatmul.bf16.gmra.mxu0 %v1065
      %v1197 = vpop.f32.mrf.mxu0
      %v1198 = vadd.f32 0.0, %v1197
      %v1199 = vpop.f32.mrf.mxu0
      %v1200 = vadd.f32 0.0, %v1199
      %1201 = vmatmul.bf16.gmra.mxu0 %v1068
      %v1202 = vpop.f32.mrf.mxu0
      %v1203 = vadd.f32 0.0, %v1202
      %v1204 = vpop.f32.mrf.mxu0
      %v1205 = vadd.f32 0.0, %v1204
      %1206 = vmatmul.bf16.gmra.mxu0 %v1071
      %v1207 = vpop.f32.mrf.mxu0
      %v1208 = vadd.f32 0.0, %v1207
      %v1209 = vpop.f32.mrf.mxu0
      %v1210 = vadd.f32 0.0, %v1209
      %1211 = vmatmul.bf16.gmra.mxu0 %v1074
      %v1212 = vpop.f32.mrf.mxu0
      %v1213 = vadd.f32 0.0, %v1212
      %v1214 = vpop.f32.mrf.mxu0
      %v1215 = vadd.f32 0.0, %v1214
      %1216 = vmatmul.bf16.gmra.mxu0 %v1077
      %v1217 = vpop.f32.mrf.mxu0
      %v1218 = vadd.f32 0.0, %v1217
      %v1219 = vpop.f32.mrf.mxu0
      %v1220 = vadd.f32 0.0, %v1219
      %1221 = vmatmul.bf16.gmra.mxu0 %v1080
      %v1222 = vpop.f32.mrf.mxu0
      %v1223 = vadd.f32 0.0, %v1222
      %v1224 = vpop.f32.mrf.mxu0
      %v1225 = vadd.f32 0.0, %v1224
      %1226 = vmatmul.bf16.gmra.mxu0 %v1083
      %v1227 = vpop.f32.mrf.mxu0
      %v1228 = vadd.f32 0.0, %v1227
      %v1229 = vpop.f32.mrf.mxu0
      %v1230 = vadd.f32 0.0, %v1229
      %1231 = vmatmul.bf16.gmra.mxu0 %v1086
      %v1232 = vpop.f32.mrf.mxu0
      %v1233 = vadd.f32 0.0, %v1232
      %v1234 = vpop.f32.mrf.mxu0
      %v1235 = vadd.f32 0.0, %v1234
      %1236 = vmatmul.bf16.gmra.mxu0 %v1089
      %v1237 = vpop.f32.mrf.mxu0
      %v1238 = vadd.f32 0.0, %v1237
      %v1239 = vpop.f32.mrf.mxu0
      %v1240 = vadd.f32 0.0, %v1239
      %1241 = vmatmul.bf16.gmra.mxu0 %v1092
      %v1242 = vpop.f32.mrf.mxu0
      %v1243 = vadd.f32 0.0, %v1242
      %v1244 = vpop.f32.mrf.mxu0
      %v1245 = vadd.f32 0.0, %v1244
      %1246 = vdwg.mxu0
      %v1247 = vld [vmem:[%s2] sm:$0x1]
      %v1249 = vperm.slane %v1247, 0
      %v1251 = vadd.f32 %v1168, %v1249
      %v1252 = vadd.f32 %v1170, %v1249
      %v1253 = vadd.f32 %v1173, %v1249
      %v1254 = vadd.f32 %v1175, %v1249
      %v1255 = vadd.f32 %v1178, %v1249
      %v1256 = vadd.f32 %v1180, %v1249
      %v1257 = vadd.f32 %v1183, %v1249
      %v1258 = vadd.f32 %v1185, %v1249
      %v1259 = vadd.f32 %v1188, %v1249
      %v1260 = vadd.f32 %v1190, %v1249
      %v1261 = vadd.f32 %v1193, %v1249
      %v1262 = vadd.f32 %v1195, %v1249
      %v1263 = vadd.f32 %v1198, %v1249
      %v1264 = vadd.f32 %v1200, %v1249
      %v1265 = vadd.f32 %v1203, %v1249
      %v1266 = vadd.f32 %v1205, %v1249
      %v1267 = vadd.f32 %v1208, %v1249
      %v1268 = vadd.f32 %v1210, %v1249
      %v1269 = vadd.f32 %v1213, %v1249
      %v1270 = vadd.f32 %v1215, %v1249
      %v1271 = vadd.f32 %v1218, %v1249
      %v1272 = vadd.f32 %v1220, %v1249
      %v1273 = vadd.f32 %v1223, %v1249
      %v1274 = vadd.f32 %v1225, %v1249
      %v1275 = vadd.f32 %v1228, %v1249
      %v1276 = vadd.f32 %v1230, %v1249
      %v1277 = vadd.f32 %v1233, %v1249
      %v1278 = vadd.f32 %v1235, %v1249
      %v1279 = vadd.f32 %v1238, %v1249
      %v1280 = vadd.f32 %v1240, %v1249
      %v1281 = vadd.f32 %v1243, %v1249
      %v1282 = vadd.f32 %v1245, %v1249
      %1283 = vst.msk [vmem:[%s172] sm:$0xff] %vm174, %v1251
      %1284 = vst.msk [vmem:[%s172 + $0x8] sm:$0xff] %vm174, %v1252
      %1285 = vst.msk [vmem:[%s172 + $0x10] sm:$0xff] %vm174, %v1253
      %1286 = vst.msk [vmem:[%s172 + $0x18] sm:$0xff] %vm174, %v1254
      %1287 = vst.msk [vmem:[%s172 + $0x20] sm:$0xff] %vm174, %v1255
      %1288 = vst.msk [vmem:[%s172 + $0x28] sm:$0xff] %vm174, %v1256
      %1289 = vst.msk [vmem:[%s172 + $0x30] sm:$0xff] %vm174, %v1257
      %1290 = vst.msk [vmem:[%s172 + $0x38] sm:$0xff] %vm174, %v1258
      %1291 = vst.msk [vmem:[%s172 + $0x40] sm:$0xff] %vm174, %v1259
      %1292 = vst.msk [vmem:[%s172 + $0x48] sm:$0xff] %vm174, %v1260
      %1293 = vst.msk [vmem:[%s172 + $0x50] sm:$0xff] %vm174, %v1261
      %1294 = vst.msk [vmem:[%s172 + $0x58] sm:$0xff] %vm174, %v1262
      %1295 = vst.msk [vmem:[%s172 + $0x60] sm:$0xff] %vm174, %v1263
      %1296 = vst.msk [vmem:[%s172 + $0x68] sm:$0xff] %vm174, %v1264
      %1297 = vst.msk [vmem:[%s172 + $0x70] sm:$0xff] %vm174, %v1265
      %1298 = vst.msk [vmem:[%s172 + $0x78] sm:$0xff] %vm174, %v1266
      %1299 = vst.msk [vmem:[%s172 + $0x80] sm:$0xff] %vm174, %v1267
      %1300 = vst.msk [vmem:[%s172 + $0x88] sm:$0xff] %vm174, %v1268
      %1301 = vst.msk [vmem:[%s172 + $0x90] sm:$0xff] %vm174, %v1269
      %1302 = vst.msk [vmem:[%s172 + $0x98] sm:$0xff] %vm174, %v1270
      %1303 = vst.msk [vmem:[%s172 + $0xa0] sm:$0xff] %vm174, %v1271
      %1304 = vst.msk [vmem:[%s172 + $0xa8] sm:$0xff] %vm174, %v1272
      %1305 = vst.msk [vmem:[%s172 + $0xb0] sm:$0xff] %vm174, %v1273
      %1306 = vst.msk [vmem:[%s172 + $0xb8] sm:$0xff] %vm174, %v1274
      %1307 = vst.msk [vmem:[%s172 + $0xc0] sm:$0xff] %vm174, %v1275
      %1308 = vst.msk [vmem:[%s172 + $0xc8] sm:$0xff] %vm174, %v1276
      %1309 = vst.msk [vmem:[%s172 + $0xd0] sm:$0xff] %vm174, %v1277
      %1310 = vst.msk [vmem:[%s172 + $0xd8] sm:$0xff] %vm174, %v1278
      %1311 = vst.msk [vmem:[%s172 + $0xe0] sm:$0xff] %vm174, %v1279
      %1312 = vst.msk [vmem:[%s172 + $0xe8] sm:$0xff] %vm174, %v1280
      %1313 = vst.msk [vmem:[%s172 + $0xf0] sm:$0xff] %vm174, %v1281
      %1314 = vst.msk [vmem:[%s172 + $0xf8] sm:$0xff] %vm174, %v1282
      %v1315 = vld [vmem:[%s2] sm:$0x1]
      %v1317 = vperm.slane %v1315, 0
      %1318 = vrot.lane.b32.xlu0 %v1317, 32
      %v1319 = vpop.permute.xlu0 %1318
      %v1321 = vadd.f32 %v1168, %v1319
      %v1322 = vadd.f32 %v1170, %v1319
      %v1323 = vadd.f32 %v1173, %v1319
      %v1324 = vadd.f32 %v1175, %v1319
      %v1325 = vadd.f32 %v1178, %v1319
      %v1326 = vadd.f32 %v1180, %v1319
      %v1327 = vadd.f32 %v1183, %v1319
      %v1328 = vadd.f32 %v1185, %v1319
      %v1329 = vadd.f32 %v1188, %v1319
      %v1330 = vadd.f32 %v1190, %v1319
      %v1331 = vadd.f32 %v1193, %v1319
      %v1332 = vadd.f32 %v1195, %v1319
      %v1333 = vadd.f32 %v1198, %v1319
      %v1334 = vadd.f32 %v1200, %v1319
      %v1335 = vadd.f32 %v1203, %v1319
      %v1336 = vadd.f32 %v1205, %v1319
      %v1337 = vadd.f32 %v1208, %v1319
      %v1338 = vadd.f32 %v1210, %v1319
      %v1339 = vadd.f32 %v1213, %v1319
      %v1340 = vadd.f32 %v1215, %v1319
      %v1341 = vadd.f32 %v1218, %v1319
      %v1342 = vadd.f32 %v1220, %v1319
      %v1343 = vadd.f32 %v1223, %v1319
      %v1344 = vadd.f32 %v1225, %v1319
      %v1345 = vadd.f32 %v1228, %v1319
      %v1346 = vadd.f32 %v1230, %v1319
      %v1347 = vadd.f32 %v1233, %v1319
      %v1348 = vadd.f32 %v1235, %v1319
      %v1349 = vadd.f32 %v1238, %v1319
      %v1350 = vadd.f32 %v1240, %v1319
      %v1351 = vadd.f32 %v1243, %v1319
      %v1352 = vadd.f32 %v1245, %v1319
      %1385 = vrot.lane.b32.xlu0 %v1321, 96
      %v1386 = vpop.permute.xlu0 %1385
      %1387 = vrot.lane.b32.xlu0 %v1322, 96
      %v1388 = vpop.permute.xlu0 %1387
      %1389 = vrot.lane.b32.xlu0 %v1323, 96
      %v1390 = vpop.permute.xlu0 %1389
      %1391 = vrot.lane.b32.xlu0 %v1324, 96
      %v1392 = vpop.permute.xlu0 %1391
      %1393 = vrot.lane.b32.xlu0 %v1325, 96
      %v1394 = vpop.permute.xlu0 %1393
      %1395 = vrot.lane.b32.xlu0 %v1326, 96
      %v1396 = vpop.permute.xlu0 %1395
      %1397 = vrot.lane.b32.xlu0 %v1327, 96
      %v1398 = vpop.permute.xlu0 %1397
      %1399 = vrot.lane.b32.xlu0 %v1328, 96
      %v1400 = vpop.permute.xlu0 %1399
      %1401 = vrot.lane.b32.xlu0 %v1329, 96
      %v1402 = vpop.permute.xlu0 %1401
      %1403 = vrot.lane.b32.xlu0 %v1330, 96
      %v1404 = vpop.permute.xlu0 %1403
      %1405 = vrot.lane.b32.xlu0 %v1331, 96
      %v1406 = vpop.permute.xlu0 %1405
      %1407 = vrot.lane.b32.xlu0 %v1332, 96
      %v1408 = vpop.permute.xlu0 %1407
      %1409 = vrot.lane.b32.xlu0 %v1333, 96
      %v1410 = vpop.permute.xlu0 %1409
      %1411 = vrot.lane.b32.xlu0 %v1334, 96
      %v1412 = vpop.permute.xlu0 %1411
      %1413 = vrot.lane.b32.xlu0 %v1335, 96
      %v1414 = vpop.permute.xlu0 %1413
      %1415 = vrot.lane.b32.xlu0 %v1336, 96
      %v1416 = vpop.permute.xlu0 %1415
      %1417 = vrot.lane.b32.xlu0 %v1337, 96
      %v1418 = vpop.permute.xlu0 %1417
      %1419 = vrot.lane.b32.xlu0 %v1338, 96
      %v1420 = vpop.permute.xlu0 %1419
      %1421 = vrot.lane.b32.xlu0 %v1339, 96
      %v1422 = vpop.permute.xlu0 %1421
      %1423 = vrot.lane.b32.xlu0 %v1340, 96
      %v1424 = vpop.permute.xlu0 %1423
      %1425 = vrot.lane.b32.xlu0 %v1341, 96
      %v1426 = vpop.permute.xlu0 %1425
      %1427 = vrot.lane.b32.xlu0 %v1342, 96
      %v1428 = vpop.permute.xlu0 %1427
      %1429 = vrot.lane.b32.xlu0 %v1343, 96
      %v1430 = vpop.permute.xlu0 %1429
      %1431 = vrot.lane.b32.xlu0 %v1344, 96
      %v1432 = vpop.permute.xlu0 %1431
      %1433 = vrot.lane.b32.xlu0 %v1345, 96
      %v1434 = vpop.permute.xlu0 %1433
      %1435 = vrot.lane.b32.xlu0 %v1346, 96
      %v1436 = vpop.permute.xlu0 %1435
      %1437 = vrot.lane.b32.xlu0 %v1347, 96
      %v1438 = vpop.permute.xlu0 %1437
      %1439 = vrot.lane.b32.xlu0 %v1348, 96
      %v1440 = vpop.permute.xlu0 %1439
      %1441 = vrot.lane.b32.xlu0 %v1349, 96
      %v1442 = vpop.permute.xlu0 %1441
      %1443 = vrot.lane.b32.xlu0 %v1350, 96
      %v1444 = vpop.permute.xlu0 %1443
      %1445 = vrot.lane.b32.xlu0 %v1351, 96
      %v1446 = vpop.permute.xlu0 %1445
      %1447 = vrot.lane.b32.xlu0 %v1352, 96
      %v1448 = vpop.permute.xlu0 %1447
      %s1481 = scalar_lea.vmem %s172, 256
      %1482 = vst.msk [vmem:[%s1481] sm:$0xff] %vm174, %v1386
      %1483 = vst.msk [vmem:[%s1481 + $0x8] sm:$0xff] %vm174, %v1388
      %1484 = vst.msk [vmem:[%s1481 + $0x10] sm:$0xff] %vm174, %v1390
      %1485 = vst.msk [vmem:[%s1481 + $0x18] sm:$0xff] %vm174, %v1392
      %1486 = vst.msk [vmem:[%s1481 + $0x20] sm:$0xff] %vm174, %v1394
      %1487 = vst.msk [vmem:[%s1481 + $0x28] sm:$0xff] %vm174, %v1396
      %1488 = vst.msk [vmem:[%s1481 + $0x30] sm:$0xff] %vm174, %v1398
      %1489 = vst.msk [vmem:[%s1481 + $0x38] sm:$0xff] %vm174, %v1400
      %1490 = vst.msk [vmem:[%s1481 + $0x40] sm:$0xff] %vm174, %v1402
      %1491 = vst.msk [vmem:[%s1481 + $0x48] sm:$0xff] %vm174, %v1404
      %1492 = vst.msk [vmem:[%s1481 + $0x50] sm:$0xff] %vm174, %v1406
      %1493 = vst.msk [vmem:[%s1481 + $0x58] sm:$0xff] %vm174, %v1408
      %1494 = vst.msk [vmem:[%s1481 + $0x60] sm:$0xff] %vm174, %v1410
      %1495 = vst.msk [vmem:[%s1481 + $0x68] sm:$0xff] %vm174, %v1412
      %1496 = vst.msk [vmem:[%s1481 + $0x70] sm:$0xff] %vm174, %v1414
      %1497 = vst.msk [vmem:[%s1481 + $0x78] sm:$0xff] %vm174, %v1416
      %1498 = vst.msk [vmem:[%s1481 + $0x80] sm:$0xff] %vm174, %v1418
      %1499 = vst.msk [vmem:[%s1481 + $0x88] sm:$0xff] %vm174, %v1420
      %1500 = vst.msk [vmem:[%s1481 + $0x90] sm:$0xff] %vm174, %v1422
      %1501 = vst.msk [vmem:[%s1481 + $0x98] sm:$0xff] %vm174, %v1424
      %1502 = vst.msk [vmem:[%s1481 + $0xa0] sm:$0xff] %vm174, %v1426
      %1503 = vst.msk [vmem:[%s1481 + $0xa8] sm:$0xff] %vm174, %v1428
      %1504 = vst.msk [vmem:[%s1481 + $0xb0] sm:$0xff] %vm174, %v1430
      %1505 = vst.msk [vmem:[%s1481 + $0xb8] sm:$0xff] %vm174, %v1432
      %1506 = vst.msk [vmem:[%s1481 + $0xc0] sm:$0xff] %vm174, %v1434
      %1507 = vst.msk [vmem:[%s1481 + $0xc8] sm:$0xff] %vm174, %v1436
      %1508 = vst.msk [vmem:[%s1481 + $0xd0] sm:$0xff] %vm174, %v1438
      %1509 = vst.msk [vmem:[%s1481 + $0xd8] sm:$0xff] %vm174, %v1440
      %1510 = vst.msk [vmem:[%s1481 + $0xe0] sm:$0xff] %vm174, %v1442
      %1511 = vst.msk [vmem:[%s1481 + $0xe8] sm:$0xff] %vm174, %v1444
      %1512 = vst.msk [vmem:[%s1481 + $0xf0] sm:$0xff] %vm174, %v1446
      %1513 = vst.msk [vmem:[%s1481 + $0xf8] sm:$0xff] %vm174, %v1448
      %v1514 = vld [vmem:[%s2] sm:$0x1]
      %v1516 = vperm.slane %v1514, 0
      %1517 = vrot.lane.b32.xlu0 %v1516, 64
      %v1518 = vpop.permute.xlu0 %1517
      %v1520 = vadd.f32 %v1168, %v1518
      %v1521 = vadd.f32 %v1170, %v1518
      %v1522 = vadd.f32 %v1173, %v1518
      %v1523 = vadd.f32 %v1175, %v1518
      %v1524 = vadd.f32 %v1178, %v1518
      %v1525 = vadd.f32 %v1180, %v1518
      %v1526 = vadd.f32 %v1183, %v1518
      %v1527 = vadd.f32 %v1185, %v1518
      %v1528 = vadd.f32 %v1188, %v1518
      %v1529 = vadd.f32 %v1190, %v1518
      %v1530 = vadd.f32 %v1193, %v1518
      %v1531 = vadd.f32 %v1195, %v1518
      %v1532 = vadd.f32 %v1198, %v1518
      %v1533 = vadd.f32 %v1200, %v1518
      %v1534 = vadd.f32 %v1203, %v1518
      %v1535 = vadd.f32 %v1205, %v1518
      %v1536 = vadd.f32 %v1208, %v1518
      %v1537 = vadd.f32 %v1210, %v1518
      %v1538 = vadd.f32 %v1213, %v1518
      %v1539 = vadd.f32 %v1215, %v1518
      %v1540 = vadd.f32 %v1218, %v1518
      %v1541 = vadd.f32 %v1220, %v1518
      %v1542 = vadd.f32 %v1223, %v1518
      %v1543 = vadd.f32 %v1225, %v1518
      %v1544 = vadd.f32 %v1228, %v1518
      %v1545 = vadd.f32 %v1230, %v1518
      %v1546 = vadd.f32 %v1233, %v1518
      %v1547 = vadd.f32 %v1235, %v1518
      %v1548 = vadd.f32 %v1238, %v1518
      %v1549 = vadd.f32 %v1240, %v1518
      %v1550 = vadd.f32 %v1243, %v1518
      %v1551 = vadd.f32 %v1245, %v1518
      %1584 = vrot.lane.b32.xlu0 %v1520, 64
      %v1585 = vpop.permute.xlu0 %1584
      %1586 = vrot.lane.b32.xlu0 %v1521, 64
      %v1587 = vpop.permute.xlu0 %1586
      %1588 = vrot.lane.b32.xlu0 %v1522, 64
      %v1589 = vpop.permute.xlu0 %1588
      %1590 = vrot.lane.b32.xlu0 %v1523, 64
      %v1591 = vpop.permute.xlu0 %1590
      %1592 = vrot.lane.b32.xlu0 %v1524, 64
      %v1593 = vpop.permute.xlu0 %1592
      %1594 = vrot.lane.b32.xlu0 %v1525, 64
      %v1595 = vpop.permute.xlu0 %1594
      %1596 = vrot.lane.b32.xlu0 %v1526, 64
      %v1597 = vpop.permute.xlu0 %1596
      %1598 = vrot.lane.b32.xlu0 %v1527, 64
      %v1599 = vpop.permute.xlu0 %1598
      %1600 = vrot.lane.b32.xlu0 %v1528, 64
      %v1601 = vpop.permute.xlu0 %1600
      %1602 = vrot.lane.b32.xlu0 %v1529, 64
      %v1603 = vpop.permute.xlu0 %1602
      %1604 = vrot.lane.b32.xlu0 %v1530, 64
      %v1605 = vpop.permute.xlu0 %1604
      %1606 = vrot.lane.b32.xlu0 %v1531, 64
      %v1607 = vpop.permute.xlu0 %1606
      %1608 = vrot.lane.b32.xlu0 %v1532, 64
      %v1609 = vpop.permute.xlu0 %1608
      %1610 = vrot.lane.b32.xlu0 %v1533, 64
      %v1611 = vpop.permute.xlu0 %1610
      %1612 = vrot.lane.b32.xlu0 %v1534, 64
      %v1613 = vpop.permute.xlu0 %1612
      %1614 = vrot.lane.b32.xlu0 %v1535, 64
      %v1615 = vpop.permute.xlu0 %1614
      %1616 = vrot.lane.b32.xlu0 %v1536, 64
      %v1617 = vpop.permute.xlu0 %1616
      %1618 = vrot.lane.b32.xlu0 %v1537, 64
      %v1619 = vpop.permute.xlu0 %1618
      %1620 = vrot.lane.b32.xlu0 %v1538, 64
      %v1621 = vpop.permute.xlu0 %1620
      %1622 = vrot.lane.b32.xlu0 %v1539, 64
      %v1623 = vpop.permute.xlu0 %1622
      %1624 = vrot.lane.b32.xlu0 %v1540, 64
      %v1625 = vpop.permute.xlu0 %1624
      %1626 = vrot.lane.b32.xlu0 %v1541, 64
      %v1627 = vpop.permute.xlu0 %1626
      %1628 = vrot.lane.b32.xlu0 %v1542, 64
      %v1629 = vpop.permute.xlu0 %1628
      %1630 = vrot.lane.b32.xlu0 %v1543, 64
      %v1631 = vpop.permute.xlu0 %1630
      %1632 = vrot.lane.b32.xlu0 %v1544, 64
      %v1633 = vpop.permute.xlu0 %1632
      %1634 = vrot.lane.b32.xlu0 %v1545, 64
      %v1635 = vpop.permute.xlu0 %1634
      %1636 = vrot.lane.b32.xlu0 %v1546, 64
      %v1637 = vpop.permute.xlu0 %1636
      %1638 = vrot.lane.b32.xlu0 %v1547, 64
      %v1639 = vpop.permute.xlu0 %1638
      %1640 = vrot.lane.b32.xlu0 %v1548, 64
      %v1641 = vpop.permute.xlu0 %1640
      %1642 = vrot.lane.b32.xlu0 %v1549, 64
      %v1643 = vpop.permute.xlu0 %1642
      %1644 = vrot.lane.b32.xlu0 %v1550, 64
      %v1645 = vpop.permute.xlu0 %1644
      %1646 = vrot.lane.b32.xlu0 %v1551, 64
      %v1647 = vpop.permute.xlu0 %1646
      %s1680 = scalar_lea.vmem %s172, 512
      %1681 = vst.msk [vmem:[%s1680] sm:$0xff] %vm174, %v1585
      %1682 = vst.msk [vmem:[%s1680 + $0x8] sm:$0xff] %vm174, %v1587
      %1683 = vst.msk [vmem:[%s1680 + $0x10] sm:$0xff] %vm174, %v1589
      %1684 = vst.msk [vmem:[%s1680 + $0x18] sm:$0xff] %vm174, %v1591
      %1685 = vst.msk [vmem:[%s1680 + $0x20] sm:$0xff] %vm174, %v1593
      %1686 = vst.msk [vmem:[%s1680 + $0x28] sm:$0xff] %vm174, %v1595
      %1687 = vst.msk [vmem:[%s1680 + $0x30] sm:$0xff] %vm174, %v1597
      %1688 = vst.msk [vmem:[%s1680 + $0x38] sm:$0xff] %vm174, %v1599
      %1689 = vst.msk [vmem:[%s1680 + $0x40] sm:$0xff] %vm174, %v1601
      %1690 = vst.msk [vmem:[%s1680 + $0x48] sm:$0xff] %vm174, %v1603
      %1691 = vst.msk [vmem:[%s1680 + $0x50] sm:$0xff] %vm174, %v1605
      %1692 = vst.msk [vmem:[%s1680 + $0x58] sm:$0xff] %vm174, %v1607
      %1693 = vst.msk [vmem:[%s1680 + $0x60] sm:$0xff] %vm174, %v1609
      %1694 = vst.msk [vmem:[%s1680 + $0x68] sm:$0xff] %vm174, %v1611
      %1695 = vst.msk [vmem:[%s1680 + $0x70] sm:$0xff] %vm174, %v1613
      %1696 = vst.msk [vmem:[%s1680 + $0x78] sm:$0xff] %vm174, %v1615
      %1697 = vst.msk [vmem:[%s1680 + $0x80] sm:$0xff] %vm174, %v1617
      %1698 = vst.msk [vmem:[%s1680 + $0x88] sm:$0xff] %vm174, %v1619
      %1699 = vst.msk [vmem:[%s1680 + $0x90] sm:$0xff] %vm174, %v1621
      %1700 = vst.msk [vmem:[%s1680 + $0x98] sm:$0xff] %vm174, %v1623
      %1701 = vst.msk [vmem:[%s1680 + $0xa0] sm:$0xff] %vm174, %v1625
      %1702 = vst.msk [vmem:[%s1680 + $0xa8] sm:$0xff] %vm174, %v1627
      %1703 = vst.msk [vmem:[%s1680 + $0xb0] sm:$0xff] %vm174, %v1629
      %1704 = vst.msk [vmem:[%s1680 + $0xb8] sm:$0xff] %vm174, %v1631
      %1705 = vst.msk [vmem:[%s1680 + $0xc0] sm:$0xff] %vm174, %v1633
      %1706 = vst.msk [vmem:[%s1680 + $0xc8] sm:$0xff] %vm174, %v1635
      %1707 = vst.msk [vmem:[%s1680 + $0xd0] sm:$0xff] %vm174, %v1637
      %1708 = vst.msk [vmem:[%s1680 + $0xd8] sm:$0xff] %vm174, %v1639
      %1709 = vst.msk [vmem:[%s1680 + $0xe0] sm:$0xff] %vm174, %v1641
      %1710 = vst.msk [vmem:[%s1680 + $0xe8] sm:$0xff] %vm174, %v1643
      %1711 = vst.msk [vmem:[%s1680 + $0xf0] sm:$0xff] %vm174, %v1645
      %1712 = vst.msk [vmem:[%s1680 + $0xf8] sm:$0xff] %vm174, %v1647
      %v1713 = vld [vmem:[%s2] sm:$0x1]
      %v1715 = vperm.slane %v1713, 0
      %1716 = vrot.lane.b32.xlu0 %v1715, 96
      %v1717 = vpop.permute.xlu0 %1716
      %v1719 = vadd.f32 %v1168, %v1717
      %v1720 = vadd.f32 %v1170, %v1717
      %v1721 = vadd.f32 %v1173, %v1717
      %v1722 = vadd.f32 %v1175, %v1717
      %v1723 = vadd.f32 %v1178, %v1717
      %v1724 = vadd.f32 %v1180, %v1717
      %v1725 = vadd.f32 %v1183, %v1717
      %v1726 = vadd.f32 %v1185, %v1717
      %v1727 = vadd.f32 %v1188, %v1717
      %v1728 = vadd.f32 %v1190, %v1717
      %v1729 = vadd.f32 %v1193, %v1717
      %v1730 = vadd.f32 %v1195, %v1717
      %v1731 = vadd.f32 %v1198, %v1717
      %v1732 = vadd.f32 %v1200, %v1717
      %v1733 = vadd.f32 %v1203, %v1717
      %v1734 = vadd.f32 %v1205, %v1717
      %v1735 = vadd.f32 %v1208, %v1717
      %v1736 = vadd.f32 %v1210, %v1717
      %v1737 = vadd.f32 %v1213, %v1717
      %v1738 = vadd.f32 %v1215, %v1717
      %v1739 = vadd.f32 %v1218, %v1717
      %v1740 = vadd.f32 %v1220, %v1717
      %v1741 = vadd.f32 %v1223, %v1717
      %v1742 = vadd.f32 %v1225, %v1717
      %v1743 = vadd.f32 %v1228, %v1717
      %v1744 = vadd.f32 %v1230, %v1717
      %v1745 = vadd.f32 %v1233, %v1717
      %v1746 = vadd.f32 %v1235, %v1717
      %v1747 = vadd.f32 %v1238, %v1717
      %v1748 = vadd.f32 %v1240, %v1717
      %v1749 = vadd.f32 %v1243, %v1717
      %v1750 = vadd.f32 %v1245, %v1717
      %1783 = vrot.lane.b32.xlu0 %v1719, 32
      %v1784 = vpop.permute.xlu0 %1783
      %1785 = vrot.lane.b32.xlu0 %v1720, 32
      %v1786 = vpop.permute.xlu0 %1785
      %1787 = vrot.lane.b32.xlu0 %v1721, 32
      %v1788 = vpop.permute.xlu0 %1787
      %1789 = vrot.lane.b32.xlu0 %v1722, 32
      %v1790 = vpop.permute.xlu0 %1789
      %1791 = vrot.lane.b32.xlu0 %v1723, 32
      %v1792 = vpop.permute.xlu0 %1791
      %1793 = vrot.lane.b32.xlu0 %v1724, 32
      %v1794 = vpop.permute.xlu0 %1793
      %1795 = vrot.lane.b32.xlu0 %v1725, 32
      %v1796 = vpop.permute.xlu0 %1795
      %1797 = vrot.lane.b32.xlu0 %v1726, 32
      %v1798 = vpop.permute.xlu0 %1797
      %1799 = vrot.lane.b32.xlu0 %v1727, 32
      %v1800 = vpop.permute.xlu0 %1799
      %1801 = vrot.lane.b32.xlu0 %v1728, 32
      %v1802 = vpop.permute.xlu0 %1801
      %1803 = vrot.lane.b32.xlu0 %v1729, 32
      %v1804 = vpop.permute.xlu0 %1803
      %1805 = vrot.lane.b32.xlu0 %v1730, 32
      %v1806 = vpop.permute.xlu0 %1805
      %1807 = vrot.lane.b32.xlu0 %v1731, 32
      %v1808 = vpop.permute.xlu0 %1807
      %1809 = vrot.lane.b32.xlu0 %v1732, 32
      %v1810 = vpop.permute.xlu0 %1809
      %1811 = vrot.lane.b32.xlu0 %v1733, 32
      %v1812 = vpop.permute.xlu0 %1811
      %1813 = vrot.lane.b32.xlu0 %v1734, 32
      %v1814 = vpop.permute.xlu0 %1813
      %1815 = vrot.lane.b32.xlu0 %v1735, 32
      %v1816 = vpop.permute.xlu0 %1815
      %1817 = vrot.lane.b32.xlu0 %v1736, 32
      %v1818 = vpop.permute.xlu0 %1817
      %1819 = vrot.lane.b32.xlu0 %v1737, 32
      %v1820 = vpop.permute.xlu0 %1819
      %1821 = vrot.lane.b32.xlu0 %v1738, 32
      %v1822 = vpop.permute.xlu0 %1821
      %1823 = vrot.lane.b32.xlu0 %v1739, 32
      %v1824 = vpop.permute.xlu0 %1823
      %1825 = vrot.lane.b32.xlu0 %v1740, 32
      %v1826 = vpop.permute.xlu0 %1825
      %1827 = vrot.lane.b32.xlu0 %v1741, 32
      %v1828 = vpop.permute.xlu0 %1827
      %1829 = vrot.lane.b32.xlu0 %v1742, 32
      %v1830 = vpop.permute.xlu0 %1829
      %1831 = vrot.lane.b32.xlu0 %v1743, 32
      %v1832 = vpop.permute.xlu0 %1831
      %1833 = vrot.lane.b32.xlu0 %v1744, 32
      %v1834 = vpop.permute.xlu0 %1833
      %1835 = vrot.lane.b32.xlu0 %v1745, 32
      %v1836 = vpop.permute.xlu0 %1835
      %1837 = vrot.lane.b32.xlu0 %v1746, 32
      %v1838 = vpop.permute.xlu0 %1837
      %1839 = vrot.lane.b32.xlu0 %v1747, 32
      %v1840 = vpop.permute.xlu0 %1839
      %1841 = vrot.lane.b32.xlu0 %v1748, 32
      %v1842 = vpop.permute.xlu0 %1841
      %1843 = vrot.lane.b32.xlu0 %v1749, 32
      %v1844 = vpop.permute.xlu0 %1843
      %1845 = vrot.lane.b32.xlu0 %v1750, 32
      %v1846 = vpop.permute.xlu0 %1845
      %s1879 = scalar_lea.vmem %s172, 768
      %1880 = vst.msk [vmem:[%s1879] sm:$0xff] %vm174, %v1784
      %1881 = vst.msk [vmem:[%s1879 + $0x8] sm:$0xff] %vm174, %v1786
      %1882 = vst.msk [vmem:[%s1879 + $0x10] sm:$0xff] %vm174, %v1788
      %1883 = vst.msk [vmem:[%s1879 + $0x18] sm:$0xff] %vm174, %v1790
      %1884 = vst.msk [vmem:[%s1879 + $0x20] sm:$0xff] %vm174, %v1792
      %1885 = vst.msk [vmem:[%s1879 + $0x28] sm:$0xff] %vm174, %v1794
      %1886 = vst.msk [vmem:[%s1879 + $0x30] sm:$0xff] %vm174, %v1796
      %1887 = vst.msk [vmem:[%s1879 + $0x38] sm:$0xff] %vm174, %v1798
      %1888 = vst.msk [vmem:[%s1879 + $0x40] sm:$0xff] %vm174, %v1800
      %1889 = vst.msk [vmem:[%s1879 + $0x48] sm:$0xff] %vm174, %v1802
      %1890 = vst.msk [vmem:[%s1879 + $0x50] sm:$0xff] %vm174, %v1804
      %1891 = vst.msk [vmem:[%s1879 + $0x58] sm:$0xff] %vm174, %v1806
      %1892 = vst.msk [vmem:[%s1879 + $0x60] sm:$0xff] %vm174, %v1808
      %1893 = vst.msk [vmem:[%s1879 + $0x68] sm:$0xff] %vm174, %v1810
      %1894 = vst.msk [vmem:[%s1879 + $0x70] sm:$0xff] %vm174, %v1812
      %1895 = vst.msk [vmem:[%s1879 + $0x78] sm:$0xff] %vm174, %v1814
      %1896 = vst.msk [vmem:[%s1879 + $0x80] sm:$0xff] %vm174, %v1816
      %1897 = vst.msk [vmem:[%s1879 + $0x88] sm:$0xff] %vm174, %v1818
      %1898 = vst.msk [vmem:[%s1879 + $0x90] sm:$0xff] %vm174, %v1820
      %1899 = vst.msk [vmem:[%s1879 + $0x98] sm:$0xff] %vm174, %v1822
      %1900 = vst.msk [vmem:[%s1879 + $0xa0] sm:$0xff] %vm174, %v1824
      %1901 = vst.msk [vmem:[%s1879 + $0xa8] sm:$0xff] %vm174, %v1826
      %1902 = vst.msk [vmem:[%s1879 + $0xb0] sm:$0xff] %vm174, %v1828
      %1903 = vst.msk [vmem:[%s1879 + $0xb8] sm:$0xff] %vm174, %v1830
      %1904 = vst.msk [vmem:[%s1879 + $0xc0] sm:$0xff] %vm174, %v1832
      %1905 = vst.msk [vmem:[%s1879 + $0xc8] sm:$0xff] %vm174, %v1834
      %1906 = vst.msk [vmem:[%s1879 + $0xd0] sm:$0xff] %vm174, %v1836
      %1907 = vst.msk [vmem:[%s1879 + $0xd8] sm:$0xff] %vm174, %v1838
      %1908 = vst.msk [vmem:[%s1879 + $0xe0] sm:$0xff] %vm174, %v1840
      %1909 = vst.msk [vmem:[%s1879 + $0xe8] sm:$0xff] %vm174, %v1842
      %1910 = vst.msk [vmem:[%s1879 + $0xf0] sm:$0xff] %vm174, %v1844
      %1911 = vst.msk [vmem:[%s1879 + $0xf8] sm:$0xff] %vm174, %v1846
      %s1912 = smul.u32 4, %s14
      %p1913 = scmp.lt.s32.totalorder %s1912, 7
      %s1914 = scalar_select %p1913, %s1912, 7
      %s1915 = smul.addr %s1914, 32
      %s1916 = smul.addr %s1915, 8
      %s1917 = scalar_lea.vmem %s3, %s1916
      // Predicated region
      $region33: #{dncnn_forward.3} parent=31 // pred_check
        %p1918 = pneg %p100
      $region34: #{dncnn_forward.3} parent=31 // pred_check_branch
        %1920 = sbr.rel (%p1918) target = $region36
      $region35: #{dncnn_forward.3} parent=31 // pred_region
        %s1921 = smul.u32 4, %s14
      $region36: #{dncnn_forward.3} parent=31 // pred_fallthru
        _
    $region32: #{dncnn_forward.3} parent=5 // pred_fallthru
      _
    %p1922 = scmp.le.s32.totalorder 2, %s9
    // Predicated region
    $region37: #{dncnn_forward.3} parent=5 // pred_check
      %p1923 = pneg %p1922
    $region38: #{dncnn_forward.3} parent=5 // pred_check_branch
      %1925 = sbr.rel (%p1923) target = $region40
    $region39: #{dncnn_forward.3} parent=5 // pred_region
      %s1926 = ssub.s32 %s9, 2
      // Predicated region
      $region41: #{dncnn_forward.3} parent=39 // pred_check
        %p1927 = pneg %p106
      $region42: #{dncnn_forward.3} parent=39 // pred_check_branch
        %1929 = sbr.rel (%p1927) target = $region44
      $region43: #{dncnn_forward.3} parent=39 // pred_region
        %s1930 = smul.u32 4, %s15
        %p1931 = scmp.lt.s32.totalorder %s1930, 7
        %s1932 = scalar_select %p1931, %s1930, 7
        %s1933 = smul.addr %s1932, 32
        %s1934 = smul.addr %s1933, 8
        %s1935 = scalar_lea.vmem %s3, %s1934
      $region44: #{dncnn_forward.3} parent=39 // pred_fallthru
        _
    $region40: #{dncnn_forward.3} parent=5 // pred_fallthru
      _
  $region6: #{dncnn_forward.3} parent=0 // loop_footer
    %s13 = sadd.s32 1, %s9
  $region7: #{dncnn_forward.3} parent=0 // loop_footer_branch
    %8 = sbr.rel target = $region3
  $region8: #{dncnn_forward.3} parent=0 // loop_exit
    _

// kernel: dncnn_forward.2
$region0: #{dncnn_forward.2}
  #allocation0 [shape = 'u32[]', space=smem, size = 0x4, offset = 0x4, fixed_abs, tag = 'smem constant byte address 0x4 - core index']
  #allocation1 [shape = 'u32[72,128]{1,0:T(1,128)}', space=vmem, size = 0x9000, scoped, tag = 'internal scratch']
  #allocation2 [shape = 'f32[18,18,32]{2,1,0:T(8,128)}', space=vmem, size = 0x36000, scoped, tag = 'scratch operand']
  #allocation3 [shape = 'f32[18,18,32]{2,1,0:T(8,128)}', space=vmem, size = 0x36000, scoped, tag = 'scratch operand']
  %s0 = inlined_call_operand.vmem [shape: f32[2,16,16,32], index: 0, kind: input, shape index: {}]
  %s1 = inlined_call_operand.vmem [shape: bf16[4,288,32], index: 1, kind: input, shape index: {}]
  %s2 = inlined_call_operand.vmem [shape: f32[4,1,32], index: 2, kind: input, shape index: {}]
  %s3 = inlined_call_operand.vmem [shape: f32[4,1,32], index: 3, kind: input, shape index: {}]
  %s4 = inlined_call_operand.vmem [shape: f32[2,16,16,32], index: 4, kind: output, shape index: {}]
  %s5 = sld [smem:[#allocation0]]
  $region49: #{dncnn_forward.2} parent=0
    _
  %s7 = ssub.s32 1, %s5
  %s8 = scalar_select 0, %s7, %s5
  loop: start=0, step=1, limit=4
  $region2: #{dncnn_forward.2} parent=0 // loop_pre_header
    _
  $region3: #{dncnn_forward.2} parent=0 // loop_header
    %s10 = sphi 0, %s14
    %p11 = scmp.ge.s32.totalorder %s10, 4
    %s20 = sphi 0, %s22
    %s23 = sphi 0, %s20
    %s24 = sphi 0, %s23
    %s40 = sphi 0, %s24
    %s44 = sphi 0, %s44
    %s46 = sphi 0, %s44
    %s47 = sphi 0, %s46
    %s61 = sphi 0, %s47
    %s65 = sphi 0, %s65
    %s67 = sphi 0, %s65
    %s68 = sphi 0, %s67
    %s82 = sphi 0, %s68
    %s86 = sphi 0, %s86
    %s88 = sphi 0, %s86
    %s89 = sphi 0, %s88
    %s103 = sphi 0, %s89
    %s109 = sphi 0, %s111
    %s112 = sphi 0, %s109
    %s113 = sphi 0, %s112
    %s129 = sphi 0, %s113
  $region4: #{dncnn_forward.2} parent=0 // loop_header_branch
    %13 = sbr.rel (%p11) target = $region8
  $region5: #{dncnn_forward.2} parent=0 // loop_body
    %s15 = ssub.s32 %s10, 1
    %s16 = ssub.s32 %s10, 2
    %s17 = sadd.s32 %s10, 1
    %s18 = ssub.s32 %s10, %s17
    %p19 = scmp.eq.s32.totalorder %s18, 0
    %s21 = sadd.s32 %s20, 1
    %s22 = scalar_select %p19, %s20, %s21
    %p25 = pneg %p19
    %p26 = scmp.eq.s32.totalorder %s10, 1
    %p27 = por %p25, %p26
    %p28 = scmp.ne.s32.totalorder %s20, %s23
    %p29 = scmp.eq.s32.totalorder %s10, 0
    %p30 = por %p28, %p29
    %p31 = scmp.ne.s32.totalorder %s20, %s23
    %p32 = scmp.eq.s32.totalorder %s15, 1
    %p33 = por %p31, %p32
    %p34 = scmp.ne.s32.totalorder %s23, %s24
    %p35 = scmp.eq.s32.totalorder %s15, 0
    %p36 = por %p34, %p35
    %p37 = scmp.ne.s32.totalorder %s23, %s24
    %p38 = scmp.eq.s32.totalorder %s16, 1
    %p39 = por %p37, %p38
    %p41 = scmp.ne.s32.totalorder %s24, %s40
    %p42 = scmp.eq.s32.totalorder %s16, 0
    %p43 = por %p41, %p42
    %s45 = sadd.s32 %s44, 1
    %p48 = scmp.eq.s32.totalorder %s10, 1
    %p49 = scmp.ne.s32.totalorder %s44, %s46
    %p50 = scmp.eq.s32.totalorder %s10, 0
    %p51 = por %p49, %p50
    %p52 = scmp.ne.s32.totalorder %s44, %s46
    %p53 = scmp.eq.s32.totalorder %s15, 1
    %p54 = por %p52, %p53
    %p55 = scmp.ne.s32.totalorder %s46, %s47
    %p56 = scmp.eq.s32.totalorder %s15, 0
    %p57 = por %p55, %p56
    %p58 = scmp.ne.s32.totalorder %s46, %s47
    %p59 = scmp.eq.s32.totalorder %s16, 1
    %p60 = por %p58, %p59
    %p62 = scmp.ne.s32.totalorder %s47, %s61
    %p63 = scmp.eq.s32.totalorder %s16, 0
    %p64 = por %p62, %p63
    %s66 = sadd.s32 %s65, 1
    %p69 = scmp.eq.s32.totalorder %s10, 1
    %p70 = scmp.ne.s32.totalorder %s65, %s67
    %p71 = scmp.eq.s32.totalorder %s10, 0
    %p72 = por %p70, %p71
    %p73 = scmp.ne.s32.totalorder %s65, %s67
    %p74 = scmp.eq.s32.totalorder %s15, 1
    %p75 = por %p73, %p74
    %p76 = scmp.ne.s32.totalorder %s67, %s68
    %p77 = scmp.eq.s32.totalorder %s15, 0
    %p78 = por %p76, %p77
    %p79 = scmp.ne.s32.totalorder %s67, %s68
    %p80 = scmp.eq.s32.totalorder %s16, 1
    %p81 = por %p79, %p80
    %p83 = scmp.ne.s32.totalorder %s68, %s82
    %p84 = scmp.eq.s32.totalorder %s16, 0
    %p85 = por %p83, %p84
    %s87 = sadd.s32 %s86, 1
    %p90 = scmp.eq.s32.totalorder %s10, 1
    %p91 = scmp.ne.s32.totalorder %s86, %s88
    %p92 = scmp.eq.s32.totalorder %s10, 0
    %p93 = por %p91, %p92
    %p94 = scmp.ne.s32.totalorder %s86, %s88
    %p95 = scmp.eq.s32.totalorder %s15, 1
    %p96 = por %p94, %p95
    %p97 = scmp.ne.s32.totalorder %s88, %s89
    %p98 = scmp.eq.s32.totalorder %s15, 0
    %p99 = por %p97, %p98
    %p100 = scmp.ne.s32.totalorder %s88, %s89
    %p101 = scmp.eq.s32.totalorder %s16, 1
    %p102 = por %p100, %p101
    %p104 = scmp.ne.s32.totalorder %s89, %s103
    %p105 = scmp.eq.s32.totalorder %s16, 0
    %p106 = por %p104, %p105
    %s107 = ssub.s32 %s10, %s17
    %p108 = scmp.eq.s32.totalorder %s107, 0
    %s110 = sadd.s32 %s109, 1
    %s111 = scalar_select %p108, %s109, %s110
    %p114 = pneg %p108
    %p115 = scmp.eq.s32.totalorder %s10, 1
    %p116 = por %p114, %p115
    %p117 = scmp.ne.s32.totalorder %s109, %s112
    %p118 = scmp.eq.s32.totalorder %s10, 0
    %p119 = por %p117, %p118
    %p120 = scmp.ne.s32.totalorder %s109, %s112
    %p121 = scmp.eq.s32.totalorder %s15, 1
    %p122 = por %p120, %p121
    %p123 = scmp.ne.s32.totalorder %s112, %s113
    %p124 = scmp.eq.s32.totalorder %s15, 0
    %p125 = por %p123, %p124
    %p126 = scmp.ne.s32.totalorder %s112, %s113
    %p127 = scmp.eq.s32.totalorder %s16, 1
    %p128 = por %p126, %p127
    %p130 = scmp.ne.s32.totalorder %s113, %s129
    %p131 = scmp.eq.s32.totalorder %s16, 0
    %p132 = por %p130, %p131
    %p133 = scmp.le.s32.totalorder 1, %s10
    %p134 = scmp.lt.s32.totalorder %s10, 3
    %p135 = pnand %p133, %p134
    %p136 = pneg %p135
    // Predicated region
    $region9: #{dncnn_forward.2} parent=5 // pred_check
      _
    $region10: #{dncnn_forward.2} parent=5 // pred_check_branch
      %138 = sbr.rel (%p135) target = $region12
    $region11: #{dncnn_forward.2} parent=5 // pred_region
      %s139 = ssub.s32 %s10, 1
      // Predicated region
      $region13: #{dncnn_forward.2} parent=11 // pred_check
        %p140 = pneg %p57
      $region14: #{dncnn_forward.2} parent=11 // pred_check_branch
        %142 = sbr.rel (%p140) target = $region16
      $region15: #{dncnn_forward.2} parent=11 // pred_region
        _
      $region16: #{dncnn_forward.2} parent=11 // pred_fallthru
        _
      // Predicated region
      $region17: #{dncnn_forward.2} parent=11 // pred_check
        %p143 = pneg %p78
      $region18: #{dncnn_forward.2} parent=11 // pred_check_branch
        %145 = sbr.rel (%p143) target = $region20
      $region19: #{dncnn_forward.2} parent=11 // pred_region
        _
      $region20: #{dncnn_forward.2} parent=11 // pred_fallthru
        _
      // Predicated region
      $region21: #{dncnn_forward.2} parent=11 // pred_check
        %p146 = pneg %p99
      $region22: #{dncnn_forward.2} parent=11 // pred_check_branch
        %148 = sbr.rel (%p146) target = $region24
      $region23: #{dncnn_forward.2} parent=11 // pred_region
        _
      $region24: #{dncnn_forward.2} parent=11 // pred_fallthru
        _
    $region12: #{dncnn_forward.2} parent=5 // pred_fallthru
      _
    %p149 = scmp.lt.s32.totalorder %s10, 2
    // Predicated region
    $region25: #{dncnn_forward.2} parent=5 // pred_check
      %p150 = pneg %p149
    $region26: #{dncnn_forward.2} parent=5 // pred_check_branch
      %152 = sbr.rel (%p150) target = $region28
    $region27: #{dncnn_forward.2} parent=5 // pred_region
      // Predicated region
      $region29: #{dncnn_forward.2} parent=27 // pred_check
        %p153 = pneg %p30
      $region30: #{dncnn_forward.2} parent=27 // pred_check_branch
        %155 = sbr.rel (%p153) target = $region32
      $region31: #{dncnn_forward.2} parent=27 // pred_region
        %p156 = scmp.lt.s32.totalorder %s10, 1
        %s157 = scalar_select %p156, %s10, 1
        %s158 = smul.addr %s157, 32
        %s159 = smul.addr %s158, 8
        %s160 = scalar_lea.vmem %s0, %s159
      $region32: #{dncnn_forward.2} parent=27 // pred_fallthru
        _
    $region28: #{dncnn_forward.2} parent=5 // pred_fallthru
      _
    %p161 = scmp.le.s32.totalorder 1, %s10
    %p162 = scmp.lt.s32.totalorder %s10, 3
    %p163 = pnand %p161, %p162
    %p164 = pneg %p163
    // Predicated region
    $region33: #{dncnn_forward.2} parent=5 // pred_check
      _
    $region34: #{dncnn_forward.2} parent=5 // pred_check_branch
      %166 = sbr.rel (%p163) target = $region36
    $region35: #{dncnn_forward.2} parent=5 // pred_region
      %s167 = ssub.s32 %s10, 1
      %p168 = scmp.lt.s32.totalorder %s15, 1
      %s169 = scalar_select %p168, %s15, 1
      %s170 = smul.addr %s169, 32
      %s171 = smul.addr %s170, 8
      %s172 = scalar_lea.vmem %s0, %s171
      %p173 = pneg %p36
      %p174 = pneg %p33
      %p175 = pneg %p57
      %p176 = pneg %p54
      %p177 = pneg %p78
      %p178 = pneg %p75
      %p179 = pneg %p99
      %p180 = pneg %p96
      %p181 = pneg %p125
      %p182 = pneg %p122
      %p183 = scmp.lt.s32.totalorder %s15, 1
      %s184 = scalar_select %p183, %s15, 1
      %s185 = smul.addr %s184, 32
      %s186 = smul.addr %s185, 8
      %s187 = scalar_lea.vmem %s4, %s186
      %p188 = scmp.lt.s32.totalorder %s15, 1
      %s189 = scalar_select %p188, %s15, 1
      %s190 = smul.addr %s189, 32
      %s191 = smul.addr %s190, 8
      %s192 = scalar_lea.vmem %s0, %s191
      %p193 = scmp.lt.s32.totalorder %s15, 1
      %s194 = scalar_select %p193, %s15, 1
      %s195 = smul.addr %s194, 32
      %s196 = smul.addr %s195, 8
      %s197 = scalar_lea.vmem %s4, %s196
      %vm199 = vcmask 261120
      %200 = vst.msk [vmem:[#allocation2] sm:$0xff] %vm199, 0.0
      %201 = vst.msk [vmem:[#allocation2 + $0x8] sm:$0xff] %vm199, 0.0
      %vm202 = vcmask 254976
      %203 = vst.msk [vmem:[#allocation2 + $0x10] sm:$0x3] %vm202, 0.0
      %204 = vst.msk [vmem:[#allocation2 + $0x18] sm:$0xff] %vm199, 0.0
      %205 = vst.msk [vmem:[#allocation2 + $0x20] sm:$0xff] %vm199, 0.0
      %206 = vst.msk [vmem:[#allocation2 + $0x28] sm:$0x3] %vm202, 0.0
      %207 = vst.msk [vmem:[#allocation2 + $0x30] sm:$0xff] %vm199, 0.0
      %208 = vst.msk [vmem:[#allocation2 + $0x38] sm:$0xff] %vm199, 0.0
      %209 = vst.msk [vmem:[#allocation2 + $0x40] sm:$0x3] %vm202, 0.0
      %210 = vst.msk [vmem:[#allocation2 + $0x48] sm:$0xff] %vm199, 0.0
      %211 = vst.msk [vmem:[#allocation2 + $0x50] sm:$0xff] %vm199, 0.0
      %212 = vst.msk [vmem:[#allocation2 + $0x58] sm:$0x3] %vm202, 0.0
      %213 = vst.msk [vmem:[#allocation2 + $0x60] sm:$0xff] %vm199, 0.0
      %214 = vst.msk [vmem:[#allocation2 + $0x68] sm:$0xff] %vm199, 0.0
      %215 = vst.msk [vmem:[#allocation2 + $0x70] sm:$0x3] %vm202, 0.0
      %216 = vst.msk [vmem:[#allocation2 + $0x78] sm:$0xff] %vm199, 0.0
      %217 = vst.msk [vmem:[#allocation2 + $0x80] sm:$0xff] %vm199, 0.0
      %218 = vst.msk [vmem:[#allocation2 + $0x88] sm:$0x3] %vm202, 0.0
      %219 = vst.msk [vmem:[#allocation2 + $0x90] sm:$0xff] %vm199, 0.0
      %220 = vst.msk [vmem:[#allocation2 + $0x98] sm:$0xff] %vm199, 0.0
      %221 = vst.msk [vmem:[#allocation2 + $0xa0] sm:$0x3] %vm202, 0.0
      %222 = vst.msk [vmem:[#allocation2 + $0xa8] sm:$0xff] %vm199, 0.0
      %223 = vst.msk [vmem:[#allocation2 + $0xb0] sm:$0xff] %vm199, 0.0
      %224 = vst.msk [vmem:[#allocation2 + $0xb8] sm:$0x3] %vm202, 0.0
      %225 = vst.msk [vmem:[#allocation2 + $0xc0] sm:$0xff] %vm199, 0.0
      %226 = vst.msk [vmem:[#allocation2 + $0xc8] sm:$0xff] %vm199, 0.0
      %227 = vst.msk [vmem:[#allocation2 + $0xd0] sm:$0x3] %vm202, 0.0
      %228 = vst.msk [vmem:[#allocation2 + $0xd8] sm:$0xff] %vm199, 0.0
      %229 = vst.msk [vmem:[#allocation2 + $0xe0] sm:$0xff] %vm199, 0.0
      %230 = vst.msk [vmem:[#allocation2 + $0xe8] sm:$0x3] %vm202, 0.0
      %231 = vst.msk [vmem:[#allocation2 + $0xf0] sm:$0xff] %vm199, 0.0
      %232 = vst.msk [vmem:[#allocation2 + $0xf8] sm:$0xff] %vm199, 0.0
      %233 = vst.msk [vmem:[#allocation2 + $0x100] sm:$0x3] %vm202, 0.0
      %234 = vst.msk [vmem:[#allocation2 + $0x108] sm:$0xff] %vm199, 0.0
      %235 = vst.msk [vmem:[#allocation2 + $0x110] sm:$0xff] %vm199, 0.0
      %236 = vst.msk [vmem:[#allocation2 + $0x118] sm:$0x3] %vm202, 0.0
      %237 = vst.msk [vmem:[#allocation2 + $0x120] sm:$0xff] %vm199, 0.0
      %238 = vst.msk [vmem:[#allocation2 + $0x128] sm:$0xff] %vm199, 0.0
      %239 = vst.msk [vmem:[#allocation2 + $0x130] sm:$0x3] %vm202, 0.0
      %240 = vst.msk [vmem:[#allocation2 + $0x138] sm:$0xff] %vm199, 0.0
      %241 = vst.msk [vmem:[#allocation2 + $0x140] sm:$0xff] %vm199, 0.0
      %242 = vst.msk [vmem:[#allocation2 + $0x148] sm:$0x3] %vm202, 0.0
      %243 = vst.msk [vmem:[#allocation2 + $0x150] sm:$0xff] %vm199, 0.0
      %244 = vst.msk [vmem:[#allocation2 + $0x158] sm:$0xff] %vm199, 0.0
      %245 = vst.msk [vmem:[#allocation2 + $0x160] sm:$0x3] %vm202, 0.0
      %246 = vst.msk [vmem:[#allocation2 + $0x168] sm:$0xff] %vm199, 0.0
      %247 = vst.msk [vmem:[#allocation2 + $0x170] sm:$0xff] %vm199, 0.0
      %248 = vst.msk [vmem:[#allocation2 + $0x178] sm:$0x3] %vm202, 0.0
      %249 = vst.msk [vmem:[#allocation2 + $0x180] sm:$0xff] %vm199, 0.0
      %250 = vst.msk [vmem:[#allocation2 + $0x188] sm:$0xff] %vm199, 0.0
      %251 = vst.msk [vmem:[#allocation2 + $0x190] sm:$0x3] %vm202, 0.0
      %252 = vst.msk [vmem:[#allocation2 + $0x198] sm:$0xff] %vm199, 0.0
      %253 = vst.msk [vmem:[#allocation2 + $0x1a0] sm:$0xff] %vm199, 0.0
      %254 = vst.msk [vmem:[#allocation2 + $0x1a8] sm:$0x3] %vm202, 0.0
      %255 = vst.msk [vmem:[#allocation3] sm:$0xff] %vm199, 0.0
      %256 = vst.msk [vmem:[#allocation3 + $0x8] sm:$0xff] %vm199, 0.0
      %257 = vst.msk [vmem:[#allocation3 + $0x10] sm:$0x3] %vm202, 0.0
      %258 = vst.msk [vmem:[#allocation3 + $0x18] sm:$0xff] %vm199, 0.0
      %259 = vst.msk [vmem:[#allocation3 + $0x20] sm:$0xff] %vm199, 0.0
      %260 = vst.msk [vmem:[#allocation3 + $0x28] sm:$0x3] %vm202, 0.0
      %261 = vst.msk [vmem:[#allocation3 + $0x30] sm:$0xff] %vm199, 0.0
      %262 = vst.msk [vmem:[#allocation3 + $0x38] sm:$0xff] %vm199, 0.0
      %263 = vst.msk [vmem:[#allocation3 + $0x40] sm:$0x3] %vm202, 0.0
      %264 = vst.msk [vmem:[#allocation3 + $0x48] sm:$0xff] %vm199, 0.0
      %265 = vst.msk [vmem:[#allocation3 + $0x50] sm:$0xff] %vm199, 0.0
      %266 = vst.msk [vmem:[#allocation3 + $0x58] sm:$0x3] %vm202, 0.0
      %267 = vst.msk [vmem:[#allocation3 + $0x60] sm:$0xff] %vm199, 0.0
      %268 = vst.msk [vmem:[#allocation3 + $0x68] sm:$0xff] %vm199, 0.0
      %269 = vst.msk [vmem:[#allocation3 + $0x70] sm:$0x3] %vm202, 0.0
      %270 = vst.msk [vmem:[#allocation3 + $0x78] sm:$0xff] %vm199, 0.0
      %271 = vst.msk [vmem:[#allocation3 + $0x80] sm:$0xff] %vm199, 0.0
      %272 = vst.msk [vmem:[#allocation3 + $0x88] sm:$0x3] %vm202, 0.0
      %273 = vst.msk [vmem:[#allocation3 + $0x90] sm:$0xff] %vm199, 0.0
      %274 = vst.msk [vmem:[#allocation3 + $0x98] sm:$0xff] %vm199, 0.0
      %275 = vst.msk [vmem:[#allocation3 + $0xa0] sm:$0x3] %vm202, 0.0
      %276 = vst.msk [vmem:[#allocation3 + $0xa8] sm:$0xff] %vm199, 0.0
      %277 = vst.msk [vmem:[#allocation3 + $0xb0] sm:$0xff] %vm199, 0.0
      %278 = vst.msk [vmem:[#allocation3 + $0xb8] sm:$0x3] %vm202, 0.0
      %279 = vst.msk [vmem:[#allocation3 + $0xc0] sm:$0xff] %vm199, 0.0
      %280 = vst.msk [vmem:[#allocation3 + $0xc8] sm:$0xff] %vm199, 0.0
      %281 = vst.msk [vmem:[#allocation3 + $0xd0] sm:$0x3] %vm202, 0.0
      %282 = vst.msk [vmem:[#allocation3 + $0xd8] sm:$0xff] %vm199, 0.0
      %283 = vst.msk [vmem:[#allocation3 + $0xe0] sm:$0xff] %vm199, 0.0
      %284 = vst.msk [vmem:[#allocation3 + $0xe8] sm:$0x3] %vm202, 0.0
      %285 = vst.msk [vmem:[#allocation3 + $0xf0] sm:$0xff] %vm199, 0.0
      %286 = vst.msk [vmem:[#allocation3 + $0xf8] sm:$0xff] %vm199, 0.0
      %287 = vst.msk [vmem:[#allocation3 + $0x100] sm:$0x3] %vm202, 0.0
      %288 = vst.msk [vmem:[#allocation3 + $0x108] sm:$0xff] %vm199, 0.0
      %289 = vst.msk [vmem:[#allocation3 + $0x110] sm:$0xff] %vm199, 0.0
      %290 = vst.msk [vmem:[#allocation3 + $0x118] sm:$0x3] %vm202, 0.0
      %291 = vst.msk [vmem:[#allocation3 + $0x120] sm:$0xff] %vm199, 0.0
      %292 = vst.msk [vmem:[#allocation3 + $0x128] sm:$0xff] %vm199, 0.0
      %293 = vst.msk [vmem:[#allocation3 + $0x130] sm:$0x3] %vm202, 0.0
      %294 = vst.msk [vmem:[#allocation3 + $0x138] sm:$0xff] %vm199, 0.0
      %295 = vst.msk [vmem:[#allocation3 + $0x140] sm:$0xff] %vm199, 0.0
      %296 = vst.msk [vmem:[#allocation3 + $0x148] sm:$0x3] %vm202, 0.0
      %297 = vst.msk [vmem:[#allocation3 + $0x150] sm:$0xff] %vm199, 0.0
      %298 = vst.msk [vmem:[#allocation3 + $0x158] sm:$0xff] %vm199, 0.0
      %299 = vst.msk [vmem:[#allocation3 + $0x160] sm:$0x3] %vm202, 0.0
      %300 = vst.msk [vmem:[#allocation3 + $0x168] sm:$0xff] %vm199, 0.0
      %301 = vst.msk [vmem:[#allocation3 + $0x170] sm:$0xff] %vm199, 0.0
      %302 = vst.msk [vmem:[#allocation3 + $0x178] sm:$0x3] %vm202, 0.0
      %303 = vst.msk [vmem:[#allocation3 + $0x180] sm:$0xff] %vm199, 0.0
      %304 = vst.msk [vmem:[#allocation3 + $0x188] sm:$0xff] %vm199, 0.0
      %305 = vst.msk [vmem:[#allocation3 + $0x190] sm:$0x3] %vm202, 0.0
      %306 = vst.msk [vmem:[#allocation3 + $0x198] sm:$0xff] %vm199, 0.0
      %307 = vst.msk [vmem:[#allocation3 + $0x1a0] sm:$0xff] %vm199, 0.0
      %308 = vst.msk [vmem:[#allocation3 + $0x1a8] sm:$0x3] %vm202, 0.0
      %v309 = vld [vmem:[%s192] sm:$0xff]
      %v310 = vld [vmem:[%s192 + $0x8] sm:$0xff]
      %v311 = vld [vmem:[%s192 + $0x10] sm:$0xff]
      %v312 = vld [vmem:[%s192 + $0x18] sm:$0xff]
      %v313 = vld [vmem:[%s192 + $0x20] sm:$0xff]
      %v314 = vld [vmem:[%s192 + $0x28] sm:$0xff]
      %v315 = vld [vmem:[%s192 + $0x30] sm:$0xff]
      %v316 = vld [vmem:[%s192 + $0x38] sm:$0xff]
      %v317 = vld [vmem:[%s192 + $0x40] sm:$0xff]
      %v318 = vld [vmem:[%s192 + $0x48] sm:$0xff]
      %v319 = vld [vmem:[%s192 + $0x50] sm:$0xff]
      %v320 = vld [vmem:[%s192 + $0x58] sm:$0xff]
      %v321 = vld [vmem:[%s192 + $0x60] sm:$0xff]
      %v322 = vld [vmem:[%s192 + $0x68] sm:$0xff]
      %v323 = vld [vmem:[%s192 + $0x70] sm:$0xff]
      %v324 = vld [vmem:[%s192 + $0x78] sm:$0xff]
      %v325 = vld [vmem:[%s192 + $0x80] sm:$0xff]
      %v326 = vld [vmem:[%s192 + $0x88] sm:$0xff]
      %v327 = vld [vmem:[%s192 + $0x90] sm:$0xff]
      %v328 = vld [vmem:[%s192 + $0x98] sm:$0xff]
      %v329 = vld [vmem:[%s192 + $0xa0] sm:$0xff]
      %v330 = vld [vmem:[%s192 + $0xa8] sm:$0xff]
      %v331 = vld [vmem:[%s192 + $0xb0] sm:$0xff]
      %v332 = vld [vmem:[%s192 + $0xb8] sm:$0xff]
      %v333 = vld [vmem:[%s192 + $0xc0] sm:$0xff]
      %v334 = vld [vmem:[%s192 + $0xc8] sm:$0xff]
      %v335 = vld [vmem:[%s192 + $0xd0] sm:$0xff]
      %v336 = vld [vmem:[%s192 + $0xd8] sm:$0xff]
      %v337 = vld [vmem:[%s192 + $0xe0] sm:$0xff]
      %v338 = vld [vmem:[%s192 + $0xe8] sm:$0xff]
      %v339 = vld [vmem:[%s192 + $0xf0] sm:$0xff]
      %v340 = vld [vmem:[%s192 + $0xf8] sm:$0xff]
      %s341 = scalar_lea.vmem [#allocation2], 24
      %342 = vst.msk [vmem:[%s341 + $0x1] sm:$0xff] %vm199, %v309
      %343 = vst.msk [vmem:[%s341 + $0x9] sm:$0xff] %vm199, %v310
      %344 = vst.msk [vmem:[%s341 + $0x19] sm:$0xff] %vm199, %v311
      %345 = vst.msk [vmem:[%s341 + $0x21] sm:$0xff] %vm199, %v312
      %346 = vst.msk [vmem:[%s341 + $0x31] sm:$0xff] %vm199, %v313
      %347 = vst.msk [vmem:[%s341 + $0x39] sm:$0xff] %vm199, %v314
      %348 = vst.msk [vmem:[%s341 + $0x49] sm:$0xff] %vm199, %v315
      %349 = vst.msk [vmem:[%s341 + $0x51] sm:$0xff] %vm199, %v316
      %350 = vst.msk [vmem:[%s341 + $0x61] sm:$0xff] %vm199, %v317
      %351 = vst.msk [vmem:[%s341 + $0x69] sm:$0xff] %vm199, %v318
      %352 = vst.msk [vmem:[%s341 + $0x79] sm:$0xff] %vm199, %v319
      %353 = vst.msk [vmem:[%s341 + $0x81] sm:$0xff] %vm199, %v320
      %354 = vst.msk [vmem:[%s341 + $0x91] sm:$0xff] %vm199, %v321
      %355 = vst.msk [vmem:[%s341 + $0x99] sm:$0xff] %vm199, %v322
      %356 = vst.msk [vmem:[%s341 + $0xa9] sm:$0xff] %vm199, %v323
      %357 = vst.msk [vmem:[%s341 + $0xb1] sm:$0xff] %vm199, %v324
      %358 = vst.msk [vmem:[%s341 + $0xc1] sm:$0xff] %vm199, %v325
      %359 = vst.msk [vmem:[%s341 + $0xc9] sm:$0xff] %vm199, %v326
      %360 = vst.msk [vmem:[%s341 + $0xd9] sm:$0xff] %vm199, %v327
      %361 = vst.msk [vmem:[%s341 + $0xe1] sm:$0xff] %vm199, %v328
      %362 = vst.msk [vmem:[%s341 + $0xf1] sm:$0xff] %vm199, %v329
      %363 = vst.msk [vmem:[%s341 + $0xf9] sm:$0xff] %vm199, %v330
      %364 = vst.msk [vmem:[%s341 + $0x109] sm:$0xff] %vm199, %v331
      %365 = vst.msk [vmem:[%s341 + $0x111] sm:$0xff] %vm199, %v332
      %366 = vst.msk [vmem:[%s341 + $0x121] sm:$0xff] %vm199, %v333
      %367 = vst.msk [vmem:[%s341 + $0x129] sm:$0xff] %vm199, %v334
      %368 = vst.msk [vmem:[%s341 + $0x139] sm:$0xff] %vm199, %v335
      %369 = vst.msk [vmem:[%s341 + $0x141] sm:$0xff] %vm199, %v336
      %370 = vst.msk [vmem:[%s341 + $0x151] sm:$0xff] %vm199, %v337
      %371 = vst.msk [vmem:[%s341 + $0x159] sm:$0xff] %vm199, %v338
      %372 = vst.msk [vmem:[%s341 + $0x169] sm:$0xff] %vm199, %v339
      %373 = vst.msk [vmem:[%s341 + $0x171] sm:$0xff] %vm199, %v340
      %v374 = vld [vmem:[#allocation2] sm:$0xff]
      %v375 = vld [vmem:[#allocation2 + $0x8] sm:$0xff]
      %v376 = vld [vmem:[#allocation2 + $0x18] sm:$0xff]
      %v377 = vld [vmem:[#allocation2 + $0x20] sm:$0xff]
      %v378 = vld [vmem:[#allocation2 + $0x30] sm:$0xff]
      %v379 = vld [vmem:[#allocation2 + $0x38] sm:$0xff]
      %v380 = vld [vmem:[#allocation2 + $0x48] sm:$0xff]
      %v381 = vld [vmem:[#allocation2 + $0x50] sm:$0xff]
      %v382 = vld [vmem:[#allocation2 + $0x60] sm:$0xff]
      %v383 = vld [vmem:[#allocation2 + $0x68] sm:$0xff]
      %v384 = vld [vmem:[#allocation2 + $0x78] sm:$0xff]
      %v385 = vld [vmem:[#allocation2 + $0x80] sm:$0xff]
      %v386 = vld [vmem:[#allocation2 + $0x90] sm:$0xff]
      %v387 = vld [vmem:[#allocation2 + $0x98] sm:$0xff]
      %v388 = vld [vmem:[#allocation2 + $0xa8] sm:$0xff]
      %v389 = vld [vmem:[#allocation2 + $0xb0] sm:$0xff]
      %v390 = vld [vmem:[#allocation2 + $0xc0] sm:$0xff]
      %v391 = vld [vmem:[#allocation2 + $0xc8] sm:$0xff]
      %v392 = vld [vmem:[#allocation2 + $0xd8] sm:$0xff]
      %v393 = vld [vmem:[#allocation2 + $0xe0] sm:$0xff]
      %v394 = vld [vmem:[#allocation2 + $0xf0] sm:$0xff]
      %v395 = vld [vmem:[#allocation2 + $0xf8] sm:$0xff]
      %v396 = vld [vmem:[#allocation2 + $0x108] sm:$0xff]
      %v397 = vld [vmem:[#allocation2 + $0x110] sm:$0xff]
      %v398 = vld [vmem:[#allocation2 + $0x120] sm:$0xff]
      %v399 = vld [vmem:[#allocation2 + $0x128] sm:$0xff]
      %v400 = vld [vmem:[#allocation2 + $0x138] sm:$0xff]
      %v401 = vld [vmem:[#allocation2 + $0x140] sm:$0xff]
      %v402 = vld [vmem:[#allocation2 + $0x150] sm:$0xff]
      %v403 = vld [vmem:[#allocation2 + $0x158] sm:$0xff]
      %v404 = vld [vmem:[#allocation2 + $0x168] sm:$0xff]
      %v405 = vld [vmem:[#allocation2 + $0x170] sm:$0xff]
      %v406 = vpack.c.bf16 %v374, %v374
      %v407 = vpack.c.bf16 %v375, %v375
      %v408 = vpack.c.bf16 %v376, %v376
      %v409 = vpack.c.bf16 %v377, %v377
      %v410 = vpack.c.bf16 %v378, %v378
      %v411 = vpack.c.bf16 %v379, %v379
      %v412 = vpack.c.bf16 %v380, %v380
      %v413 = vpack.c.bf16 %v381, %v381
      %v414 = vpack.c.bf16 %v382, %v382
      %v415 = vpack.c.bf16 %v383, %v383
      %v416 = vpack.c.bf16 %v384, %v384
      %v417 = vpack.c.bf16 %v385, %v385
      %v418 = vpack.c.bf16 %v386, %v386
      %v419 = vpack.c.bf16 %v387, %v387
      %v420 = vpack.c.bf16 %v388, %v388
      %v421 = vpack.c.bf16 %v389, %v389
      %v422 = vpack.c.bf16 %v390, %v390
      %v423 = vpack.c.bf16 %v391, %v391
      %v424 = vpack.c.bf16 %v392, %v392
      %v425 = vpack.c.bf16 %v393, %v393
      %v426 = vpack.c.bf16 %v394, %v394
      %v427 = vpack.c.bf16 %v395, %v395
      %v428 = vpack.c.bf16 %v396, %v396
      %v429 = vpack.c.bf16 %v397, %v397
      %v430 = vpack.c.bf16 %v398, %v398
      %v431 = vpack.c.bf16 %v399, %v399
      %v432 = vpack.c.bf16 %v400, %v400
      %v433 = vpack.c.bf16 %v401, %v401
      %v434 = vpack.c.bf16 %v402, %v402
      %v435 = vpack.c.bf16 %v403, %v403
      %v436 = vpack.c.bf16 %v404, %v404
      %v437 = vpack.c.bf16 %v405, %v405
      %v438 = vld [vmem:[#allocation2 + $0x1] sm:$0xff]
      %v439 = vld [vmem:[#allocation2 + $0x9] sm:$0xff]
      %v440 = vld [vmem:[#allocation2 + $0x19] sm:$0xff]
      %v441 = vld [vmem:[#allocation2 + $0x21] sm:$0xff]
      %v442 = vld [vmem:[#allocation2 + $0x31] sm:$0xff]
      %v443 = vld [vmem:[#allocation2 + $0x39] sm:$0xff]
      %v444 = vld [vmem:[#allocation2 + $0x49] sm:$0xff]
      %v445 = vld [vmem:[#allocation2 + $0x51] sm:$0xff]
      %v446 = vld [vmem:[#allocation2 + $0x61] sm:$0xff]
      %v447 = vld [vmem:[#allocation2 + $0x69] sm:$0xff]
      %v448 = vld [vmem:[#allocation2 + $0x79] sm:$0xff]
      %v449 = vld [vmem:[#allocation2 + $0x81] sm:$0xff]
      %v450 = vld [vmem:[#allocation2 + $0x91] sm:$0xff]
      %v451 = vld [vmem:[#allocation2 + $0x99] sm:$0xff]
      %v452 = vld [vmem:[#allocation2 + $0xa9] sm:$0xff]
      %v453 = vld [vmem:[#allocation2 + $0xb1] sm:$0xff]
      %v454 = vld [vmem:[#allocation2 + $0xc1] sm:$0xff]
      %v455 = vld [vmem:[#allocation2 + $0xc9] sm:$0xff]
      %v456 = vld [vmem:[#allocation2 + $0xd9] sm:$0xff]
      %v457 = vld [vmem:[#allocation2 + $0xe1] sm:$0xff]
      %v458 = vld [vmem:[#allocation2 + $0xf1] sm:$0xff]
      %v459 = vld [vmem:[#allocation2 + $0xf9] sm:$0xff]
      %v460 = vld [vmem:[#allocation2 + $0x109] sm:$0xff]
      %v461 = vld [vmem:[#allocation2 + $0x111] sm:$0xff]
      %v462 = vld [vmem:[#allocation2 + $0x121] sm:$0xff]
      %v463 = vld [vmem:[#allocation2 + $0x129] sm:$0xff]
      %v464 = vld [vmem:[#allocation2 + $0x139] sm:$0xff]
      %v465 = vld [vmem:[#allocation2 + $0x141] sm:$0xff]
      %v466 = vld [vmem:[#allocation2 + $0x151] sm:$0xff]
      %v467 = vld [vmem:[#allocation2 + $0x159] sm:$0xff]
      %v468 = vld [vmem:[#allocation2 + $0x169] sm:$0xff]
      %v469 = vld [vmem:[#allocation2 + $0x171] sm:$0xff]
      %v470 = vpack.c.bf16 %v438, %v438
      %v471 = vpack.c.bf16 %v439, %v439
      %v472 = vpack.c.bf16 %v440, %v440
      %v473 = vpack.c.bf16 %v441, %v441
      %v474 = vpack.c.bf16 %v442, %v442
      %v475 = vpack.c.bf16 %v443, %v443
      %v476 = vpack.c.bf16 %v444, %v444
      %v477 = vpack.c.bf16 %v445, %v445
      %v478 = vpack.c.bf16 %v446, %v446
      %v479 = vpack.c.bf16 %v447, %v447
      %v480 = vpack.c.bf16 %v448, %v448
      %v481 = vpack.c.bf16 %v449, %v449
      %v482 = vpack.c.bf16 %v450, %v450
      %v483 = vpack.c.bf16 %v451, %v451
      %v484 = vpack.c.bf16 %v452, %v452
      %v485 = vpack.c.bf16 %v453, %v453
      %v486 = vpack.c.bf16 %v454, %v454
      %v487 = vpack.c.bf16 %v455, %v455
      %v488 = vpack.c.bf16 %v456, %v456
      %v489 = vpack.c.bf16 %v457, %v457
      %v490 = vpack.c.bf16 %v458, %v458
      %v491 = vpack.c.bf16 %v459, %v459
      %v492 = vpack.c.bf16 %v460, %v460
      %v493 = vpack.c.bf16 %v461, %v461
      %v494 = vpack.c.bf16 %v462, %v462
      %v495 = vpack.c.bf16 %v463, %v463
      %v496 = vpack.c.bf16 %v464, %v464
      %v497 = vpack.c.bf16 %v465, %v465
      %v498 = vpack.c.bf16 %v466, %v466
      %v499 = vpack.c.bf16 %v467, %v467
      %v500 = vpack.c.bf16 %v468, %v468
      %v501 = vpack.c.bf16 %v469, %v469
      %v502 = vld [vmem:[#allocation2 + $0x2] sm:$0xff]
      %v503 = vld [vmem:[#allocation2 + $0xa] sm:$0xff]
      %v504 = vld [vmem:[#allocation2 + $0x1a] sm:$0xff]
      %v505 = vld [vmem:[#allocation2 + $0x22] sm:$0xff]
      %v506 = vld [vmem:[#allocation2 + $0x32] sm:$0xff]
      %v507 = vld [vmem:[#allocation2 + $0x3a] sm:$0xff]
      %v508 = vld [vmem:[#allocation2 + $0x4a] sm:$0xff]
      %v509 = vld [vmem:[#allocation2 + $0x52] sm:$0xff]
      %v510 = vld [vmem:[#allocation2 + $0x62] sm:$0xff]
      %v511 = vld [vmem:[#allocation2 + $0x6a] sm:$0xff]
      %v512 = vld [vmem:[#allocation2 + $0x7a] sm:$0xff]
      %v513 = vld [vmem:[#allocation2 + $0x82] sm:$0xff]
      %v514 = vld [vmem:[#allocation2 + $0x92] sm:$0xff]
      %v515 = vld [vmem:[#allocation2 + $0x9a] sm:$0xff]
      %v516 = vld [vmem:[#allocation2 + $0xaa] sm:$0xff]
      %v517 = vld [vmem:[#allocation2 + $0xb2] sm:$0xff]
      %v518 = vld [vmem:[#allocation2 + $0xc2] sm:$0xff]
      %v519 = vld [vmem:[#allocation2 + $0xca] sm:$0xff]
      %v520 = vld [vmem:[#allocation2 + $0xda] sm:$0xff]
      %v521 = vld [vmem:[#allocation2 + $0xe2] sm:$0xff]
      %v522 = vld [vmem:[#allocation2 + $0xf2] sm:$0xff]
      %v523 = vld [vmem:[#allocation2 + $0xfa] sm:$0xff]
      %v524 = vld [vmem:[#allocation2 + $0x10a] sm:$0xff]
      %v525 = vld [vmem:[#allocation2 + $0x112] sm:$0xff]
      %v526 = vld [vmem:[#allocation2 + $0x122] sm:$0xff]
      %v527 = vld [vmem:[#allocation2 + $0x12a] sm:$0xff]
      %v528 = vld [vmem:[#allocation2 + $0x13a] sm:$0xff]
      %v529 = vld [vmem:[#allocation2 + $0x142] sm:$0xff]
      %v530 = vld [vmem:[#allocation2 + $0x152] sm:$0xff]
      %v531 = vld [vmem:[#allocation2 + $0x15a] sm:$0xff]
      %v532 = vld [vmem:[#allocation2 + $0x16a] sm:$0xff]
      %v533 = vld [vmem:[#allocation2 + $0x172] sm:$0xff]
      %v534 = vpack.c.bf16 %v502, %v502
      %v535 = vpack.c.bf16 %v503, %v503
      %v536 = vpack.c.bf16 %v504, %v504
      %v537 = vpack.c.bf16 %v505, %v505
      %v538 = vpack.c.bf16 %v506, %v506
      %v539 = vpack.c.bf16 %v507, %v507
      %v540 = vpack.c.bf16 %v508, %v508
      %v541 = vpack.c.bf16 %v509, %v509
      %v542 = vpack.c.bf16 %v510, %v510
      %v543 = vpack.c.bf16 %v511, %v511
      %v544 = vpack.c.bf16 %v512, %v512
      %v545 = vpack.c.bf16 %v513, %v513
      %v546 = vpack.c.bf16 %v514, %v514
      %v547 = vpack.c.bf16 %v515, %v515
      %v548 = vpack.c.bf16 %v516, %v516
      %v549 = vpack.c.bf16 %v517, %v517
      %v550 = vpack.c.bf16 %v518, %v518
      %v551 = vpack.c.bf16 %v519, %v519
      %v552 = vpack.c.bf16 %v520, %v520
      %v553 = vpack.c.bf16 %v521, %v521
      %v554 = vpack.c.bf16 %v522, %v522
      %v555 = vpack.c.bf16 %v523, %v523
      %v556 = vpack.c.bf16 %v524, %v524
      %v557 = vpack.c.bf16 %v525, %v525
      %v558 = vpack.c.bf16 %v526, %v526
      %v559 = vpack.c.bf16 %v527, %v527
      %v560 = vpack.c.bf16 %v528, %v528
      %v561 = vpack.c.bf16 %v529, %v529
      %v562 = vpack.c.bf16 %v530, %v530
      %v563 = vpack.c.bf16 %v531, %v531
      %v564 = vpack.c.bf16 %v532, %v532
      %v565 = vpack.c.bf16 %v533, %v533
      %v566 = vld [vmem:[%s341] sm:$0xff]
      %v567 = vld [vmem:[%s341 + $0x8] sm:$0xff]
      %v568 = vld [vmem:[%s341 + $0x18] sm:$0xff]
      %v569 = vld [vmem:[%s341 + $0x20] sm:$0xff]
      %v570 = vld [vmem:[%s341 + $0x30] sm:$0xff]
      %v571 = vld [vmem:[%s341 + $0x38] sm:$0xff]
      %v572 = vld [vmem:[%s341 + $0x48] sm:$0xff]
      %v573 = vld [vmem:[%s341 + $0x50] sm:$0xff]
      %v574 = vld [vmem:[%s341 + $0x60] sm:$0xff]
      %v575 = vld [vmem:[%s341 + $0x68] sm:$0xff]
      %v576 = vld [vmem:[%s341 + $0x78] sm:$0xff]
      %v577 = vld [vmem:[%s341 + $0x80] sm:$0xff]
      %v578 = vld [vmem:[%s341 + $0x90] sm:$0xff]
      %v579 = vld [vmem:[%s341 + $0x98] sm:$0xff]
      %v580 = vld [vmem:[%s341 + $0xa8] sm:$0xff]
      %v581 = vld [vmem:[%s341 + $0xb0] sm:$0xff]
      %v582 = vld [vmem:[%s341 + $0xc0] sm:$0xff]
      %v583 = vld [vmem:[%s341 + $0xc8] sm:$0xff]
      %v584 = vld [vmem:[%s341 + $0xd8] sm:$0xff]
      %v585 = vld [vmem:[%s341 + $0xe0] sm:$0xff]
      %v586 = vld [vmem:[%s341 + $0xf0] sm:$0xff]
      %v587 = vld [vmem:[%s341 + $0xf8] sm:$0xff]
      %v588 = vld [vmem:[%s341 + $0x108] sm:$0xff]
      %v589 = vld [vmem:[%s341 + $0x110] sm:$0xff]
      %v590 = vld [vmem:[%s341 + $0x120] sm:$0xff]
      %v591 = vld [vmem:[%s341 + $0x128] sm:$0xff]
      %v592 = vld [vmem:[%s341 + $0x138] sm:$0xff]
      %v593 = vld [vmem:[%s341 + $0x140] sm:$0xff]
      %v594 = vld [vmem:[%s341 + $0x150] sm:$0xff]
      %v595 = vld [vmem:[%s341 + $0x158] sm:$0xff]
      %v596 = vld [vmem:[%s341 + $0x168] sm:$0xff]
      %v597 = vld [vmem:[%s341 + $0x170] sm:$0xff]
      %v598 = vpack.c.bf16 %v566, %v566
      %v599 = vpack.c.bf16 %v567, %v567
      %v600 = vpack.c.bf16 %v568, %v568
      %v601 = vpack.c.bf16 %v569, %v569
      %v602 = vpack.c.bf16 %v570, %v570
      %v603 = vpack.c.bf16 %v571, %v571
      %v604 = vpack.c.bf16 %v572, %v572
      %v605 = vpack.c.bf16 %v573, %v573
      %v606 = vpack.c.bf16 %v574, %v574
      %v607 = vpack.c.bf16 %v575, %v575
      %v608 = vpack.c.bf16 %v576, %v576
      %v609 = vpack.c.bf16 %v577, %v577
      %v610 = vpack.c.bf16 %v578, %v578
      %v611 = vpack.c.bf16 %v579, %v579
      %v612 = vpack.c.bf16 %v580, %v580
      %v613 = vpack.c.bf16 %v581, %v581
      %v614 = vpack.c.bf16 %v582, %v582
      %v615 = vpack.c.bf16 %v583, %v583
      %v616 = vpack.c.bf16 %v584, %v584
      %v617 = vpack.c.bf16 %v585, %v585
      %v618 = vpack.c.bf16 %v586, %v586
      %v619 = vpack.c.bf16 %v587, %v587
      %v620 = vpack.c.bf16 %v588, %v588
      %v621 = vpack.c.bf16 %v589, %v589
      %v622 = vpack.c.bf16 %v590, %v590
      %v623 = vpack.c.bf16 %v591, %v591
      %v624 = vpack.c.bf16 %v592, %v592
      %v625 = vpack.c.bf16 %v593, %v593
      %v626 = vpack.c.bf16 %v594, %v594
      %v627 = vpack.c.bf16 %v595, %v595
      %v628 = vpack.c.bf16 %v596, %v596
      %v629 = vpack.c.bf16 %v597, %v597
      %v630 = vld [vmem:[%s341 + $0x1] sm:$0xff]
      %v631 = vld [vmem:[%s341 + $0x9] sm:$0xff]
      %v632 = vld [vmem:[%s341 + $0x19] sm:$0xff]
      %v633 = vld [vmem:[%s341 + $0x21] sm:$0xff]
      %v634 = vld [vmem:[%s341 + $0x31] sm:$0xff]
      %v635 = vld [vmem:[%s341 + $0x39] sm:$0xff]
      %v636 = vld [vmem:[%s341 + $0x49] sm:$0xff]
      %v637 = vld [vmem:[%s341 + $0x51] sm:$0xff]
      %v638 = vld [vmem:[%s341 + $0x61] sm:$0xff]
      %v639 = vld [vmem:[%s341 + $0x69] sm:$0xff]
      %v640 = vld [vmem:[%s341 + $0x79] sm:$0xff]
      %v641 = vld [vmem:[%s341 + $0x81] sm:$0xff]
      %v642 = vld [vmem:[%s341 + $0x91] sm:$0xff]
      %v643 = vld [vmem:[%s341 + $0x99] sm:$0xff]
      %v644 = vld [vmem:[%s341 + $0xa9] sm:$0xff]
      %v645 = vld [vmem:[%s341 + $0xb1] sm:$0xff]
      %v646 = vld [vmem:[%s341 + $0xc1] sm:$0xff]
      %v647 = vld [vmem:[%s341 + $0xc9] sm:$0xff]
      %v648 = vld [vmem:[%s341 + $0xd9] sm:$0xff]
      %v649 = vld [vmem:[%s341 + $0xe1] sm:$0xff]
      %v650 = vld [vmem:[%s341 + $0xf1] sm:$0xff]
      %v651 = vld [vmem:[%s341 + $0xf9] sm:$0xff]
      %v652 = vld [vmem:[%s341 + $0x109] sm:$0xff]
      %v653 = vld [vmem:[%s341 + $0x111] sm:$0xff]
      %v654 = vld [vmem:[%s341 + $0x121] sm:$0xff]
      %v655 = vld [vmem:[%s341 + $0x129] sm:$0xff]
      %v656 = vld [vmem:[%s341 + $0x139] sm:$0xff]
      %v657 = vld [vmem:[%s341 + $0x141] sm:$0xff]
      %v658 = vld [vmem:[%s341 + $0x151] sm:$0xff]
      %v659 = vld [vmem:[%s341 + $0x159] sm:$0xff]
      %v660 = vld [vmem:[%s341 + $0x169] sm:$0xff]
      %v661 = vld [vmem:[%s341 + $0x171] sm:$0xff]
      %v662 = vpack.c.bf16 %v630, %v630
      %v663 = vpack.c.bf16 %v631, %v631
      %v664 = vpack.c.bf16 %v632, %v632
      %v665 = vpack.c.bf16 %v633, %v633
      %v666 = vpack.c.bf16 %v634, %v634
      %v667 = vpack.c.bf16 %v635, %v635
      %v668 = vpack.c.bf16 %v636, %v636
      %v669 = vpack.c.bf16 %v637, %v637
      %v670 = vpack.c.bf16 %v638, %v638
      %v671 = vpack.c.bf16 %v639, %v639
      %v672 = vpack.c.bf16 %v640, %v640
      %v673 = vpack.c.bf16 %v641, %v641
      %v674 = vpack.c.bf16 %v642, %v642
      %v675 = vpack.c.bf16 %v643, %v643
      %v676 = vpack.c.bf16 %v644, %v644
      %v677 = vpack.c.bf16 %v645, %v645
      %v678 = vpack.c.bf16 %v646, %v646
      %v679 = vpack.c.bf16 %v647, %v647
      %v680 = vpack.c.bf16 %v648, %v648
      %v681 = vpack.c.bf16 %v649, %v649
      %v682 = vpack.c.bf16 %v650, %v650
      %v683 = vpack.c.bf16 %v651, %v651
      %v684 = vpack.c.bf16 %v652, %v652
      %v685 = vpack.c.bf16 %v653, %v653
      %v686 = vpack.c.bf16 %v654, %v654
      %v687 = vpack.c.bf16 %v655, %v655
      %v688 = vpack.c.bf16 %v656, %v656
      %v689 = vpack.c.bf16 %v657, %v657
      %v690 = vpack.c.bf16 %v658, %v658
      %v691 = vpack.c.bf16 %v659, %v659
      %v692 = vpack.c.bf16 %v660, %v660
      %v693 = vpack.c.bf16 %v661, %v661
      %v694 = vld [vmem:[%s341 + $0x2] sm:$0xff]
      %v695 = vld [vmem:[%s341 + $0xa] sm:$0xff]
      %v696 = vld [vmem:[%s341 + $0x1a] sm:$0xff]
      %v697 = vld [vmem:[%s341 + $0x22] sm:$0xff]
      %v698 = vld [vmem:[%s341 + $0x32] sm:$0xff]
      %v699 = vld [vmem:[%s341 + $0x3a] sm:$0xff]
      %v700 = vld [vmem:[%s341 + $0x4a] sm:$0xff]
      %v701 = vld [vmem:[%s341 + $0x52] sm:$0xff]
      %v702 = vld [vmem:[%s341 + $0x62] sm:$0xff]
      %v703 = vld [vmem:[%s341 + $0x6a] sm:$0xff]
      %v704 = vld [vmem:[%s341 + $0x7a] sm:$0xff]
      %v705 = vld [vmem:[%s341 + $0x82] sm:$0xff]
      %v706 = vld [vmem:[%s341 + $0x92] sm:$0xff]
      %v707 = vld [vmem:[%s341 + $0x9a] sm:$0xff]
      %v708 = vld [vmem:[%s341 + $0xaa] sm:$0xff]
      %v709 = vld [vmem:[%s341 + $0xb2] sm:$0xff]
      %v710 = vld [vmem:[%s341 + $0xc2] sm:$0xff]
      %v711 = vld [vmem:[%s341 + $0xca] sm:$0xff]
      %v712 = vld [vmem:[%s341 + $0xda] sm:$0xff]
      %v713 = vld [vmem:[%s341 + $0xe2] sm:$0xff]
      %v714 = vld [vmem:[%s341 + $0xf2] sm:$0xff]
      %v715 = vld [vmem:[%s341 + $0xfa] sm:$0xff]
      %v716 = vld [vmem:[%s341 + $0x10a] sm:$0xff]
      %v717 = vld [vmem:[%s341 + $0x112] sm:$0xff]
      %v718 = vld [vmem:[%s341 + $0x122] sm:$0xff]
      %v719 = vld [vmem:[%s341 + $0x12a] sm:$0xff]
      %v720 = vld [vmem:[%s341 + $0x13a] sm:$0xff]
      %v721 = vld [vmem:[%s341 + $0x142] sm:$0xff]
      %v722 = vld [vmem:[%s341 + $0x152] sm:$0xff]
      %v723 = vld [vmem:[%s341 + $0x15a] sm:$0xff]
      %v724 = vld [vmem:[%s341 + $0x16a] sm:$0xff]
      %v725 = vld [vmem:[%s341 + $0x172] sm:$0xff]
      %v726 = vpack.c.bf16 %v694, %v694
      %v727 = vpack.c.bf16 %v695, %v695
      %v728 = vpack.c.bf16 %v696, %v696
      %v729 = vpack.c.bf16 %v697, %v697
      %v730 = vpack.c.bf16 %v698, %v698
      %v731 = vpack.c.bf16 %v699, %v699
      %v732 = vpack.c.bf16 %v700, %v700
      %v733 = vpack.c.bf16 %v701, %v701
      %v734 = vpack.c.bf16 %v702, %v702
      %v735 = vpack.c.bf16 %v703, %v703
      %v736 = vpack.c.bf16 %v704, %v704
      %v737 = vpack.c.bf16 %v705, %v705
      %v738 = vpack.c.bf16 %v706, %v706
      %v739 = vpack.c.bf16 %v707, %v707
      %v740 = vpack.c.bf16 %v708, %v708
      %v741 = vpack.c.bf16 %v709, %v709
      %v742 = vpack.c.bf16 %v710, %v710
      %v743 = vpack.c.bf16 %v711, %v711
      %v744 = vpack.c.bf16 %v712, %v712
      %v745 = vpack.c.bf16 %v713, %v713
      %v746 = vpack.c.bf16 %v714, %v714
      %v747 = vpack.c.bf16 %v715, %v715
      %v748 = vpack.c.bf16 %v716, %v716
      %v749 = vpack.c.bf16 %v717, %v717
      %v750 = vpack.c.bf16 %v718, %v718
      %v751 = vpack.c.bf16 %v719, %v719
      %v752 = vpack.c.bf16 %v720, %v720
      %v753 = vpack.c.bf16 %v721, %v721
      %v754 = vpack.c.bf16 %v722, %v722
      %v755 = vpack.c.bf16 %v723, %v723
      %v756 = vpack.c.bf16 %v724, %v724
      %v757 = vpack.c.bf16 %v725, %v725
      %s758 = scalar_lea.vmem [#allocation2], 48
      %v759 = vld [vmem:[%s758] sm:$0xff]
      %v760 = vld [vmem:[%s758 + $0x8] sm:$0xff]
      %v761 = vld [vmem:[%s758 + $0x18] sm:$0xff]
      %v762 = vld [vmem:[%s758 + $0x20] sm:$0xff]
      %v763 = vld [vmem:[%s758 + $0x30] sm:$0xff]
      %v764 = vld [vmem:[%s758 + $0x38] sm:$0xff]
      %v765 = vld [vmem:[%s758 + $0x48] sm:$0xff]
      %v766 = vld [vmem:[%s758 + $0x50] sm:$0xff]
      %v767 = vld [vmem:[%s758 + $0x60] sm:$0xff]
      %v768 = vld [vmem:[%s758 + $0x68] sm:$0xff]
      %v769 = vld [vmem:[%s758 + $0x78] sm:$0xff]
      %v770 = vld [vmem:[%s758 + $0x80] sm:$0xff]
      %v771 = vld [vmem:[%s758 + $0x90] sm:$0xff]
      %v772 = vld [vmem:[%s758 + $0x98] sm:$0xff]
      %v773 = vld [vmem:[%s758 + $0xa8] sm:$0xff]
      %v774 = vld [vmem:[%s758 + $0xb0] sm:$0xff]
      %v775 = vld [vmem:[%s758 + $0xc0] sm:$0xff]
      %v776 = vld [vmem:[%s758 + $0xc8] sm:$0xff]
      %v777 = vld [vmem:[%s758 + $0xd8] sm:$0xff]
      %v778 = vld [vmem:[%s758 + $0xe0] sm:$0xff]
      %v779 = vld [vmem:[%s758 + $0xf0] sm:$0xff]
      %v780 = vld [vmem:[%s758 + $0xf8] sm:$0xff]
      %v781 = vld [vmem:[%s758 + $0x108] sm:$0xff]
      %v782 = vld [vmem:[%s758 + $0x110] sm:$0xff]
      %v783 = vld [vmem:[%s758 + $0x120] sm:$0xff]
      %v784 = vld [vmem:[%s758 + $0x128] sm:$0xff]
      %v785 = vld [vmem:[%s758 + $0x138] sm:$0xff]
      %v786 = vld [vmem:[%s758 + $0x140] sm:$0xff]
      %v787 = vld [vmem:[%s758 + $0x150] sm:$0xff]
      %v788 = vld [vmem:[%s758 + $0x158] sm:$0xff]
      %v789 = vld [vmem:[%s758 + $0x168] sm:$0xff]
      %v790 = vld [vmem:[%s758 + $0x170] sm:$0xff]
      %v791 = vpack.c.bf16 %v759, %v759
      %v792 = vpack.c.bf16 %v760, %v760
      %v793 = vpack.c.bf16 %v761, %v761
      %v794 = vpack.c.bf16 %v762, %v762
      %v795 = vpack.c.bf16 %v763, %v763
      %v796 = vpack.c.bf16 %v764, %v764
      %v797 = vpack.c.bf16 %v765, %v765
      %v798 = vpack.c.bf16 %v766, %v766
      %v799 = vpack.c.bf16 %v767, %v767
      %v800 = vpack.c.bf16 %v768, %v768
      %v801 = vpack.c.bf16 %v769, %v769
      %v802 = vpack.c.bf16 %v770, %v770
      %v803 = vpack.c.bf16 %v771, %v771
      %v804 = vpack.c.bf16 %v772, %v772
      %v805 = vpack.c.bf16 %v773, %v773
      %v806 = vpack.c.bf16 %v774, %v774
      %v807 = vpack.c.bf16 %v775, %v775
      %v808 = vpack.c.bf16 %v776, %v776
      %v809 = vpack.c.bf16 %v777, %v777
      %v810 = vpack.c.bf16 %v778, %v778
      %v811 = vpack.c.bf16 %v779, %v779
      %v812 = vpack.c.bf16 %v780, %v780
      %v813 = vpack.c.bf16 %v781, %v781
      %v814 = vpack.c.bf16 %v782, %v782
      %v815 = vpack.c.bf16 %v783, %v783
      %v816 = vpack.c.bf16 %v784, %v784
      %v817 = vpack.c.bf16 %v785, %v785
      %v818 = vpack.c.bf16 %v786, %v786
      %v819 = vpack.c.bf16 %v787, %v787
      %v820 = vpack.c.bf16 %v788, %v788
      %v821 = vpack.c.bf16 %v789, %v789
      %v822 = vpack.c.bf16 %v790, %v790
      %v823 = vld [vmem:[%s758 + $0x1] sm:$0xff]
      %v824 = vld [vmem:[%s758 + $0x9] sm:$0xff]
      %v825 = vld [vmem:[%s758 + $0x19] sm:$0xff]
      %v826 = vld [vmem:[%s758 + $0x21] sm:$0xff]
      %v827 = vld [vmem:[%s758 + $0x31] sm:$0xff]
      %v828 = vld [vmem:[%s758 + $0x39] sm:$0xff]
      %v829 = vld [vmem:[%s758 + $0x49] sm:$0xff]
      %v830 = vld [vmem:[%s758 + $0x51] sm:$0xff]
      %v831 = vld [vmem:[%s758 + $0x61] sm:$0xff]
      %v832 = vld [vmem:[%s758 + $0x69] sm:$0xff]
      %v833 = vld [vmem:[%s758 + $0x79] sm:$0xff]
      %v834 = vld [vmem:[%s758 + $0x81] sm:$0xff]
      %v835 = vld [vmem:[%s758 + $0x91] sm:$0xff]
      %v836 = vld [vmem:[%s758 + $0x99] sm:$0xff]
      %v837 = vld [vmem:[%s758 + $0xa9] sm:$0xff]
      %v838 = vld [vmem:[%s758 + $0xb1] sm:$0xff]
      %v839 = vld [vmem:[%s758 + $0xc1] sm:$0xff]
      %v840 = vld [vmem:[%s758 + $0xc9] sm:$0xff]
      %v841 = vld [vmem:[%s758 + $0xd9] sm:$0xff]
      %v842 = vld [vmem:[%s758 + $0xe1] sm:$0xff]
      %v843 = vld [vmem:[%s758 + $0xf1] sm:$0xff]
      %v844 = vld [vmem:[%s758 + $0xf9] sm:$0xff]
      %v845 = vld [vmem:[%s758 + $0x109] sm:$0xff]
      %v846 = vld [vmem:[%s758 + $0x111] sm:$0xff]
      %v847 = vld [vmem:[%s758 + $0x121] sm:$0xff]
      %v848 = vld [vmem:[%s758 + $0x129] sm:$0xff]
      %v849 = vld [vmem:[%s758 + $0x139] sm:$0xff]
      %v850 = vld [vmem:[%s758 + $0x141] sm:$0xff]
      %v851 = vld [vmem:[%s758 + $0x151] sm:$0xff]
      %v852 = vld [vmem:[%s758 + $0x159] sm:$0xff]
      %v853 = vld [vmem:[%s758 + $0x169] sm:$0xff]
      %v854 = vld [vmem:[%s758 + $0x171] sm:$0xff]
      %v855 = vpack.c.bf16 %v823, %v823
      %v856 = vpack.c.bf16 %v824, %v824
      %v857 = vpack.c.bf16 %v825, %v825
      %v858 = vpack.c.bf16 %v826, %v826
      %v859 = vpack.c.bf16 %v827, %v827
      %v860 = vpack.c.bf16 %v828, %v828
      %v861 = vpack.c.bf16 %v829, %v829
      %v862 = vpack.c.bf16 %v830, %v830
      %v863 = vpack.c.bf16 %v831, %v831
      %v864 = vpack.c.bf16 %v832, %v832
      %v865 = vpack.c.bf16 %v833, %v833
      %v866 = vpack.c.bf16 %v834, %v834
      %v867 = vpack.c.bf16 %v835, %v835
      %v868 = vpack.c.bf16 %v836, %v836
      %v869 = vpack.c.bf16 %v837, %v837
      %v870 = vpack.c.bf16 %v838, %v838
      %v871 = vpack.c.bf16 %v839, %v839
      %v872 = vpack.c.bf16 %v840, %v840
      %v873 = vpack.c.bf16 %v841, %v841
      %v874 = vpack.c.bf16 %v842, %v842
      %v875 = vpack.c.bf16 %v843, %v843
      %v876 = vpack.c.bf16 %v844, %v844
      %v877 = vpack.c.bf16 %v845, %v845
      %v878 = vpack.c.bf16 %v846, %v846
      %v879 = vpack.c.bf16 %v847, %v847
      %v880 = vpack.c.bf16 %v848, %v848
      %v881 = vpack.c.bf16 %v849, %v849
      %v882 = vpack.c.bf16 %v850, %v850
      %v883 = vpack.c.bf16 %v851, %v851
      %v884 = vpack.c.bf16 %v852, %v852
      %v885 = vpack.c.bf16 %v853, %v853
      %v886 = vpack.c.bf16 %v854, %v854
      %v887 = vld [vmem:[%s758 + $0x2] sm:$0xff]
      %v888 = vld [vmem:[%s758 + $0xa] sm:$0xff]
      %v889 = vld [vmem:[%s758 + $0x1a] sm:$0xff]
      %v890 = vld [vmem:[%s758 + $0x22] sm:$0xff]
      %v891 = vld [vmem:[%s758 + $0x32] sm:$0xff]
      %v892 = vld [vmem:[%s758 + $0x3a] sm:$0xff]
      %v893 = vld [vmem:[%s758 + $0x4a] sm:$0xff]
      %v894 = vld [vmem:[%s758 + $0x52] sm:$0xff]
      %v895 = vld [vmem:[%s758 + $0x62] sm:$0xff]
      %v896 = vld [vmem:[%s758 + $0x6a] sm:$0xff]
      %v897 = vld [vmem:[%s758 + $0x7a] sm:$0xff]
      %v898 = vld [vmem:[%s758 + $0x82] sm:$0xff]
      %v899 = vld [vmem:[%s758 + $0x92] sm:$0xff]
      %v900 = vld [vmem:[%s758 + $0x9a] sm:$0xff]
      %v901 = vld [vmem:[%s758 + $0xaa] sm:$0xff]
      %v902 = vld [vmem:[%s758 + $0xb2] sm:$0xff]
      %v903 = vld [vmem:[%s758 + $0xc2] sm:$0xff]
      %v904 = vld [vmem:[%s758 + $0xca] sm:$0xff]
      %v905 = vld [vmem:[%s758 + $0xda] sm:$0xff]
      %v906 = vld [vmem:[%s758 + $0xe2] sm:$0xff]
      %v907 = vld [vmem:[%s758 + $0xf2] sm:$0xff]
      %v908 = vld [vmem:[%s758 + $0xfa] sm:$0xff]
      %v909 = vld [vmem:[%s758 + $0x10a] sm:$0xff]
      %v910 = vld [vmem:[%s758 + $0x112] sm:$0xff]
      %v911 = vld [vmem:[%s758 + $0x122] sm:$0xff]
      %v912 = vld [vmem:[%s758 + $0x12a] sm:$0xff]
      %v913 = vld [vmem:[%s758 + $0x13a] sm:$0xff]
      %v914 = vld [vmem:[%s758 + $0x142] sm:$0xff]
      %v915 = vld [vmem:[%s758 + $0x152] sm:$0xff]
      %v916 = vld [vmem:[%s758 + $0x15a] sm:$0xff]
      %v917 = vld [vmem:[%s758 + $0x16a] sm:$0xff]
      %v918 = vld [vmem:[%s758 + $0x172] sm:$0xff]
      %v919 = vpack.c.bf16 %v887, %v887
      %v920 = vpack.c.bf16 %v888, %v888
      %v921 = vpack.c.bf16 %v889, %v889
      %v922 = vpack.c.bf16 %v890, %v890
      %v923 = vpack.c.bf16 %v891, %v891
      %v924 = vpack.c.bf16 %v892, %v892
      %v925 = vpack.c.bf16 %v893, %v893
      %v926 = vpack.c.bf16 %v894, %v894
      %v927 = vpack.c.bf16 %v895, %v895
      %v928 = vpack.c.bf16 %v896, %v896
      %v929 = vpack.c.bf16 %v897, %v897
      %v930 = vpack.c.bf16 %v898, %v898
      %v931 = vpack.c.bf16 %v899, %v899
      %v932 = vpack.c.bf16 %v900, %v900
      %v933 = vpack.c.bf16 %v901, %v901
      %v934 = vpack.c.bf16 %v902, %v902
      %v935 = vpack.c.bf16 %v903, %v903
      %v936 = vpack.c.bf16 %v904, %v904
      %v937 = vpack.c.bf16 %v905, %v905
      %v938 = vpack.c.bf16 %v906, %v906
      %v939 = vpack.c.bf16 %v907, %v907
      %v940 = vpack.c.bf16 %v908, %v908
      %v941 = vpack.c.bf16 %v909, %v909
      %v942 = vpack.c.bf16 %v910, %v910
      %v943 = vpack.c.bf16 %v911, %v911
      %v944 = vpack.c.bf16 %v912, %v912
      %v945 = vpack.c.bf16 %v913, %v913
      %v946 = vpack.c.bf16 %v914, %v914
      %v947 = vpack.c.bf16 %v915, %v915
      %v948 = vpack.c.bf16 %v916, %v916
      %v949 = vpack.c.bf16 %v917, %v917
      %v950 = vpack.c.bf16 %v918, %v918
      %v983 = vunpack.c.l.b16 %v406
      %v984 = vunpack.c.l.b16 %v407
      %v985 = vunpack.c.l.b16 %v408
      %v986 = vunpack.c.l.b16 %v409
      %v987 = vunpack.c.l.b16 %v410
      %v988 = vunpack.c.l.b16 %v411
      %v989 = vunpack.c.l.b16 %v412
      %v990 = vunpack.c.l.b16 %v413
      %v991 = vunpack.c.l.b16 %v414
      %v992 = vunpack.c.l.b16 %v415
      %v993 = vunpack.c.l.b16 %v416
      %v994 = vunpack.c.l.b16 %v417
      %v995 = vunpack.c.l.b16 %v418
      %v996 = vunpack.c.l.b16 %v419
      %v997 = vunpack.c.l.b16 %v420
      %v998 = vunpack.c.l.b16 %v421
      %v999 = vunpack.c.l.b16 %v422
      %v1000 = vunpack.c.l.b16 %v423
      %v1001 = vunpack.c.l.b16 %v424
      %v1002 = vunpack.c.l.b16 %v425
      %v1003 = vunpack.c.l.b16 %v426
      %v1004 = vunpack.c.l.b16 %v427
      %v1005 = vunpack.c.l.b16 %v428
      %v1006 = vunpack.c.l.b16 %v429
      %v1007 = vunpack.c.l.b16 %v430
      %v1008 = vunpack.c.l.b16 %v431
      %v1009 = vunpack.c.l.b16 %v432
      %v1010 = vunpack.c.l.b16 %v433
      %v1011 = vunpack.c.l.b16 %v434
      %v1012 = vunpack.c.l.b16 %v435
      %v1013 = vunpack.c.l.b16 %v436
      %v1014 = vunpack.c.l.b16 %v437
      %v1015 = vpack.c.b16 %v984, %v983
      %v1016 = vpack.c.b16 %v986, %v985
      %v1017 = vpack.c.b16 %v988, %v987
      %v1018 = vpack.c.b16 %v990, %v989
      %v1019 = vpack.c.b16 %v992, %v991
      %v1020 = vpack.c.b16 %v994, %v993
      %v1021 = vpack.c.b16 %v996, %v995
      %v1022 = vpack.c.b16 %v998, %v997
      %v1023 = vpack.c.b16 %v1000, %v999
      %v1024 = vpack.c.b16 %v1002, %v1001
      %v1025 = vpack.c.b16 %v1004, %v1003
      %v1026 = vpack.c.b16 %v1006, %v1005
      %v1027 = vpack.c.b16 %v1008, %v1007
      %v1028 = vpack.c.b16 %v1010, %v1009
      %v1029 = vpack.c.b16 %v1012, %v1011
      %v1030 = vpack.c.b16 %v1014, %v1013
      %v1063 = vunpack.c.l.b16 %v470
      %v1064 = vunpack.c.l.b16 %v471
      %v1065 = vunpack.c.l.b16 %v472
      %v1066 = vunpack.c.l.b16 %v473
      %v1067 = vunpack.c.l.b16 %v474
      %v1068 = vunpack.c.l.b16 %v475
      %v1069 = vunpack.c.l.b16 %v476
      %v1070 = vunpack.c.l.b16 %v477
      %v1071 = vunpack.c.l.b16 %v478
      %v1072 = vunpack.c.l.b16 %v479
      %v1073 = vunpack.c.l.b16 %v480
      %v1074 = vunpack.c.l.b16 %v481
      %v1075 = vunpack.c.l.b16 %v482
      %v1076 = vunpack.c.l.b16 %v483
      %v1077 = vunpack.c.l.b16 %v484
      %v1078 = vunpack.c.l.b16 %v485
      %v1079 = vunpack.c.l.b16 %v486
      %v1080 = vunpack.c.l.b16 %v487
      %v1081 = vunpack.c.l.b16 %v488
      %v1082 = vunpack.c.l.b16 %v489
      %v1083 = vunpack.c.l.b16 %v490
      %v1084 = vunpack.c.l.b16 %v491
      %v1085 = vunpack.c.l.b16 %v492
      %v1086 = vunpack.c.l.b16 %v493
      %v1087 = vunpack.c.l.b16 %v494
      %v1088 = vunpack.c.l.b16 %v495
      %v1089 = vunpack.c.l.b16 %v496
      %v1090 = vunpack.c.l.b16 %v497
      %v1091 = vunpack.c.l.b16 %v498
      %v1092 = vunpack.c.l.b16 %v499
      %v1093 = vunpack.c.l.b16 %v500
      %v1094 = vunpack.c.l.b16 %v501
      %v1095 = vpack.c.b16 %v1064, %v1063
      %v1096 = vpack.c.b16 %v1066, %v1065
      %v1097 = vpack.c.b16 %v1068, %v1067
      %v1098 = vpack.c.b16 %v1070, %v1069
      %v1099 = vpack.c.b16 %v1072, %v1071
      %v1100 = vpack.c.b16 %v1074, %v1073
      %v1101 = vpack.c.b16 %v1076, %v1075
      %v1102 = vpack.c.b16 %v1078, %v1077
      %v1103 = vpack.c.b16 %v1080, %v1079
      %v1104 = vpack.c.b16 %v1082, %v1081
      %v1105 = vpack.c.b16 %v1084, %v1083
      %v1106 = vpack.c.b16 %v1086, %v1085
      %v1107 = vpack.c.b16 %v1088, %v1087
      %v1108 = vpack.c.b16 %v1090, %v1089
      %v1109 = vpack.c.b16 %v1092, %v1091
      %v1110 = vpack.c.b16 %v1094, %v1093
      %1111 = vrot.lane.b32.xlu0 %v1095, 32
      %v1112 = vpop.permute.xlu0 %1111
      %1113 = vrot.lane.b32.xlu0 %v1096, 32
      %v1114 = vpop.permute.xlu0 %1113
      %1115 = vrot.lane.b32.xlu0 %v1097, 32
      %v1116 = vpop.permute.xlu0 %1115
      %1117 = vrot.lane.b32.xlu0 %v1098, 32
      %v1118 = vpop.permute.xlu0 %1117
      %1119 = vrot.lane.b32.xlu0 %v1099, 32
      %v1120 = vpop.permute.xlu0 %1119
      %1121 = vrot.lane.b32.xlu0 %v1100, 32
      %v1122 = vpop.permute.xlu0 %1121
      %1123 = vrot.lane.b32.xlu0 %v1101, 32
      %v1124 = vpop.permute.xlu0 %1123
      %1125 = vrot.lane.b32.xlu0 %v1102, 32
      %v1126 = vpop.permute.xlu0 %1125
      %1127 = vrot.lane.b32.xlu0 %v1103, 32
      %v1128 = vpop.permute.xlu0 %1127
      %1129 = vrot.lane.b32.xlu0 %v1104, 32
      %v1130 = vpop.permute.xlu0 %1129
      %1131 = vrot.lane.b32.xlu0 %v1105, 32
      %v1132 = vpop.permute.xlu0 %1131
      %1133 = vrot.lane.b32.xlu0 %v1106, 32
      %v1134 = vpop.permute.xlu0 %1133
      %1135 = vrot.lane.b32.xlu0 %v1107, 32
      %v1136 = vpop.permute.xlu0 %1135
      %1137 = vrot.lane.b32.xlu0 %v1108, 32
      %v1138 = vpop.permute.xlu0 %1137
      %1139 = vrot.lane.b32.xlu0 %v1109, 32
      %v1140 = vpop.permute.xlu0 %1139
      %1141 = vrot.lane.b32.xlu0 %v1110, 32
      %v1142 = vpop.permute.xlu0 %1141
      %v1175 = vunpack.c.l.b16 %v534
      %v1176 = vunpack.c.l.b16 %v535
      %v1177 = vunpack.c.l.b16 %v536
      %v1178 = vunpack.c.l.b16 %v537
      %v1179 = vunpack.c.l.b16 %v538
      %v1180 = vunpack.c.l.b16 %v539
      %v1181 = vunpack.c.l.b16 %v540
      %v1182 = vunpack.c.l.b16 %v541
      %v1183 = vunpack.c.l.b16 %v542
      %v1184 = vunpack.c.l.b16 %v543
      %v1185 = vunpack.c.l.b16 %v544
      %v1186 = vunpack.c.l.b16 %v545
      %v1187 = vunpack.c.l.b16 %v546
      %v1188 = vunpack.c.l.b16 %v547
      %v1189 = vunpack.c.l.b16 %v548
      %v1190 = vunpack.c.l.b16 %v549
      %v1191 = vunpack.c.l.b16 %v550
      %v1192 = vunpack.c.l.b16 %v551
      %v1193 = vunpack.c.l.b16 %v552
      %v1194 = vunpack.c.l.b16 %v553
      %v1195 = vunpack.c.l.b16 %v554
      %v1196 = vunpack.c.l.b16 %v555
      %v1197 = vunpack.c.l.b16 %v556
      %v1198 = vunpack.c.l.b16 %v557
      %v1199 = vunpack.c.l.b16 %v558
      %v1200 = vunpack.c.l.b16 %v559
      %v1201 = vunpack.c.l.b16 %v560
      %v1202 = vunpack.c.l.b16 %v561
      %v1203 = vunpack.c.l.b16 %v562
      %v1204 = vunpack.c.l.b16 %v563
      %v1205 = vunpack.c.l.b16 %v564
      %v1206 = vunpack.c.l.b16 %v565
      %v1207 = vpack.c.b16 %v1176, %v1175
      %v1208 = vpack.c.b16 %v1178, %v1177
      %v1209 = vpack.c.b16 %v1180, %v1179
      %v1210 = vpack.c.b16 %v1182, %v1181
      %v1211 = vpack.c.b16 %v1184, %v1183
      %v1212 = vpack.c.b16 %v1186, %v1185
      %v1213 = vpack.c.b16 %v1188, %v1187
      %v1214 = vpack.c.b16 %v1190, %v1189
      %v1215 = vpack.c.b16 %v1192, %v1191
      %v1216 = vpack.c.b16 %v1194, %v1193
      %v1217 = vpack.c.b16 %v1196, %v1195
      %v1218 = vpack.c.b16 %v1198, %v1197
      %v1219 = vpack.c.b16 %v1200, %v1199
      %v1220 = vpack.c.b16 %v1202, %v1201
      %v1221 = vpack.c.b16 %v1204, %v1203
      %v1222 = vpack.c.b16 %v1206, %v1205
      %1223 = vrot.lane.b32.xlu0 %v1207, 64
      %v1224 = vpop.permute.xlu0 %1223
      %1225 = vrot.lane.b32.xlu0 %v1208, 64
      %v1226 = vpop.permute.xlu0 %1225
      %1227 = vrot.lane.b32.xlu0 %v1209, 64
      %v1228 = vpop.permute.xlu0 %1227
      %1229 = vrot.lane.b32.xlu0 %v1210, 64
      %v1230 = vpop.permute.xlu0 %1229
      %1231 = vrot.lane.b32.xlu0 %v1211, 64
      %v1232 = vpop.permute.xlu0 %1231
      %1233 = vrot.lane.b32.xlu0 %v1212, 64
      %v1234 = vpop.permute.xlu0 %1233
      %1235 = vrot.lane.b32.xlu0 %v1213, 64
      %v1236 = vpop.permute.xlu0 %1235
      %1237 = vrot.lane.b32.xlu0 %v1214, 64
      %v1238 = vpop.permute.xlu0 %1237
      %1239 = vrot.lane.b32.xlu0 %v1215, 64
      %v1240 = vpop.permute.xlu0 %1239
      %1241 = vrot.lane.b32.xlu0 %v1216, 64
      %v1242 = vpop.permute.xlu0 %1241
      %1243 = vrot.lane.b32.xlu0 %v1217, 64
      %v1244 = vpop.permute.xlu0 %1243
      %1245 = vrot.lane.b32.xlu0 %v1218, 64
      %v1246 = vpop.permute.xlu0 %1245
      %1247 = vrot.lane.b32.xlu0 %v1219, 64
      %v1248 = vpop.permute.xlu0 %1247
      %1249 = vrot.lane.b32.xlu0 %v1220, 64
      %v1250 = vpop.permute.xlu0 %1249
      %1251 = vrot.lane.b32.xlu0 %v1221, 64
      %v1252 = vpop.permute.xlu0 %1251
      %1253 = vrot.lane.b32.xlu0 %v1222, 64
      %v1254 = vpop.permute.xlu0 %1253
      %v1287 = vunpack.c.l.b16 %v598
      %v1288 = vunpack.c.l.b16 %v599
      %v1289 = vunpack.c.l.b16 %v600
      %v1290 = vunpack.c.l.b16 %v601
      %v1291 = vunpack.c.l.b16 %v602
      %v1292 = vunpack.c.l.b16 %v603
      %v1293 = vunpack.c.l.b16 %v604
      %v1294 = vunpack.c.l.b16 %v605
      %v1295 = vunpack.c.l.b16 %v606
      %v1296 = vunpack.c.l.b16 %v607
      %v1297 = vunpack.c.l.b16 %v608
      %v1298 = vunpack.c.l.b16 %v609
      %v1299 = vunpack.c.l.b16 %v610
      %v1300 = vunpack.c.l.b16 %v611
      %v1301 = vunpack.c.l.b16 %v612
      %v1302 = vunpack.c.l.b16 %v613
      %v1303 = vunpack.c.l.b16 %v614
      %v1304 = vunpack.c.l.b16 %v615
      %v1305 = vunpack.c.l.b16 %v616
      %v1306 = vunpack.c.l.b16 %v617
      %v1307 = vunpack.c.l.b16 %v618
      %v1308 = vunpack.c.l.b16 %v619
      %v1309 = vunpack.c.l.b16 %v620
      %v1310 = vunpack.c.l.b16 %v621
      %v1311 = vunpack.c.l.b16 %v622
      %v1312 = vunpack.c.l.b16 %v623
      %v1313 = vunpack.c.l.b16 %v624
      %v1314 = vunpack.c.l.b16 %v625
      %v1315 = vunpack.c.l.b16 %v626
      %v1316 = vunpack.c.l.b16 %v627
      %v1317 = vunpack.c.l.b16 %v628
      %v1318 = vunpack.c.l.b16 %v629
      %v1319 = vpack.c.b16 %v1288, %v1287
      %v1320 = vpack.c.b16 %v1290, %v1289
      %v1321 = vpack.c.b16 %v1292, %v1291
      %v1322 = vpack.c.b16 %v1294, %v1293
      %v1323 = vpack.c.b16 %v1296, %v1295
      %v1324 = vpack.c.b16 %v1298, %v1297
      %v1325 = vpack.c.b16 %v1300, %v1299
      %v1326 = vpack.c.b16 %v1302, %v1301
      %v1327 = vpack.c.b16 %v1304, %v1303
      %v1328 = vpack.c.b16 %v1306, %v1305
      %v1329 = vpack.c.b16 %v1308, %v1307
      %v1330 = vpack.c.b16 %v1310, %v1309
      %v1331 = vpack.c.b16 %v1312, %v1311
      %v1332 = vpack.c.b16 %v1314, %v1313
      %v1333 = vpack.c.b16 %v1316, %v1315
      %v1334 = vpack.c.b16 %v1318, %v1317
      %1335 = vrot.lane.b32.xlu0 %v1319, 96
      %v1336 = vpop.permute.xlu0 %1335
      %1337 = vrot.lane.b32.xlu0 %v1320, 96
      %v1338 = vpop.permute.xlu0 %1337
      %1339 = vrot.lane.b32.xlu0 %v1321, 96
      %v1340 = vpop.permute.xlu0 %1339
      %1341 = vrot.lane.b32.xlu0 %v1322, 96
      %v1342 = vpop.permute.xlu0 %1341
      %1343 = vrot.lane.b32.xlu0 %v1323, 96
      %v1344 = vpop.permute.xlu0 %1343
      %1345 = vrot.lane.b32.xlu0 %v1324, 96
      %v1346 = vpop.permute.xlu0 %1345
      %1347 = vrot.lane.b32.xlu0 %v1325, 96
      %v1348 = vpop.permute.xlu0 %1347
      %1349 = vrot.lane.b32.xlu0 %v1326, 96
      %v1350 = vpop.permute.xlu0 %1349
      %1351 = vrot.lane.b32.xlu0 %v1327, 96
      %v1352 = vpop.permute.xlu0 %1351
      %1353 = vrot.lane.b32.xlu0 %v1328, 96
      %v1354 = vpop.permute.xlu0 %1353
      %1355 = vrot.lane.b32.xlu0 %v1329, 96
      %v1356 = vpop.permute.xlu0 %1355
      %1357 = vrot.lane.b32.xlu0 %v1330, 96
      %v1358 = vpop.permute.xlu0 %1357
      %1359 = vrot.lane.b32.xlu0 %v1331, 96
      %v1360 = vpop.permute.xlu0 %1359
      %1361 = vrot.lane.b32.xlu0 %v1332, 96
      %v1362 = vpop.permute.xlu0 %1361
      %1363 = vrot.lane.b32.xlu0 %v1333, 96
      %v1364 = vpop.permute.xlu0 %1363
      %1365 = vrot.lane.b32.xlu0 %v1334, 96
      %v1366 = vpop.permute.xlu0 %1365
      %v1399 = vunpack.c.l.b16 %v662
      %v1400 = vunpack.c.l.b16 %v663
      %v1401 = vunpack.c.l.b16 %v664
      %v1402 = vunpack.c.l.b16 %v665
      %v1403 = vunpack.c.l.b16 %v666
      %v1404 = vunpack.c.l.b16 %v667
      %v1405 = vunpack.c.l.b16 %v668
      %v1406 = vunpack.c.l.b16 %v669
      %v1407 = vunpack.c.l.b16 %v670
      %v1408 = vunpack.c.l.b16 %v671
      %v1409 = vunpack.c.l.b16 %v672
      %v1410 = vunpack.c.l.b16 %v673
      %v1411 = vunpack.c.l.b16 %v674
      %v1412 = vunpack.c.l.b16 %v675
      %v1413 = vunpack.c.l.b16 %v676
      %v1414 = vunpack.c.l.b16 %v677
      %v1415 = vunpack.c.l.b16 %v678
      %v1416 = vunpack.c.l.b16 %v679
      %v1417 = vunpack.c.l.b16 %v680
      %v1418 = vunpack.c.l.b16 %v681
      %v1419 = vunpack.c.l.b16 %v682
      %v1420 = vunpack.c.l.b16 %v683
      %v1421 = vunpack.c.l.b16 %v684
      %v1422 = vunpack.c.l.b16 %v685
      %v1423 = vunpack.c.l.b16 %v686
      %v1424 = vunpack.c.l.b16 %v687
      %v1425 = vunpack.c.l.b16 %v688
      %v1426 = vunpack.c.l.b16 %v689
      %v1427 = vunpack.c.l.b16 %v690
      %v1428 = vunpack.c.l.b16 %v691
      %v1429 = vunpack.c.l.b16 %v692
      %v1430 = vunpack.c.l.b16 %v693
      %v1431 = vpack.c.b16 %v1400, %v1399
      %v1432 = vpack.c.b16 %v1402, %v1401
      %v1433 = vpack.c.b16 %v1404, %v1403
      %v1434 = vpack.c.b16 %v1406, %v1405
      %v1435 = vpack.c.b16 %v1408, %v1407
      %v1436 = vpack.c.b16 %v1410, %v1409
      %v1437 = vpack.c.b16 %v1412, %v1411
      %v1438 = vpack.c.b16 %v1414, %v1413
      %v1439 = vpack.c.b16 %v1416, %v1415
      %v1440 = vpack.c.b16 %v1418, %v1417
      %v1441 = vpack.c.b16 %v1420, %v1419
      %v1442 = vpack.c.b16 %v1422, %v1421
      %v1443 = vpack.c.b16 %v1424, %v1423
      %v1444 = vpack.c.b16 %v1426, %v1425
      %v1445 = vpack.c.b16 %v1428, %v1427
      %v1446 = vpack.c.b16 %v1430, %v1429
      %v1479 = vunpack.c.l.b16 %v726
      %v1480 = vunpack.c.l.b16 %v727
      %v1481 = vunpack.c.l.b16 %v728
      %v1482 = vunpack.c.l.b16 %v729
      %v1483 = vunpack.c.l.b16 %v730
      %v1484 = vunpack.c.l.b16 %v731
      %v1485 = vunpack.c.l.b16 %v732
      %v1486 = vunpack.c.l.b16 %v733
      %v1487 = vunpack.c.l.b16 %v734
      %v1488 = vunpack.c.l.b16 %v735
      %v1489 = vunpack.c.l.b16 %v736
      %v1490 = vunpack.c.l.b16 %v737
      %v1491 = vunpack.c.l.b16 %v738
      %v1492 = vunpack.c.l.b16 %v739
      %v1493 = vunpack.c.l.b16 %v740
      %v1494 = vunpack.c.l.b16 %v741
      %v1495 = vunpack.c.l.b16 %v742
      %v1496 = vunpack.c.l.b16 %v743
      %v1497 = vunpack.c.l.b16 %v744
      %v1498 = vunpack.c.l.b16 %v745
      %v1499 = vunpack.c.l.b16 %v746
      %v1500 = vunpack.c.l.b16 %v747
      %v1501 = vunpack.c.l.b16 %v748
      %v1502 = vunpack.c.l.b16 %v749
      %v1503 = vunpack.c.l.b16 %v750
      %v1504 = vunpack.c.l.b16 %v751
      %v1505 = vunpack.c.l.b16 %v752
      %v1506 = vunpack.c.l.b16 %v753
      %v1507 = vunpack.c.l.b16 %v754
      %v1508 = vunpack.c.l.b16 %v755
      %v1509 = vunpack.c.l.b16 %v756
      %v1510 = vunpack.c.l.b16 %v757
      %v1511 = vpack.c.b16 %v1480, %v1479
      %v1512 = vpack.c.b16 %v1482, %v1481
      %v1513 = vpack.c.b16 %v1484, %v1483
      %v1514 = vpack.c.b16 %v1486, %v1485
      %v1515 = vpack.c.b16 %v1488, %v1487
      %v1516 = vpack.c.b16 %v1490, %v1489
      %v1517 = vpack.c.b16 %v1492, %v1491
      %v1518 = vpack.c.b16 %v1494, %v1493
      %v1519 = vpack.c.b16 %v1496, %v1495
      %v1520 = vpack.c.b16 %v1498, %v1497
      %v1521 = vpack.c.b16 %v1500, %v1499
      %v1522 = vpack.c.b16 %v1502, %v1501
      %v1523 = vpack.c.b16 %v1504, %v1503
      %v1524 = vpack.c.b16 %v1506, %v1505
      %v1525 = vpack.c.b16 %v1508, %v1507
      %v1526 = vpack.c.b16 %v1510, %v1509
      %1527 = vrot.lane.b32.xlu0 %v1511, 32
      %v1528 = vpop.permute.xlu0 %1527
      %1529 = vrot.lane.b32.xlu0 %v1512, 32
      %v1530 = vpop.permute.xlu0 %1529
      %1531 = vrot.lane.b32.xlu0 %v1513, 32
      %v1532 = vpop.permute.xlu0 %1531
      %1533 = vrot.lane.b32.xlu0 %v1514, 32
      %v1534 = vpop.permute.xlu0 %1533
      %1535 = vrot.lane.b32.xlu0 %v1515, 32
      %v1536 = vpop.permute.xlu0 %1535
      %1537 = vrot.lane.b32.xlu0 %v1516, 32
      %v1538 = vpop.permute.xlu0 %1537
      %1539 = vrot.lane.b32.xlu0 %v1517, 32
      %v1540 = vpop.permute.xlu0 %1539
      %1541 = vrot.lane.b32.xlu0 %v1518, 32
      %v1542 = vpop.permute.xlu0 %1541
      %1543 = vrot.lane.b32.xlu0 %v1519, 32
      %v1544 = vpop.permute.xlu0 %1543
      %1545 = vrot.lane.b32.xlu0 %v1520, 32
      %v1546 = vpop.permute.xlu0 %1545
      %1547 = vrot.lane.b32.xlu0 %v1521, 32
      %v1548 = vpop.permute.xlu0 %1547
      %1549 = vrot.lane.b32.xlu0 %v1522, 32
      %v1550 = vpop.permute.xlu0 %1549
      %1551 = vrot.lane.b32.xlu0 %v1523, 32
      %v1552 = vpop.permute.xlu0 %1551
      %1553 = vrot.lane.b32.xlu0 %v1524, 32
      %v1554 = vpop.permute.xlu0 %1553
      %1555 = vrot.lane.b32.xlu0 %v1525, 32
      %v1556 = vpop.permute.xlu0 %1555
      %1557 = vrot.lane.b32.xlu0 %v1526, 32
      %v1558 = vpop.permute.xlu0 %1557
      %v1591 = vunpack.c.l.b16 %v791
      %v1592 = vunpack.c.l.b16 %v792
      %v1593 = vunpack.c.l.b16 %v793
      %v1594 = vunpack.c.l.b16 %v794
      %v1595 = vunpack.c.l.b16 %v795
      %v1596 = vunpack.c.l.b16 %v796
      %v1597 = vunpack.c.l.b16 %v797
      %v1598 = vunpack.c.l.b16 %v798
      %v1599 = vunpack.c.l.b16 %v799
      %v1600 = vunpack.c.l.b16 %v800
      %v1601 = vunpack.c.l.b16 %v801
      %v1602 = vunpack.c.l.b16 %v802
      %v1603 = vunpack.c.l.b16 %v803
      %v1604 = vunpack.c.l.b16 %v804
      %v1605 = vunpack.c.l.b16 %v805
      %v1606 = vunpack.c.l.b16 %v806
      %v1607 = vunpack.c.l.b16 %v807
      %v1608 = vunpack.c.l.b16 %v808
      %v1609 = vunpack.c.l.b16 %v809
      %v1610 = vunpack.c.l.b16 %v810
      %v1611 = vunpack.c.l.b16 %v811
      %v1612 = vunpack.c.l.b16 %v812
      %v1613 = vunpack.c.l.b16 %v813
      %v1614 = vunpack.c.l.b16 %v814
      %v1615 = vunpack.c.l.b16 %v815
      %v1616 = vunpack.c.l.b16 %v816
      %v1617 = vunpack.c.l.b16 %v817
      %v1618 = vunpack.c.l.b16 %v818
      %v1619 = vunpack.c.l.b16 %v819
      %v1620 = vunpack.c.l.b16 %v820
      %v1621 = vunpack.c.l.b16 %v821
      %v1622 = vunpack.c.l.b16 %v822
      %v1623 = vpack.c.b16 %v1592, %v1591
      %v1624 = vpack.c.b16 %v1594, %v1593
      %v1625 = vpack.c.b16 %v1596, %v1595
      %v1626 = vpack.c.b16 %v1598, %v1597
      %v1627 = vpack.c.b16 %v1600, %v1599
      %v1628 = vpack.c.b16 %v1602, %v1601
      %v1629 = vpack.c.b16 %v1604, %v1603
      %v1630 = vpack.c.b16 %v1606, %v1605
      %v1631 = vpack.c.b16 %v1608, %v1607
      %v1632 = vpack.c.b16 %v1610, %v1609
      %v1633 = vpack.c.b16 %v1612, %v1611
      %v1634 = vpack.c.b16 %v1614, %v1613
      %v1635 = vpack.c.b16 %v1616, %v1615
      %v1636 = vpack.c.b16 %v1618, %v1617
      %v1637 = vpack.c.b16 %v1620, %v1619
      %v1638 = vpack.c.b16 %v1622, %v1621
      %1639 = vrot.lane.b32.xlu0 %v1623, 64
      %v1640 = vpop.permute.xlu0 %1639
      %1641 = vrot.lane.b32.xlu0 %v1624, 64
      %v1642 = vpop.permute.xlu0 %1641
      %1643 = vrot.lane.b32.xlu0 %v1625, 64
      %v1644 = vpop.permute.xlu0 %1643
      %1645 = vrot.lane.b32.xlu0 %v1626, 64
      %v1646 = vpop.permute.xlu0 %1645
      %1647 = vrot.lane.b32.xlu0 %v1627, 64
      %v1648 = vpop.permute.xlu0 %1647
      %1649 = vrot.lane.b32.xlu0 %v1628, 64
      %v1650 = vpop.permute.xlu0 %1649
      %1651 = vrot.lane.b32.xlu0 %v1629, 64
      %v1652 = vpop.permute.xlu0 %1651
      %1653 = vrot.lane.b32.xlu0 %v1630, 64
      %v1654 = vpop.permute.xlu0 %1653
      %1655 = vrot.lane.b32.xlu0 %v1631, 64
      %v1656 = vpop.permute.xlu0 %1655
      %1657 = vrot.lane.b32.xlu0 %v1632, 64
      %v1658 = vpop.permute.xlu0 %1657
      %1659 = vrot.lane.b32.xlu0 %v1633, 64
      %v1660 = vpop.permute.xlu0 %1659
      %1661 = vrot.lane.b32.xlu0 %v1634, 64
      %v1662 = vpop.permute.xlu0 %1661
      %1663 = vrot.lane.b32.xlu0 %v1635, 64
      %v1664 = vpop.permute.xlu0 %1663
      %1665 = vrot.lane.b32.xlu0 %v1636, 64
      %v1666 = vpop.permute.xlu0 %1665
      %1667 = vrot.lane.b32.xlu0 %v1637, 64
      %v1668 = vpop.permute.xlu0 %1667
      %1669 = vrot.lane.b32.xlu0 %v1638, 64
      %v1670 = vpop.permute.xlu0 %1669
      %v1703 = vunpack.c.l.b16 %v855
      %v1704 = vunpack.c.l.b16 %v856
      %v1705 = vunpack.c.l.b16 %v857
      %v1706 = vunpack.c.l.b16 %v858
      %v1707 = vunpack.c.l.b16 %v859
      %v1708 = vunpack.c.l.b16 %v860
      %v1709 = vunpack.c.l.b16 %v861
      %v1710 = vunpack.c.l.b16 %v862
      %v1711 = vunpack.c.l.b16 %v863
      %v1712 = vunpack.c.l.b16 %v864
      %v1713 = vunpack.c.l.b16 %v865
      %v1714 = vunpack.c.l.b16 %v866
      %v1715 = vunpack.c.l.b16 %v867
      %v1716 = vunpack.c.l.b16 %v868
      %v1717 = vunpack.c.l.b16 %v869
      %v1718 = vunpack.c.l.b16 %v870
      %v1719 = vunpack.c.l.b16 %v871
      %v1720 = vunpack.c.l.b16 %v872
      %v1721 = vunpack.c.l.b16 %v873
      %v1722 = vunpack.c.l.b16 %v874
      %v1723 = vunpack.c.l.b16 %v875
      %v1724 = vunpack.c.l.b16 %v876
      %v1725 = vunpack.c.l.b16 %v877
      %v1726 = vunpack.c.l.b16 %v878
      %v1727 = vunpack.c.l.b16 %v879
      %v1728 = vunpack.c.l.b16 %v880
      %v1729 = vunpack.c.l.b16 %v881
      %v1730 = vunpack.c.l.b16 %v882
      %v1731 = vunpack.c.l.b16 %v883
      %v1732 = vunpack.c.l.b16 %v884
      %v1733 = vunpack.c.l.b16 %v885
      %v1734 = vunpack.c.l.b16 %v886
      %v1735 = vpack.c.b16 %v1704, %v1703
      %v1736 = vpack.c.b16 %v1706, %v1705
      %v1737 = vpack.c.b16 %v1708, %v1707
      %v1738 = vpack.c.b16 %v1710, %v1709
      %v1739 = vpack.c.b16 %v1712, %v1711
      %v1740 = vpack.c.b16 %v1714, %v1713
      %v1741 = vpack.c.b16 %v1716, %v1715
      %v1742 = vpack.c.b16 %v1718, %v1717
      %v1743 = vpack.c.b16 %v1720, %v1719
      %v1744 = vpack.c.b16 %v1722, %v1721
      %v1745 = vpack.c.b16 %v1724, %v1723
      %v1746 = vpack.c.b16 %v1726, %v1725
      %v1747 = vpack.c.b16 %v1728, %v1727
      %v1748 = vpack.c.b16 %v1730, %v1729
      %v1749 = vpack.c.b16 %v1732, %v1731
      %v1750 = vpack.c.b16 %v1734, %v1733
      %1751 = vrot.lane.b32.xlu0 %v1735, 96
      %v1752 = vpop.permute.xlu0 %1751
      %1753 = vrot.lane.b32.xlu0 %v1736, 96
      %v1754 = vpop.permute.xlu0 %1753
      %1755 = vrot.lane.b32.xlu0 %v1737, 96
      %v1756 = vpop.permute.xlu0 %1755
      %1757 = vrot.lane.b32.xlu0 %v1738, 96
      %v1758 = vpop.permute.xlu0 %1757
      %1759 = vrot.lane.b32.xlu0 %v1739, 96
      %v1760 = vpop.permute.xlu0 %1759
      %1761 = vrot.lane.b32.xlu0 %v1740, 96
      %v1762 = vpop.permute.xlu0 %1761
      %1763 = vrot.lane.b32.xlu0 %v1741, 96
      %v1764 = vpop.permute.xlu0 %1763
      %1765 = vrot.lane.b32.xlu0 %v1742, 96
      %v1766 = vpop.permute.xlu0 %1765
      %1767 = vrot.lane.b32.xlu0 %v1743, 96
      %v1768 = vpop.permute.xlu0 %1767
      %1769 = vrot.lane.b32.xlu0 %v1744, 96
      %v1770 = vpop.permute.xlu0 %1769
      %1771 = vrot.lane.b32.xlu0 %v1745, 96
      %v1772 = vpop.permute.xlu0 %1771
      %1773 = vrot.lane.b32.xlu0 %v1746, 96
      %v1774 = vpop.permute.xlu0 %1773
      %1775 = vrot.lane.b32.xlu0 %v1747, 96
      %v1776 = vpop.permute.xlu0 %1775
      %1777 = vrot.lane.b32.xlu0 %v1748, 96
      %v1778 = vpop.permute.xlu0 %1777
      %1779 = vrot.lane.b32.xlu0 %v1749, 96
      %v1780 = vpop.permute.xlu0 %1779
      %1781 = vrot.lane.b32.xlu0 %v1750, 96
      %v1782 = vpop.permute.xlu0 %1781
      %v1815 = vunpack.c.l.b16 %v919
      %v1816 = vunpack.c.l.b16 %v920
      %v1817 = vunpack.c.l.b16 %v921
      %v1818 = vunpack.c.l.b16 %v922
      %v1819 = vunpack.c.l.b16 %v923
      %v1820 = vunpack.c.l.b16 %v924
      %v1821 = vunpack.c.l.b16 %v925
      %v1822 = vunpack.c.l.b16 %v926
      %v1823 = vunpack.c.l.b16 %v927
      %v1824 = vunpack.c.l.b16 %v928
      %v1825 = vunpack.c.l.b16 %v929
      %v1826 = vunpack.c.l.b16 %v930
      %v1827 = vunpack.c.l.b16 %v931
      %v1828 = vunpack.c.l.b16 %v932
      %v1829 = vunpack.c.l.b16 %v933
      %v1830 = vunpack.c.l.b16 %v934
      %v1831 = vunpack.c.l.b16 %v935
      %v1832 = vunpack.c.l.b16 %v936
      %v1833 = vunpack.c.l.b16 %v937
      %v1834 = vunpack.c.l.b16 %v938
      %v1835 = vunpack.c.l.b16 %v939
      %v1836 = vunpack.c.l.b16 %v940
      %v1837 = vunpack.c.l.b16 %v941
      %v1838 = vunpack.c.l.b16 %v942
      %v1839 = vunpack.c.l.b16 %v943
      %v1840 = vunpack.c.l.b16 %v944
      %v1841 = vunpack.c.l.b16 %v945
      %v1842 = vunpack.c.l.b16 %v946
      %v1843 = vunpack.c.l.b16 %v947
      %v1844 = vunpack.c.l.b16 %v948
      %v1845 = vunpack.c.l.b16 %v949
      %v1846 = vunpack.c.l.b16 %v950
      %v1847 = vpack.c.b16 %v1816, %v1815
      %v1848 = vpack.c.b16 %v1818, %v1817
      %v1849 = vpack.c.b16 %v1820, %v1819
      %v1850 = vpack.c.b16 %v1822, %v1821
      %v1851 = vpack.c.b16 %v1824, %v1823
      %v1852 = vpack.c.b16 %v1826, %v1825
      %v1853 = vpack.c.b16 %v1828, %v1827
      %v1854 = vpack.c.b16 %v1830, %v1829
      %v1855 = vpack.c.b16 %v1832, %v1831
      %v1856 = vpack.c.b16 %v1834, %v1833
      %v1857 = vpack.c.b16 %v1836, %v1835
      %v1858 = vpack.c.b16 %v1838, %v1837
      %v1859 = vpack.c.b16 %v1840, %v1839
      %v1860 = vpack.c.b16 %v1842, %v1841
      %v1861 = vpack.c.b16 %v1844, %v1843
      %v1862 = vpack.c.b16 %v1846, %v1845
      %v1865 = vsel %vm199, %v1015, %v1112
      %v1868 = vsel %vm199, %v1016, %v1114
      %v1871 = vsel %vm199, %v1017, %v1116
      %v1874 = vsel %vm199, %v1018, %v1118
      %v1877 = vsel %vm199, %v1019, %v1120
      %v1880 = vsel %vm199, %v1020, %v1122
      %v1883 = vsel %vm199, %v1021, %v1124
      %v1886 = vsel %vm199, %v1022, %v1126
      %v1889 = vsel %vm199, %v1023, %v1128
      %v1892 = vsel %vm199, %v1024, %v1130
      %v1895 = vsel %vm199, %v1025, %v1132
      %v1898 = vsel %vm199, %v1026, %v1134
      %v1901 = vsel %vm199, %v1027, %v1136
      %v1904 = vsel %vm199, %v1028, %v1138
      %v1907 = vsel %vm199, %v1029, %v1140
      %v1910 = vsel %vm199, %v1030, %v1142
      %vm1911 = vcmask 523264
      %v1913 = vsel %vm1911, %v1865, %v1224
      %v1915 = vsel %vm1911, %v1868, %v1226
      %v1917 = vsel %vm1911, %v1871, %v1228
      %v1919 = vsel %vm1911, %v1874, %v1230
      %v1921 = vsel %vm1911, %v1877, %v1232
      %v1923 = vsel %vm1911, %v1880, %v1234
      %v1925 = vsel %vm1911, %v1883, %v1236
      %v1927 = vsel %vm1911, %v1886, %v1238
      %v1929 = vsel %vm1911, %v1889, %v1240
      %v1931 = vsel %vm1911, %v1892, %v1242
      %v1933 = vsel %vm1911, %v1895, %v1244
      %v1935 = vsel %vm1911, %v1898, %v1246
      %v1937 = vsel %vm1911, %v1901, %v1248
      %v1939 = vsel %vm1911, %v1904, %v1250
      %v1941 = vsel %vm1911, %v1907, %v1252
      %v1943 = vsel %vm1911, %v1910, %v1254
      %vm1944 = vcmask 785408
      %v1946 = vsel %vm1944, %v1913, %v1336
      %v1949 = vsel %vm1944, %v1915, %v1338
      %v1952 = vsel %vm1944, %v1917, %v1340
      %v1955 = vsel %vm1944, %v1919, %v1342
      %v1958 = vsel %vm1944, %v1921, %v1344
      %v1961 = vsel %vm1944, %v1923, %v1346
      %v1964 = vsel %vm1944, %v1925, %v1348
      %v1967 = vsel %vm1944, %v1927, %v1350
      %v1970 = vsel %vm1944, %v1929, %v1352
      %v1973 = vsel %vm1944, %v1931, %v1354
      %v1976 = vsel %vm1944, %v1933, %v1356
      %v1979 = vsel %vm1944, %v1935, %v1358
      %v1982 = vsel %vm1944, %v1937, %v1360
      %v1985 = vsel %vm1944, %v1939, %v1362
      %v1988 = vsel %vm1944, %v1941, %v1364
      %v1991 = vsel %vm1944, %v1943, %v1366
      %v1995 = vsel %vm199, %v1431, %v1528
      %v1998 = vsel %vm199, %v1432, %v1530
      %v2001 = vsel %vm199, %v1433, %v1532
      %v2004 = vsel %vm199, %v1434, %v1534
      %v2007 = vsel %vm199, %v1435, %v1536
      %v2010 = vsel %vm199, %v1436, %v1538
      %v2013 = vsel %vm199, %v1437, %v1540
      %v2016 = vsel %vm199, %v1438, %v1542
      %v2019 = vsel %vm199, %v1439, %v1544
      %v2022 = vsel %vm199, %v1440, %v1546
      %v2025 = vsel %vm199, %v1441, %v1548
      %v2028 = vsel %vm199, %v1442, %v1550
      %v2031 = vsel %vm199, %v1443, %v1552
      %v2034 = vsel %vm199, %v1444, %v1554
      %v2037 = vsel %vm199, %v1445, %v1556
      %v2040 = vsel %vm199, %v1446, %v1558
      %v2042 = vsel %vm1911, %v1995, %v1640
      %v2044 = vsel %vm1911, %v1998, %v1642
      %v2046 = vsel %vm1911, %v2001, %v1644
      %v2048 = vsel %vm1911, %v2004, %v1646
      %v2050 = vsel %vm1911, %v2007, %v1648
      %v2052 = vsel %vm1911, %v2010, %v1650
      %v2054 = vsel %vm1911, %v2013, %v1652
      %v2056 = vsel %vm1911, %v2016, %v1654
      %v2058 = vsel %vm1911, %v2019, %v1656
      %v2060 = vsel %vm1911, %v2022, %v1658
      %v2062 = vsel %vm1911, %v2025, %v1660
      %v2064 = vsel %vm1911, %v2028, %v1662
      %v2066 = vsel %vm1911, %v2031, %v1664
      %v2068 = vsel %vm1911, %v2034, %v1666
      %v2070 = vsel %vm1911, %v2037, %v1668
      %v2072 = vsel %vm1911, %v2040, %v1670
      %v2074 = vsel %vm1944, %v2042, %v1752
      %v2077 = vsel %vm1944, %v2044, %v1754
      %v2080 = vsel %vm1944, %v2046, %v1756
      %v2083 = vsel %vm1944, %v2048, %v1758
      %v2086 = vsel %vm1944, %v2050, %v1760
      %v2089 = vsel %vm1944, %v2052, %v1762
      %v2092 = vsel %vm1944, %v2054, %v1764
      %v2095 = vsel %vm1944, %v2056, %v1766
      %v2098 = vsel %vm1944, %v2058, %v1768
      %v2101 = vsel %vm1944, %v2060, %v1770
      %v2104 = vsel %vm1944, %v2062, %v1772
      %v2107 = vsel %vm1944, %v2064, %v1774
      %v2110 = vsel %vm1944, %v2066, %v1776
      %v2113 = vsel %vm1944, %v2068, %v1778
      %v2116 = vsel %vm1944, %v2070, %v1780
      %v2119 = vsel %vm1944, %v2072, %v1782
      %v2121 = vld [vmem:[%s1] sm:$0xf]
      %v2122 = vld [vmem:[%s1 + $0x4] sm:$0xf]
      %v2123 = vld [vmem:[%s1 + $0x8] sm:$0xf]
      %v2124 = vld [vmem:[%s1 + $0xc] sm:$0xf]
      %v2125 = vld [vmem:[%s1 + $0x10] sm:$0xf]
      %v2126 = vld [vmem:[%s1 + $0x14] sm:$0xf]
      %v2127 = vld [vmem:[%s1 + $0x18] sm:$0xf]
      %v2128 = vld [vmem:[%s1 + $0x1c] sm:$0xf]
      %v2129 = vld [vmem:[%s1 + $0x20] sm:$0xf]
      %v2130 = vld [vmem:[%s1 + $0x24] sm:$0xf]
      %v2131 = vld [vmem:[%s1 + $0x28] sm:$0xf]
      %v2132 = vld [vmem:[%s1 + $0x2c] sm:$0xf]
      %v2133 = vld [vmem:[%s1 + $0x30] sm:$0xf]
      %v2134 = vld [vmem:[%s1 + $0x34] sm:$0xf]
      %v2135 = vld [vmem:[%s1 + $0x38] sm:$0xf]
      %v2136 = vld [vmem:[%s1 + $0x3c] sm:$0xf]
      %v2137 = vld [vmem:[%s1 + $0x40] sm:$0xf]
      %v2138 = vld [vmem:[%s1 + $0x44] sm:$0xf]
      %v2139 = vld [vmem:[%s1 + $0x48] sm:$0xf]
      %v2140 = vld [vmem:[%s1 + $0x4c] sm:$0xf]
      %v2141 = vld [vmem:[%s1 + $0x50] sm:$0xf]
      %v2142 = vld [vmem:[%s1 + $0x54] sm:$0xf]
      %v2143 = vld [vmem:[%s1 + $0x58] sm:$0xf]
      %v2144 = vld [vmem:[%s1 + $0x5c] sm:$0xf]
      %v2145 = vld [vmem:[%s1 + $0x60] sm:$0xf]
      %v2146 = vld [vmem:[%s1 + $0x64] sm:$0xf]
      %v2147 = vld [vmem:[%s1 + $0x68] sm:$0xf]
      %v2148 = vld [vmem:[%s1 + $0x6c] sm:$0xf]
      %v2149 = vld [vmem:[%s1 + $0x70] sm:$0xf]
      %v2150 = vld [vmem:[%s1 + $0x74] sm:$0xf]
      %v2151 = vld [vmem:[%s1 + $0x78] sm:$0xf]
      %v2152 = vld [vmem:[%s1 + $0x7c] sm:$0xf]
      %v2153 = vld [vmem:[%s1 + $0x80] sm:$0xf]
      %v2154 = vld [vmem:[%s1 + $0x84] sm:$0xf]
      %v2155 = vld [vmem:[%s1 + $0x88] sm:$0xf]
      %v2156 = vld [vmem:[%s1 + $0x8c] sm:$0xf]
      %v2193 = vunpack.c.l.b16 %v2121
      %v2194 = vunpack.c.l.b16 %v2122
      %v2195 = vunpack.c.l.b16 %v2123
      %v2196 = vunpack.c.l.b16 %v2124
      %v2197 = vunpack.c.l.b16 %v2125
      %v2198 = vunpack.c.l.b16 %v2126
      %v2199 = vunpack.c.l.b16 %v2127
      %v2200 = vunpack.c.l.b16 %v2128
      %v2201 = vunpack.c.l.b16 %v2129
      %v2202 = vunpack.c.l.b16 %v2130
      %v2203 = vunpack.c.l.b16 %v2131
      %v2204 = vunpack.c.l.b16 %v2132
      %v2205 = vunpack.c.l.b16 %v2133
      %v2206 = vunpack.c.l.b16 %v2134
      %v2207 = vunpack.c.l.b16 %v2135
      %v2208 = vunpack.c.l.b16 %v2136
      %v2209 = vunpack.c.l.b16 %v2137
      %v2210 = vunpack.c.l.b16 %v2138
      %v2211 = vunpack.c.l.b16 %v2139
      %v2212 = vunpack.c.l.b16 %v2140
      %v2213 = vunpack.c.l.b16 %v2141
      %v2214 = vunpack.c.l.b16 %v2142
      %v2215 = vunpack.c.l.b16 %v2143
      %v2216 = vunpack.c.l.b16 %v2144
      %v2217 = vunpack.c.l.b16 %v2145
      %v2218 = vunpack.c.l.b16 %v2146
      %v2219 = vunpack.c.l.b16 %v2147
      %v2220 = vunpack.c.l.b16 %v2148
      %v2221 = vunpack.c.l.b16 %v2149
      %v2222 = vunpack.c.l.b16 %v2150
      %v2223 = vunpack.c.l.b16 %v2151
      %v2224 = vunpack.c.l.b16 %v2152
      %v2225 = vunpack.c.l.b16 %v2153
      %v2226 = vunpack.c.l.b16 %v2154
      %v2227 = vunpack.c.l.b16 %v2155
      %v2228 = vunpack.c.l.b16 %v2156
      %v2229 = vpack.c.b16 %v2194, %v2193
      %v2230 = vpack.c.b16 %v2196, %v2195
      %v2231 = vpack.c.b16 %v2198, %v2197
      %v2232 = vpack.c.b16 %v2200, %v2199
      %v2233 = vpack.c.b16 %v2202, %v2201
      %v2234 = vpack.c.b16 %v2204, %v2203
      %v2235 = vpack.c.b16 %v2206, %v2205
      %v2236 = vpack.c.b16 %v2208, %v2207
      %v2237 = vpack.c.b16 %v2210, %v2209
      %v2238 = vpack.c.b16 %v2212, %v2211
      %v2239 = vpack.c.b16 %v2214, %v2213
      %v2240 = vpack.c.b16 %v2216, %v2215
      %v2241 = vpack.c.b16 %v2218, %v2217
      %v2242 = vpack.c.b16 %v2220, %v2219
      %v2243 = vpack.c.b16 %v2222, %v2221
      %v2244 = vpack.c.b16 %v2224, %v2223
      %v2245 = vpack.c.b16 %v2226, %v2225
      %v2246 = vpack.c.b16 %v2228, %v2227
      %v2266 = vsel %vm199, %v1847, 0
      %v2269 = vsel %vm199, %v1848, 0
      %v2272 = vsel %vm199, %v1849, 0
      %v2275 = vsel %vm199, %v1850, 0
      %v2278 = vsel %vm199, %v1851, 0
      %v2281 = vsel %vm199, %v1852, 0
      %v2284 = vsel %vm199, %v1853, 0
      %v2287 = vsel %vm199, %v1854, 0
      %v2290 = vsel %vm199, %v1855, 0
      %v2293 = vsel %vm199, %v1856, 0
      %v2296 = vsel %vm199, %v1857, 0
      %v2299 = vsel %vm199, %v1858, 0
      %v2302 = vsel %vm199, %v1859, 0
      %v2305 = vsel %vm199, %v1860, 0
      %v2308 = vsel %vm199, %v1861, 0
      %v2311 = vsel %vm199, %v1862, 0
      %2313 = vmatpush.bf16.msra.mxu0 %v2236
      %2314 = vmatpush.bf16.msra.mxu0 %v2235
      %2315 = vmatpush.bf16.msra.mxu0 %v2234
      %2316 = vmatpush.bf16.msra.mxu0 %v2233
      %2317 = vmatpush.bf16.msra.mxu0 %v2232
      %2318 = vmatpush.bf16.msra.mxu0 %v2231
      %2319 = vmatpush.bf16.msra.mxu0 %v2230
      %2320 = vmatpush.bf16.msra.mxu0 %v2229
      %2321 = vmatmul.bf16.gmra.mxu0 %v1946
      %v2322 = vpop.f32.mrf.mxu0
      %v2323 = vadd.f32 0.0, %v2322
      %v2324 = vpop.f32.mrf.mxu0
      %v2325 = vadd.f32 0.0, %v2324
      %2326 = vmatmul.bf16.gmra.mxu0 %v1949
      %v2327 = vpop.f32.mrf.mxu0
      %v2328 = vadd.f32 0.0, %v2327
      %v2329 = vpop.f32.mrf.mxu0
      %v2330 = vadd.f32 0.0, %v2329
      %2331 = vmatmul.bf16.gmra.mxu0 %v1952
      %v2332 = vpop.f32.mrf.mxu0
      %v2333 = vadd.f32 0.0, %v2332
      %v2334 = vpop.f32.mrf.mxu0
      %v2335 = vadd.f32 0.0, %v2334
      %2336 = vmatmul.bf16.gmra.mxu0 %v1955
      %v2337 = vpop.f32.mrf.mxu0
      %v2338 = vadd.f32 0.0, %v2337
      %v2339 = vpop.f32.mrf.mxu0
      %v2340 = vadd.f32 0.0, %v2339
      %2341 = vmatmul.bf16.gmra.mxu0 %v1958
      %v2342 = vpop.f32.mrf.mxu0
      %v2343 = vadd.f32 0.0, %v2342
      %v2344 = vpop.f32.mrf.mxu0
      %v2345 = vadd.f32 0.0, %v2344
      %2346 = vmatmul.bf16.gmra.mxu0 %v1961
      %v2347 = vpop.f32.mrf.mxu0
      %v2348 = vadd.f32 0.0, %v2347
      %v2349 = vpop.f32.mrf.mxu0
      %v2350 = vadd.f32 0.0, %v2349
      %2351 = vmatmul.bf16.gmra.mxu0 %v1964
      %v2352 = vpop.f32.mrf.mxu0
      %v2353 = vadd.f32 0.0, %v2352
      %v2354 = vpop.f32.mrf.mxu0
      %v2355 = vadd.f32 0.0, %v2354
      %2356 = vmatmul.bf16.gmra.mxu0 %v1967
      %v2357 = vpop.f32.mrf.mxu0
      %v2358 = vadd.f32 0.0, %v2357
      %v2359 = vpop.f32.mrf.mxu0
      %v2360 = vadd.f32 0.0, %v2359
      %2361 = vmatmul.bf16.gmra.mxu0 %v1970
      %v2362 = vpop.f32.mrf.mxu0
      %v2363 = vadd.f32 0.0, %v2362
      %v2364 = vpop.f32.mrf.mxu0
      %v2365 = vadd.f32 0.0, %v2364
      %2366 = vmatmul.bf16.gmra.mxu0 %v1973
      %v2367 = vpop.f32.mrf.mxu0
      %v2368 = vadd.f32 0.0, %v2367
      %v2369 = vpop.f32.mrf.mxu0
      %v2370 = vadd.f32 0.0, %v2369
      %2371 = vmatmul.bf16.gmra.mxu0 %v1976
      %v2372 = vpop.f32.mrf.mxu0
      %v2373 = vadd.f32 0.0, %v2372
      %v2374 = vpop.f32.mrf.mxu0
      %v2375 = vadd.f32 0.0, %v2374
      %2376 = vmatmul.bf16.gmra.mxu0 %v1979
      %v2377 = vpop.f32.mrf.mxu0
      %v2378 = vadd.f32 0.0, %v2377
      %v2379 = vpop.f32.mrf.mxu0
      %v2380 = vadd.f32 0.0, %v2379
      %2381 = vmatmul.bf16.gmra.mxu0 %v1982
      %v2382 = vpop.f32.mrf.mxu0
      %v2383 = vadd.f32 0.0, %v2382
      %v2384 = vpop.f32.mrf.mxu0
      %v2385 = vadd.f32 0.0, %v2384
      %2386 = vmatmul.bf16.gmra.mxu0 %v1985
      %v2387 = vpop.f32.mrf.mxu0
      %v2388 = vadd.f32 0.0, %v2387
      %v2389 = vpop.f32.mrf.mxu0
      %v2390 = vadd.f32 0.0, %v2389
      %2391 = vmatmul.bf16.gmra.mxu0 %v1988
      %v2392 = vpop.f32.mrf.mxu0
      %v2393 = vadd.f32 0.0, %v2392
      %v2394 = vpop.f32.mrf.mxu0
      %v2395 = vadd.f32 0.0, %v2394
      %2396 = vmatmul.bf16.gmra.mxu0 %v1991
      %v2397 = vpop.f32.mrf.mxu0
      %v2398 = vadd.f32 0.0, %v2397
      %v2399 = vpop.f32.mrf.mxu0
      %v2400 = vadd.f32 0.0, %v2399
      %2401 = vdwg.mxu0
      %2402 = vmatpush.bf16.msra.mxu0 %v2244
      %2403 = vmatpush.bf16.msra.mxu0 %v2243
      %2404 = vmatpush.bf16.msra.mxu0 %v2242
      %2405 = vmatpush.bf16.msra.mxu0 %v2241
      %2406 = vmatpush.bf16.msra.mxu0 %v2240
      %2407 = vmatpush.bf16.msra.mxu0 %v2239
      %2408 = vmatpush.bf16.msra.mxu0 %v2238
      %2409 = vmatpush.bf16.msra.mxu0 %v2237
      %2410 = vmatmul.bf16.gmra.mxu0 %v2074
      %v2411 = vpop.f32.mrf.mxu0
      %v2412 = vadd.f32 %v2323, %v2411
      %v2413 = vpop.f32.mrf.mxu0
      %v2414 = vadd.f32 %v2325, %v2413
      %2415 = vmatmul.bf16.gmra.mxu0 %v2077
      %v2416 = vpop.f32.mrf.mxu0
      %v2417 = vadd.f32 %v2328, %v2416
      %v2418 = vpop.f32.mrf.mxu0
      %v2419 = vadd.f32 %v2330, %v2418
      %2420 = vmatmul.bf16.gmra.mxu0 %v2080
      %v2421 = vpop.f32.mrf.mxu0
      %v2422 = vadd.f32 %v2333, %v2421
      %v2423 = vpop.f32.mrf.mxu0
      %v2424 = vadd.f32 %v2335, %v2423
      %2425 = vmatmul.bf16.gmra.mxu0 %v2083
      %v2426 = vpop.f32.mrf.mxu0
      %v2427 = vadd.f32 %v2338, %v2426
      %v2428 = vpop.f32.mrf.mxu0
      %v2429 = vadd.f32 %v2340, %v2428
      %2430 = vmatmul.bf16.gmra.mxu0 %v2086
      %v2431 = vpop.f32.mrf.mxu0
      %v2432 = vadd.f32 %v2343, %v2431
      %v2433 = vpop.f32.mrf.mxu0
      %v2434 = vadd.f32 %v2345, %v2433
      %2435 = vmatmul.bf16.gmra.mxu0 %v2089
      %v2436 = vpop.f32.mrf.mxu0
      %v2437 = vadd.f32 %v2348, %v2436
      %v2438 = vpop.f32.mrf.mxu0
      %v2439 = vadd.f32 %v2350, %v2438
      %2440 = vmatmul.bf16.gmra.mxu0 %v2092
      %v2441 = vpop.f32.mrf.mxu0
      %v2442 = vadd.f32 %v2353, %v2441
      %v2443 = vpop.f32.mrf.mxu0
      %v2444 = vadd.f32 %v2355, %v2443
      %2445 = vmatmul.bf16.gmra.mxu0 %v2095
      %v2446 = vpop.f32.mrf.mxu0
      %v2447 = vadd.f32 %v2358, %v2446
      %v2448 = vpop.f32.mrf.mxu0
      %v2449 = vadd.f32 %v2360, %v2448
      %2450 = vmatmul.bf16.gmra.mxu0 %v2098
      %v2451 = vpop.f32.mrf.mxu0
      %v2452 = vadd.f32 %v2363, %v2451
      %v2453 = vpop.f32.mrf.mxu0
      %v2454 = vadd.f32 %v2365, %v2453
      %2455 = vmatmul.bf16.gmra.mxu0 %v2101
      %v2456 = vpop.f32.mrf.mxu0
      %v2457 = vadd.f32 %v2368, %v2456
      %v2458 = vpop.f32.mrf.mxu0
      %v2459 = vadd.f32 %v2370, %v2458
      %2460 = vmatmul.bf16.gmra.mxu0 %v2104
      %v2461 = vpop.f32.mrf.mxu0
      %v2462 = vadd.f32 %v2373, %v2461
      %v2463 = vpop.f32.mrf.mxu0
      %v2464 = vadd.f32 %v2375, %v2463
      %2465 = vmatmul.bf16.gmra.mxu0 %v2107
      %v2466 = vpop.f32.mrf.mxu0
      %v2467 = vadd.f32 %v2378, %v2466
      %v2468 = vpop.f32.mrf.mxu0
      %v2469 = vadd.f32 %v2380, %v2468
      %2470 = vmatmul.bf16.gmra.mxu0 %v2110
      %v2471 = vpop.f32.mrf.mxu0
      %v2472 = vadd.f32 %v2383, %v2471
      %v2473 = vpop.f32.mrf.mxu0
      %v2474 = vadd.f32 %v2385, %v2473
      %2475 = vmatmul.bf16.gmra.mxu0 %v2113
      %v2476 = vpop.f32.mrf.mxu0
      %v2477 = vadd.f32 %v2388, %v2476
      %v2478 = vpop.f32.mrf.mxu0
      %v2479 = vadd.f32 %v2390, %v2478
      %2480 = vmatmul.bf16.gmra.mxu0 %v2116
      %v2481 = vpop.f32.mrf.mxu0
      %v2482 = vadd.f32 %v2393, %v2481
      %v2483 = vpop.f32.mrf.mxu0
      %v2484 = vadd.f32 %v2395, %v2483
      %2485 = vmatmul.bf16.gmra.mxu0 %v2119
      %v2486 = vpop.f32.mrf.mxu0
      %v2487 = vadd.f32 %v2398, %v2486
      %v2488 = vpop.f32.mrf.mxu0
      %v2489 = vadd.f32 %v2400, %v2488
      %2490 = vdwg.mxu0
      %2491 = vmatpush.bf16.msra.mxu0 0
      %2492 = vmatpush.bf16.msra.mxu0 0
      %2493 = vmatpush.bf16.msra.mxu0 0
      %2494 = vmatpush.bf16.msra.mxu0 0
      %2495 = vmatpush.bf16.msra.mxu0 0
      %2496 = vmatpush.bf16.msra.mxu0 0
      %2497 = vmatpush.bf16.msra.mxu0 %v2246
      %2498 = vmatpush.bf16.msra.mxu0 %v2245
      %2499 = vmatmul.bf16.gmra.mxu0 %v2266
      %v2500 = vpop.f32.mrf.mxu0
      %v2501 = vadd.f32 %v2412, %v2500
      %v2502 = vpop.f32.mrf.mxu0
      %v2503 = vadd.f32 %v2414, %v2502
      %2504 = vmatmul.bf16.gmra.mxu0 %v2269
      %v2505 = vpop.f32.mrf.mxu0
      %v2506 = vadd.f32 %v2417, %v2505
      %v2507 = vpop.f32.mrf.mxu0
      %v2508 = vadd.f32 %v2419, %v2507
      %2509 = vmatmul.bf16.gmra.mxu0 %v2272
      %v2510 = vpop.f32.mrf.mxu0
      %v2511 = vadd.f32 %v2422, %v2510
      %v2512 = vpop.f32.mrf.mxu0
      %v2513 = vadd.f32 %v2424, %v2512
      %2514 = vmatmul.bf16.gmra.mxu0 %v2275
      %v2515 = vpop.f32.mrf.mxu0
      %v2516 = vadd.f32 %v2427, %v2515
      %v2517 = vpop.f32.mrf.mxu0
      %v2518 = vadd.f32 %v2429, %v2517
      %2519 = vmatmul.bf16.gmra.mxu0 %v2278
      %v2520 = vpop.f32.mrf.mxu0
      %v2521 = vadd.f32 %v2432, %v2520
      %v2522 = vpop.f32.mrf.mxu0
      %v2523 = vadd.f32 %v2434, %v2522
      %2524 = vmatmul.bf16.gmra.mxu0 %v2281
      %v2525 = vpop.f32.mrf.mxu0
      %v2526 = vadd.f32 %v2437, %v2525
      %v2527 = vpop.f32.mrf.mxu0
      %v2528 = vadd.f32 %v2439, %v2527
      %2529 = vmatmul.bf16.gmra.mxu0 %v2284
      %v2530 = vpop.f32.mrf.mxu0
      %v2531 = vadd.f32 %v2442, %v2530
      %v2532 = vpop.f32.mrf.mxu0
      %v2533 = vadd.f32 %v2444, %v2532
      %2534 = vmatmul.bf16.gmra.mxu0 %v2287
      %v2535 = vpop.f32.mrf.mxu0
      %v2536 = vadd.f32 %v2447, %v2535
      %v2537 = vpop.f32.mrf.mxu0
      %v2538 = vadd.f32 %v2449, %v2537
      %2539 = vmatmul.bf16.gmra.mxu0 %v2290
      %v2540 = vpop.f32.mrf.mxu0
      %v2541 = vadd.f32 %v2452, %v2540
      %v2542 = vpop.f32.mrf.mxu0
      %v2543 = vadd.f32 %v2454, %v2542
      %2544 = vmatmul.bf16.gmra.mxu0 %v2293
      %v2545 = vpop.f32.mrf.mxu0
      %v2546 = vadd.f32 %v2457, %v2545
      %v2547 = vpop.f32.mrf.mxu0
      %v2548 = vadd.f32 %v2459, %v2547
      %2549 = vmatmul.bf16.gmra.mxu0 %v2296
      %v2550 = vpop.f32.mrf.mxu0
      %v2551 = vadd.f32 %v2462, %v2550
      %v2552 = vpop.f32.mrf.mxu0
      %v2553 = vadd.f32 %v2464, %v2552
      %2554 = vmatmul.bf16.gmra.mxu0 %v2299
      %v2555 = vpop.f32.mrf.mxu0
      %v2556 = vadd.f32 %v2467, %v2555
      %v2557 = vpop.f32.mrf.mxu0
      %v2558 = vadd.f32 %v2469, %v2557
      %2559 = vmatmul.bf16.gmra.mxu0 %v2302
      %v2560 = vpop.f32.mrf.mxu0
      %v2561 = vadd.f32 %v2472, %v2560
      %v2562 = vpop.f32.mrf.mxu0
      %v2563 = vadd.f32 %v2474, %v2562
      %2564 = vmatmul.bf16.gmra.mxu0 %v2305
      %v2565 = vpop.f32.mrf.mxu0
      %v2566 = vadd.f32 %v2477, %v2565
      %v2567 = vpop.f32.mrf.mxu0
      %v2568 = vadd.f32 %v2479, %v2567
      %2569 = vmatmul.bf16.gmra.mxu0 %v2308
      %v2570 = vpop.f32.mrf.mxu0
      %v2571 = vadd.f32 %v2482, %v2570
      %v2572 = vpop.f32.mrf.mxu0
      %v2573 = vadd.f32 %v2484, %v2572
      %2574 = vmatmul.bf16.gmra.mxu0 %v2311
      %v2575 = vpop.f32.mrf.mxu0
      %v2576 = vadd.f32 %v2487, %v2575
      %v2577 = vpop.f32.mrf.mxu0
      %v2578 = vadd.f32 %v2489, %v2577
      %2579 = vdwg.mxu0
      %v2580 = vld [vmem:[%s2] sm:$0x1]
      %v2582 = vperm.slane %v2580, 0
      %v2584 = vmul.f32 %v2501, %v2582
      %v2585 = vmul.f32 %v2503, %v2582
      %v2586 = vmul.f32 %v2506, %v2582
      %v2587 = vmul.f32 %v2508, %v2582
      %v2588 = vmul.f32 %v2511, %v2582
      %v2589 = vmul.f32 %v2513, %v2582
      %v2590 = vmul.f32 %v2516, %v2582
      %v2591 = vmul.f32 %v2518, %v2582
      %v2592 = vmul.f32 %v2521, %v2582
      %v2593 = vmul.f32 %v2523, %v2582
      %v2594 = vmul.f32 %v2526, %v2582
      %v2595 = vmul.f32 %v2528, %v2582
      %v2596 = vmul.f32 %v2531, %v2582
      %v2597 = vmul.f32 %v2533, %v2582
      %v2598 = vmul.f32 %v2536, %v2582
      %v2599 = vmul.f32 %v2538, %v2582
      %v2600 = vmul.f32 %v2541, %v2582
      %v2601 = vmul.f32 %v2543, %v2582
      %v2602 = vmul.f32 %v2546, %v2582
      %v2603 = vmul.f32 %v2548, %v2582
      %v2604 = vmul.f32 %v2551, %v2582
      %v2605 = vmul.f32 %v2553, %v2582
      %v2606 = vmul.f32 %v2556, %v2582
      %v2607 = vmul.f32 %v2558, %v2582
      %v2608 = vmul.f32 %v2561, %v2582
      %v2609 = vmul.f32 %v2563, %v2582
      %v2610 = vmul.f32 %v2566, %v2582
      %v2611 = vmul.f32 %v2568, %v2582
      %v2612 = vmul.f32 %v2571, %v2582
      %v2613 = vmul.f32 %v2573, %v2582
      %v2614 = vmul.f32 %v2576, %v2582
      %v2615 = vmul.f32 %v2578, %v2582
      %v2616 = vld [vmem:[%s3] sm:$0x1]
      %v2618 = vperm.slane %v2616, 0
      %v2620 = vadd.f32 %v2584, %v2618
      %v2621 = vadd.f32 %v2585, %v2618
      %v2622 = vadd.f32 %v2586, %v2618
      %v2623 = vadd.f32 %v2587, %v2618
      %v2624 = vadd.f32 %v2588, %v2618
      %v2625 = vadd.f32 %v2589, %v2618
      %v2626 = vadd.f32 %v2590, %v2618
      %v2627 = vadd.f32 %v2591, %v2618
      %v2628 = vadd.f32 %v2592, %v2618
      %v2629 = vadd.f32 %v2593, %v2618
      %v2630 = vadd.f32 %v2594, %v2618
      %v2631 = vadd.f32 %v2595, %v2618
      %v2632 = vadd.f32 %v2596, %v2618
      %v2633 = vadd.f32 %v2597, %v2618
      %v2634 = vadd.f32 %v2598, %v2618
      %v2635 = vadd.f32 %v2599, %v2618
      %v2636 = vadd.f32 %v2600, %v2618
      %v2637 = vadd.f32 %v2601, %v2618
      %v2638 = vadd.f32 %v2602, %v2618
      %v2639 = vadd.f32 %v2603, %v2618
      %v2640 = vadd.f32 %v2604, %v2618
      %v2641 = vadd.f32 %v2605, %v2618
      %v2642 = vadd.f32 %v2606, %v2618
      %v2643 = vadd.f32 %v2607, %v2618
      %v2644 = vadd.f32 %v2608, %v2618
      %v2645 = vadd.f32 %v2609, %v2618
      %v2646 = vadd.f32 %v2610, %v2618
      %v2647 = vadd.f32 %v2611, %v2618
      %v2648 = vadd.f32 %v2612, %v2618
      %v2649 = vadd.f32 %v2613, %v2618
      %v2650 = vadd.f32 %v2614, %v2618
      %v2651 = vadd.f32 %v2615, %v2618
      %v2652 = vmax.f32 %v2620, 0.0
      %v2653 = vmax.f32 %v2621, 0.0
      %v2654 = vmax.f32 %v2622, 0.0
      %v2655 = vmax.f32 %v2623, 0.0
      %v2656 = vmax.f32 %v2624, 0.0
      %v2657 = vmax.f32 %v2625, 0.0
      %v2658 = vmax.f32 %v2626, 0.0
      %v2659 = vmax.f32 %v2627, 0.0
      %v2660 = vmax.f32 %v2628, 0.0
      %v2661 = vmax.f32 %v2629, 0.0
      %v2662 = vmax.f32 %v2630, 0.0
      %v2663 = vmax.f32 %v2631, 0.0
      %v2664 = vmax.f32 %v2632, 0.0
      %v2665 = vmax.f32 %v2633, 0.0
      %v2666 = vmax.f32 %v2634, 0.0
      %v2667 = vmax.f32 %v2635, 0.0
      %v2668 = vmax.f32 %v2636, 0.0
      %v2669 = vmax.f32 %v2637, 0.0
      %v2670 = vmax.f32 %v2638, 0.0
      %v2671 = vmax.f32 %v2639, 0.0
      %v2672 = vmax.f32 %v2640, 0.0
      %v2673 = vmax.f32 %v2641, 0.0
      %v2674 = vmax.f32 %v2642, 0.0
      %v2675 = vmax.f32 %v2643, 0.0
      %v2676 = vmax.f32 %v2644, 0.0
      %v2677 = vmax.f32 %v2645, 0.0
      %v2678 = vmax.f32 %v2646, 0.0
      %v2679 = vmax.f32 %v2647, 0.0
      %v2680 = vmax.f32 %v2648, 0.0
      %v2681 = vmax.f32 %v2649, 0.0
      %v2682 = vmax.f32 %v2650, 0.0
      %v2683 = vmax.f32 %v2651, 0.0
      %s2684 = scalar_lea.vmem [#allocation3], 24
      %2685 = vst.msk [vmem:[%s2684 + $0x1] sm:$0xff] %vm199, %v2652
      %2686 = vst.msk [vmem:[%s2684 + $0x9] sm:$0xff] %vm199, %v2653
      %2687 = vst.msk [vmem:[%s2684 + $0x19] sm:$0xff] %vm199, %v2654
      %2688 = vst.msk [vmem:[%s2684 + $0x21] sm:$0xff] %vm199, %v2655
      %2689 = vst.msk [vmem:[%s2684 + $0x31] sm:$0xff] %vm199, %v2656
      %2690 = vst.msk [vmem:[%s2684 + $0x39] sm:$0xff] %vm199, %v2657
      %2691 = vst.msk [vmem:[%s2684 + $0x49] sm:$0xff] %vm199, %v2658
      %2692 = vst.msk [vmem:[%s2684 + $0x51] sm:$0xff] %vm199, %v2659
      %2693 = vst.msk [vmem:[%s2684 + $0x61] sm:$0xff] %vm199, %v2660
      %2694 = vst.msk [vmem:[%s2684 + $0x69] sm:$0xff] %vm199, %v2661
      %2695 = vst.msk [vmem:[%s2684 + $0x79] sm:$0xff] %vm199, %v2662
      %2696 = vst.msk [vmem:[%s2684 + $0x81] sm:$0xff] %vm199, %v2663
      %2697 = vst.msk [vmem:[%s2684 + $0x91] sm:$0xff] %vm199, %v2664
      %2698 = vst.msk [vmem:[%s2684 + $0x99] sm:$0xff] %vm199, %v2665
      %2699 = vst.msk [vmem:[%s2684 + $0xa9] sm:$0xff] %vm199, %v2666
      %2700 = vst.msk [vmem:[%s2684 + $0xb1] sm:$0xff] %vm199, %v2667
      %2701 = vst.msk [vmem:[%s2684 + $0xc1] sm:$0xff] %vm199, %v2668
      %2702 = vst.msk [vmem:[%s2684 + $0xc9] sm:$0xff] %vm199, %v2669
      %2703 = vst.msk [vmem:[%s2684 + $0xd9] sm:$0xff] %vm199, %v2670
      %2704 = vst.msk [vmem:[%s2684 + $0xe1] sm:$0xff] %vm199, %v2671
      %2705 = vst.msk [vmem:[%s2684 + $0xf1] sm:$0xff] %vm199, %v2672
      %2706 = vst.msk [vmem:[%s2684 + $0xf9] sm:$0xff] %vm199, %v2673
      %2707 = vst.msk [vmem:[%s2684 + $0x109] sm:$0xff] %vm199, %v2674
      %2708 = vst.msk [vmem:[%s2684 + $0x111] sm:$0xff] %vm199, %v2675
      %2709 = vst.msk [vmem:[%s2684 + $0x121] sm:$0xff] %vm199, %v2676
      %2710 = vst.msk [vmem:[%s2684 + $0x129] sm:$0xff] %vm199, %v2677
      %2711 = vst.msk [vmem:[%s2684 + $0x139] sm:$0xff] %vm199, %v2678
      %2712 = vst.msk [vmem:[%s2684 + $0x141] sm:$0xff] %vm199, %v2679
      %2713 = vst.msk [vmem:[%s2684 + $0x151] sm:$0xff] %vm199, %v2680
      %2714 = vst.msk [vmem:[%s2684 + $0x159] sm:$0xff] %vm199, %v2681
      %2715 = vst.msk [vmem:[%s2684 + $0x169] sm:$0xff] %vm199, %v2682
      %2716 = vst.msk [vmem:[%s2684 + $0x171] sm:$0xff] %vm199, %v2683
      %v2717 = vld [vmem:[#allocation3] sm:$0xff]
      %v2718 = vld [vmem:[#allocation3 + $0x8] sm:$0xff]
      %v2719 = vld [vmem:[#allocation3 + $0x18] sm:$0xff]
      %v2720 = vld [vmem:[#allocation3 + $0x20] sm:$0xff]
      %v2721 = vld [vmem:[#allocation3 + $0x30] sm:$0xff]
      %v2722 = vld [vmem:[#allocation3 + $0x38] sm:$0xff]
      %v2723 = vld [vmem:[#allocation3 + $0x48] sm:$0xff]
      %v2724 = vld [vmem:[#allocation3 + $0x50] sm:$0xff]
      %v2725 = vld [vmem:[#allocation3 + $0x60] sm:$0xff]
      %v2726 = vld [vmem:[#allocation3 + $0x68] sm:$0xff]
      %v2727 = vld [vmem:[#allocation3 + $0x78] sm:$0xff]
      %v2728 = vld [vmem:[#allocation3 + $0x80] sm:$0xff]
      %v2729 = vld [vmem:[#allocation3 + $0x90] sm:$0xff]
      %v2730 = vld [vmem:[#allocation3 + $0x98] sm:$0xff]
      %v2731 = vld [vmem:[#allocation3 + $0xa8] sm:$0xff]
      %v2732 = vld [vmem:[#allocation3 + $0xb0] sm:$0xff]
      %v2733 = vld [vmem:[#allocation3 + $0xc0] sm:$0xff]
      %v2734 = vld [vmem:[#allocation3 + $0xc8] sm:$0xff]
      %v2735 = vld [vmem:[#allocation3 + $0xd8] sm:$0xff]
      %v2736 = vld [vmem:[#allocation3 + $0xe0] sm:$0xff]
      %v2737 = vld [vmem:[#allocation3 + $0xf0] sm:$0xff]
      %v2738 = vld [vmem:[#allocation3 + $0xf8] sm:$0xff]
      %v2739 = vld [vmem:[#allocation3 + $0x108] sm:$0xff]
      %v2740 = vld [vmem:[#allocation3 + $0x110] sm:$0xff]
      %v2741 = vld [vmem:[#allocation3 + $0x120] sm:$0xff]
      %v2742 = vld [vmem:[#allocation3 + $0x128] sm:$0xff]
      %v2743 = vld [vmem:[#allocation3 + $0x138] sm:$0xff]
      %v2744 = vld [vmem:[#allocation3 + $0x140] sm:$0xff]
      %v2745 = vld [vmem:[#allocation3 + $0x150] sm:$0xff]
      %v2746 = vld [vmem:[#allocation3 + $0x158] sm:$0xff]
      %v2747 = vld [vmem:[#allocation3 + $0x168] sm:$0xff]
      %v2748 = vld [vmem:[#allocation3 + $0x170] sm:$0xff]
      %v2749 = vpack.c.bf16 %v2717, %v2717
      %v2750 = vpack.c.bf16 %v2718, %v2718
      %v2751 = vpack.c.bf16 %v2719, %v2719
      %v2752 = vpack.c.bf16 %v2720, %v2720
      %v2753 = vpack.c.bf16 %v2721, %v2721
      %v2754 = vpack.c.bf16 %v2722, %v2722
      %v2755 = vpack.c.bf16 %v2723, %v2723
      %v2756 = vpack.c.bf16 %v2724, %v2724
      %v2757 = vpack.c.bf16 %v2725, %v2725
      %v2758 = vpack.c.bf16 %v2726, %v2726
      %v2759 = vpack.c.bf16 %v2727, %v2727
      %v2760 = vpack.c.bf16 %v2728, %v2728
      %v2761 = vpack.c.bf16 %v2729, %v2729
      %v2762 = vpack.c.bf16 %v2730, %v2730
      %v2763 = vpack.c.bf16 %v2731, %v2731
      %v2764 = vpack.c.bf16 %v2732, %v2732
      %v2765 = vpack.c.bf16 %v2733, %v2733
      %v2766 = vpack.c.bf16 %v2734, %v2734
      %v2767 = vpack.c.bf16 %v2735, %v2735
      %v2768 = vpack.c.bf16 %v2736, %v2736
      %v2769 = vpack.c.bf16 %v2737, %v2737
      %v2770 = vpack.c.bf16 %v2738, %v2738
      %v2771 = vpack.c.bf16 %v2739, %v2739
      %v2772 = vpack.c.bf16 %v2740, %v2740
      %v2773 = vpack.c.bf16 %v2741, %v2741
      %v2774 = vpack.c.bf16 %v2742, %v2742
      %v2775 = vpack.c.bf16 %v2743, %v2743
      %v2776 = vpack.c.bf16 %v2744, %v2744
      %v2777 = vpack.c.bf16 %v2745, %v2745
      %v2778 = vpack.c.bf16 %v2746, %v2746
      %v2779 = vpack.c.bf16 %v2747, %v2747
      %v2780 = vpack.c.bf16 %v2748, %v2748
      %v2781 = vld [vmem:[#allocation3 + $0x1] sm:$0xff]
      %v2782 = vld [vmem:[#allocation3 + $0x9] sm:$0xff]
      %v2783 = vld [vmem:[#allocation3 + $0x19] sm:$0xff]
      %v2784 = vld [vmem:[#allocation3 + $0x21] sm:$0xff]
      %v2785 = vld [vmem:[#allocation3 + $0x31] sm:$0xff]
      %v2786 = vld [vmem:[#allocation3 + $0x39] sm:$0xff]
      %v2787 = vld [vmem:[#allocation3 + $0x49] sm:$0xff]
      %v2788 = vld [vmem:[#allocation3 + $0x51] sm:$0xff]
      %v2789 = vld [vmem:[#allocation3 + $0x61] sm:$0xff]
      %v2790 = vld [vmem:[#allocation3 + $0x69] sm:$0xff]
      %v2791 = vld [vmem:[#allocation3 + $0x79] sm:$0xff]
      %v2792 = vld [vmem:[#allocation3 + $0x81] sm:$0xff]
      %v2793 = vld [vmem:[#allocation3 + $0x91] sm:$0xff]
      %v2794 = vld [vmem:[#allocation3 + $0x99] sm:$0xff]
      %v2795 = vld [vmem:[#allocation3 + $0xa9] sm:$0xff]
      %v2796 = vld [vmem:[#allocation3 + $0xb1] sm:$0xff]
      %v2797 = vld [vmem:[#allocation3 + $0xc1] sm:$0xff]
      %v2798 = vld [vmem:[#allocation3 + $0xc9] sm:$0xff]
      %v2799 = vld [vmem:[#allocation3 + $0xd9] sm:$0xff]
      %v2800 = vld [vmem:[#allocation3 + $0xe1] sm:$0xff]
      %v2801 = vld [vmem:[#allocation3 + $0xf1] sm:$0xff]
      %v2802 = vld [vmem:[#allocation3 + $0xf9] sm:$0xff]
      %v2803 = vld [vmem:[#allocation3 + $0x109] sm:$0xff]
      %v2804 = vld [vmem:[#allocation3 + $0x111] sm:$0xff]
      %v2805 = vld [vmem:[#allocation3 + $0x121] sm:$0xff]
      %v2806 = vld [vmem:[#allocation3 + $0x129] sm:$0xff]
      %v2807 = vld [vmem:[#allocation3 + $0x139] sm:$0xff]
      %v2808 = vld [vmem:[#allocation3 + $0x141] sm:$0xff]
      %v2809 = vld [vmem:[#allocation3 + $0x151] sm:$0xff]
      %v2810 = vld [vmem:[#allocation3 + $0x159] sm:$0xff]
      %v2811 = vld [vmem:[#allocation3 + $0x169] sm:$0xff]
      %v2812 = vld [vmem:[#allocation3 + $0x171] sm:$0xff]
      %v2813 = vpack.c.bf16 %v2781, %v2781
      %v2814 = vpack.c.bf16 %v2782, %v2782
      %v2815 = vpack.c.bf16 %v2783, %v2783
      %v2816 = vpack.c.bf16 %v2784, %v2784
      %v2817 = vpack.c.bf16 %v2785, %v2785
      %v2818 = vpack.c.bf16 %v2786, %v2786
      %v2819 = vpack.c.bf16 %v2787, %v2787
      %v2820 = vpack.c.bf16 %v2788, %v2788
      %v2821 = vpack.c.bf16 %v2789, %v2789
      %v2822 = vpack.c.bf16 %v2790, %v2790
      %v2823 = vpack.c.bf16 %v2791, %v2791
      %v2824 = vpack.c.bf16 %v2792, %v2792
      %v2825 = vpack.c.bf16 %v2793, %v2793
      %v2826 = vpack.c.bf16 %v2794, %v2794
      %v2827 = vpack.c.bf16 %v2795, %v2795
      %v2828 = vpack.c.bf16 %v2796, %v2796
      %v2829 = vpack.c.bf16 %v2797, %v2797
      %v2830 = vpack.c.bf16 %v2798, %v2798
      %v2831 = vpack.c.bf16 %v2799, %v2799
      %v2832 = vpack.c.bf16 %v2800, %v2800
      %v2833 = vpack.c.bf16 %v2801, %v2801
      %v2834 = vpack.c.bf16 %v2802, %v2802
      %v2835 = vpack.c.bf16 %v2803, %v2803
      %v2836 = vpack.c.bf16 %v2804, %v2804
      %v2837 = vpack.c.bf16 %v2805, %v2805
      %v2838 = vpack.c.bf16 %v2806, %v2806
      %v2839 = vpack.c.bf16 %v2807, %v2807
      %v2840 = vpack.c.bf16 %v2808, %v2808
      %v2841 = vpack.c.bf16 %v2809, %v2809
      %v2842 = vpack.c.bf16 %v2810, %v2810
      %v2843 = vpack.c.bf16 %v2811, %v2811
      %v2844 = vpack.c.bf16 %v2812, %v2812
      %v2845 = vld [vmem:[#allocation3 + $0x2] sm:$0xff]
      %v2846 = vld [vmem:[#allocation3 + $0xa] sm:$0xff]
      %v2847 = vld [vmem:[#allocation3 + $0x1a] sm:$0xff]
      %v2848 = vld [vmem:[#allocation3 + $0x22] sm:$0xff]
      %v2849 = vld [vmem:[#allocation3 + $0x32] sm:$0xff]
      %v2850 = vld [vmem:[#allocation3 + $0x3a] sm:$0xff]
      %v2851 = vld [vmem:[#allocation3 + $0x4a] sm:$0xff]
      %v2852 = vld [vmem:[#allocation3 + $0x52] sm:$0xff]
      %v2853 = vld [vmem:[#allocation3 + $0x62] sm:$0xff]
      %v2854 = vld [vmem:[#allocation3 + $0x6a] sm:$0xff]
      %v2855 = vld [vmem:[#allocation3 + $0x7a] sm:$0xff]
      %v2856 = vld [vmem:[#allocation3 + $0x82] sm:$0xff]
      %v2857 = vld [vmem:[#allocation3 + $0x92] sm:$0xff]
      %v2858 = vld [vmem:[#allocation3 + $0x9a] sm:$0xff]
      %v2859 = vld [vmem:[#allocation3 + $0xaa] sm:$0xff]
      %v2860 = vld [vmem:[#allocation3 + $0xb2] sm:$0xff]
      %v2861 = vld [vmem:[#allocation3 + $0xc2] sm:$0xff]
      %v2862 = vld [vmem:[#allocation3 + $0xca] sm:$0xff]
      %v2863 = vld [vmem:[#allocation3 + $0xda] sm:$0xff]
      %v2864 = vld [vmem:[#allocation3 + $0xe2] sm:$0xff]
      %v2865 = vld [vmem:[#allocation3 + $0xf2] sm:$0xff]
      %v2866 = vld [vmem:[#allocation3 + $0xfa] sm:$0xff]
      %v2867 = vld [vmem:[#allocation3 + $0x10a] sm:$0xff]
      %v2868 = vld [vmem:[#allocation3 + $0x112] sm:$0xff]
      %v2869 = vld [vmem:[#allocation3 + $0x122] sm:$0xff]
      %v2870 = vld [vmem:[#allocation3 + $0x12a] sm:$0xff]
      %v2871 = vld [vmem:[#allocation3 + $0x13a] sm:$0xff]
      %v2872 = vld [vmem:[#allocation3 + $0x142] sm:$0xff]
      %v2873 = vld [vmem:[#allocation3 + $0x152] sm:$0xff]
      %v2874 = vld [vmem:[#allocation3 + $0x15a] sm:$0xff]
      %v2875 = vld [vmem:[#allocation3 + $0x16a] sm:$0xff]
      %v2876 = vld [vmem:[#allocation3 + $0x172] sm:$0xff]
      %v2877 = vpack.c.bf16 %v2845, %v2845
      %v2878 = vpack.c.bf16 %v2846, %v2846
      %v2879 = vpack.c.bf16 %v2847, %v2847
      %v2880 = vpack.c.bf16 %v2848, %v2848
      %v2881 = vpack.c.bf16 %v2849, %v2849
      %v2882 = vpack.c.bf16 %v2850, %v2850
      %v2883 = vpack.c.bf16 %v2851, %v2851
      %v2884 = vpack.c.bf16 %v2852, %v2852
      %v2885 = vpack.c.bf16 %v2853, %v2853
      %v2886 = vpack.c.bf16 %v2854, %v2854
      %v2887 = vpack.c.bf16 %v2855, %v2855
      %v2888 = vpack.c.bf16 %v2856, %v2856
      %v2889 = vpack.c.bf16 %v2857, %v2857
      %v2890 = vpack.c.bf16 %v2858, %v2858
      %v2891 = vpack.c.bf16 %v2859, %v2859
      %v2892 = vpack.c.bf16 %v2860, %v2860
      %v2893 = vpack.c.bf16 %v2861, %v2861
      %v2894 = vpack.c.bf16 %v2862, %v2862
      %v2895 = vpack.c.bf16 %v2863, %v2863
      %v2896 = vpack.c.bf16 %v2864, %v2864
      %v2897 = vpack.c.bf16 %v2865, %v2865
      %v2898 = vpack.c.bf16 %v2866, %v2866
      %v2899 = vpack.c.bf16 %v2867, %v2867
      %v2900 = vpack.c.bf16 %v2868, %v2868
      %v2901 = vpack.c.bf16 %v2869, %v2869
      %v2902 = vpack.c.bf16 %v2870, %v2870
      %v2903 = vpack.c.bf16 %v2871, %v2871
      %v2904 = vpack.c.bf16 %v2872, %v2872
      %v2905 = vpack.c.bf16 %v2873, %v2873
      %v2906 = vpack.c.bf16 %v2874, %v2874
      %v2907 = vpack.c.bf16 %v2875, %v2875
      %v2908 = vpack.c.bf16 %v2876, %v2876
      %v2909 = vld [vmem:[%s2684] sm:$0xff]
      %v2910 = vld [vmem:[%s2684 + $0x8] sm:$0xff]
      %v2911 = vld [vmem:[%s2684 + $0x18] sm:$0xff]
      %v2912 = vld [vmem:[%s2684 + $0x20] sm:$0xff]
      %v2913 = vld [vmem:[%s2684 + $0x30] sm:$0xff]
      %v2914 = vld [vmem:[%s2684 + $0x38] sm:$0xff]
      %v2915 = vld [vmem:[%s2684 + $0x48] sm:$0xff]
      %v2916 = vld [vmem:[%s2684 + $0x50] sm:$0xff]
      %v2917 = vld [vmem:[%s2684 + $0x60] sm:$0xff]
      %v2918 = vld [vmem:[%s2684 + $0x68] sm:$0xff]
      %v2919 = vld [vmem:[%s2684 + $0x78] sm:$0xff]
      %v2920 = vld [vmem:[%s2684 + $0x80] sm:$0xff]
      %v2921 = vld [vmem:[%s2684 + $0x90] sm:$0xff]
      %v2922 = vld [vmem:[%s2684 + $0x98] sm:$0xff]
      %v2923 = vld [vmem:[%s2684 + $0xa8] sm:$0xff]
      %v2924 = vld [vmem:[%s2684 + $0xb0] sm:$0xff]
      %v2925 = vld [vmem:[%s2684 + $0xc0] sm:$0xff]
      %v2926 = vld [vmem:[%s2684 + $0xc8] sm:$0xff]
      %v2927 = vld [vmem:[%s2684 + $0xd8] sm:$0xff]
      %v2928 = vld [vmem:[%s2684 + $0xe0] sm:$0xff]
      %v2929 = vld [vmem:[%s2684 + $0xf0] sm:$0xff]
      %v2930 = vld [vmem:[%s2684 + $0xf8] sm:$0xff]
      %v2931 = vld [vmem:[%s2684 + $0x108] sm:$0xff]
      %v2932 = vld [vmem:[%s2684 + $0x110] sm:$0xff]
      %v2933 = vld [vmem:[%s2684 + $0x120] sm:$0xff]
      %v2934 = vld [vmem:[%s2684 + $0x128] sm:$0xff]
      %v2935 = vld [vmem:[%s2684 + $0x138] sm:$0xff]
      %v2936 = vld [vmem:[%s2684 + $0x140] sm:$0xff]
      %v2937 = vld [vmem:[%s2684 + $0x150] sm:$0xff]
      %v2938 = vld [vmem:[%s2684 + $0x158] sm:$0xff]
      %v2939 = vld [vmem:[%s2684 + $0x168] sm:$0xff]
      %v2940 = vld [vmem:[%s2684 + $0x170] sm:$0xff]
      %v2941 = vpack.c.bf16 %v2909, %v2909
      %v2942 = vpack.c.bf16 %v2910, %v2910
      %v2943 = vpack.c.bf16 %v2911, %v2911
      %v2944 = vpack.c.bf16 %v2912, %v2912
      %v2945 = vpack.c.bf16 %v2913, %v2913
      %v2946 = vpack.c.bf16 %v2914, %v2914
      %v2947 = vpack.c.bf16 %v2915, %v2915
      %v2948 = vpack.c.bf16 %v2916, %v2916
      %v2949 = vpack.c.bf16 %v2917, %v2917
      %v2950 = vpack.c.bf16 %v2918, %v2918
      %v2951 = vpack.c.bf16 %v2919, %v2919
      %v2952 = vpack.c.bf16 %v2920, %v2920
      %v2953 = vpack.c.bf16 %v2921, %v2921
      %v2954 = vpack.c.bf16 %v2922, %v2922
      %v2955 = vpack.c.bf16 %v2923, %v2923
      %v2956 = vpack.c.bf16 %v2924, %v2924
      %v2957 = vpack.c.bf16 %v2925, %v2925
      %v2958 = vpack.c.bf16 %v2926, %v2926
      %v2959 = vpack.c.bf16 %v2927, %v2927
      %v2960 = vpack.c.bf16 %v2928, %v2928
      %v2961 = vpack.c.bf16 %v2929, %v2929
      %v2962 = vpack.c.bf16 %v2930, %v2930
      %v2963 = vpack.c.bf16 %v2931, %v2931
      %v2964 = vpack.c.bf16 %v2932, %v2932
      %v2965 = vpack.c.bf16 %v2933, %v2933
      %v2966 = vpack.c.bf16 %v2934, %v2934
      %v2967 = vpack.c.bf16 %v2935, %v2935
      %v2968 = vpack.c.bf16 %v2936, %v2936
      %v2969 = vpack.c.bf16 %v2937, %v2937
      %v2970 = vpack.c.bf16 %v2938, %v2938
      %v2971 = vpack.c.bf16 %v2939, %v2939
      %v2972 = vpack.c.bf16 %v2940, %v2940
      %v2973 = vld [vmem:[%s2684 + $0x1] sm:$0xff]
      %v2974 = vld [vmem:[%s2684 + $0x9] sm:$0xff]
      %v2975 = vld [vmem:[%s2684 + $0x19] sm:$0xff]
      %v2976 = vld [vmem:[%s2684 + $0x21] sm:$0xff]
      %v2977 = vld [vmem:[%s2684 + $0x31] sm:$0xff]
      %v2978 = vld [vmem:[%s2684 + $0x39] sm:$0xff]
      %v2979 = vld [vmem:[%s2684 + $0x49] sm:$0xff]
      %v2980 = vld [vmem:[%s2684 + $0x51] sm:$0xff]
      %v2981 = vld [vmem:[%s2684 + $0x61] sm:$0xff]
      %v2982 = vld [vmem:[%s2684 + $0x69] sm:$0xff]
      %v2983 = vld [vmem:[%s2684 + $0x79] sm:$0xff]
      %v2984 = vld [vmem:[%s2684 + $0x81] sm:$0xff]
      %v2985 = vld [vmem:[%s2684 + $0x91] sm:$0xff]
      %v2986 = vld [vmem:[%s2684 + $0x99] sm:$0xff]
      %v2987 = vld [vmem:[%s2684 + $0xa9] sm:$0xff]
      %v2988 = vld [vmem:[%s2684 + $0xb1] sm:$0xff]
      %v2989 = vld [vmem:[%s2684 + $0xc1] sm:$0xff]
      %v2990 = vld [vmem:[%s2684 + $0xc9] sm:$0xff]
      %v2991 = vld [vmem:[%s2684 + $0xd9] sm:$0xff]
      %v2992 = vld [vmem:[%s2684 + $0xe1] sm:$0xff]
      %v2993 = vld [vmem:[%s2684 + $0xf1] sm:$0xff]
      %v2994 = vld [vmem:[%s2684 + $0xf9] sm:$0xff]
      %v2995 = vld [vmem:[%s2684 + $0x109] sm:$0xff]
      %v2996 = vld [vmem:[%s2684 + $0x111] sm:$0xff]
      %v2997 = vld [vmem:[%s2684 + $0x121] sm:$0xff]
      %v2998 = vld [vmem:[%s2684 + $0x129] sm:$0xff]
      %v2999 = vld [vmem:[%s2684 + $0x139] sm:$0xff]
      %v3000 = vld [vmem:[%s2684 + $0x141] sm:$0xff]
      %v3001 = vld [vmem:[%s2684 + $0x151] sm:$0xff]
      %v3002 = vld [vmem:[%s2684 + $0x159] sm:$0xff]
      %v3003 = vld [vmem:[%s2684 + $0x169] sm:$0xff]
      %v3004 = vld [vmem:[%s2684 + $0x171] sm:$0xff]
      %v3005 = vpack.c.bf16 %v2973, %v2973
      %v3006 = vpack.c.bf16 %v2974, %v2974
      %v3007 = vpack.c.bf16 %v2975, %v2975
      %v3008 = vpack.c.bf16 %v2976, %v2976
      %v3009 = vpack.c.bf16 %v2977, %v2977
      %v3010 = vpack.c.bf16 %v2978, %v2978
      %v3011 = vpack.c.bf16 %v2979, %v2979
      %v3012 = vpack.c.bf16 %v2980, %v2980
      %v3013 = vpack.c.bf16 %v2981, %v2981
      %v3014 = vpack.c.bf16 %v2982, %v2982
      %v3015 = vpack.c.bf16 %v2983, %v2983
      %v3016 = vpack.c.bf16 %v2984, %v2984
      %v3017 = vpack.c.bf16 %v2985, %v2985
      %v3018 = vpack.c.bf16 %v2986, %v2986
      %v3019 = vpack.c.bf16 %v2987, %v2987
      %v3020 = vpack.c.bf16 %v2988, %v2988
      %v3021 = vpack.c.bf16 %v2989, %v2989
      %v3022 = vpack.c.bf16 %v2990, %v2990
      %v3023 = vpack.c.bf16 %v2991, %v2991
      %v3024 = vpack.c.bf16 %v2992, %v2992
      %v3025 = vpack.c.bf16 %v2993, %v2993
      %v3026 = vpack.c.bf16 %v2994, %v2994
      %v3027 = vpack.c.bf16 %v2995, %v2995
      %v3028 = vpack.c.bf16 %v2996, %v2996
      %v3029 = vpack.c.bf16 %v2997, %v2997
      %v3030 = vpack.c.bf16 %v2998, %v2998
      %v3031 = vpack.c.bf16 %v2999, %v2999
      %v3032 = vpack.c.bf16 %v3000, %v3000
      %v3033 = vpack.c.bf16 %v3001, %v3001
      %v3034 = vpack.c.bf16 %v3002, %v3002
      %v3035 = vpack.c.bf16 %v3003, %v3003
      %v3036 = vpack.c.bf16 %v3004, %v3004
      %v3037 = vld [vmem:[%s2684 + $0x2] sm:$0xff]
      %v3038 = vld [vmem:[%s2684 + $0xa] sm:$0xff]
      %v3039 = vld [vmem:[%s2684 + $0x1a] sm:$0xff]
      %v3040 = vld [vmem:[%s2684 + $0x22] sm:$0xff]
      %v3041 = vld [vmem:[%s2684 + $0x32] sm:$0xff]
      %v3042 = vld [vmem:[%s2684 + $0x3a] sm:$0xff]
      %v3043 = vld [vmem:[%s2684 + $0x4a] sm:$0xff]
      %v3044 = vld [vmem:[%s2684 + $0x52] sm:$0xff]
      %v3045 = vld [vmem:[%s2684 + $0x62] sm:$0xff]
      %v3046 = vld [vmem:[%s2684 + $0x6a] sm:$0xff]
      %v3047 = vld [vmem:[%s2684 + $0x7a] sm:$0xff]
      %v3048 = vld [vmem:[%s2684 + $0x82] sm:$0xff]
      %v3049 = vld [vmem:[%s2684 + $0x92] sm:$0xff]
      %v3050 = vld [vmem:[%s2684 + $0x9a] sm:$0xff]
      %v3051 = vld [vmem:[%s2684 + $0xaa] sm:$0xff]
      %v3052 = vld [vmem:[%s2684 + $0xb2] sm:$0xff]
      %v3053 = vld [vmem:[%s2684 + $0xc2] sm:$0xff]
      %v3054 = vld [vmem:[%s2684 + $0xca] sm:$0xff]
      %v3055 = vld [vmem:[%s2684 + $0xda] sm:$0xff]
      %v3056 = vld [vmem:[%s2684 + $0xe2] sm:$0xff]
      %v3057 = vld [vmem:[%s2684 + $0xf2] sm:$0xff]
      %v3058 = vld [vmem:[%s2684 + $0xfa] sm:$0xff]
      %v3059 = vld [vmem:[%s2684 + $0x10a] sm:$0xff]
      %v3060 = vld [vmem:[%s2684 + $0x112] sm:$0xff]
      %v3061 = vld [vmem:[%s2684 + $0x122] sm:$0xff]
      %v3062 = vld [vmem:[%s2684 + $0x12a] sm:$0xff]
      %v3063 = vld [vmem:[%s2684 + $0x13a] sm:$0xff]
      %v3064 = vld [vmem:[%s2684 + $0x142] sm:$0xff]
      %v3065 = vld [vmem:[%s2684 + $0x152] sm:$0xff]
      %v3066 = vld [vmem:[%s2684 + $0x15a] sm:$0xff]
      %v3067 = vld [vmem:[%s2684 + $0x16a] sm:$0xff]
      %v3068 = vld [vmem:[%s2684 + $0x172] sm:$0xff]
      %v3069 = vpack.c.bf16 %v3037, %v3037
      %v3070 = vpack.c.bf16 %v3038, %v3038
      %v3071 = vpack.c.bf16 %v3039, %v3039
      %v3072 = vpack.c.bf16 %v3040, %v3040
      %v3073 = vpack.c.bf16 %v3041, %v3041
      %v3074 = vpack.c.bf16 %v3042, %v3042
      %v3075 = vpack.c.bf16 %v3043, %v3043
      %v3076 = vpack.c.bf16 %v3044, %v3044
      %v3077 = vpack.c.bf16 %v3045, %v3045
      %v3078 = vpack.c.bf16 %v3046, %v3046
      %v3079 = vpack.c.bf16 %v3047, %v3047
      %v3080 = vpack.c.bf16 %v3048, %v3048
      %v3081 = vpack.c.bf16 %v3049, %v3049
      %v3082 = vpack.c.bf16 %v3050, %v3050
      %v3083 = vpack.c.bf16 %v3051, %v3051
      %v3084 = vpack.c.bf16 %v3052, %v3052
      %v3085 = vpack.c.bf16 %v3053, %v3053
      %v3086 = vpack.c.bf16 %v3054, %v3054
      %v3087 = vpack.c.bf16 %v3055, %v3055
      %v3088 = vpack.c.bf16 %v3056, %v3056
      %v3089 = vpack.c.bf16 %v3057, %v3057
      %v3090 = vpack.c.bf16 %v3058, %v3058
      %v3091 = vpack.c.bf16 %v3059, %v3059
      %v3092 = vpack.c.bf16 %v3060, %v3060
      %v3093 = vpack.c.bf16 %v3061, %v3061
      %v3094 = vpack.c.bf16 %v3062, %v3062
      %v3095 = vpack.c.bf16 %v3063, %v3063
      %v3096 = vpack.c.bf16 %v3064, %v3064
      %v3097 = vpack.c.bf16 %v3065, %v3065
      %v3098 = vpack.c.bf16 %v3066, %v3066
      %v3099 = vpack.c.bf16 %v3067, %v3067
      %v3100 = vpack.c.bf16 %v3068, %v3068
      %s3101 = scalar_lea.vmem [#allocation3], 48
      %v3102 = vld [vmem:[%s3101] sm:$0xff]
      %v3103 = vld [vmem:[%s3101 + $0x8] sm:$0xff]
      %v3104 = vld [vmem:[%s3101 + $0x18] sm:$0xff]
      %v3105 = vld [vmem:[%s3101 + $0x20] sm:$0xff]
      %v3106 = vld [vmem:[%s3101 + $0x30] sm:$0xff]
      %v3107 = vld [vmem:[%s3101 + $0x38] sm:$0xff]
      %v3108 = vld [vmem:[%s3101 + $0x48] sm:$0xff]
      %v3109 = vld [vmem:[%s3101 + $0x50] sm:$0xff]
      %v3110 = vld [vmem:[%s3101 + $0x60] sm:$0xff]
      %v3111 = vld [vmem:[%s3101 + $0x68] sm:$0xff]
      %v3112 = vld [vmem:[%s3101 + $0x78] sm:$0xff]
      %v3113 = vld [vmem:[%s3101 + $0x80] sm:$0xff]
      %v3114 = vld [vmem:[%s3101 + $0x90] sm:$0xff]
      %v3115 = vld [vmem:[%s3101 + $0x98] sm:$0xff]
      %v3116 = vld [vmem:[%s3101 + $0xa8] sm:$0xff]
      %v3117 = vld [vmem:[%s3101 + $0xb0] sm:$0xff]
      %v3118 = vld [vmem:[%s3101 + $0xc0] sm:$0xff]
      %v3119 = vld [vmem:[%s3101 + $0xc8] sm:$0xff]
      %v3120 = vld [vmem:[%s3101 + $0xd8] sm:$0xff]
      %v3121 = vld [vmem:[%s3101 + $0xe0] sm:$0xff]
      %v3122 = vld [vmem:[%s3101 + $0xf0] sm:$0xff]
      %v3123 = vld [vmem:[%s3101 + $0xf8] sm:$0xff]
      %v3124 = vld [vmem:[%s3101 + $0x108] sm:$0xff]
      %v3125 = vld [vmem:[%s3101 + $0x110] sm:$0xff]
      %v3126 = vld [vmem:[%s3101 + $0x120] sm:$0xff]
      %v3127 = vld [vmem:[%s3101 + $0x128] sm:$0xff]
      %v3128 = vld [vmem:[%s3101 + $0x138] sm:$0xff]
      %v3129 = vld [vmem:[%s3101 + $0x140] sm:$0xff]
      %v3130 = vld [vmem:[%s3101 + $0x150] sm:$0xff]
      %v3131 = vld [vmem:[%s3101 + $0x158] sm:$0xff]
      %v3132 = vld [vmem:[%s3101 + $0x168] sm:$0xff]
      %v3133 = vld [vmem:[%s3101 + $0x170] sm:$0xff]
      %v3134 = vpack.c.bf16 %v3102, %v3102
      %v3135 = vpack.c.bf16 %v3103, %v3103
      %v3136 = vpack.c.bf16 %v3104, %v3104
      %v3137 = vpack.c.bf16 %v3105, %v3105
      %v3138 = vpack.c.bf16 %v3106, %v3106
      %v3139 = vpack.c.bf16 %v3107, %v3107
      %v3140 = vpack.c.bf16 %v3108, %v3108
      %v3141 = vpack.c.bf16 %v3109, %v3109
      %v3142 = vpack.c.bf16 %v3110, %v3110
      %v3143 = vpack.c.bf16 %v3111, %v3111
      %v3144 = vpack.c.bf16 %v3112, %v3112
      %v3145 = vpack.c.bf16 %v3113, %v3113
      %v3146 = vpack.c.bf16 %v3114, %v3114
      %v3147 = vpack.c.bf16 %v3115, %v3115
      %v3148 = vpack.c.bf16 %v3116, %v3116
      %v3149 = vpack.c.bf16 %v3117, %v3117
      %v3150 = vpack.c.bf16 %v3118, %v3118
      %v3151 = vpack.c.bf16 %v3119, %v3119
      %v3152 = vpack.c.bf16 %v3120, %v3120
      %v3153 = vpack.c.bf16 %v3121, %v3121
      %v3154 = vpack.c.bf16 %v3122, %v3122
      %v3155 = vpack.c.bf16 %v3123, %v3123
      %v3156 = vpack.c.bf16 %v3124, %v3124
      %v3157 = vpack.c.bf16 %v3125, %v3125
      %v3158 = vpack.c.bf16 %v3126, %v3126
      %v3159 = vpack.c.bf16 %v3127, %v3127
      %v3160 = vpack.c.bf16 %v3128, %v3128
      %v3161 = vpack.c.bf16 %v3129, %v3129
      %v3162 = vpack.c.bf16 %v3130, %v3130
      %v3163 = vpack.c.bf16 %v3131, %v3131
      %v3164 = vpack.c.bf16 %v3132, %v3132
      %v3165 = vpack.c.bf16 %v3133, %v3133
      %v3166 = vld [vmem:[%s3101 + $0x1] sm:$0xff]
      %v3167 = vld [vmem:[%s3101 + $0x9] sm:$0xff]
      %v3168 = vld [vmem:[%s3101 + $0x19] sm:$0xff]
      %v3169 = vld [vmem:[%s3101 + $0x21] sm:$0xff]
      %v3170 = vld [vmem:[%s3101 + $0x31] sm:$0xff]
      %v3171 = vld [vmem:[%s3101 + $0x39] sm:$0xff]
      %v3172 = vld [vmem:[%s3101 + $0x49] sm:$0xff]
      %v3173 = vld [vmem:[%s3101 + $0x51] sm:$0xff]
      %v3174 = vld [vmem:[%s3101 + $0x61] sm:$0xff]
      %v3175 = vld [vmem:[%s3101 + $0x69] sm:$0xff]
      %v3176 = vld [vmem:[%s3101 + $0x79] sm:$0xff]
      %v3177 = vld [vmem:[%s3101 + $0x81] sm:$0xff]
      %v3178 = vld [vmem:[%s3101 + $0x91] sm:$0xff]
      %v3179 = vld [vmem:[%s3101 + $0x99] sm:$0xff]
      %v3180 = vld [vmem:[%s3101 + $0xa9] sm:$0xff]
      %v3181 = vld [vmem:[%s3101 + $0xb1] sm:$0xff]
      %v3182 = vld [vmem:[%s3101 + $0xc1] sm:$0xff]
      %v3183 = vld [vmem:[%s3101 + $0xc9] sm:$0xff]
      %v3184 = vld [vmem:[%s3101 + $0xd9] sm:$0xff]
      %v3185 = vld [vmem:[%s3101 + $0xe1] sm:$0xff]
      %v3186 = vld [vmem:[%s3101 + $0xf1] sm:$0xff]
      %v3187 = vld [vmem:[%s3101 + $0xf9] sm:$0xff]
      %v3188 = vld [vmem:[%s3101 + $0x109] sm:$0xff]
      %v3189 = vld [vmem:[%s3101 + $0x111] sm:$0xff]
      %v3190 = vld [vmem:[%s3101 + $0x121] sm:$0xff]
      %v3191 = vld [vmem:[%s3101 + $0x129] sm:$0xff]
      %v3192 = vld [vmem:[%s3101 + $0x139] sm:$0xff]
      %v3193 = vld [vmem:[%s3101 + $0x141] sm:$0xff]
      %v3194 = vld [vmem:[%s3101 + $0x151] sm:$0xff]
      %v3195 = vld [vmem:[%s3101 + $0x159] sm:$0xff]
      %v3196 = vld [vmem:[%s3101 + $0x169] sm:$0xff]
      %v3197 = vld [vmem:[%s3101 + $0x171] sm:$0xff]
      %v3198 = vpack.c.bf16 %v3166, %v3166
      %v3199 = vpack.c.bf16 %v3167, %v3167
      %v3200 = vpack.c.bf16 %v3168, %v3168
      %v3201 = vpack.c.bf16 %v3169, %v3169
      %v3202 = vpack.c.bf16 %v3170, %v3170
      %v3203 = vpack.c.bf16 %v3171, %v3171
      %v3204 = vpack.c.bf16 %v3172, %v3172
      %v3205 = vpack.c.bf16 %v3173, %v3173
      %v3206 = vpack.c.bf16 %v3174, %v3174
      %v3207 = vpack.c.bf16 %v3175, %v3175
      %v3208 = vpack.c.bf16 %v3176, %v3176
      %v3209 = vpack.c.bf16 %v3177, %v3177
      %v3210 = vpack.c.bf16 %v3178, %v3178
      %v3211 = vpack.c.bf16 %v3179, %v3179
      %v3212 = vpack.c.bf16 %v3180, %v3180
      %v3213 = vpack.c.bf16 %v3181, %v3181
      %v3214 = vpack.c.bf16 %v3182, %v3182
      %v3215 = vpack.c.bf16 %v3183, %v3183
      %v3216 = vpack.c.bf16 %v3184, %v3184
      %v3217 = vpack.c.bf16 %v3185, %v3185
      %v3218 = vpack.c.bf16 %v3186, %v3186
      %v3219 = vpack.c.bf16 %v3187, %v3187
      %v3220 = vpack.c.bf16 %v3188, %v3188
      %v3221 = vpack.c.bf16 %v3189, %v3189
      %v3222 = vpack.c.bf16 %v3190, %v3190
      %v3223 = vpack.c.bf16 %v3191, %v3191
      %v3224 = vpack.c.bf16 %v3192, %v3192
      %v3225 = vpack.c.bf16 %v3193, %v3193
      %v3226 = vpack.c.bf16 %v3194, %v3194
      %v3227 = vpack.c.bf16 %v3195, %v3195
      %v3228 = vpack.c.bf16 %v3196, %v3196
      %v3229 = vpack.c.bf16 %v3197, %v3197
      %v3230 = vld [vmem:[%s3101 + $0x2] sm:$0xff]
      %v3231 = vld [vmem:[%s3101 + $0xa] sm:$0xff]
      %v3232 = vld [vmem:[%s3101 + $0x1a] sm:$0xff]
      %v3233 = vld [vmem:[%s3101 + $0x22] sm:$0xff]
      %v3234 = vld [vmem:[%s3101 + $0x32] sm:$0xff]
      %v3235 = vld [vmem:[%s3101 + $0x3a] sm:$0xff]
      %v3236 = vld [vmem:[%s3101 + $0x4a] sm:$0xff]
      %v3237 = vld [vmem:[%s3101 + $0x52] sm:$0xff]
      %v3238 = vld [vmem:[%s3101 + $0x62] sm:$0xff]
      %v3239 = vld [vmem:[%s3101 + $0x6a] sm:$0xff]
      %v3240 = vld [vmem:[%s3101 + $0x7a] sm:$0xff]
      %v3241 = vld [vmem:[%s3101 + $0x82] sm:$0xff]
      %v3242 = vld [vmem:[%s3101 + $0x92] sm:$0xff]
      %v3243 = vld [vmem:[%s3101 + $0x9a] sm:$0xff]
      %v3244 = vld [vmem:[%s3101 + $0xaa] sm:$0xff]
      %v3245 = vld [vmem:[%s3101 + $0xb2] sm:$0xff]
      %v3246 = vld [vmem:[%s3101 + $0xc2] sm:$0xff]
      %v3247 = vld [vmem:[%s3101 + $0xca] sm:$0xff]
      %v3248 = vld [vmem:[%s3101 + $0xda] sm:$0xff]
      %v3249 = vld [vmem:[%s3101 + $0xe2] sm:$0xff]
      %v3250 = vld [vmem:[%s3101 + $0xf2] sm:$0xff]
      %v3251 = vld [vmem:[%s3101 + $0xfa] sm:$0xff]
      %v3252 = vld [vmem:[%s3101 + $0x10a] sm:$0xff]
      %v3253 = vld [vmem:[%s3101 + $0x112] sm:$0xff]
      %v3254 = vld [vmem:[%s3101 + $0x122] sm:$0xff]
      %v3255 = vld [vmem:[%s3101 + $0x12a] sm:$0xff]
      %v3256 = vld [vmem:[%s3101 + $0x13a] sm:$0xff]
      %v3257 = vld [vmem:[%s3101 + $0x142] sm:$0xff]
      %v3258 = vld [vmem:[%s3101 + $0x152] sm:$0xff]
      %v3259 = vld [vmem:[%s3101 + $0x15a] sm:$0xff]
      %v3260 = vld [vmem:[%s3101 + $0x16a] sm:$0xff]
      %v3261 = vld [vmem:[%s3101 + $0x172] sm:$0xff]
      %v3262 = vpack.c.bf16 %v3230, %v3230
      %v3263 = vpack.c.bf16 %v3231, %v3231
      %v3264 = vpack.c.bf16 %v3232, %v3232
      %v3265 = vpack.c.bf16 %v3233, %v3233
      %v3266 = vpack.c.bf16 %v3234, %v3234
      %v3267 = vpack.c.bf16 %v3235, %v3235
      %v3268 = vpack.c.bf16 %v3236, %v3236
      %v3269 = vpack.c.bf16 %v3237, %v3237
      %v3270 = vpack.c.bf16 %v3238, %v3238
      %v3271 = vpack.c.bf16 %v3239, %v3239
      %v3272 = vpack.c.bf16 %v3240, %v3240
      %v3273 = vpack.c.bf16 %v3241, %v3241
      %v3274 = vpack.c.bf16 %v3242, %v3242
      %v3275 = vpack.c.bf16 %v3243, %v3243
      %v3276 = vpack.c.bf16 %v3244, %v3244
      %v3277 = vpack.c.bf16 %v3245, %v3245
      %v3278 = vpack.c.bf16 %v3246, %v3246
      %v3279 = vpack.c.bf16 %v3247, %v3247
      %v3280 = vpack.c.bf16 %v3248, %v3248
      %v3281 = vpack.c.bf16 %v3249, %v3249
      %v3282 = vpack.c.bf16 %v3250, %v3250
      %v3283 = vpack.c.bf16 %v3251, %v3251
      %v3284 = vpack.c.bf16 %v3252, %v3252
      %v3285 = vpack.c.bf16 %v3253, %v3253
      %v3286 = vpack.c.bf16 %v3254, %v3254
      %v3287 = vpack.c.bf16 %v3255, %v3255
      %v3288 = vpack.c.bf16 %v3256, %v3256
      %v3289 = vpack.c.bf16 %v3257, %v3257
      %v3290 = vpack.c.bf16 %v3258, %v3258
      %v3291 = vpack.c.bf16 %v3259, %v3259
      %v3292 = vpack.c.bf16 %v3260, %v3260
      %v3293 = vpack.c.bf16 %v3261, %v3261
      %v3326 = vunpack.c.l.b16 %v2749
      %v3327 = vunpack.c.l.b16 %v2750
      %v3328 = vunpack.c.l.b16 %v2751
      %v3329 = vunpack.c.l.b16 %v2752
      %v3330 = vunpack.c.l.b16 %v2753
      %v3331 = vunpack.c.l.b16 %v2754
      %v3332 = vunpack.c.l.b16 %v2755
      %v3333 = vunpack.c.l.b16 %v2756
      %v3334 = vunpack.c.l.b16 %v2757
      %v3335 = vunpack.c.l.b16 %v2758
      %v3336 = vunpack.c.l.b16 %v2759
      %v3337 = vunpack.c.l.b16 %v2760
      %v3338 = vunpack.c.l.b16 %v2761
      %v3339 = vunpack.c.l.b16 %v2762
      %v3340 = vunpack.c.l.b16 %v2763
      %v3341 = vunpack.c.l.b16 %v2764
      %v3342 = vunpack.c.l.b16 %v2765
      %v3343 = vunpack.c.l.b16 %v2766
      %v3344 = vunpack.c.l.b16 %v2767
      %v3345 = vunpack.c.l.b16 %v2768
      %v3346 = vunpack.c.l.b16 %v2769
      %v3347 = vunpack.c.l.b16 %v2770
      %v3348 = vunpack.c.l.b16 %v2771
      %v3349 = vunpack.c.l.b16 %v2772
      %v3350 = vunpack.c.l.b16 %v2773
      %v3351 = vunpack.c.l.b16 %v2774
      %v3352 = vunpack.c.l.b16 %v2775
      %v3353 = vunpack.c.l.b16 %v2776
      %v3354 = vunpack.c.l.b16 %v2777
      %v3355 = vunpack.c.l.b16 %v2778
      %v3356 = vunpack.c.l.b16 %v2779
      %v3357 = vunpack.c.l.b16 %v2780
      %v3358 = vpack.c.b16 %v3327, %v3326
      %v3359 = vpack.c.b16 %v3329, %v3328
      %v3360 = vpack.c.b16 %v3331, %v3330
      %v3361 = vpack.c.b16 %v3333, %v3332
      %v3362 = vpack.c.b16 %v3335, %v3334
      %v3363 = vpack.c.b16 %v3337, %v3336
      %v3364 = vpack.c.b16 %v3339, %v3338
      %v3365 = vpack.c.b16 %v3341, %v3340
      %v3366 = vpack.c.b16 %v3343, %v3342
      %v3367 = vpack.c.b16 %v3345, %v3344
      %v3368 = vpack.c.b16 %v3347, %v3346
      %v3369 = vpack.c.b16 %v3349, %v3348
      %v3370 = vpack.c.b16 %v3351, %v3350
      %v3371 = vpack.c.b16 %v3353, %v3352
      %v3372 = vpack.c.b16 %v3355, %v3354
      %v3373 = vpack.c.b16 %v3357, %v3356
      %v3406 = vunpack.c.l.b16 %v2813
      %v3407 = vunpack.c.l.b16 %v2814
      %v3408 = vunpack.c.l.b16 %v2815
      %v3409 = vunpack.c.l.b16 %v2816
      %v3410 = vunpack.c.l.b16 %v2817
      %v3411 = vunpack.c.l.b16 %v2818
      %v3412 = vunpack.c.l.b16 %v2819
      %v3413 = vunpack.c.l.b16 %v2820
      %v3414 = vunpack.c.l.b16 %v2821
      %v3415 = vunpack.c.l.b16 %v2822
      %v3416 = vunpack.c.l.b16 %v2823
      %v3417 = vunpack.c.l.b16 %v2824
      %v3418 = vunpack.c.l.b16 %v2825
      %v3419 = vunpack.c.l.b16 %v2826
      %v3420 = vunpack.c.l.b16 %v2827
      %v3421 = vunpack.c.l.b16 %v2828
      %v3422 = vunpack.c.l.b16 %v2829
      %v3423 = vunpack.c.l.b16 %v2830
      %v3424 = vunpack.c.l.b16 %v2831
      %v3425 = vunpack.c.l.b16 %v2832
      %v3426 = vunpack.c.l.b16 %v2833
      %v3427 = vunpack.c.l.b16 %v2834
      %v3428 = vunpack.c.l.b16 %v2835
      %v3429 = vunpack.c.l.b16 %v2836
      %v3430 = vunpack.c.l.b16 %v2837
      %v3431 = vunpack.c.l.b16 %v2838
      %v3432 = vunpack.c.l.b16 %v2839
      %v3433 = vunpack.c.l.b16 %v2840
      %v3434 = vunpack.c.l.b16 %v2841
      %v3435 = vunpack.c.l.b16 %v2842
      %v3436 = vunpack.c.l.b16 %v2843
      %v3437 = vunpack.c.l.b16 %v2844
      %v3438 = vpack.c.b16 %v3407, %v3406
      %v3439 = vpack.c.b16 %v3409, %v3408
      %v3440 = vpack.c.b16 %v3411, %v3410
      %v3441 = vpack.c.b16 %v3413, %v3412
      %v3442 = vpack.c.b16 %v3415, %v3414
      %v3443 = vpack.c.b16 %v3417, %v3416
      %v3444 = vpack.c.b16 %v3419, %v3418
      %v3445 = vpack.c.b16 %v3421, %v3420
      %v3446 = vpack.c.b16 %v3423, %v3422
      %v3447 = vpack.c.b16 %v3425, %v3424
      %v3448 = vpack.c.b16 %v3427, %v3426
      %v3449 = vpack.c.b16 %v3429, %v3428
      %v3450 = vpack.c.b16 %v3431, %v3430
      %v3451 = vpack.c.b16 %v3433, %v3432
      %v3452 = vpack.c.b16 %v3435, %v3434
      %v3453 = vpack.c.b16 %v3437, %v3436
      %3454 = vrot.lane.b32.xlu0 %v3438, 32
      %v3455 = vpop.permute.xlu0 %3454
      %3456 = vrot.lane.b32.xlu0 %v3439, 32
      %v3457 = vpop.permute.xlu0 %3456
      %3458 = vrot.lane.b32.xlu0 %v3440, 32
      %v3459 = vpop.permute.xlu0 %3458
      %3460 = vrot.lane.b32.xlu0 %v3441, 32
      %v3461 = vpop.permute.xlu0 %3460
      %3462 = vrot.lane.b32.xlu0 %v3442, 32
      %v3463 = vpop.permute.xlu0 %3462
      %3464 = vrot.lane.b32.xlu0 %v3443, 32
      %v3465 = vpop.permute.xlu0 %3464
      %3466 = vrot.lane.b32.xlu0 %v3444, 32
      %v3467 = vpop.permute.xlu0 %3466
      %3468 = vrot.lane.b32.xlu0 %v3445, 32
      %v3469 = vpop.permute.xlu0 %3468
      %3470 = vrot.lane.b32.xlu0 %v3446, 32
      %v3471 = vpop.permute.xlu0 %3470
      %3472 = vrot.lane.b32.xlu0 %v3447, 32
      %v3473 = vpop.permute.xlu0 %3472
      %3474 = vrot.lane.b32.xlu0 %v3448, 32
      %v3475 = vpop.permute.xlu0 %3474
      %3476 = vrot.lane.b32.xlu0 %v3449, 32
      %v3477 = vpop.permute.xlu0 %3476
      %3478 = vrot.lane.b32.xlu0 %v3450, 32
      %v3479 = vpop.permute.xlu0 %3478
      %3480 = vrot.lane.b32.xlu0 %v3451, 32
      %v3481 = vpop.permute.xlu0 %3480
      %3482 = vrot.lane.b32.xlu0 %v3452, 32
      %v3483 = vpop.permute.xlu0 %3482
      %3484 = vrot.lane.b32.xlu0 %v3453, 32
      %v3485 = vpop.permute.xlu0 %3484
      %v3518 = vunpack.c.l.b16 %v2877
      %v3519 = vunpack.c.l.b16 %v2878
      %v3520 = vunpack.c.l.b16 %v2879
      %v3521 = vunpack.c.l.b16 %v2880
      %v3522 = vunpack.c.l.b16 %v2881
      %v3523 = vunpack.c.l.b16 %v2882
      %v3524 = vunpack.c.l.b16 %v2883
      %v3525 = vunpack.c.l.b16 %v2884
      %v3526 = vunpack.c.l.b16 %v2885
      %v3527 = vunpack.c.l.b16 %v2886
      %v3528 = vunpack.c.l.b16 %v2887
      %v3529 = vunpack.c.l.b16 %v2888
      %v3530 = vunpack.c.l.b16 %v2889
      %v3531 = vunpack.c.l.b16 %v2890
      %v3532 = vunpack.c.l.b16 %v2891
      %v3533 = vunpack.c.l.b16 %v2892
      %v3534 = vunpack.c.l.b16 %v2893
      %v3535 = vunpack.c.l.b16 %v2894
      %v3536 = vunpack.c.l.b16 %v2895
      %v3537 = vunpack.c.l.b16 %v2896
      %v3538 = vunpack.c.l.b16 %v2897
      %v3539 = vunpack.c.l.b16 %v2898
      %v3540 = vunpack.c.l.b16 %v2899
      %v3541 = vunpack.c.l.b16 %v2900
      %v3542 = vunpack.c.l.b16 %v2901
      %v3543 = vunpack.c.l.b16 %v2902
      %v3544 = vunpack.c.l.b16 %v2903
      %v3545 = vunpack.c.l.b16 %v2904
      %v3546 = vunpack.c.l.b16 %v2905
      %v3547 = vunpack.c.l.b16 %v2906
      %v3548 = vunpack.c.l.b16 %v2907
      %v3549 = vunpack.c.l.b16 %v2908
      %v3550 = vpack.c.b16 %v3519, %v3518
      %v3551 = vpack.c.b16 %v3521, %v3520
      %v3552 = vpack.c.b16 %v3523, %v3522
      %v3553 = vpack.c.b16 %v3525, %v3524
      %v3554 = vpack.c.b16 %v3527, %v3526
      %v3555 = vpack.c.b16 %v3529, %v3528
      %v3556 = vpack.c.b16 %v3531, %v3530
      %v3557 = vpack.c.b16 %v3533, %v3532
      %v3558 = vpack.c.b16 %v3535, %v3534
      %v3559 = vpack.c.b16 %v3537, %v3536
      %v3560 = vpack.c.b16 %v3539, %v3538
      %v3561 = vpack.c.b16 %v3541, %v3540
      %v3562 = vpack.c.b16 %v3543, %v3542
      %v3563 = vpack.c.b16 %v3545, %v3544
      %v3564 = vpack.c.b16 %v3547, %v3546
      %v3565 = vpack.c.b16 %v3549, %v3548
      %3566 = vrot.lane.b32.xlu0 %v3550, 64
      %v3567 = vpop.permute.xlu0 %3566
      %3568 = vrot.lane.b32.xlu0 %v3551, 64
      %v3569 = vpop.permute.xlu0 %3568
      %3570 = vrot.lane.b32.xlu0 %v3552, 64
      %v3571 = vpop.permute.xlu0 %3570
      %3572 = vrot.lane.b32.xlu0 %v3553, 64
      %v3573 = vpop.permute.xlu0 %3572
      %3574 = vrot.lane.b32.xlu0 %v3554, 64
      %v3575 = vpop.permute.xlu0 %3574
      %3576 = vrot.lane.b32.xlu0 %v3555, 64
      %v3577 = vpop.permute.xlu0 %3576
      %3578 = vrot.lane.b32.xlu0 %v3556, 64
      %v3579 = vpop.permute.xlu0 %3578
      %3580 = vrot.lane.b32.xlu0 %v3557, 64
      %v3581 = vpop.permute.xlu0 %3580
      %3582 = vrot.lane.b32.xlu0 %v3558, 64
      %v3583 = vpop.permute.xlu0 %3582
      %3584 = vrot.lane.b32.xlu0 %v3559, 64
      %v3585 = vpop.permute.xlu0 %3584
      %3586 = vrot.lane.b32.xlu0 %v3560, 64
      %v3587 = vpop.permute.xlu0 %3586
      %3588 = vrot.lane.b32.xlu0 %v3561, 64
      %v3589 = vpop.permute.xlu0 %3588
      %3590 = vrot.lane.b32.xlu0 %v3562, 64
      %v3591 = vpop.permute.xlu0 %3590
      %3592 = vrot.lane.b32.xlu0 %v3563, 64
      %v3593 = vpop.permute.xlu0 %3592
      %3594 = vrot.lane.b32.xlu0 %v3564, 64
      %v3595 = vpop.permute.xlu0 %3594
      %3596 = vrot.lane.b32.xlu0 %v3565, 64
      %v3597 = vpop.permute.xlu0 %3596
      %v3630 = vunpack.c.l.b16 %v2941
      %v3631 = vunpack.c.l.b16 %v2942
      %v3632 = vunpack.c.l.b16 %v2943
      %v3633 = vunpack.c.l.b16 %v2944
      %v3634 = vunpack.c.l.b16 %v2945
      %v3635 = vunpack.c.l.b16 %v2946
      %v3636 = vunpack.c.l.b16 %v2947
      %v3637 = vunpack.c.l.b16 %v2948
      %v3638 = vunpack.c.l.b16 %v2949
      %v3639 = vunpack.c.l.b16 %v2950
      %v3640 = vunpack.c.l.b16 %v2951
      %v3641 = vunpack.c.l.b16 %v2952
      %v3642 = vunpack.c.l.b16 %v2953
      %v3643 = vunpack.c.l.b16 %v2954
      %v3644 = vunpack.c.l.b16 %v2955
      %v3645 = vunpack.c.l.b16 %v2956
      %v3646 = vunpack.c.l.b16 %v2957
      %v3647 = vunpack.c.l.b16 %v2958
      %v3648 = vunpack.c.l.b16 %v2959
      %v3649 = vunpack.c.l.b16 %v2960
      %v3650 = vunpack.c.l.b16 %v2961
      %v3651 = vunpack.c.l.b16 %v2962
      %v3652 = vunpack.c.l.b16 %v2963
      %v3653 = vunpack.c.l.b16 %v2964
      %v3654 = vunpack.c.l.b16 %v2965
      %v3655 = vunpack.c.l.b16 %v2966
      %v3656 = vunpack.c.l.b16 %v2967
      %v3657 = vunpack.c.l.b16 %v2968
      %v3658 = vunpack.c.l.b16 %v2969
      %v3659 = vunpack.c.l.b16 %v2970
      %v3660 = vunpack.c.l.b16 %v2971
      %v3661 = vunpack.c.l.b16 %v2972
      %v3662 = vpack.c.b16 %v3631, %v3630
      %v3663 = vpack.c.b16 %v3633, %v3632
      %v3664 = vpack.c.b16 %v3635, %v3634
      %v3665 = vpack.c.b16 %v3637, %v3636
      %v3666 = vpack.c.b16 %v3639, %v3638
      %v3667 = vpack.c.b16 %v3641, %v3640
      %v3668 = vpack.c.b16 %v3643, %v3642
      %v3669 = vpack.c.b16 %v3645, %v3644
      %v3670 = vpack.c.b16 %v3647, %v3646
      %v3671 = vpack.c.b16 %v3649, %v3648
      %v3672 = vpack.c.b16 %v3651, %v3650
      %v3673 = vpack.c.b16 %v3653, %v3652
      %v3674 = vpack.c.b16 %v3655, %v3654
      %v3675 = vpack.c.b16 %v3657, %v3656
      %v3676 = vpack.c.b16 %v3659, %v3658
      %v3677 = vpack.c.b16 %v3661, %v3660
      %3678 = vrot.lane.b32.xlu0 %v3662, 96
      %v3679 = vpop.permute.xlu0 %3678
      %3680 = vrot.lane.b32.xlu0 %v3663, 96
      %v3681 = vpop.permute.xlu0 %3680
      %3682 = vrot.lane.b32.xlu0 %v3664, 96
      %v3683 = vpop.permute.xlu0 %3682
      %3684 = vrot.lane.b32.xlu0 %v3665, 96
      %v3685 = vpop.permute.xlu0 %3684
      %3686 = vrot.lane.b32.xlu0 %v3666, 96
      %v3687 = vpop.permute.xlu0 %3686
      %3688 = vrot.lane.b32.xlu0 %v3667, 96
      %v3689 = vpop.permute.xlu0 %3688
      %3690 = vrot.lane.b32.xlu0 %v3668, 96
      %v3691 = vpop.permute.xlu0 %3690
      %3692 = vrot.lane.b32.xlu0 %v3669, 96
      %v3693 = vpop.permute.xlu0 %3692
      %3694 = vrot.lane.b32.xlu0 %v3670, 96
      %v3695 = vpop.permute.xlu0 %3694
      %3696 = vrot.lane.b32.xlu0 %v3671, 96
      %v3697 = vpop.permute.xlu0 %3696
      %3698 = vrot.lane.b32.xlu0 %v3672, 96
      %v3699 = vpop.permute.xlu0 %3698
      %3700 = vrot.lane.b32.xlu0 %v3673, 96
      %v3701 = vpop.permute.xlu0 %3700
      %3702 = vrot.lane.b32.xlu0 %v3674, 96
      %v3703 = vpop.permute.xlu0 %3702
      %3704 = vrot.lane.b32.xlu0 %v3675, 96
      %v3705 = vpop.permute.xlu0 %3704
      %3706 = vrot.lane.b32.xlu0 %v3676, 96
      %v3707 = vpop.permute.xlu0 %3706
      %3708 = vrot.lane.b32.xlu0 %v3677, 96
      %v3709 = vpop.permute.xlu0 %3708
      %v3742 = vunpack.c.l.b16 %v3005
      %v3743 = vunpack.c.l.b16 %v3006
      %v3744 = vunpack.c.l.b16 %v3007
      %v3745 = vunpack.c.l.b16 %v3008
      %v3746 = vunpack.c.l.b16 %v3009
      %v3747 = vunpack.c.l.b16 %v3010
      %v3748 = vunpack.c.l.b16 %v3011
      %v3749 = vunpack.c.l.b16 %v3012
      %v3750 = vunpack.c.l.b16 %v3013
      %v3751 = vunpack.c.l.b16 %v3014
      %v3752 = vunpack.c.l.b16 %v3015
      %v3753 = vunpack.c.l.b16 %v3016
      %v3754 = vunpack.c.l.b16 %v3017
      %v3755 = vunpack.c.l.b16 %v3018
      %v3756 = vunpack.c.l.b16 %v3019
      %v3757 = vunpack.c.l.b16 %v3020
      %v3758 = vunpack.c.l.b16 %v3021
      %v3759 = vunpack.c.l.b16 %v3022
      %v3760 = vunpack.c.l.b16 %v3023
      %v3761 = vunpack.c.l.b16 %v3024
      %v3762 = vunpack.c.l.b16 %v3025
      %v3763 = vunpack.c.l.b16 %v3026
      %v3764 = vunpack.c.l.b16 %v3027
      %v3765 = vunpack.c.l.b16 %v3028
      %v3766 = vunpack.c.l.b16 %v3029
      %v3767 = vunpack.c.l.b16 %v3030
      %v3768 = vunpack.c.l.b16 %v3031
      %v3769 = vunpack.c.l.b16 %v3032
      %v3770 = vunpack.c.l.b16 %v3033
      %v3771 = vunpack.c.l.b16 %v3034
      %v3772 = vunpack.c.l.b16 %v3035
      %v3773 = vunpack.c.l.b16 %v3036
      %v3774 = vpack.c.b16 %v3743, %v3742
      %v3775 = vpack.c.b16 %v3745, %v3744
      %v3776 = vpack.c.b16 %v3747, %v3746
      %v3777 = vpack.c.b16 %v3749, %v3748
      %v3778 = vpack.c.b16 %v3751, %v3750
      %v3779 = vpack.c.b16 %v3753, %v3752
      %v3780 = vpack.c.b16 %v3755, %v3754
      %v3781 = vpack.c.b16 %v3757, %v3756
      %v3782 = vpack.c.b16 %v3759, %v3758
      %v3783 = vpack.c.b16 %v3761, %v3760
      %v3784 = vpack.c.b16 %v3763, %v3762
      %v3785 = vpack.c.b16 %v3765, %v3764
      %v3786 = vpack.c.b16 %v3767, %v3766
      %v3787 = vpack.c.b16 %v3769, %v3768
      %v3788 = vpack.c.b16 %v3771, %v3770
      %v3789 = vpack.c.b16 %v3773, %v3772
      %v3822 = vunpack.c.l.b16 %v3069
      %v3823 = vunpack.c.l.b16 %v3070
      %v3824 = vunpack.c.l.b16 %v3071
      %v3825 = vunpack.c.l.b16 %v3072
      %v3826 = vunpack.c.l.b16 %v3073
      %v3827 = vunpack.c.l.b16 %v3074
      %v3828 = vunpack.c.l.b16 %v3075
      %v3829 = vunpack.c.l.b16 %v3076
      %v3830 = vunpack.c.l.b16 %v3077
      %v3831 = vunpack.c.l.b16 %v3078
      %v3832 = vunpack.c.l.b16 %v3079
      %v3833 = vunpack.c.l.b16 %v3080
      %v3834 = vunpack.c.l.b16 %v3081
      %v3835 = vunpack.c.l.b16 %v3082
      %v3836 = vunpack.c.l.b16 %v3083
      %v3837 = vunpack.c.l.b16 %v3084
      %v3838 = vunpack.c.l.b16 %v3085
      %v3839 = vunpack.c.l.b16 %v3086
      %v3840 = vunpack.c.l.b16 %v3087
      %v3841 = vunpack.c.l.b16 %v3088
      %v3842 = vunpack.c.l.b16 %v3089
      %v3843 = vunpack.c.l.b16 %v3090
      %v3844 = vunpack.c.l.b16 %v3091
      %v3845 = vunpack.c.l.b16 %v3092
      %v3846 = vunpack.c.l.b16 %v3093
      %v3847 = vunpack.c.l.b16 %v3094
      %v3848 = vunpack.c.l.b16 %v3095
      %v3849 = vunpack.c.l.b16 %v3096
      %v3850 = vunpack.c.l.b16 %v3097
      %v3851 = vunpack.c.l.b16 %v3098
      %v3852 = vunpack.c.l.b16 %v3099
      %v3853 = vunpack.c.l.b16 %v3100
      %v3854 = vpack.c.b16 %v3823, %v3822
      %v3855 = vpack.c.b16 %v3825, %v3824
      %v3856 = vpack.c.b16 %v3827, %v3826
      %v3857 = vpack.c.b16 %v3829, %v3828
      %v3858 = vpack.c.b16 %v3831, %v3830
      %v3859 = vpack.c.b16 %v3833, %v3832
      %v3860 = vpack.c.b16 %v3835, %v3834
      %v3861 = vpack.c.b16 %v3837, %v3836
      %v3862 = vpack.c.b16 %v3839, %v3838
      %v3863 = vpack.c.b16 %v3841, %v3840
      %v3864 = vpack.c.b16 %v3843, %v3842
      %v3865 = vpack.c.b16 %v3845, %v3844
      %v3866 = vpack.c.b16 %v3847, %v3846
      %v3867 = vpack.c.b16 %v3849, %v3848
      %v3868 = vpack.c.b16 %v3851, %v3850
      %v3869 = vpack.c.b16 %v3853, %v3852
      %3870 = vrot.lane.b32.xlu0 %v3854, 32
      %v3871 = vpop.permute.xlu0 %3870
      %3872 = vrot.lane.b32.xlu0 %v3855, 32
      %v3873 = vpop.permute.xlu0 %3872
      %3874 = vrot.lane.b32.xlu0 %v3856, 32
      %v3875 = vpop.permute.xlu0 %3874
      %3876 = vrot.lane.b32.xlu0 %v3857, 32
      %v3877 = vpop.permute.xlu0 %3876
      %3878 = vrot.lane.b32.xlu0 %v3858, 32
      %v3879 = vpop.permute.xlu0 %3878
      %3880 = vrot.lane.b32.xlu0 %v3859, 32
      %v3881 = vpop.permute.xlu0 %3880
      %3882 = vrot.lane.b32.xlu0 %v3860, 32
      %v3883 = vpop.permute.xlu0 %3882
      %3884 = vrot.lane.b32.xlu0 %v3861, 32
      %v3885 = vpop.permute.xlu0 %3884
      %3886 = vrot.lane.b32.xlu0 %v3862, 32
      %v3887 = vpop.permute.xlu0 %3886
      %3888 = vrot.lane.b32.xlu0 %v3863, 32
      %v3889 = vpop.permute.xlu0 %3888
      %3890 = vrot.lane.b32.xlu0 %v3864, 32
      %v3891 = vpop.permute.xlu0 %3890
      %3892 = vrot.lane.b32.xlu0 %v3865, 32
      %v3893 = vpop.permute.xlu0 %3892
      %3894 = vrot.lane.b32.xlu0 %v3866, 32
      %v3895 = vpop.permute.xlu0 %3894
      %3896 = vrot.lane.b32.xlu0 %v3867, 32
      %v3897 = vpop.permute.xlu0 %3896
      %3898 = vrot.lane.b32.xlu0 %v3868, 32
      %v3899 = vpop.permute.xlu0 %3898
      %3900 = vrot.lane.b32.xlu0 %v3869, 32
      %v3901 = vpop.permute.xlu0 %3900
      %v3934 = vunpack.c.l.b16 %v3134
      %v3935 = vunpack.c.l.b16 %v3135
      %v3936 = vunpack.c.l.b16 %v3136
      %v3937 = vunpack.c.l.b16 %v3137
      %v3938 = vunpack.c.l.b16 %v3138
      %v3939 = vunpack.c.l.b16 %v3139
      %v3940 = vunpack.c.l.b16 %v3140
      %v3941 = vunpack.c.l.b16 %v3141
      %v3942 = vunpack.c.l.b16 %v3142
      %v3943 = vunpack.c.l.b16 %v3143
      %v3944 = vunpack.c.l.b16 %v3144
      %v3945 = vunpack.c.l.b16 %v3145
      %v3946 = vunpack.c.l.b16 %v3146
      %v3947 = vunpack.c.l.b16 %v3147
      %v3948 = vunpack.c.l.b16 %v3148
      %v3949 = vunpack.c.l.b16 %v3149
      %v3950 = vunpack.c.l.b16 %v3150
      %v3951 = vunpack.c.l.b16 %v3151
      %v3952 = vunpack.c.l.b16 %v3152
      %v3953 = vunpack.c.l.b16 %v3153
      %v3954 = vunpack.c.l.b16 %v3154
      %v3955 = vunpack.c.l.b16 %v3155
      %v3956 = vunpack.c.l.b16 %v3156
      %v3957 = vunpack.c.l.b16 %v3157
      %v3958 = vunpack.c.l.b16 %v3158
      %v3959 = vunpack.c.l.b16 %v3159
      %v3960 = vunpack.c.l.b16 %v3160
      %v3961 = vunpack.c.l.b16 %v3161
      %v3962 = vunpack.c.l.b16 %v3162
      %v3963 = vunpack.c.l.b16 %v3163
      %v3964 = vunpack.c.l.b16 %v3164
      %v3965 = vunpack.c.l.b16 %v3165
      %v3966 = vpack.c.b16 %v3935, %v3934
      %v3967 = vpack.c.b16 %v3937, %v3936
      %v3968 = vpack.c.b16 %v3939, %v3938
      %v3969 = vpack.c.b16 %v3941, %v3940
      %v3970 = vpack.c.b16 %v3943, %v3942
      %v3971 = vpack.c.b16 %v3945, %v3944
      %v3972 = vpack.c.b16 %v3947, %v3946
      %v3973 = vpack.c.b16 %v3949, %v3948
      %v3974 = vpack.c.b16 %v3951, %v3950
      %v3975 = vpack.c.b16 %v3953, %v3952
      %v3976 = vpack.c.b16 %v3955, %v3954
      %v3977 = vpack.c.b16 %v3957, %v3956
      %v3978 = vpack.c.b16 %v3959, %v3958
      %v3979 = vpack.c.b16 %v3961, %v3960
      %v3980 = vpack.c.b16 %v3963, %v3962
      %v3981 = vpack.c.b16 %v3965, %v3964
      %3982 = vrot.lane.b32.xlu0 %v3966, 64
      %v3983 = vpop.permute.xlu0 %3982
      %3984 = vrot.lane.b32.xlu0 %v3967, 64
      %v3985 = vpop.permute.xlu0 %3984
      %3986 = vrot.lane.b32.xlu0 %v3968, 64
      %v3987 = vpop.permute.xlu0 %3986
      %3988 = vrot.lane.b32.xlu0 %v3969, 64
      %v3989 = vpop.permute.xlu0 %3988
      %3990 = vrot.lane.b32.xlu0 %v3970, 64
      %v3991 = vpop.permute.xlu0 %3990
      %3992 = vrot.lane.b32.xlu0 %v3971, 64
      %v3993 = vpop.permute.xlu0 %3992
      %3994 = vrot.lane.b32.xlu0 %v3972, 64
      %v3995 = vpop.permute.xlu0 %3994
      %3996 = vrot.lane.b32.xlu0 %v3973, 64
      %v3997 = vpop.permute.xlu0 %3996
      %3998 = vrot.lane.b32.xlu0 %v3974, 64
      %v3999 = vpop.permute.xlu0 %3998
      %4000 = vrot.lane.b32.xlu0 %v3975, 64
      %v4001 = vpop.permute.xlu0 %4000
      %4002 = vrot.lane.b32.xlu0 %v3976, 64
      %v4003 = vpop.permute.xlu0 %4002
      %4004 = vrot.lane.b32.xlu0 %v3977, 64
      %v4005 = vpop.permute.xlu0 %4004
      %4006 = vrot.lane.b32.xlu0 %v3978, 64
      %v4007 = vpop.permute.xlu0 %4006
      %4008 = vrot.lane.b32.xlu0 %v3979, 64
      %v4009 = vpop.permute.xlu0 %4008
      %4010 = vrot.lane.b32.xlu0 %v3980, 64
      %v4011 = vpop.permute.xlu0 %4010
      %4012 = vrot.lane.b32.xlu0 %v3981, 64
      %v4013 = vpop.permute.xlu0 %4012
      %v4046 = vunpack.c.l.b16 %v3198
      %v4047 = vunpack.c.l.b16 %v3199
      %v4048 = vunpack.c.l.b16 %v3200
      %v4049 = vunpack.c.l.b16 %v3201
      %v4050 = vunpack.c.l.b16 %v3202
      %v4051 = vunpack.c.l.b16 %v3203
      %v4052 = vunpack.c.l.b16 %v3204
      %v4053 = vunpack.c.l.b16 %v3205
      %v4054 = vunpack.c.l.b16 %v3206
      %v4055 = vunpack.c.l.b16 %v3207
      %v4056 = vunpack.c.l.b16 %v3208
      %v4057 = vunpack.c.l.b16 %v3209
      %v4058 = vunpack.c.l.b16 %v3210
      %v4059 = vunpack.c.l.b16 %v3211
      %v4060 = vunpack.c.l.b16 %v3212
      %v4061 = vunpack.c.l.b16 %v3213
      %v4062 = vunpack.c.l.b16 %v3214
      %v4063 = vunpack.c.l.b16 %v3215
      %v4064 = vunpack.c.l.b16 %v3216
      %v4065 = vunpack.c.l.b16 %v3217
      %v4066 = vunpack.c.l.b16 %v3218
      %v4067 = vunpack.c.l.b16 %v3219
      %v4068 = vunpack.c.l.b16 %v3220
      %v4069 = vunpack.c.l.b16 %v3221
      %v4070 = vunpack.c.l.b16 %v3222
      %v4071 = vunpack.c.l.b16 %v3223
      %v4072 = vunpack.c.l.b16 %v3224
      %v4073 = vunpack.c.l.b16 %v3225
      %v4074 = vunpack.c.l.b16 %v3226
      %v4075 = vunpack.c.l.b16 %v3227
      %v4076 = vunpack.c.l.b16 %v3228
      %v4077 = vunpack.c.l.b16 %v3229
      %v4078 = vpack.c.b16 %v4047, %v4046
      %v4079 = vpack.c.b16 %v4049, %v4048
      %v4080 = vpack.c.b16 %v4051, %v4050
      %v4081 = vpack.c.b16 %v4053, %v4052
      %v4082 = vpack.c.b16 %v4055, %v4054
      %v4083 = vpack.c.b16 %v4057, %v4056
      %v4084 = vpack.c.b16 %v4059, %v4058
      %v4085 = vpack.c.b16 %v4061, %v4060
      %v4086 = vpack.c.b16 %v4063, %v4062
      %v4087 = vpack.c.b16 %v4065, %v4064
      %v4088 = vpack.c.b16 %v4067, %v4066
      %v4089 = vpack.c.b16 %v4069, %v4068
      %v4090 = vpack.c.b16 %v4071, %v4070
      %v4091 = vpack.c.b16 %v4073, %v4072
      %v4092 = vpack.c.b16 %v4075, %v4074
      %v4093 = vpack.c.b16 %v4077, %v4076
      %4094 = vrot.lane.b32.xlu0 %v4078, 96
      %v4095 = vpop.permute.xlu0 %4094
      %4096 = vrot.lane.b32.xlu0 %v4079, 96
      %v4097 = vpop.permute.xlu0 %4096
      %4098 = vrot.lane.b32.xlu0 %v4080, 96
      %v4099 = vpop.permute.xlu0 %4098
      %4100 = vrot.lane.b32.xlu0 %v4081, 96
      %v4101 = vpop.permute.xlu0 %4100
      %4102 = vrot.lane.b32.xlu0 %v4082, 96
      %v4103 = vpop.permute.xlu0 %4102
      %4104 = vrot.lane.b32.xlu0 %v4083, 96
      %v4105 = vpop.permute.xlu0 %4104
      %4106 = vrot.lane.b32.xlu0 %v4084, 96
      %v4107 = vpop.permute.xlu0 %4106
      %4108 = vrot.lane.b32.xlu0 %v4085, 96
      %v4109 = vpop.permute.xlu0 %4108
      %4110 = vrot.lane.b32.xlu0 %v4086, 96
      %v4111 = vpop.permute.xlu0 %4110
      %4112 = vrot.lane.b32.xlu0 %v4087, 96
      %v4113 = vpop.permute.xlu0 %4112
      %4114 = vrot.lane.b32.xlu0 %v4088, 96
      %v4115 = vpop.permute.xlu0 %4114
      %4116 = vrot.lane.b32.xlu0 %v4089, 96
      %v4117 = vpop.permute.xlu0 %4116
      %4118 = vrot.lane.b32.xlu0 %v4090, 96
      %v4119 = vpop.permute.xlu0 %4118
      %4120 = vrot.lane.b32.xlu0 %v4091, 96
      %v4121 = vpop.permute.xlu0 %4120
      %4122 = vrot.lane.b32.xlu0 %v4092, 96
      %v4123 = vpop.permute.xlu0 %4122
      %4124 = vrot.lane.b32.xlu0 %v4093, 96
      %v4125 = vpop.permute.xlu0 %4124
      %v4158 = vunpack.c.l.b16 %v3262
      %v4159 = vunpack.c.l.b16 %v3263
      %v4160 = vunpack.c.l.b16 %v3264
      %v4161 = vunpack.c.l.b16 %v3265
      %v4162 = vunpack.c.l.b16 %v3266
      %v4163 = vunpack.c.l.b16 %v3267
      %v4164 = vunpack.c.l.b16 %v3268
      %v4165 = vunpack.c.l.b16 %v3269
      %v4166 = vunpack.c.l.b16 %v3270
      %v4167 = vunpack.c.l.b16 %v3271
      %v4168 = vunpack.c.l.b16 %v3272
      %v4169 = vunpack.c.l.b16 %v3273
      %v4170 = vunpack.c.l.b16 %v3274
      %v4171 = vunpack.c.l.b16 %v3275
      %v4172 = vunpack.c.l.b16 %v3276
      %v4173 = vunpack.c.l.b16 %v3277
      %v4174 = vunpack.c.l.b16 %v3278
      %v4175 = vunpack.c.l.b16 %v3279
      %v4176 = vunpack.c.l.b16 %v3280
      %v4177 = vunpack.c.l.b16 %v3281
      %v4178 = vunpack.c.l.b16 %v3282
      %v4179 = vunpack.c.l.b16 %v3283
      %v4180 = vunpack.c.l.b16 %v3284
      %v4181 = vunpack.c.l.b16 %v3285
      %v4182 = vunpack.c.l.b16 %v3286
      %v4183 = vunpack.c.l.b16 %v3287
      %v4184 = vunpack.c.l.b16 %v3288
      %v4185 = vunpack.c.l.b16 %v3289
      %v4186 = vunpack.c.l.b16 %v3290
      %v4187 = vunpack.c.l.b16 %v3291
      %v4188 = vunpack.c.l.b16 %v3292
      %v4189 = vunpack.c.l.b16 %v3293
      %v4190 = vpack.c.b16 %v4159, %v4158
      %v4191 = vpack.c.b16 %v4161, %v4160
      %v4192 = vpack.c.b16 %v4163, %v4162
      %v4193 = vpack.c.b16 %v4165, %v4164
      %v4194 = vpack.c.b16 %v4167, %v4166
      %v4195 = vpack.c.b16 %v4169, %v4168
      %v4196 = vpack.c.b16 %v4171, %v4170
      %v4197 = vpack.c.b16 %v4173, %v4172
      %v4198 = vpack.c.b16 %v4175, %v4174
      %v4199 = vpack.c.b16 %v4177, %v4176
      %v4200 = vpack.c.b16 %v4179, %v4178
      %v4201 = vpack.c.b16 %v4181, %v4180
      %v4202 = vpack.c.b16 %v4183, %v4182
      %v4203 = vpack.c.b16 %v4185, %v4184
      %v4204 = vpack.c.b16 %v4187, %v4186
      %v4205 = vpack.c.b16 %v4189, %v4188
      %v4208 = vsel %vm199, %v3358, %v3455
      %v4211 = vsel %vm199, %v3359, %v3457
      %v4214 = vsel %vm199, %v3360, %v3459
      %v4217 = vsel %vm199, %v3361, %v3461
      %v4220 = vsel %vm199, %v3362, %v3463
      %v4223 = vsel %vm199, %v3363, %v3465
      %v4226 = vsel %vm199, %v3364, %v3467
      %v4229 = vsel %vm199, %v3365, %v3469
      %v4232 = vsel %vm199, %v3366, %v3471
      %v4235 = vsel %vm199, %v3367, %v3473
      %v4238 = vsel %vm199, %v3368, %v3475
      %v4241 = vsel %vm199, %v3369, %v3477
      %v4244 = vsel %vm199, %v3370, %v3479
      %v4247 = vsel %vm199, %v3371, %v3481
      %v4250 = vsel %vm199, %v3372, %v3483
      %v4253 = vsel %vm199, %v3373, %v3485
      %v4255 = vsel %vm1911, %v4208, %v3567
      %v4257 = vsel %vm1911, %v4211, %v3569
      %v4259 = vsel %vm1911, %v4214, %v3571
      %v4261 = vsel %vm1911, %v4217, %v3573
      %v4263 = vsel %vm1911, %v4220, %v3575
      %v4265 = vsel %vm1911, %v4223, %v3577
      %v4267 = vsel %vm1911, %v4226, %v3579
      %v4269 = vsel %vm1911, %v4229, %v3581
      %v4271 = vsel %vm1911, %v4232, %v3583
      %v4273 = vsel %vm1911, %v4235, %v3585
      %v4275 = vsel %vm1911, %v4238, %v3587
      %v4277 = vsel %vm1911, %v4241, %v3589
      %v4279 = vsel %vm1911, %v4244, %v3591
      %v4281 = vsel %vm1911, %v4247, %v3593
      %v4283 = vsel %vm1911, %v4250, %v3595
      %v4285 = vsel %vm1911, %v4253, %v3597
      %v4287 = vsel %vm1944, %v4255, %v3679
      %v4290 = vsel %vm1944, %v4257, %v3681
      %v4293 = vsel %vm1944, %v4259, %v3683
      %v4296 = vsel %vm1944, %v4261, %v3685
      %v4299 = vsel %vm1944, %v4263, %v3687
      %v4302 = vsel %vm1944, %v4265, %v3689
      %v4305 = vsel %vm1944, %v4267, %v3691
      %v4308 = vsel %vm1944, %v4269, %v3693
      %v4311 = vsel %vm1944, %v4271, %v3695
      %v4314 = vsel %vm1944, %v4273, %v3697
      %v4317 = vsel %vm1944, %v4275, %v3699
      %v4320 = vsel %vm1944, %v4277, %v3701
      %v4323 = vsel %vm1944, %v4279, %v3703
      %v4326 = vsel %vm1944, %v4281, %v3705
      %v4329 = vsel %vm1944, %v4283, %v3707
      %v4332 = vsel %vm1944, %v4285, %v3709
      %v4336 = vsel %vm199, %v3774, %v3871
      %v4339 = vsel %vm199, %v3775, %v3873
      %v4342 = vsel %vm199, %v3776, %v3875
      %v4345 = vsel %vm199, %v3777, %v3877
      %v4348 = vsel %vm199, %v3778, %v3879
      %v4351 = vsel %vm199, %v3779, %v3881
      %v4354 = vsel %vm199, %v3780, %v3883
      %v4357 = vsel %vm199, %v3781, %v3885
      %v4360 = vsel %vm199, %v3782, %v3887
      %v4363 = vsel %vm199, %v3783, %v3889
      %v4366 = vsel %vm199, %v3784, %v3891
      %v4369 = vsel %vm199, %v3785, %v3893
      %v4372 = vsel %vm199, %v3786, %v3895
      %v4375 = vsel %vm199, %v3787, %v3897
      %v4378 = vsel %vm199, %v3788, %v3899
      %v4381 = vsel %vm199, %v3789, %v3901
      %v4383 = vsel %vm1911, %v4336, %v3983
      %v4385 = vsel %vm1911, %v4339, %v3985
      %v4387 = vsel %vm1911, %v4342, %v3987
      %v4389 = vsel %vm1911, %v4345, %v3989
      %v4391 = vsel %vm1911, %v4348, %v3991
      %v4393 = vsel %vm1911, %v4351, %v3993
      %v4395 = vsel %vm1911, %v4354, %v3995
      %v4397 = vsel %vm1911, %v4357, %v3997
      %v4399 = vsel %vm1911, %v4360, %v3999
      %v4401 = vsel %vm1911, %v4363, %v4001
      %v4403 = vsel %vm1911, %v4366, %v4003
      %v4405 = vsel %vm1911, %v4369, %v4005
      %v4407 = vsel %vm1911, %v4372, %v4007
      %v4409 = vsel %vm1911, %v4375, %v4009
      %v4411 = vsel %vm1911, %v4378, %v4011
      %v4413 = vsel %vm1911, %v4381, %v4013
      %v4415 = vsel %vm1944, %v4383, %v4095
      %v4418 = vsel %vm1944, %v4385, %v4097
      %v4421 = vsel %vm1944, %v4387, %v4099
      %v4424 = vsel %vm1944, %v4389, %v4101
      %v4427 = vsel %vm1944, %v4391, %v4103
      %v4430 = vsel %vm1944, %v4393, %v4105
      %v4433 = vsel %vm1944, %v4395, %v4107
      %v4436 = vsel %vm1944, %v4397, %v4109
      %v4439 = vsel %vm1944, %v4399, %v4111
      %v4442 = vsel %vm1944, %v4401, %v4113
      %v4445 = vsel %vm1944, %v4403, %v4115
      %v4448 = vsel %vm1944, %v4405, %v4117
      %v4451 = vsel %vm1944, %v4407, %v4119
      %v4454 = vsel %vm1944, %v4409, %v4121
      %v4457 = vsel %vm1944, %v4411, %v4123
      %v4460 = vsel %vm1944, %v4413, %v4125
      %s4462 = scalar_lea.vmem %s1, 144
      %v4463 = vld [vmem:[%s4462] sm:$0xf]
      %v4464 = vld [vmem:[%s4462 + $0x4] sm:$0xf]
      %v4465 = vld [vmem:[%s4462 + $0x8] sm:$0xf]
      %v4466 = vld [vmem:[%s4462 + $0xc] sm:$0xf]
      %v4467 = vld [vmem:[%s4462 + $0x10] sm:$0xf]
      %v4468 = vld [vmem:[%s4462 + $0x14] sm:$0xf]
      %v4469 = vld [vmem:[%s4462 + $0x18] sm:$0xf]
      %v4470 = vld [vmem:[%s4462 + $0x1c] sm:$0xf]
      %v4471 = vld [vmem:[%s4462 + $0x20] sm:$0xf]
      %v4472 = vld [vmem:[%s4462 + $0x24] sm:$0xf]
      %v4473 = vld [vmem:[%s4462 + $0x28] sm:$0xf]
      %v4474 = vld [vmem:[%s4462 + $0x2c] sm:$0xf]
      %v4475 = vld [vmem:[%s4462 + $0x30] sm:$0xf]
      %v4476 = vld [vmem:[%s4462 + $0x34] sm:$0xf]
      %v4477 = vld [vmem:[%s4462 + $0x38] sm:$0xf]
      %v4478 = vld [vmem:[%s4462 + $0x3c] sm:$0xf]
      %v4479 = vld [vmem:[%s4462 + $0x40] sm:$0xf]
      %v4480 = vld [vmem:[%s4462 + $0x44] sm:$0xf]
      %v4481 = vld [vmem:[%s4462 + $0x48] sm:$0xf]
      %v4482 = vld [vmem:[%s4462 + $0x4c] sm:$0xf]
      %v4483 = vld [vmem:[%s4462 + $0x50] sm:$0xf]
      %v4484 = vld [vmem:[%s4462 + $0x54] sm:$0xf]
      %v4485 = vld [vmem:[%s4462 + $0x58] sm:$0xf]
      %v4486 = vld [vmem:[%s4462 + $0x5c] sm:$0xf]
      %v4487 = vld [vmem:[%s4462 + $0x60] sm:$0xf]
      %v4488 = vld [vmem:[%s4462 + $0x64] sm:$0xf]
      %v4489 = vld [vmem:[%s4462 + $0x68] sm:$0xf]
      %v4490 = vld [vmem:[%s4462 + $0x6c] sm:$0xf]
      %v4491 = vld [vmem:[%s4462 + $0x70] sm:$0xf]
      %v4492 = vld [vmem:[%s4462 + $0x74] sm:$0xf]
      %v4493 = vld [vmem:[%s4462 + $0x78] sm:$0xf]
      %v4494 = vld [vmem:[%s4462 + $0x7c] sm:$0xf]
      %v4495 = vld [vmem:[%s4462 + $0x80] sm:$0xf]
      %v4496 = vld [vmem:[%s4462 + $0x84] sm:$0xf]
      %v4497 = vld [vmem:[%s4462 + $0x88] sm:$0xf]
      %v4498 = vld [vmem:[%s4462 + $0x8c] sm:$0xf]
      %v4535 = vunpack.c.l.b16 %v4463
      %v4536 = vunpack.c.l.b16 %v4464
      %v4537 = vunpack.c.l.b16 %v4465
      %v4538 = vunpack.c.l.b16 %v4466
      %v4539 = vunpack.c.l.b16 %v4467
      %v4540 = vunpack.c.l.b16 %v4468
      %v4541 = vunpack.c.l.b16 %v4469
      %v4542 = vunpack.c.l.b16 %v4470
      %v4543 = vunpack.c.l.b16 %v4471
      %v4544 = vunpack.c.l.b16 %v4472
      %v4545 = vunpack.c.l.b16 %v4473
      %v4546 = vunpack.c.l.b16 %v4474
      %v4547 = vunpack.c.l.b16 %v4475
      %v4548 = vunpack.c.l.b16 %v4476
      %v4549 = vunpack.c.l.b16 %v4477
      %v4550 = vunpack.c.l.b16 %v4478
      %v4551 = vunpack.c.l.b16 %v4479
      %v4552 = vunpack.c.l.b16 %v4480
      %v4553 = vunpack.c.l.b16 %v4481
      %v4554 = vunpack.c.l.b16 %v4482
      %v4555 = vunpack.c.l.b16 %v4483
      %v4556 = vunpack.c.l.b16 %v4484
      %v4557 = vunpack.c.l.b16 %v4485
      %v4558 = vunpack.c.l.b16 %v4486
      %v4559 = vunpack.c.l.b16 %v4487
      %v4560 = vunpack.c.l.b16 %v4488
      %v4561 = vunpack.c.l.b16 %v4489
      %v4562 = vunpack.c.l.b16 %v4490
      %v4563 = vunpack.c.l.b16 %v4491
      %v4564 = vunpack.c.l.b16 %v4492
      %v4565 = vunpack.c.l.b16 %v4493
      %v4566 = vunpack.c.l.b16 %v4494
      %v4567 = vunpack.c.l.b16 %v4495
      %v4568 = vunpack.c.l.b16 %v4496
      %v4569 = vunpack.c.l.b16 %v4497
      %v4570 = vunpack.c.l.b16 %v4498
      %v4571 = vpack.c.b16 %v4536, %v4535
      %v4572 = vpack.c.b16 %v4538, %v4537
      %v4573 = vpack.c.b16 %v4540, %v4539
      %v4574 = vpack.c.b16 %v4542, %v4541
      %v4575 = vpack.c.b16 %v4544, %v4543
      %v4576 = vpack.c.b16 %v4546, %v4545
      %v4577 = vpack.c.b16 %v4548, %v4547
      %v4578 = vpack.c.b16 %v4550, %v4549
      %v4579 = vpack.c.b16 %v4552, %v4551
      %v4580 = vpack.c.b16 %v4554, %v4553
      %v4581 = vpack.c.b16 %v4556, %v4555
      %v4582 = vpack.c.b16 %v4558, %v4557
      %v4583 = vpack.c.b16 %v4560, %v4559
      %v4584 = vpack.c.b16 %v4562, %v4561
      %v4585 = vpack.c.b16 %v4564, %v4563
      %v4586 = vpack.c.b16 %v4566, %v4565
      %v4587 = vpack.c.b16 %v4568, %v4567
      %v4588 = vpack.c.b16 %v4570, %v4569
      %v4608 = vsel %vm199, %v4190, 0
      %v4611 = vsel %vm199, %v4191, 0
      %v4614 = vsel %vm199, %v4192, 0
      %v4617 = vsel %vm199, %v4193, 0
      %v4620 = vsel %vm199, %v4194, 0
      %v4623 = vsel %vm199, %v4195, 0
      %v4626 = vsel %vm199, %v4196, 0
      %v4629 = vsel %vm199, %v4197, 0
      %v4632 = vsel %vm199, %v4198, 0
      %v4635 = vsel %vm199, %v4199, 0
      %v4638 = vsel %vm199, %v4200, 0
      %v4641 = vsel %vm199, %v4201, 0
      %v4644 = vsel %vm199, %v4202, 0
      %v4647 = vsel %vm199, %v4203, 0
      %v4650 = vsel %vm199, %v4204, 0
      %v4653 = vsel %vm199, %v4205, 0
      %4655 = vmatpush.bf16.msra.mxu0 %v4578
      %4656 = vmatpush.bf16.msra.mxu0 %v4577
      %4657 = vmatpush.bf16.msra.mxu0 %v4576
      %4658 = vmatpush.bf16.msra.mxu0 %v4575
      %4659 = vmatpush.bf16.msra.mxu0 %v4574
      %4660 = vmatpush.bf16.msra.mxu0 %v4573
      %4661 = vmatpush.bf16.msra.mxu0 %v4572
      %4662 = vmatpush.bf16.msra.mxu0 %v4571
      %4663 = vmatmul.bf16.gmra.mxu0 %v4287
      %v4664 = vpop.f32.mrf.mxu0
      %v4665 = vadd.f32 0.0, %v4664
      %v4666 = vpop.f32.mrf.mxu0
      %v4667 = vadd.f32 0.0, %v4666
      %4668 = vmatmul.bf16.gmra.mxu0 %v4290
      %v4669 = vpop.f32.mrf.mxu0
      %v4670 = vadd.f32 0.0, %v4669
      %v4671 = vpop.f32.mrf.mxu0
      %v4672 = vadd.f32 0.0, %v4671
      %4673 = vmatmul.bf16.gmra.mxu0 %v4293
      %v4674 = vpop.f32.mrf.mxu0
      %v4675 = vadd.f32 0.0, %v4674
      %v4676 = vpop.f32.mrf.mxu0
      %v4677 = vadd.f32 0.0, %v4676
      %4678 = vmatmul.bf16.gmra.mxu0 %v4296
      %v4679 = vpop.f32.mrf.mxu0
      %v4680 = vadd.f32 0.0, %v4679
      %v4681 = vpop.f32.mrf.mxu0
      %v4682 = vadd.f32 0.0, %v4681
      %4683 = vmatmul.bf16.gmra.mxu0 %v4299
      %v4684 = vpop.f32.mrf.mxu0
      %v4685 = vadd.f32 0.0, %v4684
      %v4686 = vpop.f32.mrf.mxu0
      %v4687 = vadd.f32 0.0, %v4686
      %4688 = vmatmul.bf16.gmra.mxu0 %v4302
      %v4689 = vpop.f32.mrf.mxu0
      %v4690 = vadd.f32 0.0, %v4689
      %v4691 = vpop.f32.mrf.mxu0
      %v4692 = vadd.f32 0.0, %v4691
      %4693 = vmatmul.bf16.gmra.mxu0 %v4305
      %v4694 = vpop.f32.mrf.mxu0
      %v4695 = vadd.f32 0.0, %v4694
      %v4696 = vpop.f32.mrf.mxu0
      %v4697 = vadd.f32 0.0, %v4696
      %4698 = vmatmul.bf16.gmra.mxu0 %v4308
      %v4699 = vpop.f32.mrf.mxu0
      %v4700 = vadd.f32 0.0, %v4699
      %v4701 = vpop.f32.mrf.mxu0
      %v4702 = vadd.f32 0.0, %v4701
      %4703 = vmatmul.bf16.gmra.mxu0 %v4311
      %v4704 = vpop.f32.mrf.mxu0
      %v4705 = vadd.f32 0.0, %v4704
      %v4706 = vpop.f32.mrf.mxu0
      %v4707 = vadd.f32 0.0, %v4706
      %4708 = vmatmul.bf16.gmra.mxu0 %v4314
      %v4709 = vpop.f32.mrf.mxu0
      %v4710 = vadd.f32 0.0, %v4709
      %v4711 = vpop.f32.mrf.mxu0
      %v4712 = vadd.f32 0.0, %v4711
      %4713 = vmatmul.bf16.gmra.mxu0 %v4317
      %v4714 = vpop.f32.mrf.mxu0
      %v4715 = vadd.f32 0.0, %v4714
      %v4716 = vpop.f32.mrf.mxu0
      %v4717 = vadd.f32 0.0, %v4716
      %4718 = vmatmul.bf16.gmra.mxu0 %v4320
      %v4719 = vpop.f32.mrf.mxu0
      %v4720 = vadd.f32 0.0, %v4719
      %v4721 = vpop.f32.mrf.mxu0
      %v4722 = vadd.f32 0.0, %v4721
      %4723 = vmatmul.bf16.gmra.mxu0 %v4323
      %v4724 = vpop.f32.mrf.mxu0
      %v4725 = vadd.f32 0.0, %v4724
      %v4726 = vpop.f32.mrf.mxu0
      %v4727 = vadd.f32 0.0, %v4726
      %4728 = vmatmul.bf16.gmra.mxu0 %v4326
      %v4729 = vpop.f32.mrf.mxu0
      %v4730 = vadd.f32 0.0, %v4729
      %v4731 = vpop.f32.mrf.mxu0
      %v4732 = vadd.f32 0.0, %v4731
      %4733 = vmatmul.bf16.gmra.mxu0 %v4329
      %v4734 = vpop.f32.mrf.mxu0
      %v4735 = vadd.f32 0.0, %v4734
      %v4736 = vpop.f32.mrf.mxu0
      %v4737 = vadd.f32 0.0, %v4736
      %4738 = vmatmul.bf16.gmra.mxu0 %v4332
      %v4739 = vpop.f32.mrf.mxu0
      %v4740 = vadd.f32 0.0, %v4739
      %v4741 = vpop.f32.mrf.mxu0
      %v4742 = vadd.f32 0.0, %v4741
      %4743 = vdwg.mxu0
      %4744 = vmatpush.bf16.msra.mxu0 %v4586
      %4745 = vmatpush.bf16.msra.mxu0 %v4585
      %4746 = vmatpush.bf16.msra.mxu0 %v4584
      %4747 = vmatpush.bf16.msra.mxu0 %v4583
      %4748 = vmatpush.bf16.msra.mxu0 %v4582
      %4749 = vmatpush.bf16.msra.mxu0 %v4581
      %4750 = vmatpush.bf16.msra.mxu0 %v4580
      %4751 = vmatpush.bf16.msra.mxu0 %v4579
      %4752 = vmatmul.bf16.gmra.mxu0 %v4415
      %v4753 = vpop.f32.mrf.mxu0
      %v4754 = vadd.f32 %v4665, %v4753
      %v4755 = vpop.f32.mrf.mxu0
      %v4756 = vadd.f32 %v4667, %v4755
      %4757 = vmatmul.bf16.gmra.mxu0 %v4418
      %v4758 = vpop.f32.mrf.mxu0
      %v4759 = vadd.f32 %v4670, %v4758
      %v4760 = vpop.f32.mrf.mxu0
      %v4761 = vadd.f32 %v4672, %v4760
      %4762 = vmatmul.bf16.gmra.mxu0 %v4421
      %v4763 = vpop.f32.mrf.mxu0
      %v4764 = vadd.f32 %v4675, %v4763
      %v4765 = vpop.f32.mrf.mxu0
      %v4766 = vadd.f32 %v4677, %v4765
      %4767 = vmatmul.bf16.gmra.mxu0 %v4424
      %v4768 = vpop.f32.mrf.mxu0
      %v4769 = vadd.f32 %v4680, %v4768
      %v4770 = vpop.f32.mrf.mxu0
      %v4771 = vadd.f32 %v4682, %v4770
      %4772 = vmatmul.bf16.gmra.mxu0 %v4427
      %v4773 = vpop.f32.mrf.mxu0
      %v4774 = vadd.f32 %v4685, %v4773
      %v4775 = vpop.f32.mrf.mxu0
      %v4776 = vadd.f32 %v4687, %v4775
      %4777 = vmatmul.bf16.gmra.mxu0 %v4430
      %v4778 = vpop.f32.mrf.mxu0
      %v4779 = vadd.f32 %v4690, %v4778
      %v4780 = vpop.f32.mrf.mxu0
      %v4781 = vadd.f32 %v4692, %v4780
      %4782 = vmatmul.bf16.gmra.mxu0 %v4433
      %v4783 = vpop.f32.mrf.mxu0
      %v4784 = vadd.f32 %v4695, %v4783
      %v4785 = vpop.f32.mrf.mxu0
      %v4786 = vadd.f32 %v4697, %v4785
      %4787 = vmatmul.bf16.gmra.mxu0 %v4436
      %v4788 = vpop.f32.mrf.mxu0
      %v4789 = vadd.f32 %v4700, %v4788
      %v4790 = vpop.f32.mrf.mxu0
      %v4791 = vadd.f32 %v4702, %v4790
      %4792 = vmatmul.bf16.gmra.mxu0 %v4439
      %v4793 = vpop.f32.mrf.mxu0
      %v4794 = vadd.f32 %v4705, %v4793
      %v4795 = vpop.f32.mrf.mxu0
      %v4796 = vadd.f32 %v4707, %v4795
      %4797 = vmatmul.bf16.gmra.mxu0 %v4442
      %v4798 = vpop.f32.mrf.mxu0
      %v4799 = vadd.f32 %v4710, %v4798
      %v4800 = vpop.f32.mrf.mxu0
      %v4801 = vadd.f32 %v4712, %v4800
      %4802 = vmatmul.bf16.gmra.mxu0 %v4445
      %v4803 = vpop.f32.mrf.mxu0
      %v4804 = vadd.f32 %v4715, %v4803
      %v4805 = vpop.f32.mrf.mxu0
      %v4806 = vadd.f32 %v4717, %v4805
      %4807 = vmatmul.bf16.gmra.mxu0 %v4448
      %v4808 = vpop.f32.mrf.mxu0
      %v4809 = vadd.f32 %v4720, %v4808
      %v4810 = vpop.f32.mrf.mxu0
      %v4811 = vadd.f32 %v4722, %v4810
      %4812 = vmatmul.bf16.gmra.mxu0 %v4451
      %v4813 = vpop.f32.mrf.mxu0
      %v4814 = vadd.f32 %v4725, %v4813
      %v4815 = vpop.f32.mrf.mxu0
      %v4816 = vadd.f32 %v4727, %v4815
      %4817 = vmatmul.bf16.gmra.mxu0 %v4454
      %v4818 = vpop.f32.mrf.mxu0
      %v4819 = vadd.f32 %v4730, %v4818
      %v4820 = vpop.f32.mrf.mxu0
      %v4821 = vadd.f32 %v4732, %v4820
      %4822 = vmatmul.bf16.gmra.mxu0 %v4457
      %v4823 = vpop.f32.mrf.mxu0
      %v4824 = vadd.f32 %v4735, %v4823
      %v4825 = vpop.f32.mrf.mxu0
      %v4826 = vadd.f32 %v4737, %v4825
      %4827 = vmatmul.bf16.gmra.mxu0 %v4460
      %v4828 = vpop.f32.mrf.mxu0
      %v4829 = vadd.f32 %v4740, %v4828
      %v4830 = vpop.f32.mrf.mxu0
      %v4831 = vadd.f32 %v4742, %v4830
      %4832 = vdwg.mxu0
      %4833 = vmatpush.bf16.msra.mxu0 0
      %4834 = vmatpush.bf16.msra.mxu0 0
      %4835 = vmatpush.bf16.msra.mxu0 0
      %4836 = vmatpush.bf16.msra.mxu0 0
      %4837 = vmatpush.bf16.msra.mxu0 0
      %4838 = vmatpush.bf16.msra.mxu0 0
      %4839 = vmatpush.bf16.msra.mxu0 %v4588
      %4840 = vmatpush.bf16.msra.mxu0 %v4587
      %4841 = vmatmul.bf16.gmra.mxu0 %v4608
      %v4842 = vpop.f32.mrf.mxu0
      %v4843 = vadd.f32 %v4754, %v4842
      %v4844 = vpop.f32.mrf.mxu0
      %v4845 = vadd.f32 %v4756, %v4844
      %4846 = vmatmul.bf16.gmra.mxu0 %v4611
      %v4847 = vpop.f32.mrf.mxu0
      %v4848 = vadd.f32 %v4759, %v4847
      %v4849 = vpop.f32.mrf.mxu0
      %v4850 = vadd.f32 %v4761, %v4849
      %4851 = vmatmul.bf16.gmra.mxu0 %v4614
      %v4852 = vpop.f32.mrf.mxu0
      %v4853 = vadd.f32 %v4764, %v4852
      %v4854 = vpop.f32.mrf.mxu0
      %v4855 = vadd.f32 %v4766, %v4854
      %4856 = vmatmul.bf16.gmra.mxu0 %v4617
      %v4857 = vpop.f32.mrf.mxu0
      %v4858 = vadd.f32 %v4769, %v4857
      %v4859 = vpop.f32.mrf.mxu0
      %v4860 = vadd.f32 %v4771, %v4859
      %4861 = vmatmul.bf16.gmra.mxu0 %v4620
      %v4862 = vpop.f32.mrf.mxu0
      %v4863 = vadd.f32 %v4774, %v4862
      %v4864 = vpop.f32.mrf.mxu0
      %v4865 = vadd.f32 %v4776, %v4864
      %4866 = vmatmul.bf16.gmra.mxu0 %v4623
      %v4867 = vpop.f32.mrf.mxu0
      %v4868 = vadd.f32 %v4779, %v4867
      %v4869 = vpop.f32.mrf.mxu0
      %v4870 = vadd.f32 %v4781, %v4869
      %4871 = vmatmul.bf16.gmra.mxu0 %v4626
      %v4872 = vpop.f32.mrf.mxu0
      %v4873 = vadd.f32 %v4784, %v4872
      %v4874 = vpop.f32.mrf.mxu0
      %v4875 = vadd.f32 %v4786, %v4874
      %4876 = vmatmul.bf16.gmra.mxu0 %v4629
      %v4877 = vpop.f32.mrf.mxu0
      %v4878 = vadd.f32 %v4789, %v4877
      %v4879 = vpop.f32.mrf.mxu0
      %v4880 = vadd.f32 %v4791, %v4879
      %4881 = vmatmul.bf16.gmra.mxu0 %v4632
      %v4882 = vpop.f32.mrf.mxu0
      %v4883 = vadd.f32 %v4794, %v4882
      %v4884 = vpop.f32.mrf.mxu0
      %v4885 = vadd.f32 %v4796, %v4884
      %4886 = vmatmul.bf16.gmra.mxu0 %v4635
      %v4887 = vpop.f32.mrf.mxu0
      %v4888 = vadd.f32 %v4799, %v4887
      %v4889 = vpop.f32.mrf.mxu0
      %v4890 = vadd.f32 %v4801, %v4889
      %4891 = vmatmul.bf16.gmra.mxu0 %v4638
      %v4892 = vpop.f32.mrf.mxu0
      %v4893 = vadd.f32 %v4804, %v4892
      %v4894 = vpop.f32.mrf.mxu0
      %v4895 = vadd.f32 %v4806, %v4894
      %4896 = vmatmul.bf16.gmra.mxu0 %v4641
      %v4897 = vpop.f32.mrf.mxu0
      %v4898 = vadd.f32 %v4809, %v4897
      %v4899 = vpop.f32.mrf.mxu0
      %v4900 = vadd.f32 %v4811, %v4899
      %4901 = vmatmul.bf16.gmra.mxu0 %v4644
      %v4902 = vpop.f32.mrf.mxu0
      %v4903 = vadd.f32 %v4814, %v4902
      %v4904 = vpop.f32.mrf.mxu0
      %v4905 = vadd.f32 %v4816, %v4904
      %4906 = vmatmul.bf16.gmra.mxu0 %v4647
      %v4907 = vpop.f32.mrf.mxu0
      %v4908 = vadd.f32 %v4819, %v4907
      %v4909 = vpop.f32.mrf.mxu0
      %v4910 = vadd.f32 %v4821, %v4909
      %4911 = vmatmul.bf16.gmra.mxu0 %v4650
      %v4912 = vpop.f32.mrf.mxu0
      %v4913 = vadd.f32 %v4824, %v4912
      %v4914 = vpop.f32.mrf.mxu0
      %v4915 = vadd.f32 %v4826, %v4914
      %4916 = vmatmul.bf16.gmra.mxu0 %v4653
      %v4917 = vpop.f32.mrf.mxu0
      %v4918 = vadd.f32 %v4829, %v4917
      %v4919 = vpop.f32.mrf.mxu0
      %v4920 = vadd.f32 %v4831, %v4919
      %4921 = vdwg.mxu0
      %s4922 = scalar_lea.vmem %s2, 1
      %v4923 = vld [vmem:[%s4922] sm:$0x1]
      %v4925 = vperm.slane %v4923, 0
      %v4927 = vmul.f32 %v4843, %v4925
      %v4928 = vmul.f32 %v4845, %v4925
      %v4929 = vmul.f32 %v4848, %v4925
      %v4930 = vmul.f32 %v4850, %v4925
      %v4931 = vmul.f32 %v4853, %v4925
      %v4932 = vmul.f32 %v4855, %v4925
      %v4933 = vmul.f32 %v4858, %v4925
      %v4934 = vmul.f32 %v4860, %v4925
      %v4935 = vmul.f32 %v4863, %v4925
      %v4936 = vmul.f32 %v4865, %v4925
      %v4937 = vmul.f32 %v4868, %v4925
      %v4938 = vmul.f32 %v4870, %v4925
      %v4939 = vmul.f32 %v4873, %v4925
      %v4940 = vmul.f32 %v4875, %v4925
      %v4941 = vmul.f32 %v4878, %v4925
      %v4942 = vmul.f32 %v4880, %v4925
      %v4943 = vmul.f32 %v4883, %v4925
      %v4944 = vmul.f32 %v4885, %v4925
      %v4945 = vmul.f32 %v4888, %v4925
      %v4946 = vmul.f32 %v4890, %v4925
      %v4947 = vmul.f32 %v4893, %v4925
      %v4948 = vmul.f32 %v4895, %v4925
      %v4949 = vmul.f32 %v4898, %v4925
      %v4950 = vmul.f32 %v4900, %v4925
      %v4951 = vmul.f32 %v4903, %v4925
      %v4952 = vmul.f32 %v4905, %v4925
      %v4953 = vmul.f32 %v4908, %v4925
      %v4954 = vmul.f32 %v4910, %v4925
      %v4955 = vmul.f32 %v4913, %v4925
      %v4956 = vmul.f32 %v4915, %v4925
      %v4957 = vmul.f32 %v4918, %v4925
      %v4958 = vmul.f32 %v4920, %v4925
      %s4959 = scalar_lea.vmem %s3, 1
      %v4960 = vld [vmem:[%s4959] sm:$0x1]
      %v4962 = vperm.slane %v4960, 0
      %v4964 = vadd.f32 %v4927, %v4962
      %v4965 = vadd.f32 %v4928, %v4962
      %v4966 = vadd.f32 %v4929, %v4962
      %v4967 = vadd.f32 %v4930, %v4962
      %v4968 = vadd.f32 %v4931, %v4962
      %v4969 = vadd.f32 %v4932, %v4962
      %v4970 = vadd.f32 %v4933, %v4962
      %v4971 = vadd.f32 %v4934, %v4962
      %v4972 = vadd.f32 %v4935, %v4962
      %v4973 = vadd.f32 %v4936, %v4962
      %v4974 = vadd.f32 %v4937, %v4962
      %v4975 = vadd.f32 %v4938, %v4962
      %v4976 = vadd.f32 %v4939, %v4962
      %v4977 = vadd.f32 %v4940, %v4962
      %v4978 = vadd.f32 %v4941, %v4962
      %v4979 = vadd.f32 %v4942, %v4962
      %v4980 = vadd.f32 %v4943, %v4962
      %v4981 = vadd.f32 %v4944, %v4962
      %v4982 = vadd.f32 %v4945, %v4962
      %v4983 = vadd.f32 %v4946, %v4962
      %v4984 = vadd.f32 %v4947, %v4962
      %v4985 = vadd.f32 %v4948, %v4962
      %v4986 = vadd.f32 %v4949, %v4962
      %v4987 = vadd.f32 %v4950, %v4962
      %v4988 = vadd.f32 %v4951, %v4962
      %v4989 = vadd.f32 %v4952, %v4962
      %v4990 = vadd.f32 %v4953, %v4962
      %v4991 = vadd.f32 %v4954, %v4962
      %v4992 = vadd.f32 %v4955, %v4962
      %v4993 = vadd.f32 %v4956, %v4962
      %v4994 = vadd.f32 %v4957, %v4962
      %v4995 = vadd.f32 %v4958, %v4962
      %v4996 = vmax.f32 %v4964, 0.0
      %v4997 = vmax.f32 %v4965, 0.0
      %v4998 = vmax.f32 %v4966, 0.0
      %v4999 = vmax.f32 %v4967, 0.0
      %v5000 = vmax.f32 %v4968, 0.0
      %v5001 = vmax.f32 %v4969, 0.0
      %v5002 = vmax.f32 %v4970, 0.0
      %v5003 = vmax.f32 %v4971, 0.0
      %v5004 = vmax.f32 %v4972, 0.0
      %v5005 = vmax.f32 %v4973, 0.0
      %v5006 = vmax.f32 %v4974, 0.0
      %v5007 = vmax.f32 %v4975, 0.0
      %v5008 = vmax.f32 %v4976, 0.0
      %v5009 = vmax.f32 %v4977, 0.0
      %v5010 = vmax.f32 %v4978, 0.0
      %v5011 = vmax.f32 %v4979, 0.0
      %v5012 = vmax.f32 %v4980, 0.0
      %v5013 = vmax.f32 %v4981, 0.0
      %v5014 = vmax.f32 %v4982, 0.0
      %v5015 = vmax.f32 %v4983, 0.0
      %v5016 = vmax.f32 %v4984, 0.0
      %v5017 = vmax.f32 %v4985, 0.0
      %v5018 = vmax.f32 %v4986, 0.0
      %v5019 = vmax.f32 %v4987, 0.0
      %v5020 = vmax.f32 %v4988, 0.0
      %v5021 = vmax.f32 %v4989, 0.0
      %v5022 = vmax.f32 %v4990, 0.0
      %v5023 = vmax.f32 %v4991, 0.0
      %v5024 = vmax.f32 %v4992, 0.0
      %v5025 = vmax.f32 %v4993, 0.0
      %v5026 = vmax.f32 %v4994, 0.0
      %v5027 = vmax.f32 %v4995, 0.0
      %5028 = vst.msk [vmem:[%s341 + $0x1] sm:$0xff] %vm199, %v4996
      %5029 = vst.msk [vmem:[%s341 + $0x9] sm:$0xff] %vm199, %v4997
      %5030 = vst.msk [vmem:[%s341 + $0x19] sm:$0xff] %vm199, %v4998
      %5031 = vst.msk [vmem:[%s341 + $0x21] sm:$0xff] %vm199, %v4999
      %5032 = vst.msk [vmem:[%s341 + $0x31] sm:$0xff] %vm199, %v5000
      %5033 = vst.msk [vmem:[%s341 + $0x39] sm:$0xff] %vm199, %v5001
      %5034 = vst.msk [vmem:[%s341 + $0x49] sm:$0xff] %vm199, %v5002
      %5035 = vst.msk [vmem:[%s341 + $0x51] sm:$0xff] %vm199, %v5003
      %5036 = vst.msk [vmem:[%s341 + $0x61] sm:$0xff] %vm199, %v5004
      %5037 = vst.msk [vmem:[%s341 + $0x69] sm:$0xff] %vm199, %v5005
      %5038 = vst.msk [vmem:[%s341 + $0x79] sm:$0xff] %vm199, %v5006
      %5039 = vst.msk [vmem:[%s341 + $0x81] sm:$0xff] %vm199, %v5007
      %5040 = vst.msk [vmem:[%s341 + $0x91] sm:$0xff] %vm199, %v5008
      %5041 = vst.msk [vmem:[%s341 + $0x99] sm:$0xff] %vm199, %v5009
      %5042 = vst.msk [vmem:[%s341 + $0xa9] sm:$0xff] %vm199, %v5010
      %5043 = vst.msk [vmem:[%s341 + $0xb1] sm:$0xff] %vm199, %v5011
      %5044 = vst.msk [vmem:[%s341 + $0xc1] sm:$0xff] %vm199, %v5012
      %5045 = vst.msk [vmem:[%s341 + $0xc9] sm:$0xff] %vm199, %v5013
      %5046 = vst.msk [vmem:[%s341 + $0xd9] sm:$0xff] %vm199, %v5014
      %5047 = vst.msk [vmem:[%s341 + $0xe1] sm:$0xff] %vm199, %v5015
      %5048 = vst.msk [vmem:[%s341 + $0xf1] sm:$0xff] %vm199, %v5016
      %5049 = vst.msk [vmem:[%s341 + $0xf9] sm:$0xff] %vm199, %v5017
      %5050 = vst.msk [vmem:[%s341 + $0x109] sm:$0xff] %vm199, %v5018
      %5051 = vst.msk [vmem:[%s341 + $0x111] sm:$0xff] %vm199, %v5019
      %5052 = vst.msk [vmem:[%s341 + $0x121] sm:$0xff] %vm199, %v5020
      %5053 = vst.msk [vmem:[%s341 + $0x129] sm:$0xff] %vm199, %v5021
      %5054 = vst.msk [vmem:[%s341 + $0x139] sm:$0xff] %vm199, %v5022
      %5055 = vst.msk [vmem:[%s341 + $0x141] sm:$0xff] %vm199, %v5023
      %5056 = vst.msk [vmem:[%s341 + $0x151] sm:$0xff] %vm199, %v5024
      %5057 = vst.msk [vmem:[%s341 + $0x159] sm:$0xff] %vm199, %v5025
      %5058 = vst.msk [vmem:[%s341 + $0x169] sm:$0xff] %vm199, %v5026
      %5059 = vst.msk [vmem:[%s341 + $0x171] sm:$0xff] %vm199, %v5027
      %v5060 = vld [vmem:[#allocation2] sm:$0xff]
      %v5061 = vld [vmem:[#allocation2 + $0x8] sm:$0xff]
      %v5062 = vld [vmem:[#allocation2 + $0x18] sm:$0xff]
      %v5063 = vld [vmem:[#allocation2 + $0x20] sm:$0xff]
      %v5064 = vld [vmem:[#allocation2 + $0x30] sm:$0xff]
      %v5065 = vld [vmem:[#allocation2 + $0x38] sm:$0xff]
      %v5066 = vld [vmem:[#allocation2 + $0x48] sm:$0xff]
      %v5067 = vld [vmem:[#allocation2 + $0x50] sm:$0xff]
      %v5068 = vld [vmem:[#allocation2 + $0x60] sm:$0xff]
      %v5069 = vld [vmem:[#allocation2 + $0x68] sm:$0xff]
      %v5070 = vld [vmem:[#allocation2 + $0x78] sm:$0xff]
      %v5071 = vld [vmem:[#allocation2 + $0x80] sm:$0xff]
      %v5072 = vld [vmem:[#allocation2 + $0x90] sm:$0xff]
      %v5073 = vld [vmem:[#allocation2 + $0x98] sm:$0xff]
      %v5074 = vld [vmem:[#allocation2 + $0xa8] sm:$0xff]
      %v5075 = vld [vmem:[#allocation2 + $0xb0] sm:$0xff]
      %v5076 = vld [vmem:[#allocation2 + $0xc0] sm:$0xff]
      %v5077 = vld [vmem:[#allocation2 + $0xc8] sm:$0xff]
      %v5078 = vld [vmem:[#allocation2 + $0xd8] sm:$0xff]
      %v5079 = vld [vmem:[#allocation2 + $0xe0] sm:$0xff]
      %v5080 = vld [vmem:[#allocation2 + $0xf0] sm:$0xff]
      %v5081 = vld [vmem:[#allocation2 + $0xf8] sm:$0xff]
      %v5082 = vld [vmem:[#allocation2 + $0x108] sm:$0xff]
      %v5083 = vld [vmem:[#allocation2 + $0x110] sm:$0xff]
      %v5084 = vld [vmem:[#allocation2 + $0x120] sm:$0xff]
      %v5085 = vld [vmem:[#allocation2 + $0x128] sm:$0xff]
      %v5086 = vld [vmem:[#allocation2 + $0x138] sm:$0xff]
      %v5087 = vld [vmem:[#allocation2 + $0x140] sm:$0xff]
      %v5088 = vld [vmem:[#allocation2 + $0x150] sm:$0xff]
      %v5089 = vld [vmem:[#allocation2 + $0x158] sm:$0xff]
      %v5090 = vld [vmem:[#allocation2 + $0x168] sm:$0xff]
      %v5091 = vld [vmem:[#allocation2 + $0x170] sm:$0xff]
      %v5092 = vpack.c.bf16 %v5060, %v5060
      %v5093 = vpack.c.bf16 %v5061, %v5061
      %v5094 = vpack.c.bf16 %v5062, %v5062
      %v5095 = vpack.c.bf16 %v5063, %v5063
      %v5096 = vpack.c.bf16 %v5064, %v5064
      %v5097 = vpack.c.bf16 %v5065, %v5065
      %v5098 = vpack.c.bf16 %v5066, %v5066
      %v5099 = vpack.c.bf16 %v5067, %v5067
      %v5100 = vpack.c.bf16 %v5068, %v5068
      %v5101 = vpack.c.bf16 %v5069, %v5069
      %v5102 = vpack.c.bf16 %v5070, %v5070
      %v5103 = vpack.c.bf16 %v5071, %v5071
      %v5104 = vpack.c.bf16 %v5072, %v5072
      %v5105 = vpack.c.bf16 %v5073, %v5073
      %v5106 = vpack.c.bf16 %v5074, %v5074
      %v5107 = vpack.c.bf16 %v5075, %v5075
      %v5108 = vpack.c.bf16 %v5076, %v5076
      %v5109 = vpack.c.bf16 %v5077, %v5077
      %v5110 = vpack.c.bf16 %v5078, %v5078
      %v5111 = vpack.c.bf16 %v5079, %v5079
      %v5112 = vpack.c.bf16 %v5080, %v5080
      %v5113 = vpack.c.bf16 %v5081, %v5081
      %v5114 = vpack.c.bf16 %v5082, %v5082
      %v5115 = vpack.c.bf16 %v5083, %v5083
      %v5116 = vpack.c.bf16 %v5084, %v5084
      %v5117 = vpack.c.bf16 %v5085, %v5085
      %v5118 = vpack.c.bf16 %v5086, %v5086
      %v5119 = vpack.c.bf16 %v5087, %v5087
      %v5120 = vpack.c.bf16 %v5088, %v5088
      %v5121 = vpack.c.bf16 %v5089, %v5089
      %v5122 = vpack.c.bf16 %v5090, %v5090
      %v5123 = vpack.c.bf16 %v5091, %v5091
      %v5124 = vld [vmem:[#allocation2 + $0x1] sm:$0xff]
      %v5125 = vld [vmem:[#allocation2 + $0x9] sm:$0xff]
      %v5126 = vld [vmem:[#allocation2 + $0x19] sm:$0xff]
      %v5127 = vld [vmem:[#allocation2 + $0x21] sm:$0xff]
      %v5128 = vld [vmem:[#allocation2 + $0x31] sm:$0xff]
      %v5129 = vld [vmem:[#allocation2 + $0x39] sm:$0xff]
      %v5130 = vld [vmem:[#allocation2 + $0x49] sm:$0xff]
      %v5131 = vld [vmem:[#allocation2 + $0x51] sm:$0xff]
      %v5132 = vld [vmem:[#allocation2 + $0x61] sm:$0xff]
      %v5133 = vld [vmem:[#allocation2 + $0x69] sm:$0xff]
      %v5134 = vld [vmem:[#allocation2 + $0x79] sm:$0xff]
      %v5135 = vld [vmem:[#allocation2 + $0x81] sm:$0xff]
      %v5136 = vld [vmem:[#allocation2 + $0x91] sm:$0xff]
      %v5137 = vld [vmem:[#allocation2 + $0x99] sm:$0xff]
      %v5138 = vld [vmem:[#allocation2 + $0xa9] sm:$0xff]
      %v5139 = vld [vmem:[#allocation2 + $0xb1] sm:$0xff]
      %v5140 = vld [vmem:[#allocation2 + $0xc1] sm:$0xff]
      %v5141 = vld [vmem:[#allocation2 + $0xc9] sm:$0xff]
      %v5142 = vld [vmem:[#allocation2 + $0xd9] sm:$0xff]
      %v5143 = vld [vmem:[#allocation2 + $0xe1] sm:$0xff]
      %v5144 = vld [vmem:[#allocation2 + $0xf1] sm:$0xff]
      %v5145 = vld [vmem:[#allocation2 + $0xf9] sm:$0xff]
      %v5146 = vld [vmem:[#allocation2 + $0x109] sm:$0xff]
      %v5147 = vld [vmem:[#allocation2 + $0x111] sm:$0xff]
      %v5148 = vld [vmem:[#allocation2 + $0x121] sm:$0xff]
      %v5149 = vld [vmem:[#allocation2 + $0x129] sm:$0xff]
      %v5150 = vld [vmem:[#allocation2 + $0x139] sm:$0xff]
      %v5151 = vld [vmem:[#allocation2 + $0x141] sm:$0xff]
      %v5152 = vld [vmem:[#allocation2 + $0x151] sm:$0xff]
      %v5153 = vld [vmem:[#allocation2 + $0x159] sm:$0xff]
      %v5154 = vld [vmem:[#allocation2 + $0x169] sm:$0xff]
      %v5155 = vld [vmem:[#allocation2 + $0x171] sm:$0xff]
      %v5156 = vpack.c.bf16 %v5124, %v5124
      %v5157 = vpack.c.bf16 %v5125, %v5125
      %v5158 = vpack.c.bf16 %v5126, %v5126
      %v5159 = vpack.c.bf16 %v5127, %v5127
      %v5160 = vpack.c.bf16 %v5128, %v5128
      %v5161 = vpack.c.bf16 %v5129, %v5129
      %v5162 = vpack.c.bf16 %v5130, %v5130
      %v5163 = vpack.c.bf16 %v5131, %v5131
      %v5164 = vpack.c.bf16 %v5132, %v5132
      %v5165 = vpack.c.bf16 %v5133, %v5133
      %v5166 = vpack.c.bf16 %v5134, %v5134
      %v5167 = vpack.c.bf16 %v5135, %v5135
      %v5168 = vpack.c.bf16 %v5136, %v5136
      %v5169 = vpack.c.bf16 %v5137, %v5137
      %v5170 = vpack.c.bf16 %v5138, %v5138
      %v5171 = vpack.c.bf16 %v5139, %v5139
      %v5172 = vpack.c.bf16 %v5140, %v5140
      %v5173 = vpack.c.bf16 %v5141, %v5141
      %v5174 = vpack.c.bf16 %v5142, %v5142
      %v5175 = vpack.c.bf16 %v5143, %v5143
      %v5176 = vpack.c.bf16 %v5144, %v5144
      %v5177 = vpack.c.bf16 %v5145, %v5145
      %v5178 = vpack.c.bf16 %v5146, %v5146
      %v5179 = vpack.c.bf16 %v5147, %v5147
      %v5180 = vpack.c.bf16 %v5148, %v5148
      %v5181 = vpack.c.bf16 %v5149, %v5149
      %v5182 = vpack.c.bf16 %v5150, %v5150
      %v5183 = vpack.c.bf16 %v5151, %v5151
      %v5184 = vpack.c.bf16 %v5152, %v5152
      %v5185 = vpack.c.bf16 %v5153, %v5153
      %v5186 = vpack.c.bf16 %v5154, %v5154
      %v5187 = vpack.c.bf16 %v5155, %v5155
      %v5188 = vld [vmem:[#allocation2 + $0x2] sm:$0xff]
      %v5189 = vld [vmem:[#allocation2 + $0xa] sm:$0xff]
      %v5190 = vld [vmem:[#allocation2 + $0x1a] sm:$0xff]
      %v5191 = vld [vmem:[#allocation2 + $0x22] sm:$0xff]
      %v5192 = vld [vmem:[#allocation2 + $0x32] sm:$0xff]
      %v5193 = vld [vmem:[#allocation2 + $0x3a] sm:$0xff]
      %v5194 = vld [vmem:[#allocation2 + $0x4a] sm:$0xff]
      %v5195 = vld [vmem:[#allocation2 + $0x52] sm:$0xff]
      %v5196 = vld [vmem:[#allocation2 + $0x62] sm:$0xff]
      %v5197 = vld [vmem:[#allocation2 + $0x6a] sm:$0xff]
      %v5198 = vld [vmem:[#allocation2 + $0x7a] sm:$0xff]
      %v5199 = vld [vmem:[#allocation2 + $0x82] sm:$0xff]
      %v5200 = vld [vmem:[#allocation2 + $0x92] sm:$0xff]
      %v5201 = vld [vmem:[#allocation2 + $0x9a] sm:$0xff]
      %v5202 = vld [vmem:[#allocation2 + $0xaa] sm:$0xff]
      %v5203 = vld [vmem:[#allocation2 + $0xb2] sm:$0xff]
      %v5204 = vld [vmem:[#allocation2 + $0xc2] sm:$0xff]
      %v5205 = vld [vmem:[#allocation2 + $0xca] sm:$0xff]
      %v5206 = vld [vmem:[#allocation2 + $0xda] sm:$0xff]
      %v5207 = vld [vmem:[#allocation2 + $0xe2] sm:$0xff]
      %v5208 = vld [vmem:[#allocation2 + $0xf2] sm:$0xff]
      %v5209 = vld [vmem:[#allocation2 + $0xfa] sm:$0xff]
      %v5210 = vld [vmem:[#allocation2 + $0x10a] sm:$0xff]
      %v5211 = vld [vmem:[#allocation2 + $0x112] sm:$0xff]
      %v5212 = vld [vmem:[#allocation2 + $0x122] sm:$0xff]
      %v5213 = vld [vmem:[#allocation2 + $0x12a] sm:$0xff]
      %v5214 = vld [vmem:[#allocation2 + $0x13a] sm:$0xff]
      %v5215 = vld [vmem:[#allocation2 + $0x142] sm:$0xff]
      %v5216 = vld [vmem:[#allocation2 + $0x152] sm:$0xff]
      %v5217 = vld [vmem:[#allocation2 + $0x15a] sm:$0xff]
      %v5218 = vld [vmem:[#allocation2 + $0x16a] sm:$0xff]
      %v5219 = vld [vmem:[#allocation2 + $0x172] sm:$0xff]
      %v5220 = vpack.c.bf16 %v5188, %v5188
      %v5221 = vpack.c.bf16 %v5189, %v5189
      %v5222 = vpack.c.bf16 %v5190, %v5190
      %v5223 = vpack.c.bf16 %v5191, %v5191
      %v5224 = vpack.c.bf16 %v5192, %v5192
      %v5225 = vpack.c.bf16 %v5193, %v5193
      %v5226 = vpack.c.bf16 %v5194, %v5194
      %v5227 = vpack.c.bf16 %v5195, %v5195
      %v5228 = vpack.c.bf16 %v5196, %v5196
      %v5229 = vpack.c.bf16 %v5197, %v5197
      %v5230 = vpack.c.bf16 %v5198, %v5198
      %v5231 = vpack.c.bf16 %v5199, %v5199
      %v5232 = vpack.c.bf16 %v5200, %v5200
      %v5233 = vpack.c.bf16 %v5201, %v5201
      %v5234 = vpack.c.bf16 %v5202, %v5202
      %v5235 = vpack.c.bf16 %v5203, %v5203
      %v5236 = vpack.c.bf16 %v5204, %v5204
      %v5237 = vpack.c.bf16 %v5205, %v5205
      %v5238 = vpack.c.bf16 %v5206, %v5206
      %v5239 = vpack.c.bf16 %v5207, %v5207
      %v5240 = vpack.c.bf16 %v5208, %v5208
      %v5241 = vpack.c.bf16 %v5209, %v5209
      %v5242 = vpack.c.bf16 %v5210, %v5210
      %v5243 = vpack.c.bf16 %v5211, %v5211
      %v5244 = vpack.c.bf16 %v5212, %v5212
      %v5245 = vpack.c.bf16 %v5213, %v5213
      %v5246 = vpack.c.bf16 %v5214, %v5214
      %v5247 = vpack.c.bf16 %v5215, %v5215
      %v5248 = vpack.c.bf16 %v5216, %v5216
      %v5249 = vpack.c.bf16 %v5217, %v5217
      %v5250 = vpack.c.bf16 %v5218, %v5218
      %v5251 = vpack.c.bf16 %v5219, %v5219
      %v5252 = vld [vmem:[%s341] sm:$0xff]
      %v5253 = vld [vmem:[%s341 + $0x8] sm:$0xff]
      %v5254 = vld [vmem:[%s341 + $0x18] sm:$0xff]
      %v5255 = vld [vmem:[%s341 + $0x20] sm:$0xff]
      %v5256 = vld [vmem:[%s341 + $0x30] sm:$0xff]
      %v5257 = vld [vmem:[%s341 + $0x38] sm:$0xff]
      %v5258 = vld [vmem:[%s341 + $0x48] sm:$0xff]
      %v5259 = vld [vmem:[%s341 + $0x50] sm:$0xff]
      %v5260 = vld [vmem:[%s341 + $0x60] sm:$0xff]
      %v5261 = vld [vmem:[%s341 + $0x68] sm:$0xff]
      %v5262 = vld [vmem:[%s341 + $0x78] sm:$0xff]
      %v5263 = vld [vmem:[%s341 + $0x80] sm:$0xff]
      %v5264 = vld [vmem:[%s341 + $0x90] sm:$0xff]
      %v5265 = vld [vmem:[%s341 + $0x98] sm:$0xff]
      %v5266 = vld [vmem:[%s341 + $0xa8] sm:$0xff]
      %v5267 = vld [vmem:[%s341 + $0xb0] sm:$0xff]
      %v5268 = vld [vmem:[%s341 + $0xc0] sm:$0xff]
      %v5269 = vld [vmem:[%s341 + $0xc8] sm:$0xff]
      %v5270 = vld [vmem:[%s341 + $0xd8] sm:$0xff]
      %v5271 = vld [vmem:[%s341 + $0xe0] sm:$0xff]
      %v5272 = vld [vmem:[%s341 + $0xf0] sm:$0xff]
      %v5273 = vld [vmem:[%s341 + $0xf8] sm:$0xff]
      %v5274 = vld [vmem:[%s341 + $0x108] sm:$0xff]
      %v5275 = vld [vmem:[%s341 + $0x110] sm:$0xff]
      %v5276 = vld [vmem:[%s341 + $0x120] sm:$0xff]
      %v5277 = vld [vmem:[%s341 + $0x128] sm:$0xff]
      %v5278 = vld [vmem:[%s341 + $0x138] sm:$0xff]
      %v5279 = vld [vmem:[%s341 + $0x140] sm:$0xff]
      %v5280 = vld [vmem:[%s341 + $0x150] sm:$0xff]
      %v5281 = vld [vmem:[%s341 + $0x158] sm:$0xff]
      %v5282 = vld [vmem:[%s341 + $0x168] sm:$0xff]
      %v5283 = vld [vmem:[%s341 + $0x170] sm:$0xff]
      %v5284 = vpack.c.bf16 %v5252, %v5252
      %v5285 = vpack.c.bf16 %v5253, %v5253
      %v5286 = vpack.c.bf16 %v5254, %v5254
      %v5287 = vpack.c.bf16 %v5255, %v5255
      %v5288 = vpack.c.bf16 %v5256, %v5256
      %v5289 = vpack.c.bf16 %v5257, %v5257
      %v5290 = vpack.c.bf16 %v5258, %v5258
      %v5291 = vpack.c.bf16 %v5259, %v5259
      %v5292 = vpack.c.bf16 %v5260, %v5260
      %v5293 = vpack.c.bf16 %v5261, %v5261
      %v5294 = vpack.c.bf16 %v5262, %v5262
      %v5295 = vpack.c.bf16 %v5263, %v5263
      %v5296 = vpack.c.bf16 %v5264, %v5264
      %v5297 = vpack.c.bf16 %v5265, %v5265
      %v5298 = vpack.c.bf16 %v5266, %v5266
      %v5299 = vpack.c.bf16 %v5267, %v5267
      %v5300 = vpack.c.bf16 %v5268, %v5268
      %v5301 = vpack.c.bf16 %v5269, %v5269
      %v5302 = vpack.c.bf16 %v5270, %v5270
      %v5303 = vpack.c.bf16 %v5271, %v5271
      %v5304 = vpack.c.bf16 %v5272, %v5272
      %v5305 = vpack.c.bf16 %v5273, %v5273
      %v5306 = vpack.c.bf16 %v5274, %v5274
      %v5307 = vpack.c.bf16 %v5275, %v5275
      %v5308 = vpack.c.bf16 %v5276, %v5276
      %v5309 = vpack.c.bf16 %v5277, %v5277
      %v5310 = vpack.c.bf16 %v5278, %v5278
      %v5311 = vpack.c.bf16 %v5279, %v5279
      %v5312 = vpack.c.bf16 %v5280, %v5280
      %v5313 = vpack.c.bf16 %v5281, %v5281
      %v5314 = vpack.c.bf16 %v5282, %v5282
      %v5315 = vpack.c.bf16 %v5283, %v5283
      %v5316 = vld [vmem:[%s341 + $0x1] sm:$0xff]
      %v5317 = vld [vmem:[%s341 + $0x9] sm:$0xff]
      %v5318 = vld [vmem:[%s341 + $0x19] sm:$0xff]
      %v5319 = vld [vmem:[%s341 + $0x21] sm:$0xff]
      %v5320 = vld [vmem:[%s341 + $0x31] sm:$0xff]
      %v5321 = vld [vmem:[%s341 + $0x39] sm:$0xff]
      %v5322 = vld [vmem:[%s341 + $0x49] sm:$0xff]
      %v5323 = vld [vmem:[%s341 + $0x51] sm:$0xff]
      %v5324 = vld [vmem:[%s341 + $0x61] sm:$0xff]
      %v5325 = vld [vmem:[%s341 + $0x69] sm:$0xff]
      %v5326 = vld [vmem:[%s341 + $0x79] sm:$0xff]
      %v5327 = vld [vmem:[%s341 + $0x81] sm:$0xff]
      %v5328 = vld [vmem:[%s341 + $0x91] sm:$0xff]
      %v5329 = vld [vmem:[%s341 + $0x99] sm:$0xff]
      %v5330 = vld [vmem:[%s341 + $0xa9] sm:$0xff]
      %v5331 = vld [vmem:[%s341 + $0xb1] sm:$0xff]
      %v5332 = vld [vmem:[%s341 + $0xc1] sm:$0xff]
      %v5333 = vld [vmem:[%s341 + $0xc9] sm:$0xff]
      %v5334 = vld [vmem:[%s341 + $0xd9] sm:$0xff]
      %v5335 = vld [vmem:[%s341 + $0xe1] sm:$0xff]
      %v5336 = vld [vmem:[%s341 + $0xf1] sm:$0xff]
      %v5337 = vld [vmem:[%s341 + $0xf9] sm:$0xff]
      %v5338 = vld [vmem:[%s341 + $0x109] sm:$0xff]
      %v5339 = vld [vmem:[%s341 + $0x111] sm:$0xff]
      %v5340 = vld [vmem:[%s341 + $0x121] sm:$0xff]
      %v5341 = vld [vmem:[%s341 + $0x129] sm:$0xff]
      %v5342 = vld [vmem:[%s341 + $0x139] sm:$0xff]
      %v5343 = vld [vmem:[%s341 + $0x141] sm:$0xff]
      %v5344 = vld [vmem:[%s341 + $0x151] sm:$0xff]
      %v5345 = vld [vmem:[%s341 + $0x159] sm:$0xff]
      %v5346 = vld [vmem:[%s341 + $0x169] sm:$0xff]
      %v5347 = vld [vmem:[%s341 + $0x171] sm:$0xff]
      %v5348 = vpack.c.bf16 %v5316, %v5316
      %v5349 = vpack.c.bf16 %v5317, %v5317
      %v5350 = vpack.c.bf16 %v5318, %v5318
      %v5351 = vpack.c.bf16 %v5319, %v5319
      %v5352 = vpack.c.bf16 %v5320, %v5320
      %v5353 = vpack.c.bf16 %v5321, %v5321
      %v5354 = vpack.c.bf16 %v5322, %v5322
      %v5355 = vpack.c.bf16 %v5323, %v5323
      %v5356 = vpack.c.bf16 %v5324, %v5324
      %v5357 = vpack.c.bf16 %v5325, %v5325
      %v5358 = vpack.c.bf16 %v5326, %v5326
      %v5359 = vpack.c.bf16 %v5327, %v5327
      %v5360 = vpack.c.bf16 %v5328, %v5328
      %v5361 = vpack.c.bf16 %v5329, %v5329
      %v5362 = vpack.c.bf16 %v5330, %v5330
      %v5363 = vpack.c.bf16 %v5331, %v5331
      %v5364 = vpack.c.bf16 %v5332, %v5332
      %v5365 = vpack.c.bf16 %v5333, %v5333
      %v5366 = vpack.c.bf16 %v5334, %v5334
      %v5367 = vpack.c.bf16 %v5335, %v5335
      %v5368 = vpack.c.bf16 %v5336, %v5336
      %v5369 = vpack.c.bf16 %v5337, %v5337
      %v5370 = vpack.c.bf16 %v5338, %v5338
      %v5371 = vpack.c.bf16 %v5339, %v5339
      %v5372 = vpack.c.bf16 %v5340, %v5340
      %v5373 = vpack.c.bf16 %v5341, %v5341
      %v5374 = vpack.c.bf16 %v5342, %v5342
      %v5375 = vpack.c.bf16 %v5343, %v5343
      %v5376 = vpack.c.bf16 %v5344, %v5344
      %v5377 = vpack.c.bf16 %v5345, %v5345
      %v5378 = vpack.c.bf16 %v5346, %v5346
      %v5379 = vpack.c.bf16 %v5347, %v5347
      %v5380 = vld [vmem:[%s341 + $0x2] sm:$0xff]
      %v5381 = vld [vmem:[%s341 + $0xa] sm:$0xff]
      %v5382 = vld [vmem:[%s341 + $0x1a] sm:$0xff]
      %v5383 = vld [vmem:[%s341 + $0x22] sm:$0xff]
      %v5384 = vld [vmem:[%s341 + $0x32] sm:$0xff]
      %v5385 = vld [vmem:[%s341 + $0x3a] sm:$0xff]
      %v5386 = vld [vmem:[%s341 + $0x4a] sm:$0xff]
      %v5387 = vld [vmem:[%s341 + $0x52] sm:$0xff]
      %v5388 = vld [vmem:[%s341 + $0x62] sm:$0xff]
      %v5389 = vld [vmem:[%s341 + $0x6a] sm:$0xff]
      %v5390 = vld [vmem:[%s341 + $0x7a] sm:$0xff]
      %v5391 = vld [vmem:[%s341 + $0x82] sm:$0xff]
      %v5392 = vld [vmem:[%s341 + $0x92] sm:$0xff]
      %v5393 = vld [vmem:[%s341 + $0x9a] sm:$0xff]
      %v5394 = vld [vmem:[%s341 + $0xaa] sm:$0xff]
      %v5395 = vld [vmem:[%s341 + $0xb2] sm:$0xff]
      %v5396 = vld [vmem:[%s341 + $0xc2] sm:$0xff]
      %v5397 = vld [vmem:[%s341 + $0xca] sm:$0xff]
      %v5398 = vld [vmem:[%s341 + $0xda] sm:$0xff]
      %v5399 = vld [vmem:[%s341 + $0xe2] sm:$0xff]
      %v5400 = vld [vmem:[%s341 + $0xf2] sm:$0xff]
      %v5401 = vld [vmem:[%s341 + $0xfa] sm:$0xff]
      %v5402 = vld [vmem:[%s341 + $0x10a] sm:$0xff]
      %v5403 = vld [vmem:[%s341 + $0x112] sm:$0xff]
      %v5404 = vld [vmem:[%s341 + $0x122] sm:$0xff]
      %v5405 = vld [vmem:[%s341 + $0x12a] sm:$0xff]
      %v5406 = vld [vmem:[%s341 + $0x13a] sm:$0xff]
      %v5407 = vld [vmem:[%s341 + $0x142] sm:$0xff]
      %v5408 = vld [vmem:[%s341 + $0x152] sm:$0xff]
      %v5409 = vld [vmem:[%s341 + $0x15a] sm:$0xff]
      %v5410 = vld [vmem:[%s341 + $0x16a] sm:$0xff]
      %v5411 = vld [vmem:[%s341 + $0x172] sm:$0xff]
      %v5412 = vpack.c.bf16 %v5380, %v5380
      %v5413 = vpack.c.bf16 %v5381, %v5381
      %v5414 = vpack.c.bf16 %v5382, %v5382
      %v5415 = vpack.c.bf16 %v5383, %v5383
      %v5416 = vpack.c.bf16 %v5384, %v5384
      %v5417 = vpack.c.bf16 %v5385, %v5385
      %v5418 = vpack.c.bf16 %v5386, %v5386
      %v5419 = vpack.c.bf16 %v5387, %v5387
      %v5420 = vpack.c.bf16 %v5388, %v5388
      %v5421 = vpack.c.bf16 %v5389, %v5389
      %v5422 = vpack.c.bf16 %v5390, %v5390
      %v5423 = vpack.c.bf16 %v5391, %v5391
      %v5424 = vpack.c.bf16 %v5392, %v5392
      %v5425 = vpack.c.bf16 %v5393, %v5393
      %v5426 = vpack.c.bf16 %v5394, %v5394
      %v5427 = vpack.c.bf16 %v5395, %v5395
      %v5428 = vpack.c.bf16 %v5396, %v5396
      %v5429 = vpack.c.bf16 %v5397, %v5397
      %v5430 = vpack.c.bf16 %v5398, %v5398
      %v5431 = vpack.c.bf16 %v5399, %v5399
      %v5432 = vpack.c.bf16 %v5400, %v5400
      %v5433 = vpack.c.bf16 %v5401, %v5401
      %v5434 = vpack.c.bf16 %v5402, %v5402
      %v5435 = vpack.c.bf16 %v5403, %v5403
      %v5436 = vpack.c.bf16 %v5404, %v5404
      %v5437 = vpack.c.bf16 %v5405, %v5405
      %v5438 = vpack.c.bf16 %v5406, %v5406
      %v5439 = vpack.c.bf16 %v5407, %v5407
      %v5440 = vpack.c.bf16 %v5408, %v5408
      %v5441 = vpack.c.bf16 %v5409, %v5409
      %v5442 = vpack.c.bf16 %v5410, %v5410
      %v5443 = vpack.c.bf16 %v5411, %v5411
      %v5444 = vld [vmem:[%s758] sm:$0xff]
      %v5445 = vld [vmem:[%s758 + $0x8] sm:$0xff]
      %v5446 = vld [vmem:[%s758 + $0x18] sm:$0xff]
      %v5447 = vld [vmem:[%s758 + $0x20] sm:$0xff]
      %v5448 = vld [vmem:[%s758 + $0x30] sm:$0xff]
      %v5449 = vld [vmem:[%s758 + $0x38] sm:$0xff]
      %v5450 = vld [vmem:[%s758 + $0x48] sm:$0xff]
      %v5451 = vld [vmem:[%s758 + $0x50] sm:$0xff]
      %v5452 = vld [vmem:[%s758 + $0x60] sm:$0xff]
      %v5453 = vld [vmem:[%s758 + $0x68] sm:$0xff]
      %v5454 = vld [vmem:[%s758 + $0x78] sm:$0xff]
      %v5455 = vld [vmem:[%s758 + $0x80] sm:$0xff]
      %v5456 = vld [vmem:[%s758 + $0x90] sm:$0xff]
      %v5457 = vld [vmem:[%s758 + $0x98] sm:$0xff]
      %v5458 = vld [vmem:[%s758 + $0xa8] sm:$0xff]
      %v5459 = vld [vmem:[%s758 + $0xb0] sm:$0xff]
      %v5460 = vld [vmem:[%s758 + $0xc0] sm:$0xff]
      %v5461 = vld [vmem:[%s758 + $0xc8] sm:$0xff]
      %v5462 = vld [vmem:[%s758 + $0xd8] sm:$0xff]
      %v5463 = vld [vmem:[%s758 + $0xe0] sm:$0xff]
      %v5464 = vld [vmem:[%s758 + $0xf0] sm:$0xff]
      %v5465 = vld [vmem:[%s758 + $0xf8] sm:$0xff]
      %v5466 = vld [vmem:[%s758 + $0x108] sm:$0xff]
      %v5467 = vld [vmem:[%s758 + $0x110] sm:$0xff]
      %v5468 = vld [vmem:[%s758 + $0x120] sm:$0xff]
      %v5469 = vld [vmem:[%s758 + $0x128] sm:$0xff]
      %v5470 = vld [vmem:[%s758 + $0x138] sm:$0xff]
      %v5471 = vld [vmem:[%s758 + $0x140] sm:$0xff]
      %v5472 = vld [vmem:[%s758 + $0x150] sm:$0xff]
      %v5473 = vld [vmem:[%s758 + $0x158] sm:$0xff]
      %v5474 = vld [vmem:[%s758 + $0x168] sm:$0xff]
      %v5475 = vld [vmem:[%s758 + $0x170] sm:$0xff]
      %v5476 = vpack.c.bf16 %v5444, %v5444
      %v5477 = vpack.c.bf16 %v5445, %v5445
      %v5478 = vpack.c.bf16 %v5446, %v5446
      %v5479 = vpack.c.bf16 %v5447, %v5447
      %v5480 = vpack.c.bf16 %v5448, %v5448
      %v5481 = vpack.c.bf16 %v5449, %v5449
      %v5482 = vpack.c.bf16 %v5450, %v5450
      %v5483 = vpack.c.bf16 %v5451, %v5451
      %v5484 = vpack.c.bf16 %v5452, %v5452
      %v5485 = vpack.c.bf16 %v5453, %v5453
      %v5486 = vpack.c.bf16 %v5454, %v5454
      %v5487 = vpack.c.bf16 %v5455, %v5455
      %v5488 = vpack.c.bf16 %v5456, %v5456
      %v5489 = vpack.c.bf16 %v5457, %v5457
      %v5490 = vpack.c.bf16 %v5458, %v5458
      %v5491 = vpack.c.bf16 %v5459, %v5459
      %v5492 = vpack.c.bf16 %v5460, %v5460
      %v5493 = vpack.c.bf16 %v5461, %v5461
      %v5494 = vpack.c.bf16 %v5462, %v5462
      %v5495 = vpack.c.bf16 %v5463, %v5463
      %v5496 = vpack.c.bf16 %v5464, %v5464
      %v5497 = vpack.c.bf16 %v5465, %v5465
      %v5498 = vpack.c.bf16 %v5466, %v5466
      %v5499 = vpack.c.bf16 %v5467, %v5467
      %v5500 = vpack.c.bf16 %v5468, %v5468
      %v5501 = vpack.c.bf16 %v5469, %v5469
      %v5502 = vpack.c.bf16 %v5470, %v5470
      %v5503 = vpack.c.bf16 %v5471, %v5471
      %v5504 = vpack.c.bf16 %v5472, %v5472
      %v5505 = vpack.c.bf16 %v5473, %v5473
      %v5506 = vpack.c.bf16 %v5474, %v5474
      %v5507 = vpack.c.bf16 %v5475, %v5475
      %v5508 = vld [vmem:[%s758 + $0x1] sm:$0xff]
      %v5509 = vld [vmem:[%s758 + $0x9] sm:$0xff]
      %v5510 = vld [vmem:[%s758 + $0x19] sm:$0xff]
      %v5511 = vld [vmem:[%s758 + $0x21] sm:$0xff]
      %v5512 = vld [vmem:[%s758 + $0x31] sm:$0xff]
      %v5513 = vld [vmem:[%s758 + $0x39] sm:$0xff]
      %v5514 = vld [vmem:[%s758 + $0x49] sm:$0xff]
      %v5515 = vld [vmem:[%s758 + $0x51] sm:$0xff]
      %v5516 = vld [vmem:[%s758 + $0x61] sm:$0xff]
      %v5517 = vld [vmem:[%s758 + $0x69] sm:$0xff]
      %v5518 = vld [vmem:[%s758 + $0x79] sm:$0xff]
      %v5519 = vld [vmem:[%s758 + $0x81] sm:$0xff]
      %v5520 = vld [vmem:[%s758 + $0x91] sm:$0xff]
      %v5521 = vld [vmem:[%s758 + $0x99] sm:$0xff]
      %v5522 = vld [vmem:[%s758 + $0xa9] sm:$0xff]
      %v5523 = vld [vmem:[%s758 + $0xb1] sm:$0xff]
      %v5524 = vld [vmem:[%s758 + $0xc1] sm:$0xff]
      %v5525 = vld [vmem:[%s758 + $0xc9] sm:$0xff]
      %v5526 = vld [vmem:[%s758 + $0xd9] sm:$0xff]
      %v5527 = vld [vmem:[%s758 + $0xe1] sm:$0xff]
      %v5528 = vld [vmem:[%s758 + $0xf1] sm:$0xff]
      %v5529 = vld [vmem:[%s758 + $0xf9] sm:$0xff]
      %v5530 = vld [vmem:[%s758 + $0x109] sm:$0xff]
      %v5531 = vld [vmem:[%s758 + $0x111] sm:$0xff]
      %v5532 = vld [vmem:[%s758 + $0x121] sm:$0xff]
      %v5533 = vld [vmem:[%s758 + $0x129] sm:$0xff]
      %v5534 = vld [vmem:[%s758 + $0x139] sm:$0xff]
      %v5535 = vld [vmem:[%s758 + $0x141] sm:$0xff]
      %v5536 = vld [vmem:[%s758 + $0x151] sm:$0xff]
      %v5537 = vld [vmem:[%s758 + $0x159] sm:$0xff]
      %v5538 = vld [vmem:[%s758 + $0x169] sm:$0xff]
      %v5539 = vld [vmem:[%s758 + $0x171] sm:$0xff]
      %v5540 = vpack.c.bf16 %v5508, %v5508
      %v5541 = vpack.c.bf16 %v5509, %v5509
      %v5542 = vpack.c.bf16 %v5510, %v5510
      %v5543 = vpack.c.bf16 %v5511, %v5511
      %v5544 = vpack.c.bf16 %v5512, %v5512
      %v5545 = vpack.c.bf16 %v5513, %v5513
      %v5546 = vpack.c.bf16 %v5514, %v5514
      %v5547 = vpack.c.bf16 %v5515, %v5515
      %v5548 = vpack.c.bf16 %v5516, %v5516
      %v5549 = vpack.c.bf16 %v5517, %v5517
      %v5550 = vpack.c.bf16 %v5518, %v5518
      %v5551 = vpack.c.bf16 %v5519, %v5519
      %v5552 = vpack.c.bf16 %v5520, %v5520
      %v5553 = vpack.c.bf16 %v5521, %v5521
      %v5554 = vpack.c.bf16 %v5522, %v5522
      %v5555 = vpack.c.bf16 %v5523, %v5523
      %v5556 = vpack.c.bf16 %v5524, %v5524
      %v5557 = vpack.c.bf16 %v5525, %v5525
      %v5558 = vpack.c.bf16 %v5526, %v5526
      %v5559 = vpack.c.bf16 %v5527, %v5527
      %v5560 = vpack.c.bf16 %v5528, %v5528
      %v5561 = vpack.c.bf16 %v5529, %v5529
      %v5562 = vpack.c.bf16 %v5530, %v5530
      %v5563 = vpack.c.bf16 %v5531, %v5531
      %v5564 = vpack.c.bf16 %v5532, %v5532
      %v5565 = vpack.c.bf16 %v5533, %v5533
      %v5566 = vpack.c.bf16 %v5534, %v5534
      %v5567 = vpack.c.bf16 %v5535, %v5535
      %v5568 = vpack.c.bf16 %v5536, %v5536
      %v5569 = vpack.c.bf16 %v5537, %v5537
      %v5570 = vpack.c.bf16 %v5538, %v5538
      %v5571 = vpack.c.bf16 %v5539, %v5539
      %v5572 = vld [vmem:[%s758 + $0x2] sm:$0xff]
      %v5573 = vld [vmem:[%s758 + $0xa] sm:$0xff]
      %v5574 = vld [vmem:[%s758 + $0x1a] sm:$0xff]
      %v5575 = vld [vmem:[%s758 + $0x22] sm:$0xff]
      %v5576 = vld [vmem:[%s758 + $0x32] sm:$0xff]
      %v5577 = vld [vmem:[%s758 + $0x3a] sm:$0xff]
      %v5578 = vld [vmem:[%s758 + $0x4a] sm:$0xff]
      %v5579 = vld [vmem:[%s758 + $0x52] sm:$0xff]
      %v5580 = vld [vmem:[%s758 + $0x62] sm:$0xff]
      %v5581 = vld [vmem:[%s758 + $0x6a] sm:$0xff]
      %v5582 = vld [vmem:[%s758 + $0x7a] sm:$0xff]
      %v5583 = vld [vmem:[%s758 + $0x82] sm:$0xff]
      %v5584 = vld [vmem:[%s758 + $0x92] sm:$0xff]
      %v5585 = vld [vmem:[%s758 + $0x9a] sm:$0xff]
      %v5586 = vld [vmem:[%s758 + $0xaa] sm:$0xff]
      %v5587 = vld [vmem:[%s758 + $0xb2] sm:$0xff]
      %v5588 = vld [vmem:[%s758 + $0xc2] sm:$0xff]
      %v5589 = vld [vmem:[%s758 + $0xca] sm:$0xff]
      %v5590 = vld [vmem:[%s758 + $0xda] sm:$0xff]
      %v5591 = vld [vmem:[%s758 + $0xe2] sm:$0xff]
      %v5592 = vld [vmem:[%s758 + $0xf2] sm:$0xff]
      %v5593 = vld [vmem:[%s758 + $0xfa] sm:$0xff]
      %v5594 = vld [vmem:[%s758 + $0x10a] sm:$0xff]
      %v5595 = vld [vmem:[%s758 + $0x112] sm:$0xff]
      %v5596 = vld [vmem:[%s758 + $0x122] sm:$0xff]
      %v5597 = vld [vmem:[%s758 + $0x12a] sm:$0xff]
      %v5598 = vld [vmem:[%s758 + $0x13a] sm:$0xff]
      %v5599 = vld [vmem:[%s758 + $0x142] sm:$0xff]
      %v5600 = vld [vmem:[%s758 + $0x152] sm:$0xff]
      %v5601 = vld [vmem:[%s758 + $0x15a] sm:$0xff]
      %v5602 = vld [vmem:[%s758 + $0x16a] sm:$0xff]
      %v5603 = vld [vmem:[%s758 + $0x172] sm:$0xff]
      %v5604 = vpack.c.bf16 %v5572, %v5572
      %v5605 = vpack.c.bf16 %v5573, %v5573
      %v5606 = vpack.c.bf16 %v5574, %v5574
      %v5607 = vpack.c.bf16 %v5575, %v5575
      %v5608 = vpack.c.bf16 %v5576, %v5576
      %v5609 = vpack.c.bf16 %v5577, %v5577
      %v5610 = vpack.c.bf16 %v5578, %v5578
      %v5611 = vpack.c.bf16 %v5579, %v5579
      %v5612 = vpack.c.bf16 %v5580, %v5580
      %v5613 = vpack.c.bf16 %v5581, %v5581
      %v5614 = vpack.c.bf16 %v5582, %v5582
      %v5615 = vpack.c.bf16 %v5583, %v5583
      %v5616 = vpack.c.bf16 %v5584, %v5584
      %v5617 = vpack.c.bf16 %v5585, %v5585
      %v5618 = vpack.c.bf16 %v5586, %v5586
      %v5619 = vpack.c.bf16 %v5587, %v5587
      %v5620 = vpack.c.bf16 %v5588, %v5588
      %v5621 = vpack.c.bf16 %v5589, %v5589
      %v5622 = vpack.c.bf16 %v5590, %v5590
      %v5623 = vpack.c.bf16 %v5591, %v5591
      %v5624 = vpack.c.bf16 %v5592, %v5592
      %v5625 = vpack.c.bf16 %v5593, %v5593
      %v5626 = vpack.c.bf16 %v5594, %v5594
      %v5627 = vpack.c.bf16 %v5595, %v5595
      %v5628 = vpack.c.bf16 %v5596, %v5596
      %v5629 = vpack.c.bf16 %v5597, %v5597
      %v5630 = vpack.c.bf16 %v5598, %v5598
      %v5631 = vpack.c.bf16 %v5599, %v5599
      %v5632 = vpack.c.bf16 %v5600, %v5600
      %v5633 = vpack.c.bf16 %v5601, %v5601
      %v5634 = vpack.c.bf16 %v5602, %v5602
      %v5635 = vpack.c.bf16 %v5603, %v5603
      %v5668 = vunpack.c.l.b16 %v5092
      %v5669 = vunpack.c.l.b16 %v5093
      %v5670 = vunpack.c.l.b16 %v5094
      %v5671 = vunpack.c.l.b16 %v5095
      %v5672 = vunpack.c.l.b16 %v5096
      %v5673 = vunpack.c.l.b16 %v5097
      %v5674 = vunpack.c.l.b16 %v5098
      %v5675 = vunpack.c.l.b16 %v5099
      %v5676 = vunpack.c.l.b16 %v5100
      %v5677 = vunpack.c.l.b16 %v5101
      %v5678 = vunpack.c.l.b16 %v5102
      %v5679 = vunpack.c.l.b16 %v5103
      %v5680 = vunpack.c.l.b16 %v5104
      %v5681 = vunpack.c.l.b16 %v5105
      %v5682 = vunpack.c.l.b16 %v5106
      %v5683 = vunpack.c.l.b16 %v5107
      %v5684 = vunpack.c.l.b16 %v5108
      %v5685 = vunpack.c.l.b16 %v5109
      %v5686 = vunpack.c.l.b16 %v5110
      %v5687 = vunpack.c.l.b16 %v5111
      %v5688 = vunpack.c.l.b16 %v5112
      %v5689 = vunpack.c.l.b16 %v5113
      %v5690 = vunpack.c.l.b16 %v5114
      %v5691 = vunpack.c.l.b16 %v5115
      %v5692 = vunpack.c.l.b16 %v5116
      %v5693 = vunpack.c.l.b16 %v5117
      %v5694 = vunpack.c.l.b16 %v5118
      %v5695 = vunpack.c.l.b16 %v5119
      %v5696 = vunpack.c.l.b16 %v5120
      %v5697 = vunpack.c.l.b16 %v5121
      %v5698 = vunpack.c.l.b16 %v5122
      %v5699 = vunpack.c.l.b16 %v5123
      %v5700 = vpack.c.b16 %v5669, %v5668
      %v5701 = vpack.c.b16 %v5671, %v5670
      %v5702 = vpack.c.b16 %v5673, %v5672
      %v5703 = vpack.c.b16 %v5675, %v5674
      %v5704 = vpack.c.b16 %v5677, %v5676
      %v5705 = vpack.c.b16 %v5679, %v5678
      %v5706 = vpack.c.b16 %v5681, %v5680
      %v5707 = vpack.c.b16 %v5683, %v5682
      %v5708 = vpack.c.b16 %v5685, %v5684
      %v5709 = vpack.c.b16 %v5687, %v5686
      %v5710 = vpack.c.b16 %v5689, %v5688
      %v5711 = vpack.c.b16 %v5691, %v5690
      %v5712 = vpack.c.b16 %v5693, %v5692
      %v5713 = vpack.c.b16 %v5695, %v5694
      %v5714 = vpack.c.b16 %v5697, %v5696
      %v5715 = vpack.c.b16 %v5699, %v5698
      %v5748 = vunpack.c.l.b16 %v5156
      %v5749 = vunpack.c.l.b16 %v5157
      %v5750 = vunpack.c.l.b16 %v5158
      %v5751 = vunpack.c.l.b16 %v5159
      %v5752 = vunpack.c.l.b16 %v5160
      %v5753 = vunpack.c.l.b16 %v5161
      %v5754 = vunpack.c.l.b16 %v5162
      %v5755 = vunpack.c.l.b16 %v5163
      %v5756 = vunpack.c.l.b16 %v5164
      %v5757 = vunpack.c.l.b16 %v5165
      %v5758 = vunpack.c.l.b16 %v5166
      %v5759 = vunpack.c.l.b16 %v5167
      %v5760 = vunpack.c.l.b16 %v5168
      %v5761 = vunpack.c.l.b16 %v5169
      %v5762 = vunpack.c.l.b16 %v5170
      %v5763 = vunpack.c.l.b16 %v5171
      %v5764 = vunpack.c.l.b16 %v5172
      %v5765 = vunpack.c.l.b16 %v5173
      %v5766 = vunpack.c.l.b16 %v5174
      %v5767 = vunpack.c.l.b16 %v5175
      %v5768 = vunpack.c.l.b16 %v5176
      %v5769 = vunpack.c.l.b16 %v5177
      %v5770 = vunpack.c.l.b16 %v5178
      %v5771 = vunpack.c.l.b16 %v5179
      %v5772 = vunpack.c.l.b16 %v5180
      %v5773 = vunpack.c.l.b16 %v5181
      %v5774 = vunpack.c.l.b16 %v5182
      %v5775 = vunpack.c.l.b16 %v5183
      %v5776 = vunpack.c.l.b16 %v5184
      %v5777 = vunpack.c.l.b16 %v5185
      %v5778 = vunpack.c.l.b16 %v5186
      %v5779 = vunpack.c.l.b16 %v5187
      %v5780 = vpack.c.b16 %v5749, %v5748
      %v5781 = vpack.c.b16 %v5751, %v5750
      %v5782 = vpack.c.b16 %v5753, %v5752
      %v5783 = vpack.c.b16 %v5755, %v5754
      %v5784 = vpack.c.b16 %v5757, %v5756
      %v5785 = vpack.c.b16 %v5759, %v5758
      %v5786 = vpack.c.b16 %v5761, %v5760
      %v5787 = vpack.c.b16 %v5763, %v5762
      %v5788 = vpack.c.b16 %v5765, %v5764
      %v5789 = vpack.c.b16 %v5767, %v5766
      %v5790 = vpack.c.b16 %v5769, %v5768
      %v5791 = vpack.c.b16 %v5771, %v5770
      %v5792 = vpack.c.b16 %v5773, %v5772
      %v5793 = vpack.c.b16 %v5775, %v5774
      %v5794 = vpack.c.b16 %v5777, %v5776
      %v5795 = vpack.c.b16 %v5779, %v5778
      %5796 = vrot.lane.b32.xlu0 %v5780, 32
      %v5797 = vpop.permute.xlu0 %5796
      %5798 = vrot.lane.b32.xlu0 %v5781, 32
      %v5799 = vpop.permute.xlu0 %5798
      %5800 = vrot.lane.b32.xlu0 %v5782, 32
      %v5801 = vpop.permute.xlu0 %5800
      %5802 = vrot.lane.b32.xlu0 %v5783, 32
      %v5803 = vpop.permute.xlu0 %5802
      %5804 = vrot.lane.b32.xlu0 %v5784, 32
      %v5805 = vpop.permute.xlu0 %5804
      %5806 = vrot.lane.b32.xlu0 %v5785, 32
      %v5807 = vpop.permute.xlu0 %5806
      %5808 = vrot.lane.b32.xlu0 %v5786, 32
      %v5809 = vpop.permute.xlu0 %5808
      %5810 = vrot.lane.b32.xlu0 %v5787, 32
      %v5811 = vpop.permute.xlu0 %5810
      %5812 = vrot.lane.b32.xlu0 %v5788, 32
      %v5813 = vpop.permute.xlu0 %5812
      %5814 = vrot.lane.b32.xlu0 %v5789, 32
      %v5815 = vpop.permute.xlu0 %5814
      %5816 = vrot.lane.b32.xlu0 %v5790, 32
      %v5817 = vpop.permute.xlu0 %5816
      %5818 = vrot.lane.b32.xlu0 %v5791, 32
      %v5819 = vpop.permute.xlu0 %5818
      %5820 = vrot.lane.b32.xlu0 %v5792, 32
      %v5821 = vpop.permute.xlu0 %5820
      %5822 = vrot.lane.b32.xlu0 %v5793, 32
      %v5823 = vpop.permute.xlu0 %5822
      %5824 = vrot.lane.b32.xlu0 %v5794, 32
      %v5825 = vpop.permute.xlu0 %5824
      %5826 = vrot.lane.b32.xlu0 %v5795, 32
      %v5827 = vpop.permute.xlu0 %5826
      %v5860 = vunpack.c.l.b16 %v5220
      %v5861 = vunpack.c.l.b16 %v5221
      %v5862 = vunpack.c.l.b16 %v5222
      %v5863 = vunpack.c.l.b16 %v5223
      %v5864 = vunpack.c.l.b16 %v5224
      %v5865 = vunpack.c.l.b16 %v5225
      %v5866 = vunpack.c.l.b16 %v5226
      %v5867 = vunpack.c.l.b16 %v5227
      %v5868 = vunpack.c.l.b16 %v5228
      %v5869 = vunpack.c.l.b16 %v5229
      %v5870 = vunpack.c.l.b16 %v5230
      %v5871 = vunpack.c.l.b16 %v5231
      %v5872 = vunpack.c.l.b16 %v5232
      %v5873 = vunpack.c.l.b16 %v5233
      %v5874 = vunpack.c.l.b16 %v5234
      %v5875 = vunpack.c.l.b16 %v5235
      %v5876 = vunpack.c.l.b16 %v5236
      %v5877 = vunpack.c.l.b16 %v5237
      %v5878 = vunpack.c.l.b16 %v5238
      %v5879 = vunpack.c.l.b16 %v5239
      %v5880 = vunpack.c.l.b16 %v5240
      %v5881 = vunpack.c.l.b16 %v5241
      %v5882 = vunpack.c.l.b16 %v5242
      %v5883 = vunpack.c.l.b16 %v5243
      %v5884 = vunpack.c.l.b16 %v5244
      %v5885 = vunpack.c.l.b16 %v5245
      %v5886 = vunpack.c.l.b16 %v5246
      %v5887 = vunpack.c.l.b16 %v5247
      %v5888 = vunpack.c.l.b16 %v5248
      %v5889 = vunpack.c.l.b16 %v5249
      %v5890 = vunpack.c.l.b16 %v5250
      %v5891 = vunpack.c.l.b16 %v5251
      %v5892 = vpack.c.b16 %v5861, %v5860
      %v5893 = vpack.c.b16 %v5863, %v5862
      %v5894 = vpack.c.b16 %v5865, %v5864
      %v5895 = vpack.c.b16 %v5867, %v5866
      %v5896 = vpack.c.b16 %v5869, %v5868
      %v5897 = vpack.c.b16 %v5871, %v5870
      %v5898 = vpack.c.b16 %v5873, %v5872
      %v5899 = vpack.c.b16 %v5875, %v5874
      %v5900 = vpack.c.b16 %v5877, %v5876
      %v5901 = vpack.c.b16 %v5879, %v5878
      %v5902 = vpack.c.b16 %v5881, %v5880
      %v5903 = vpack.c.b16 %v5883, %v5882
      %v5904 = vpack.c.b16 %v5885, %v5884
      %v5905 = vpack.c.b16 %v5887, %v5886
      %v5906 = vpack.c.b16 %v5889, %v5888
      %v5907 = vpack.c.b16 %v5891, %v5890
      %5908 = vrot.lane.b32.xlu0 %v5892, 64
      %v5909 = vpop.permute.xlu0 %5908
      %5910 = vrot.lane.b32.xlu0 %v5893, 64
      %v5911 = vpop.permute.xlu0 %5910
      %5912 = vrot.lane.b32.xlu0 %v5894, 64
      %v5913 = vpop.permute.xlu0 %5912
      %5914 = vrot.lane.b32.xlu0 %v5895, 64
      %v5915 = vpop.permute.xlu0 %5914
      %5916 = vrot.lane.b32.xlu0 %v5896, 64
      %v5917 = vpop.permute.xlu0 %5916
      %5918 = vrot.lane.b32.xlu0 %v5897, 64
      %v5919 = vpop.permute.xlu0 %5918
      %5920 = vrot.lane.b32.xlu0 %v5898, 64
      %v5921 = vpop.permute.xlu0 %5920
      %5922 = vrot.lane.b32.xlu0 %v5899, 64
      %v5923 = vpop.permute.xlu0 %5922
      %5924 = vrot.lane.b32.xlu0 %v5900, 64
      %v5925 = vpop.permute.xlu0 %5924
      %5926 = vrot.lane.b32.xlu0 %v5901, 64
      %v5927 = vpop.permute.xlu0 %5926
      %5928 = vrot.lane.b32.xlu0 %v5902, 64
      %v5929 = vpop.permute.xlu0 %5928
      %5930 = vrot.lane.b32.xlu0 %v5903, 64
      %v5931 = vpop.permute.xlu0 %5930
      %5932 = vrot.lane.b32.xlu0 %v5904, 64
      %v5933 = vpop.permute.xlu0 %5932
      %5934 = vrot.lane.b32.xlu0 %v5905, 64
      %v5935 = vpop.permute.xlu0 %5934
      %5936 = vrot.lane.b32.xlu0 %v5906, 64
      %v5937 = vpop.permute.xlu0 %5936
      %5938 = vrot.lane.b32.xlu0 %v5907, 64
      %v5939 = vpop.permute.xlu0 %5938
      %v5972 = vunpack.c.l.b16 %v5284
      %v5973 = vunpack.c.l.b16 %v5285
      %v5974 = vunpack.c.l.b16 %v5286
      %v5975 = vunpack.c.l.b16 %v5287
      %v5976 = vunpack.c.l.b16 %v5288
      %v5977 = vunpack.c.l.b16 %v5289
      %v5978 = vunpack.c.l.b16 %v5290
      %v5979 = vunpack.c.l.b16 %v5291
      %v5980 = vunpack.c.l.b16 %v5292
      %v5981 = vunpack.c.l.b16 %v5293
      %v5982 = vunpack.c.l.b16 %v5294
      %v5983 = vunpack.c.l.b16 %v5295
      %v5984 = vunpack.c.l.b16 %v5296
      %v5985 = vunpack.c.l.b16 %v5297
      %v5986 = vunpack.c.l.b16 %v5298
      %v5987 = vunpack.c.l.b16 %v5299
      %v5988 = vunpack.c.l.b16 %v5300
      %v5989 = vunpack.c.l.b16 %v5301
      %v5990 = vunpack.c.l.b16 %v5302
      %v5991 = vunpack.c.l.b16 %v5303
      %v5992 = vunpack.c.l.b16 %v5304
      %v5993 = vunpack.c.l.b16 %v5305
      %v5994 = vunpack.c.l.b16 %v5306
      %v5995 = vunpack.c.l.b16 %v5307
      %v5996 = vunpack.c.l.b16 %v5308
      %v5997 = vunpack.c.l.b16 %v5309
      %v5998 = vunpack.c.l.b16 %v5310
      %v5999 = vunpack.c.l.b16 %v5311
      %v6000 = vunpack.c.l.b16 %v5312
      %v6001 = vunpack.c.l.b16 %v5313
      %v6002 = vunpack.c.l.b16 %v5314
      %v6003 = vunpack.c.l.b16 %v5315
      %v6004 = vpack.c.b16 %v5973, %v5972
      %v6005 = vpack.c.b16 %v5975, %v5974
      %v6006 = vpack.c.b16 %v5977, %v5976
      %v6007 = vpack.c.b16 %v5979, %v5978
      %v6008 = vpack.c.b16 %v5981, %v5980
      %v6009 = vpack.c.b16 %v5983, %v5982
      %v6010 = vpack.c.b16 %v5985, %v5984
      %v6011 = vpack.c.b16 %v5987, %v5986
      %v6012 = vpack.c.b16 %v5989, %v5988
      %v6013 = vpack.c.b16 %v5991, %v5990
      %v6014 = vpack.c.b16 %v5993, %v5992
      %v6015 = vpack.c.b16 %v5995, %v5994
      %v6016 = vpack.c.b16 %v5997, %v5996
      %v6017 = vpack.c.b16 %v5999, %v5998
      %v6018 = vpack.c.b16 %v6001, %v6000
      %v6019 = vpack.c.b16 %v6003, %v6002
      %6020 = vrot.lane.b32.xlu0 %v6004, 96
      %v6021 = vpop.permute.xlu0 %6020
      %6022 = vrot.lane.b32.xlu0 %v6005, 96
      %v6023 = vpop.permute.xlu0 %6022
      %6024 = vrot.lane.b32.xlu0 %v6006, 96
      %v6025 = vpop.permute.xlu0 %6024
      %6026 = vrot.lane.b32.xlu0 %v6007, 96
      %v6027 = vpop.permute.xlu0 %6026
      %6028 = vrot.lane.b32.xlu0 %v6008, 96
      %v6029 = vpop.permute.xlu0 %6028
      %6030 = vrot.lane.b32.xlu0 %v6009, 96
      %v6031 = vpop.permute.xlu0 %6030
      %6032 = vrot.lane.b32.xlu0 %v6010, 96
      %v6033 = vpop.permute.xlu0 %6032
      %6034 = vrot.lane.b32.xlu0 %v6011, 96
      %v6035 = vpop.permute.xlu0 %6034
      %6036 = vrot.lane.b32.xlu0 %v6012, 96
      %v6037 = vpop.permute.xlu0 %6036
      %6038 = vrot.lane.b32.xlu0 %v6013, 96
      %v6039 = vpop.permute.xlu0 %6038
      %6040 = vrot.lane.b32.xlu0 %v6014, 96
      %v6041 = vpop.permute.xlu0 %6040
      %6042 = vrot.lane.b32.xlu0 %v6015, 96
      %v6043 = vpop.permute.xlu0 %6042
      %6044 = vrot.lane.b32.xlu0 %v6016, 96
      %v6045 = vpop.permute.xlu0 %6044
      %6046 = vrot.lane.b32.xlu0 %v6017, 96
      %v6047 = vpop.permute.xlu0 %6046
      %6048 = vrot.lane.b32.xlu0 %v6018, 96
      %v6049 = vpop.permute.xlu0 %6048
      %6050 = vrot.lane.b32.xlu0 %v6019, 96
      %v6051 = vpop.permute.xlu0 %6050
      %v6084 = vunpack.c.l.b16 %v5348
      %v6085 = vunpack.c.l.b16 %v5349
      %v6086 = vunpack.c.l.b16 %v5350
      %v6087 = vunpack.c.l.b16 %v5351
      %v6088 = vunpack.c.l.b16 %v5352
      %v6089 = vunpack.c.l.b16 %v5353
      %v6090 = vunpack.c.l.b16 %v5354
      %v6091 = vunpack.c.l.b16 %v5355
      %v6092 = vunpack.c.l.b16 %v5356
      %v6093 = vunpack.c.l.b16 %v5357
      %v6094 = vunpack.c.l.b16 %v5358
      %v6095 = vunpack.c.l.b16 %v5359
      %v6096 = vunpack.c.l.b16 %v5360
      %v6097 = vunpack.c.l.b16 %v5361
      %v6098 = vunpack.c.l.b16 %v5362
      %v6099 = vunpack.c.l.b16 %v5363
      %v6100 = vunpack.c.l.b16 %v5364
      %v6101 = vunpack.c.l.b16 %v5365
      %v6102 = vunpack.c.l.b16 %v5366
      %v6103 = vunpack.c.l.b16 %v5367
      %v6104 = vunpack.c.l.b16 %v5368
      %v6105 = vunpack.c.l.b16 %v5369
      %v6106 = vunpack.c.l.b16 %v5370
      %v6107 = vunpack.c.l.b16 %v5371
      %v6108 = vunpack.c.l.b16 %v5372
      %v6109 = vunpack.c.l.b16 %v5373
      %v6110 = vunpack.c.l.b16 %v5374
      %v6111 = vunpack.c.l.b16 %v5375
      %v6112 = vunpack.c.l.b16 %v5376
      %v6113 = vunpack.c.l.b16 %v5377
      %v6114 = vunpack.c.l.b16 %v5378
      %v6115 = vunpack.c.l.b16 %v5379
      %v6116 = vpack.c.b16 %v6085, %v6084
      %v6117 = vpack.c.b16 %v6087, %v6086
      %v6118 = vpack.c.b16 %v6089, %v6088
      %v6119 = vpack.c.b16 %v6091, %v6090
      %v6120 = vpack.c.b16 %v6093, %v6092
      %v6121 = vpack.c.b16 %v6095, %v6094
      %v6122 = vpack.c.b16 %v6097, %v6096
      %v6123 = vpack.c.b16 %v6099, %v6098
      %v6124 = vpack.c.b16 %v6101, %v6100
      %v6125 = vpack.c.b16 %v6103, %v6102
      %v6126 = vpack.c.b16 %v6105, %v6104
      %v6127 = vpack.c.b16 %v6107, %v6106
      %v6128 = vpack.c.b16 %v6109, %v6108
      %v6129 = vpack.c.b16 %v6111, %v6110
      %v6130 = vpack.c.b16 %v6113, %v6112
      %v6131 = vpack.c.b16 %v6115, %v6114
      %v6164 = vunpack.c.l.b16 %v5412
      %v6165 = vunpack.c.l.b16 %v5413
      %v6166 = vunpack.c.l.b16 %v5414
      %v6167 = vunpack.c.l.b16 %v5415
      %v6168 = vunpack.c.l.b16 %v5416
      %v6169 = vunpack.c.l.b16 %v5417
      %v6170 = vunpack.c.l.b16 %v5418
      %v6171 = vunpack.c.l.b16 %v5419
      %v6172 = vunpack.c.l.b16 %v5420
      %v6173 = vunpack.c.l.b16 %v5421
      %v6174 = vunpack.c.l.b16 %v5422
      %v6175 = vunpack.c.l.b16 %v5423
      %v6176 = vunpack.c.l.b16 %v5424
      %v6177 = vunpack.c.l.b16 %v5425
      %v6178 = vunpack.c.l.b16 %v5426
      %v6179 = vunpack.c.l.b16 %v5427
      %v6180 = vunpack.c.l.b16 %v5428
      %v6181 = vunpack.c.l.b16 %v5429
      %v6182 = vunpack.c.l.b16 %v5430
      %v6183 = vunpack.c.l.b16 %v5431
      %v6184 = vunpack.c.l.b16 %v5432
      %v6185 = vunpack.c.l.b16 %v5433
      %v6186 = vunpack.c.l.b16 %v5434
      %v6187 = vunpack.c.l.b16 %v5435
      %v6188 = vunpack.c.l.b16 %v5436
      %v6189 = vunpack.c.l.b16 %v5437
      %v6190 = vunpack.c.l.b16 %v5438
      %v6191 = vunpack.c.l.b16 %v5439
      %v6192 = vunpack.c.l.b16 %v5440
      %v6193 = vunpack.c.l.b16 %v5441
      %v6194 = vunpack.c.l.b16 %v5442
      %v6195 = vunpack.c.l.b16 %v5443
      %v6196 = vpack.c.b16 %v6165, %v6164
      %v6197 = vpack.c.b16 %v6167, %v6166
      %v6198 = vpack.c.b16 %v6169, %v6168
      %v6199 = vpack.c.b16 %v6171, %v6170
      %v6200 = vpack.c.b16 %v6173, %v6172
      %v6201 = vpack.c.b16 %v6175, %v6174
      %v6202 = vpack.c.b16 %v6177, %v6176
      %v6203 = vpack.c.b16 %v6179, %v6178
      %v6204 = vpack.c.b16 %v6181, %v6180
      %v6205 = vpack.c.b16 %v6183, %v6182
      %v6206 = vpack.c.b16 %v6185, %v6184
      %v6207 = vpack.c.b16 %v6187, %v6186
      %v6208 = vpack.c.b16 %v6189, %v6188
      %v6209 = vpack.c.b16 %v6191, %v6190
      %v6210 = vpack.c.b16 %v6193, %v6192
      %v6211 = vpack.c.b16 %v6195, %v6194
      %6212 = vrot.lane.b32.xlu0 %v6196, 32
      %v6213 = vpop.permute.xlu0 %6212
      %6214 = vrot.lane.b32.xlu0 %v6197, 32
      %v6215 = vpop.permute.xlu0 %6214
      %6216 = vrot.lane.b32.xlu0 %v6198, 32
      %v6217 = vpop.permute.xlu0 %6216
      %6218 = vrot.lane.b32.xlu0 %v6199, 32
      %v6219 = vpop.permute.xlu0 %6218
      %6220 = vrot.lane.b32.xlu0 %v6200, 32
      %v6221 = vpop.permute.xlu0 %6220
      %6222 = vrot.lane.b32.xlu0 %v6201, 32
      %v6223 = vpop.permute.xlu0 %6222
      %6224 = vrot.lane.b32.xlu0 %v6202, 32
      %v6225 = vpop.permute.xlu0 %6224
      %6226 = vrot.lane.b32.xlu0 %v6203, 32
      %v6227 = vpop.permute.xlu0 %6226
      %6228 = vrot.lane.b32.xlu0 %v6204, 32
      %v6229 = vpop.permute.xlu0 %6228
      %6230 = vrot.lane.b32.xlu0 %v6205, 32
      %v6231 = vpop.permute.xlu0 %6230
      %6232 = vrot.lane.b32.xlu0 %v6206, 32
      %v6233 = vpop.permute.xlu0 %6232
      %6234 = vrot.lane.b32.xlu0 %v6207, 32
      %v6235 = vpop.permute.xlu0 %6234
      %6236 = vrot.lane.b32.xlu0 %v6208, 32
      %v6237 = vpop.permute.xlu0 %6236
      %6238 = vrot.lane.b32.xlu0 %v6209, 32
      %v6239 = vpop.permute.xlu0 %6238
      %6240 = vrot.lane.b32.xlu0 %v6210, 32
      %v6241 = vpop.permute.xlu0 %6240
      %6242 = vrot.lane.b32.xlu0 %v6211, 32
      %v6243 = vpop.permute.xlu0 %6242
      %v6276 = vunpack.c.l.b16 %v5476
      %v6277 = vunpack.c.l.b16 %v5477
      %v6278 = vunpack.c.l.b16 %v5478
      %v6279 = vunpack.c.l.b16 %v5479
      %v6280 = vunpack.c.l.b16 %v5480
      %v6281 = vunpack.c.l.b16 %v5481
      %v6282 = vunpack.c.l.b16 %v5482
      %v6283 = vunpack.c.l.b16 %v5483
      %v6284 = vunpack.c.l.b16 %v5484
      %v6285 = vunpack.c.l.b16 %v5485
      %v6286 = vunpack.c.l.b16 %v5486
      %v6287 = vunpack.c.l.b16 %v5487
      %v6288 = vunpack.c.l.b16 %v5488
      %v6289 = vunpack.c.l.b16 %v5489
      %v6290 = vunpack.c.l.b16 %v5490
      %v6291 = vunpack.c.l.b16 %v5491
      %v6292 = vunpack.c.l.b16 %v5492
      %v6293 = vunpack.c.l.b16 %v5493
      %v6294 = vunpack.c.l.b16 %v5494
      %v6295 = vunpack.c.l.b16 %v5495
      %v6296 = vunpack.c.l.b16 %v5496
      %v6297 = vunpack.c.l.b16 %v5497
      %v6298 = vunpack.c.l.b16 %v5498
      %v6299 = vunpack.c.l.b16 %v5499
      %v6300 = vunpack.c.l.b16 %v5500
      %v6301 = vunpack.c.l.b16 %v5501
      %v6302 = vunpack.c.l.b16 %v5502
      %v6303 = vunpack.c.l.b16 %v5503
      %v6304 = vunpack.c.l.b16 %v5504
      %v6305 = vunpack.c.l.b16 %v5505
      %v6306 = vunpack.c.l.b16 %v5506
      %v6307 = vunpack.c.l.b16 %v5507
      %v6308 = vpack.c.b16 %v6277, %v6276
      %v6309 = vpack.c.b16 %v6279, %v6278
      %v6310 = vpack.c.b16 %v6281, %v6280
      %v6311 = vpack.c.b16 %v6283, %v6282
      %v6312 = vpack.c.b16 %v6285, %v6284
      %v6313 = vpack.c.b16 %v6287, %v6286
      %v6314 = vpack.c.b16 %v6289, %v6288
      %v6315 = vpack.c.b16 %v6291, %v6290
      %v6316 = vpack.c.b16 %v6293, %v6292
      %v6317 = vpack.c.b16 %v6295, %v6294
      %v6318 = vpack.c.b16 %v6297, %v6296
      %v6319 = vpack.c.b16 %v6299, %v6298
      %v6320 = vpack.c.b16 %v6301, %v6300
      %v6321 = vpack.c.b16 %v6303, %v6302
      %v6322 = vpack.c.b16 %v6305, %v6304
      %v6323 = vpack.c.b16 %v6307, %v6306
      %6324 = vrot.lane.b32.xlu0 %v6308, 64
      %v6325 = vpop.permute.xlu0 %6324
      %6326 = vrot.lane.b32.xlu0 %v6309, 64
      %v6327 = vpop.permute.xlu0 %6326
      %6328 = vrot.lane.b32.xlu0 %v6310, 64
      %v6329 = vpop.permute.xlu0 %6328
      %6330 = vrot.lane.b32.xlu0 %v6311, 64
      %v6331 = vpop.permute.xlu0 %6330
      %6332 = vrot.lane.b32.xlu0 %v6312, 64
      %v6333 = vpop.permute.xlu0 %6332
      %6334 = vrot.lane.b32.xlu0 %v6313, 64
      %v6335 = vpop.permute.xlu0 %6334
      %6336 = vrot.lane.b32.xlu0 %v6314, 64
      %v6337 = vpop.permute.xlu0 %6336
      %6338 = vrot.lane.b32.xlu0 %v6315, 64
      %v6339 = vpop.permute.xlu0 %6338
      %6340 = vrot.lane.b32.xlu0 %v6316, 64
      %v6341 = vpop.permute.xlu0 %6340
      %6342 = vrot.lane.b32.xlu0 %v6317, 64
      %v6343 = vpop.permute.xlu0 %6342
      %6344 = vrot.lane.b32.xlu0 %v6318, 64
      %v6345 = vpop.permute.xlu0 %6344
      %6346 = vrot.lane.b32.xlu0 %v6319, 64
      %v6347 = vpop.permute.xlu0 %6346
      %6348 = vrot.lane.b32.xlu0 %v6320, 64
      %v6349 = vpop.permute.xlu0 %6348
      %6350 = vrot.lane.b32.xlu0 %v6321, 64
      %v6351 = vpop.permute.xlu0 %6350
      %6352 = vrot.lane.b32.xlu0 %v6322, 64
      %v6353 = vpop.permute.xlu0 %6352
      %6354 = vrot.lane.b32.xlu0 %v6323, 64
      %v6355 = vpop.permute.xlu0 %6354
      %v6388 = vunpack.c.l.b16 %v5540
      %v6389 = vunpack.c.l.b16 %v5541
      %v6390 = vunpack.c.l.b16 %v5542
      %v6391 = vunpack.c.l.b16 %v5543
      %v6392 = vunpack.c.l.b16 %v5544
      %v6393 = vunpack.c.l.b16 %v5545
      %v6394 = vunpack.c.l.b16 %v5546
      %v6395 = vunpack.c.l.b16 %v5547
      %v6396 = vunpack.c.l.b16 %v5548
      %v6397 = vunpack.c.l.b16 %v5549
      %v6398 = vunpack.c.l.b16 %v5550
      %v6399 = vunpack.c.l.b16 %v5551
      %v6400 = vunpack.c.l.b16 %v5552
      %v6401 = vunpack.c.l.b16 %v5553
      %v6402 = vunpack.c.l.b16 %v5554
      %v6403 = vunpack.c.l.b16 %v5555
      %v6404 = vunpack.c.l.b16 %v5556
      %v6405 = vunpack.c.l.b16 %v5557
      %v6406 = vunpack.c.l.b16 %v5558
      %v6407 = vunpack.c.l.b16 %v5559
      %v6408 = vunpack.c.l.b16 %v5560
      %v6409 = vunpack.c.l.b16 %v5561
      %v6410 = vunpack.c.l.b16 %v5562
      %v6411 = vunpack.c.l.b16 %v5563
      %v6412 = vunpack.c.l.b16 %v5564
      %v6413 = vunpack.c.l.b16 %v5565
      %v6414 = vunpack.c.l.b16 %v5566
      %v6415 = vunpack.c.l.b16 %v5567
      %v6416 = vunpack.c.l.b16 %v5568
      %v6417 = vunpack.c.l.b16 %v5569
      %v6418 = vunpack.c.l.b16 %v5570
      %v6419 = vunpack.c.l.b16 %v5571
      %v6420 = vpack.c.b16 %v6389, %v6388
      %v6421 = vpack.c.b16 %v6391, %v6390
      %v6422 = vpack.c.b16 %v6393, %v6392
      %v6423 = vpack.c.b16 %v6395, %v6394
      %v6424 = vpack.c.b16 %v6397, %v6396
      %v6425 = vpack.c.b16 %v6399, %v6398
      %v6426 = vpack.c.b16 %v6401, %v6400
      %v6427 = vpack.c.b16 %v6403, %v6402
      %v6428 = vpack.c.b16 %v6405, %v6404
      %v6429 = vpack.c.b16 %v6407, %v6406
      %v6430 = vpack.c.b16 %v6409, %v6408
      %v6431 = vpack.c.b16 %v6411, %v6410
      %v6432 = vpack.c.b16 %v6413, %v6412
      %v6433 = vpack.c.b16 %v6415, %v6414
      %v6434 = vpack.c.b16 %v6417, %v6416
      %v6435 = vpack.c.b16 %v6419, %v6418
      %6436 = vrot.lane.b32.xlu0 %v6420, 96
      %v6437 = vpop.permute.xlu0 %6436
      %6438 = vrot.lane.b32.xlu0 %v6421, 96
      %v6439 = vpop.permute.xlu0 %6438
      %6440 = vrot.lane.b32.xlu0 %v6422, 96
      %v6441 = vpop.permute.xlu0 %6440
      %6442 = vrot.lane.b32.xlu0 %v6423, 96
      %v6443 = vpop.permute.xlu0 %6442
      %6444 = vrot.lane.b32.xlu0 %v6424, 96
      %v6445 = vpop.permute.xlu0 %6444
      %6446 = vrot.lane.b32.xlu0 %v6425, 96
      %v6447 = vpop.permute.xlu0 %6446
      %6448 = vrot.lane.b32.xlu0 %v6426, 96
      %v6449 = vpop.permute.xlu0 %6448
      %6450 = vrot.lane.b32.xlu0 %v6427, 96
      %v6451 = vpop.permute.xlu0 %6450
      %6452 = vrot.lane.b32.xlu0 %v6428, 96
      %v6453 = vpop.permute.xlu0 %6452
      %6454 = vrot.lane.b32.xlu0 %v6429, 96
      %v6455 = vpop.permute.xlu0 %6454
      %6456 = vrot.lane.b32.xlu0 %v6430, 96
      %v6457 = vpop.permute.xlu0 %6456
      %6458 = vrot.lane.b32.xlu0 %v6431, 96
      %v6459 = vpop.permute.xlu0 %6458
      %6460 = vrot.lane.b32.xlu0 %v6432, 96
      %v6461 = vpop.permute.xlu0 %6460
      %6462 = vrot.lane.b32.xlu0 %v6433, 96
      %v6463 = vpop.permute.xlu0 %6462
      %6464 = vrot.lane.b32.xlu0 %v6434, 96
      %v6465 = vpop.permute.xlu0 %6464
      %6466 = vrot.lane.b32.xlu0 %v6435, 96
      %v6467 = vpop.permute.xlu0 %6466
      %v6500 = vunpack.c.l.b16 %v5604
      %v6501 = vunpack.c.l.b16 %v5605
      %v6502 = vunpack.c.l.b16 %v5606
      %v6503 = vunpack.c.l.b16 %v5607
      %v6504 = vunpack.c.l.b16 %v5608
      %v6505 = vunpack.c.l.b16 %v5609
      %v6506 = vunpack.c.l.b16 %v5610
      %v6507 = vunpack.c.l.b16 %v5611
      %v6508 = vunpack.c.l.b16 %v5612
      %v6509 = vunpack.c.l.b16 %v5613
      %v6510 = vunpack.c.l.b16 %v5614
      %v6511 = vunpack.c.l.b16 %v5615
      %v6512 = vunpack.c.l.b16 %v5616
      %v6513 = vunpack.c.l.b16 %v5617
      %v6514 = vunpack.c.l.b16 %v5618
      %v6515 = vunpack.c.l.b16 %v5619
      %v6516 = vunpack.c.l.b16 %v5620
      %v6517 = vunpack.c.l.b16 %v5621
      %v6518 = vunpack.c.l.b16 %v5622
      %v6519 = vunpack.c.l.b16 %v5623
      %v6520 = vunpack.c.l.b16 %v5624
      %v6521 = vunpack.c.l.b16 %v5625
      %v6522 = vunpack.c.l.b16 %v5626
      %v6523 = vunpack.c.l.b16 %v5627
      %v6524 = vunpack.c.l.b16 %v5628
      %v6525 = vunpack.c.l.b16 %v5629
      %v6526 = vunpack.c.l.b16 %v5630
      %v6527 = vunpack.c.l.b16 %v5631
      %v6528 = vunpack.c.l.b16 %v5632
      %v6529 = vunpack.c.l.b16 %v5633
      %v6530 = vunpack.c.l.b16 %v5634
      %v6531 = vunpack.c.l.b16 %v5635
      %v6532 = vpack.c.b16 %v6501, %v6500
      %v6533 = vpack.c.b16 %v6503, %v6502
      %v6534 = vpack.c.b16 %v6505, %v6504
      %v6535 = vpack.c.b16 %v6507, %v6506
      %v6536 = vpack.c.b16 %v6509, %v6508
      %v6537 = vpack.c.b16 %v6511, %v6510
      %v6538 = vpack.c.b16 %v6513, %v6512
      %v6539 = vpack.c.b16 %v6515, %v6514
      %v6540 = vpack.c.b16 %v6517, %v6516
      %v6541 = vpack.c.b16 %v6519, %v6518
      %v6542 = vpack.c.b16 %v6521, %v6520
      %v6543 = vpack.c.b16 %v6523, %v6522
      %v6544 = vpack.c.b16 %v6525, %v6524
      %v6545 = vpack.c.b16 %v6527, %v6526
      %v6546 = vpack.c.b16 %v6529, %v6528
      %v6547 = vpack.c.b16 %v6531, %v6530
      %v6550 = vsel %vm199, %v5700, %v5797
      %v6553 = vsel %vm199, %v5701, %v5799
      %v6556 = vsel %vm199, %v5702, %v5801
      %v6559 = vsel %vm199, %v5703, %v5803
      %v6562 = vsel %vm199, %v5704, %v5805
      %v6565 = vsel %vm199, %v5705, %v5807
      %v6568 = vsel %vm199, %v5706, %v5809
      %v6571 = vsel %vm199, %v5707, %v5811
      %v6574 = vsel %vm199, %v5708, %v5813
      %v6577 = vsel %vm199, %v5709, %v5815
      %v6580 = vsel %vm199, %v5710, %v5817
      %v6583 = vsel %vm199, %v5711, %v5819
      %v6586 = vsel %vm199, %v5712, %v5821
      %v6589 = vsel %vm199, %v5713, %v5823
      %v6592 = vsel %vm199, %v5714, %v5825
      %v6595 = vsel %vm199, %v5715, %v5827
      %v6597 = vsel %vm1911, %v6550, %v5909
      %v6599 = vsel %vm1911, %v6553, %v5911
      %v6601 = vsel %vm1911, %v6556, %v5913
      %v6603 = vsel %vm1911, %v6559, %v5915
      %v6605 = vsel %vm1911, %v6562, %v5917
      %v6607 = vsel %vm1911, %v6565, %v5919
      %v6609 = vsel %vm1911, %v6568, %v5921
      %v6611 = vsel %vm1911, %v6571, %v5923
      %v6613 = vsel %vm1911, %v6574, %v5925
      %v6615 = vsel %vm1911, %v6577, %v5927
      %v6617 = vsel %vm1911, %v6580, %v5929
      %v6619 = vsel %vm1911, %v6583, %v5931
      %v6621 = vsel %vm1911, %v6586, %v5933
      %v6623 = vsel %vm1911, %v6589, %v5935
      %v6625 = vsel %vm1911, %v6592, %v5937
      %v6627 = vsel %vm1911, %v6595, %v5939
      %v6629 = vsel %vm1944, %v6597, %v6021
      %v6632 = vsel %vm1944, %v6599, %v6023
      %v6635 = vsel %vm1944, %v6601, %v6025
      %v6638 = vsel %vm1944, %v6603, %v6027
      %v6641 = vsel %vm1944, %v6605, %v6029
      %v6644 = vsel %vm1944, %v6607, %v6031
      %v6647 = vsel %vm1944, %v6609, %v6033
      %v6650 = vsel %vm1944, %v6611, %v6035
      %v6653 = vsel %vm1944, %v6613, %v6037
      %v6656 = vsel %vm1944, %v6615, %v6039
      %v6659 = vsel %vm1944, %v6617, %v6041
      %v6662 = vsel %vm1944, %v6619, %v6043
      %v6665 = vsel %vm1944, %v6621, %v6045
      %v6668 = vsel %vm1944, %v6623, %v6047
      %v6671 = vsel %vm1944, %v6625, %v6049
      %v6674 = vsel %vm1944, %v6627, %v6051
      %v6678 = vsel %vm199, %v6116, %v6213
      %v6681 = vsel %vm199, %v6117, %v6215
      %v6684 = vsel %vm199, %v6118, %v6217
      %v6687 = vsel %vm199, %v6119, %v6219
      %v6690 = vsel %vm199, %v6120, %v6221
      %v6693 = vsel %vm199, %v6121, %v6223
      %v6696 = vsel %vm199, %v6122, %v6225
      %v6699 = vsel %vm199, %v6123, %v6227
      %v6702 = vsel %vm199, %v6124, %v6229
      %v6705 = vsel %vm199, %v6125, %v6231
      %v6708 = vsel %vm199, %v6126, %v6233
      %v6711 = vsel %vm199, %v6127, %v6235
      %v6714 = vsel %vm199, %v6128, %v6237
      %v6717 = vsel %vm199, %v6129, %v6239
      %v6720 = vsel %vm199, %v6130, %v6241
      %v6723 = vsel %vm199, %v6131, %v6243
      %v6725 = vsel %vm1911, %v6678, %v6325
      %v6727 = vsel %vm1911, %v6681, %v6327
      %v6729 = vsel %vm1911, %v6684, %v6329
      %v6731 = vsel %vm1911, %v6687, %v6331
      %v6733 = vsel %vm1911, %v6690, %v6333
      %v6735 = vsel %vm1911, %v6693, %v6335
      %v6737 = vsel %vm1911, %v6696, %v6337
      %v6739 = vsel %vm1911, %v6699, %v6339
      %v6741 = vsel %vm1911, %v6702, %v6341
      %v6743 = vsel %vm1911, %v6705, %v6343
      %v6745 = vsel %vm1911, %v6708, %v6345
      %v6747 = vsel %vm1911, %v6711, %v6347
      %v6749 = vsel %vm1911, %v6714, %v6349
      %v6751 = vsel %vm1911, %v6717, %v6351
      %v6753 = vsel %vm1911, %v6720, %v6353
      %v6755 = vsel %vm1911, %v6723, %v6355
      %v6757 = vsel %vm1944, %v6725, %v6437
      %v6760 = vsel %vm1944, %v6727, %v6439
      %v6763 = vsel %vm1944, %v6729, %v6441
      %v6766 = vsel %vm1944, %v6731, %v6443
      %v6769 = vsel %vm1944, %v6733, %v6445
      %v6772 = vsel %vm1944, %v6735, %v6447
      %v6775 = vsel %vm1944, %v6737, %v6449
      %v6778 = vsel %vm1944, %v6739, %v6451
      %v6781 = vsel %vm1944, %v6741, %v6453
      %v6784 = vsel %vm1944, %v6743, %v6455
      %v6787 = vsel %vm1944, %v6745, %v6457
      %v6790 = vsel %vm1944, %v6747, %v6459
      %v6793 = vsel %vm1944, %v6749, %v6461
      %v6796 = vsel %vm1944, %v6751, %v6463
      %v6799 = vsel %vm1944, %v6753, %v6465
      %v6802 = vsel %vm1944, %v6755, %v6467
      %s6804 = scalar_lea.vmem %s1, 288
      %v6805 = vld [vmem:[%s6804] sm:$0xf]
      %v6806 = vld [vmem:[%s6804 + $0x4] sm:$0xf]
      %v6807 = vld [vmem:[%s6804 + $0x8] sm:$0xf]
      %v6808 = vld [vmem:[%s6804 + $0xc] sm:$0xf]
      %v6809 = vld [vmem:[%s6804 + $0x10] sm:$0xf]
      %v6810 = vld [vmem:[%s6804 + $0x14] sm:$0xf]
      %v6811 = vld [vmem:[%s6804 + $0x18] sm:$0xf]
      %v6812 = vld [vmem:[%s6804 + $0x1c] sm:$0xf]
      %v6813 = vld [vmem:[%s6804 + $0x20] sm:$0xf]
      %v6814 = vld [vmem:[%s6804 + $0x24] sm:$0xf]
      %v6815 = vld [vmem:[%s6804 + $0x28] sm:$0xf]
      %v6816 = vld [vmem:[%s6804 + $0x2c] sm:$0xf]
      %v6817 = vld [vmem:[%s6804 + $0x30] sm:$0xf]
      %v6818 = vld [vmem:[%s6804 + $0x34] sm:$0xf]
      %v6819 = vld [vmem:[%s6804 + $0x38] sm:$0xf]
      %v6820 = vld [vmem:[%s6804 + $0x3c] sm:$0xf]
      %v6821 = vld [vmem:[%s6804 + $0x40] sm:$0xf]
      %v6822 = vld [vmem:[%s6804 + $0x44] sm:$0xf]
      %v6823 = vld [vmem:[%s6804 + $0x48] sm:$0xf]
      %v6824 = vld [vmem:[%s6804 + $0x4c] sm:$0xf]
      %v6825 = vld [vmem:[%s6804 + $0x50] sm:$0xf]
      %v6826 = vld [vmem:[%s6804 + $0x54] sm:$0xf]
      %v6827 = vld [vmem:[%s6804 + $0x58] sm:$0xf]
      %v6828 = vld [vmem:[%s6804 + $0x5c] sm:$0xf]
      %v6829 = vld [vmem:[%s6804 + $0x60] sm:$0xf]
      %v6830 = vld [vmem:[%s6804 + $0x64] sm:$0xf]
      %v6831 = vld [vmem:[%s6804 + $0x68] sm:$0xf]
      %v6832 = vld [vmem:[%s6804 + $0x6c] sm:$0xf]
      %v6833 = vld [vmem:[%s6804 + $0x70] sm:$0xf]
      %v6834 = vld [vmem:[%s6804 + $0x74] sm:$0xf]
      %v6835 = vld [vmem:[%s6804 + $0x78] sm:$0xf]
      %v6836 = vld [vmem:[%s6804 + $0x7c] sm:$0xf]
      %v6837 = vld [vmem:[%s6804 + $0x80] sm:$0xf]
      %v6838 = vld [vmem:[%s6804 + $0x84] sm:$0xf]
      %v6839 = vld [vmem:[%s6804 + $0x88] sm:$0xf]
      %v6840 = vld [vmem:[%s6804 + $0x8c] sm:$0xf]
      %v6877 = vunpack.c.l.b16 %v6805
      %v6878 = vunpack.c.l.b16 %v6806
      %v6879 = vunpack.c.l.b16 %v6807
      %v6880 = vunpack.c.l.b16 %v6808
      %v6881 = vunpack.c.l.b16 %v6809
      %v6882 = vunpack.c.l.b16 %v6810
      %v6883 = vunpack.c.l.b16 %v6811
      %v6884 = vunpack.c.l.b16 %v6812
      %v6885 = vunpack.c.l.b16 %v6813
      %v6886 = vunpack.c.l.b16 %v6814
      %v6887 = vunpack.c.l.b16 %v6815
      %v6888 = vunpack.c.l.b16 %v6816
      %v6889 = vunpack.c.l.b16 %v6817
      %v6890 = vunpack.c.l.b16 %v6818
      %v6891 = vunpack.c.l.b16 %v6819
      %v6892 = vunpack.c.l.b16 %v6820
      %v6893 = vunpack.c.l.b16 %v6821
      %v6894 = vunpack.c.l.b16 %v6822
      %v6895 = vunpack.c.l.b16 %v6823
      %v6896 = vunpack.c.l.b16 %v6824
      %v6897 = vunpack.c.l.b16 %v6825
      %v6898 = vunpack.c.l.b16 %v6826
      %v6899 = vunpack.c.l.b16 %v6827
      %v6900 = vunpack.c.l.b16 %v6828
      %v6901 = vunpack.c.l.b16 %v6829
      %v6902 = vunpack.c.l.b16 %v6830
      %v6903 = vunpack.c.l.b16 %v6831
      %v6904 = vunpack.c.l.b16 %v6832
      %v6905 = vunpack.c.l.b16 %v6833
      %v6906 = vunpack.c.l.b16 %v6834
      %v6907 = vunpack.c.l.b16 %v6835
      %v6908 = vunpack.c.l.b16 %v6836
      %v6909 = vunpack.c.l.b16 %v6837
      %v6910 = vunpack.c.l.b16 %v6838
      %v6911 = vunpack.c.l.b16 %v6839
      %v6912 = vunpack.c.l.b16 %v6840
      %v6913 = vpack.c.b16 %v6878, %v6877
      %v6914 = vpack.c.b16 %v6880, %v6879
      %v6915 = vpack.c.b16 %v6882, %v6881
      %v6916 = vpack.c.b16 %v6884, %v6883
      %v6917 = vpack.c.b16 %v6886, %v6885
      %v6918 = vpack.c.b16 %v6888, %v6887
      %v6919 = vpack.c.b16 %v6890, %v6889
      %v6920 = vpack.c.b16 %v6892, %v6891
      %v6921 = vpack.c.b16 %v6894, %v6893
      %v6922 = vpack.c.b16 %v6896, %v6895
      %v6923 = vpack.c.b16 %v6898, %v6897
      %v6924 = vpack.c.b16 %v6900, %v6899
      %v6925 = vpack.c.b16 %v6902, %v6901
      %v6926 = vpack.c.b16 %v6904, %v6903
      %v6927 = vpack.c.b16 %v6906, %v6905
      %v6928 = vpack.c.b16 %v6908, %v6907
      %v6929 = vpack.c.b16 %v6910, %v6909
      %v6930 = vpack.c.b16 %v6912, %v6911
      %v6950 = vsel %vm199, %v6532, 0
      %v6953 = vsel %vm199, %v6533, 0
      %v6956 = vsel %vm199, %v6534, 0
      %v6959 = vsel %vm199, %v6535, 0
      %v6962 = vsel %vm199, %v6536, 0
      %v6965 = vsel %vm199, %v6537, 0
      %v6968 = vsel %vm199, %v6538, 0
      %v6971 = vsel %vm199, %v6539, 0
      %v6974 = vsel %vm199, %v6540, 0
      %v6977 = vsel %vm199, %v6541, 0
      %v6980 = vsel %vm199, %v6542, 0
      %v6983 = vsel %vm199, %v6543, 0
      %v6986 = vsel %vm199, %v6544, 0
      %v6989 = vsel %vm199, %v6545, 0
      %v6992 = vsel %vm199, %v6546, 0
      %v6995 = vsel %vm199, %v6547, 0
      %6997 = vmatpush.bf16.msra.mxu0 %v6920
      %6998 = vmatpush.bf16.msra.mxu0 %v6919
      %6999 = vmatpush.bf16.msra.mxu0 %v6918
      %7000 = vmatpush.bf16.msra.mxu0 %v6917
      %7001 = vmatpush.bf16.msra.mxu0 %v6916
      %7002 = vmatpush.bf16.msra.mxu0 %v6915
      %7003 = vmatpush.bf16.msra.mxu0 %v6914
      %7004 = vmatpush.bf16.msra.mxu0 %v6913
      %7005 = vmatmul.bf16.gmra.mxu0 %v6629
      %v7006 = vpop.f32.mrf.mxu0
      %v7007 = vadd.f32 0.0, %v7006
      %v7008 = vpop.f32.mrf.mxu0
      %v7009 = vadd.f32 0.0, %v7008
      %7010 = vmatmul.bf16.gmra.mxu0 %v6632
      %v7011 = vpop.f32.mrf.mxu0
      %v7012 = vadd.f32 0.0, %v7011
      %v7013 = vpop.f32.mrf.mxu0
      %v7014 = vadd.f32 0.0, %v7013
      %7015 = vmatmul.bf16.gmra.mxu0 %v6635
      %v7016 = vpop.f32.mrf.mxu0
      %v7017 = vadd.f32 0.0, %v7016
      %v7018 = vpop.f32.mrf.mxu0
      %v7019 = vadd.f32 0.0, %v7018
      %7020 = vmatmul.bf16.gmra.mxu0 %v6638
      %v7021 = vpop.f32.mrf.mxu0
      %v7022 = vadd.f32 0.0, %v7021
      %v7023 = vpop.f32.mrf.mxu0
      %v7024 = vadd.f32 0.0, %v7023
      %7025 = vmatmul.bf16.gmra.mxu0 %v6641
      %v7026 = vpop.f32.mrf.mxu0
      %v7027 = vadd.f32 0.0, %v7026
      %v7028 = vpop.f32.mrf.mxu0
      %v7029 = vadd.f32 0.0, %v7028
      %7030 = vmatmul.bf16.gmra.mxu0 %v6644
      %v7031 = vpop.f32.mrf.mxu0
      %v7032 = vadd.f32 0.0, %v7031
      %v7033 = vpop.f32.mrf.mxu0
      %v7034 = vadd.f32 0.0, %v7033
      %7035 = vmatmul.bf16.gmra.mxu0 %v6647
      %v7036 = vpop.f32.mrf.mxu0
      %v7037 = vadd.f32 0.0, %v7036
      %v7038 = vpop.f32.mrf.mxu0
      %v7039 = vadd.f32 0.0, %v7038
      %7040 = vmatmul.bf16.gmra.mxu0 %v6650
      %v7041 = vpop.f32.mrf.mxu0
      %v7042 = vadd.f32 0.0, %v7041
      %v7043 = vpop.f32.mrf.mxu0
      %v7044 = vadd.f32 0.0, %v7043
      %7045 = vmatmul.bf16.gmra.mxu0 %v6653
      %v7046 = vpop.f32.mrf.mxu0
      %v7047 = vadd.f32 0.0, %v7046
      %v7048 = vpop.f32.mrf.mxu0
      %v7049 = vadd.f32 0.0, %v7048
      %7050 = vmatmul.bf16.gmra.mxu0 %v6656
      %v7051 = vpop.f32.mrf.mxu0
      %v7052 = vadd.f32 0.0, %v7051
      %v7053 = vpop.f32.mrf.mxu0
      %v7054 = vadd.f32 0.0, %v7053
      %7055 = vmatmul.bf16.gmra.mxu0 %v6659
      %v7056 = vpop.f32.mrf.mxu0
      %v7057 = vadd.f32 0.0, %v7056
      %v7058 = vpop.f32.mrf.mxu0
      %v7059 = vadd.f32 0.0, %v7058
      %7060 = vmatmul.bf16.gmra.mxu0 %v6662
      %v7061 = vpop.f32.mrf.mxu0
      %v7062 = vadd.f32 0.0, %v7061
      %v7063 = vpop.f32.mrf.mxu0
      %v7064 = vadd.f32 0.0, %v7063
      %7065 = vmatmul.bf16.gmra.mxu0 %v6665
      %v7066 = vpop.f32.mrf.mxu0
      %v7067 = vadd.f32 0.0, %v7066
      %v7068 = vpop.f32.mrf.mxu0
      %v7069 = vadd.f32 0.0, %v7068
      %7070 = vmatmul.bf16.gmra.mxu0 %v6668
      %v7071 = vpop.f32.mrf.mxu0
      %v7072 = vadd.f32 0.0, %v7071
      %v7073 = vpop.f32.mrf.mxu0
      %v7074 = vadd.f32 0.0, %v7073
      %7075 = vmatmul.bf16.gmra.mxu0 %v6671
      %v7076 = vpop.f32.mrf.mxu0
      %v7077 = vadd.f32 0.0, %v7076
      %v7078 = vpop.f32.mrf.mxu0
      %v7079 = vadd.f32 0.0, %v7078
      %7080 = vmatmul.bf16.gmra.mxu0 %v6674
      %v7081 = vpop.f32.mrf.mxu0
      %v7082 = vadd.f32 0.0, %v7081
      %v7083 = vpop.f32.mrf.mxu0
      %v7084 = vadd.f32 0.0, %v7083
      %7085 = vdwg.mxu0
      %7086 = vmatpush.bf16.msra.mxu0 %v6928
      %7087 = vmatpush.bf16.msra.mxu0 %v6927
      %7088 = vmatpush.bf16.msra.mxu0 %v6926
      %7089 = vmatpush.bf16.msra.mxu0 %v6925
      %7090 = vmatpush.bf16.msra.mxu0 %v6924
      %7091 = vmatpush.bf16.msra.mxu0 %v6923
      %7092 = vmatpush.bf16.msra.mxu0 %v6922
      %7093 = vmatpush.bf16.msra.mxu0 %v6921
      %7094 = vmatmul.bf16.gmra.mxu0 %v6757
      %v7095 = vpop.f32.mrf.mxu0
      %v7096 = vadd.f32 %v7007, %v7095
      %v7097 = vpop.f32.mrf.mxu0
      %v7098 = vadd.f32 %v7009, %v7097
      %7099 = vmatmul.bf16.gmra.mxu0 %v6760
      %v7100 = vpop.f32.mrf.mxu0
      %v7101 = vadd.f32 %v7012, %v7100
      %v7102 = vpop.f32.mrf.mxu0
      %v7103 = vadd.f32 %v7014, %v7102
      %7104 = vmatmul.bf16.gmra.mxu0 %v6763
      %v7105 = vpop.f32.mrf.mxu0
      %v7106 = vadd.f32 %v7017, %v7105
      %v7107 = vpop.f32.mrf.mxu0
      %v7108 = vadd.f32 %v7019, %v7107
      %7109 = vmatmul.bf16.gmra.mxu0 %v6766
      %v7110 = vpop.f32.mrf.mxu0
      %v7111 = vadd.f32 %v7022, %v7110
      %v7112 = vpop.f32.mrf.mxu0
      %v7113 = vadd.f32 %v7024, %v7112
      %7114 = vmatmul.bf16.gmra.mxu0 %v6769
      %v7115 = vpop.f32.mrf.mxu0
      %v7116 = vadd.f32 %v7027, %v7115
      %v7117 = vpop.f32.mrf.mxu0
      %v7118 = vadd.f32 %v7029, %v7117
      %7119 = vmatmul.bf16.gmra.mxu0 %v6772
      %v7120 = vpop.f32.mrf.mxu0
      %v7121 = vadd.f32 %v7032, %v7120
      %v7122 = vpop.f32.mrf.mxu0
      %v7123 = vadd.f32 %v7034, %v7122
      %7124 = vmatmul.bf16.gmra.mxu0 %v6775
      %v7125 = vpop.f32.mrf.mxu0
      %v7126 = vadd.f32 %v7037, %v7125
      %v7127 = vpop.f32.mrf.mxu0
      %v7128 = vadd.f32 %v7039, %v7127
      %7129 = vmatmul.bf16.gmra.mxu0 %v6778
      %v7130 = vpop.f32.mrf.mxu0
      %v7131 = vadd.f32 %v7042, %v7130
      %v7132 = vpop.f32.mrf.mxu0
      %v7133 = vadd.f32 %v7044, %v7132
      %7134 = vmatmul.bf16.gmra.mxu0 %v6781
      %v7135 = vpop.f32.mrf.mxu0
      %v7136 = vadd.f32 %v7047, %v7135
      %v7137 = vpop.f32.mrf.mxu0
      %v7138 = vadd.f32 %v7049, %v7137
      %7139 = vmatmul.bf16.gmra.mxu0 %v6784
      %v7140 = vpop.f32.mrf.mxu0
      %v7141 = vadd.f32 %v7052, %v7140
      %v7142 = vpop.f32.mrf.mxu0
      %v7143 = vadd.f32 %v7054, %v7142
      %7144 = vmatmul.bf16.gmra.mxu0 %v6787
      %v7145 = vpop.f32.mrf.mxu0
      %v7146 = vadd.f32 %v7057, %v7145
      %v7147 = vpop.f32.mrf.mxu0
      %v7148 = vadd.f32 %v7059, %v7147
      %7149 = vmatmul.bf16.gmra.mxu0 %v6790
      %v7150 = vpop.f32.mrf.mxu0
      %v7151 = vadd.f32 %v7062, %v7150
      %v7152 = vpop.f32.mrf.mxu0
      %v7153 = vadd.f32 %v7064, %v7152
      %7154 = vmatmul.bf16.gmra.mxu0 %v6793
      %v7155 = vpop.f32.mrf.mxu0
      %v7156 = vadd.f32 %v7067, %v7155
      %v7157 = vpop.f32.mrf.mxu0
      %v7158 = vadd.f32 %v7069, %v7157
      %7159 = vmatmul.bf16.gmra.mxu0 %v6796
      %v7160 = vpop.f32.mrf.mxu0
      %v7161 = vadd.f32 %v7072, %v7160
      %v7162 = vpop.f32.mrf.mxu0
      %v7163 = vadd.f32 %v7074, %v7162
      %7164 = vmatmul.bf16.gmra.mxu0 %v6799
      %v7165 = vpop.f32.mrf.mxu0
      %v7166 = vadd.f32 %v7077, %v7165
      %v7167 = vpop.f32.mrf.mxu0
      %v7168 = vadd.f32 %v7079, %v7167
      %7169 = vmatmul.bf16.gmra.mxu0 %v6802
      %v7170 = vpop.f32.mrf.mxu0
      %v7171 = vadd.f32 %v7082, %v7170
      %v7172 = vpop.f32.mrf.mxu0
      %v7173 = vadd.f32 %v7084, %v7172
      %7174 = vdwg.mxu0
      %7175 = vmatpush.bf16.msra.mxu0 0
      %7176 = vmatpush.bf16.msra.mxu0 0
      %7177 = vmatpush.bf16.msra.mxu0 0
      %7178 = vmatpush.bf16.msra.mxu0 0
      %7179 = vmatpush.bf16.msra.mxu0 0
      %7180 = vmatpush.bf16.msra.mxu0 0
      %7181 = vmatpush.bf16.msra.mxu0 %v6930
      %7182 = vmatpush.bf16.msra.mxu0 %v6929
      %7183 = vmatmul.bf16.gmra.mxu0 %v6950
      %v7184 = vpop.f32.mrf.mxu0
      %v7185 = vadd.f32 %v7096, %v7184
      %v7186 = vpop.f32.mrf.mxu0
      %v7187 = vadd.f32 %v7098, %v7186
      %7188 = vmatmul.bf16.gmra.mxu0 %v6953
      %v7189 = vpop.f32.mrf.mxu0
      %v7190 = vadd.f32 %v7101, %v7189
      %v7191 = vpop.f32.mrf.mxu0
      %v7192 = vadd.f32 %v7103, %v7191
      %7193 = vmatmul.bf16.gmra.mxu0 %v6956
      %v7194 = vpop.f32.mrf.mxu0
      %v7195 = vadd.f32 %v7106, %v7194
      %v7196 = vpop.f32.mrf.mxu0
      %v7197 = vadd.f32 %v7108, %v7196
      %7198 = vmatmul.bf16.gmra.mxu0 %v6959
      %v7199 = vpop.f32.mrf.mxu0
      %v7200 = vadd.f32 %v7111, %v7199
      %v7201 = vpop.f32.mrf.mxu0
      %v7202 = vadd.f32 %v7113, %v7201
      %7203 = vmatmul.bf16.gmra.mxu0 %v6962
      %v7204 = vpop.f32.mrf.mxu0
      %v7205 = vadd.f32 %v7116, %v7204
      %v7206 = vpop.f32.mrf.mxu0
      %v7207 = vadd.f32 %v7118, %v7206
      %7208 = vmatmul.bf16.gmra.mxu0 %v6965
      %v7209 = vpop.f32.mrf.mxu0
      %v7210 = vadd.f32 %v7121, %v7209
      %v7211 = vpop.f32.mrf.mxu0
      %v7212 = vadd.f32 %v7123, %v7211
      %7213 = vmatmul.bf16.gmra.mxu0 %v6968
      %v7214 = vpop.f32.mrf.mxu0
      %v7215 = vadd.f32 %v7126, %v7214
      %v7216 = vpop.f32.mrf.mxu0
      %v7217 = vadd.f32 %v7128, %v7216
      %7218 = vmatmul.bf16.gmra.mxu0 %v6971
      %v7219 = vpop.f32.mrf.mxu0
      %v7220 = vadd.f32 %v7131, %v7219
      %v7221 = vpop.f32.mrf.mxu0
      %v7222 = vadd.f32 %v7133, %v7221
      %7223 = vmatmul.bf16.gmra.mxu0 %v6974
      %v7224 = vpop.f32.mrf.mxu0
      %v7225 = vadd.f32 %v7136, %v7224
      %v7226 = vpop.f32.mrf.mxu0
      %v7227 = vadd.f32 %v7138, %v7226
      %7228 = vmatmul.bf16.gmra.mxu0 %v6977
      %v7229 = vpop.f32.mrf.mxu0
      %v7230 = vadd.f32 %v7141, %v7229
      %v7231 = vpop.f32.mrf.mxu0
      %v7232 = vadd.f32 %v7143, %v7231
      %7233 = vmatmul.bf16.gmra.mxu0 %v6980
      %v7234 = vpop.f32.mrf.mxu0
      %v7235 = vadd.f32 %v7146, %v7234
      %v7236 = vpop.f32.mrf.mxu0
      %v7237 = vadd.f32 %v7148, %v7236
      %7238 = vmatmul.bf16.gmra.mxu0 %v6983
      %v7239 = vpop.f32.mrf.mxu0
      %v7240 = vadd.f32 %v7151, %v7239
      %v7241 = vpop.f32.mrf.mxu0
      %v7242 = vadd.f32 %v7153, %v7241
      %7243 = vmatmul.bf16.gmra.mxu0 %v6986
      %v7244 = vpop.f32.mrf.mxu0
      %v7245 = vadd.f32 %v7156, %v7244
      %v7246 = vpop.f32.mrf.mxu0
      %v7247 = vadd.f32 %v7158, %v7246
      %7248 = vmatmul.bf16.gmra.mxu0 %v6989
      %v7249 = vpop.f32.mrf.mxu0
      %v7250 = vadd.f32 %v7161, %v7249
      %v7251 = vpop.f32.mrf.mxu0
      %v7252 = vadd.f32 %v7163, %v7251
      %7253 = vmatmul.bf16.gmra.mxu0 %v6992
      %v7254 = vpop.f32.mrf.mxu0
      %v7255 = vadd.f32 %v7166, %v7254
      %v7256 = vpop.f32.mrf.mxu0
      %v7257 = vadd.f32 %v7168, %v7256
      %7258 = vmatmul.bf16.gmra.mxu0 %v6995
      %v7259 = vpop.f32.mrf.mxu0
      %v7260 = vadd.f32 %v7171, %v7259
      %v7261 = vpop.f32.mrf.mxu0
      %v7262 = vadd.f32 %v7173, %v7261
      %7263 = vdwg.mxu0
      %s7264 = scalar_lea.vmem %s2, 2
      %v7265 = vld [vmem:[%s7264] sm:$0x1]
      %v7267 = vperm.slane %v7265, 0
      %v7269 = vmul.f32 %v7185, %v7267
      %v7270 = vmul.f32 %v7187, %v7267
      %v7271 = vmul.f32 %v7190, %v7267
      %v7272 = vmul.f32 %v7192, %v7267
      %v7273 = vmul.f32 %v7195, %v7267
      %v7274 = vmul.f32 %v7197, %v7267
      %v7275 = vmul.f32 %v7200, %v7267
      %v7276 = vmul.f32 %v7202, %v7267
      %v7277 = vmul.f32 %v7205, %v7267
      %v7278 = vmul.f32 %v7207, %v7267
      %v7279 = vmul.f32 %v7210, %v7267
      %v7280 = vmul.f32 %v7212, %v7267
      %v7281 = vmul.f32 %v7215, %v7267
      %v7282 = vmul.f32 %v7217, %v7267
      %v7283 = vmul.f32 %v7220, %v7267
      %v7284 = vmul.f32 %v7222, %v7267
      %v7285 = vmul.f32 %v7225, %v7267
      %v7286 = vmul.f32 %v7227, %v7267
      %v7287 = vmul.f32 %v7230, %v7267
      %v7288 = vmul.f32 %v7232, %v7267
      %v7289 = vmul.f32 %v7235, %v7267
      %v7290 = vmul.f32 %v7237, %v7267
      %v7291 = vmul.f32 %v7240, %v7267
      %v7292 = vmul.f32 %v7242, %v7267
      %v7293 = vmul.f32 %v7245, %v7267
      %v7294 = vmul.f32 %v7247, %v7267
      %v7295 = vmul.f32 %v7250, %v7267
      %v7296 = vmul.f32 %v7252, %v7267
      %v7297 = vmul.f32 %v7255, %v7267
      %v7298 = vmul.f32 %v7257, %v7267
      %v7299 = vmul.f32 %v7260, %v7267
      %v7300 = vmul.f32 %v7262, %v7267
      %s7301 = scalar_lea.vmem %s3, 2
      %v7302 = vld [vmem:[%s7301] sm:$0x1]
      %v7304 = vperm.slane %v7302, 0
      %v7306 = vadd.f32 %v7269, %v7304
      %v7307 = vadd.f32 %v7270, %v7304
      %v7308 = vadd.f32 %v7271, %v7304
      %v7309 = vadd.f32 %v7272, %v7304
      %v7310 = vadd.f32 %v7273, %v7304
      %v7311 = vadd.f32 %v7274, %v7304
      %v7312 = vadd.f32 %v7275, %v7304
      %v7313 = vadd.f32 %v7276, %v7304
      %v7314 = vadd.f32 %v7277, %v7304
      %v7315 = vadd.f32 %v7278, %v7304
      %v7316 = vadd.f32 %v7279, %v7304
      %v7317 = vadd.f32 %v7280, %v7304
      %v7318 = vadd.f32 %v7281, %v7304
      %v7319 = vadd.f32 %v7282, %v7304
      %v7320 = vadd.f32 %v7283, %v7304
      %v7321 = vadd.f32 %v7284, %v7304
      %v7322 = vadd.f32 %v7285, %v7304
      %v7323 = vadd.f32 %v7286, %v7304
      %v7324 = vadd.f32 %v7287, %v7304
      %v7325 = vadd.f32 %v7288, %v7304
      %v7326 = vadd.f32 %v7289, %v7304
      %v7327 = vadd.f32 %v7290, %v7304
      %v7328 = vadd.f32 %v7291, %v7304
      %v7329 = vadd.f32 %v7292, %v7304
      %v7330 = vadd.f32 %v7293, %v7304
      %v7331 = vadd.f32 %v7294, %v7304
      %v7332 = vadd.f32 %v7295, %v7304
      %v7333 = vadd.f32 %v7296, %v7304
      %v7334 = vadd.f32 %v7297, %v7304
      %v7335 = vadd.f32 %v7298, %v7304
      %v7336 = vadd.f32 %v7299, %v7304
      %v7337 = vadd.f32 %v7300, %v7304
      %v7338 = vmax.f32 %v7306, 0.0
      %v7339 = vmax.f32 %v7307, 0.0
      %v7340 = vmax.f32 %v7308, 0.0
      %v7341 = vmax.f32 %v7309, 0.0
      %v7342 = vmax.f32 %v7310, 0.0
      %v7343 = vmax.f32 %v7311, 0.0
      %v7344 = vmax.f32 %v7312, 0.0
      %v7345 = vmax.f32 %v7313, 0.0
      %v7346 = vmax.f32 %v7314, 0.0
      %v7347 = vmax.f32 %v7315, 0.0
      %v7348 = vmax.f32 %v7316, 0.0
      %v7349 = vmax.f32 %v7317, 0.0
      %v7350 = vmax.f32 %v7318, 0.0
      %v7351 = vmax.f32 %v7319, 0.0
      %v7352 = vmax.f32 %v7320, 0.0
      %v7353 = vmax.f32 %v7321, 0.0
      %v7354 = vmax.f32 %v7322, 0.0
      %v7355 = vmax.f32 %v7323, 0.0
      %v7356 = vmax.f32 %v7324, 0.0
      %v7357 = vmax.f32 %v7325, 0.0
      %v7358 = vmax.f32 %v7326, 0.0
      %v7359 = vmax.f32 %v7327, 0.0
      %v7360 = vmax.f32 %v7328, 0.0
      %v7361 = vmax.f32 %v7329, 0.0
      %v7362 = vmax.f32 %v7330, 0.0
      %v7363 = vmax.f32 %v7331, 0.0
      %v7364 = vmax.f32 %v7332, 0.0
      %v7365 = vmax.f32 %v7333, 0.0
      %v7366 = vmax.f32 %v7334, 0.0
      %v7367 = vmax.f32 %v7335, 0.0
      %v7368 = vmax.f32 %v7336, 0.0
      %v7369 = vmax.f32 %v7337, 0.0
      %7370 = vst.msk [vmem:[%s2684 + $0x1] sm:$0xff] %vm199, %v7338
      %7371 = vst.msk [vmem:[%s2684 + $0x9] sm:$0xff] %vm199, %v7339
      %7372 = vst.msk [vmem:[%s2684 + $0x19] sm:$0xff] %vm199, %v7340
      %7373 = vst.msk [vmem:[%s2684 + $0x21] sm:$0xff] %vm199, %v7341
      %7374 = vst.msk [vmem:[%s2684 + $0x31] sm:$0xff] %vm199, %v7342
      %7375 = vst.msk [vmem:[%s2684 + $0x39] sm:$0xff] %vm199, %v7343
      %7376 = vst.msk [vmem:[%s2684 + $0x49] sm:$0xff] %vm199, %v7344
      %7377 = vst.msk [vmem:[%s2684 + $0x51] sm:$0xff] %vm199, %v7345
      %7378 = vst.msk [vmem:[%s2684 + $0x61] sm:$0xff] %vm199, %v7346
      %7379 = vst.msk [vmem:[%s2684 + $0x69] sm:$0xff] %vm199, %v7347
      %7380 = vst.msk [vmem:[%s2684 + $0x79] sm:$0xff] %vm199, %v7348
      %7381 = vst.msk [vmem:[%s2684 + $0x81] sm:$0xff] %vm199, %v7349
      %7382 = vst.msk [vmem:[%s2684 + $0x91] sm:$0xff] %vm199, %v7350
      %7383 = vst.msk [vmem:[%s2684 + $0x99] sm:$0xff] %vm199, %v7351
      %7384 = vst.msk [vmem:[%s2684 + $0xa9] sm:$0xff] %vm199, %v7352
      %7385 = vst.msk [vmem:[%s2684 + $0xb1] sm:$0xff] %vm199, %v7353
      %7386 = vst.msk [vmem:[%s2684 + $0xc1] sm:$0xff] %vm199, %v7354
      %7387 = vst.msk [vmem:[%s2684 + $0xc9] sm:$0xff] %vm199, %v7355
      %7388 = vst.msk [vmem:[%s2684 + $0xd9] sm:$0xff] %vm199, %v7356
      %7389 = vst.msk [vmem:[%s2684 + $0xe1] sm:$0xff] %vm199, %v7357
      %7390 = vst.msk [vmem:[%s2684 + $0xf1] sm:$0xff] %vm199, %v7358
      %7391 = vst.msk [vmem:[%s2684 + $0xf9] sm:$0xff] %vm199, %v7359
      %7392 = vst.msk [vmem:[%s2684 + $0x109] sm:$0xff] %vm199, %v7360
      %7393 = vst.msk [vmem:[%s2684 + $0x111] sm:$0xff] %vm199, %v7361
      %7394 = vst.msk [vmem:[%s2684 + $0x121] sm:$0xff] %vm199, %v7362
      %7395 = vst.msk [vmem:[%s2684 + $0x129] sm:$0xff] %vm199, %v7363
      %7396 = vst.msk [vmem:[%s2684 + $0x139] sm:$0xff] %vm199, %v7364
      %7397 = vst.msk [vmem:[%s2684 + $0x141] sm:$0xff] %vm199, %v7365
      %7398 = vst.msk [vmem:[%s2684 + $0x151] sm:$0xff] %vm199, %v7366
      %7399 = vst.msk [vmem:[%s2684 + $0x159] sm:$0xff] %vm199, %v7367
      %7400 = vst.msk [vmem:[%s2684 + $0x169] sm:$0xff] %vm199, %v7368
      %7401 = vst.msk [vmem:[%s2684 + $0x171] sm:$0xff] %vm199, %v7369
      %v7402 = vld [vmem:[#allocation3] sm:$0xff]
      %v7403 = vld [vmem:[#allocation3 + $0x8] sm:$0xff]
      %v7404 = vld [vmem:[#allocation3 + $0x18] sm:$0xff]
      %v7405 = vld [vmem:[#allocation3 + $0x20] sm:$0xff]
      %v7406 = vld [vmem:[#allocation3 + $0x30] sm:$0xff]
      %v7407 = vld [vmem:[#allocation3 + $0x38] sm:$0xff]
      %v7408 = vld [vmem:[#allocation3 + $0x48] sm:$0xff]
      %v7409 = vld [vmem:[#allocation3 + $0x50] sm:$0xff]
      %v7410 = vld [vmem:[#allocation3 + $0x60] sm:$0xff]
      %v7411 = vld [vmem:[#allocation3 + $0x68] sm:$0xff]
      %v7412 = vld [vmem:[#allocation3 + $0x78] sm:$0xff]
      %v7413 = vld [vmem:[#allocation3 + $0x80] sm:$0xff]
      %v7414 = vld [vmem:[#allocation3 + $0x90] sm:$0xff]
      %v7415 = vld [vmem:[#allocation3 + $0x98] sm:$0xff]
      %v7416 = vld [vmem:[#allocation3 + $0xa8] sm:$0xff]
      %v7417 = vld [vmem:[#allocation3 + $0xb0] sm:$0xff]
      %v7418 = vld [vmem:[#allocation3 + $0xc0] sm:$0xff]
      %v7419 = vld [vmem:[#allocation3 + $0xc8] sm:$0xff]
      %v7420 = vld [vmem:[#allocation3 + $0xd8] sm:$0xff]
      %v7421 = vld [vmem:[#allocation3 + $0xe0] sm:$0xff]
      %v7422 = vld [vmem:[#allocation3 + $0xf0] sm:$0xff]
      %v7423 = vld [vmem:[#allocation3 + $0xf8] sm:$0xff]
      %v7424 = vld [vmem:[#allocation3 + $0x108] sm:$0xff]
      %v7425 = vld [vmem:[#allocation3 + $0x110] sm:$0xff]
      %v7426 = vld [vmem:[#allocation3 + $0x120] sm:$0xff]
      %v7427 = vld [vmem:[#allocation3 + $0x128] sm:$0xff]
      %v7428 = vld [vmem:[#allocation3 + $0x138] sm:$0xff]
      %v7429 = vld [vmem:[#allocation3 + $0x140] sm:$0xff]
      %v7430 = vld [vmem:[#allocation3 + $0x150] sm:$0xff]
      %v7431 = vld [vmem:[#allocation3 + $0x158] sm:$0xff]
      %v7432 = vld [vmem:[#allocation3 + $0x168] sm:$0xff]
      %v7433 = vld [vmem:[#allocation3 + $0x170] sm:$0xff]
      %v7434 = vpack.c.bf16 %v7402, %v7402
      %v7435 = vpack.c.bf16 %v7403, %v7403
      %v7436 = vpack.c.bf16 %v7404, %v7404
      %v7437 = vpack.c.bf16 %v7405, %v7405
      %v7438 = vpack.c.bf16 %v7406, %v7406
      %v7439 = vpack.c.bf16 %v7407, %v7407
      %v7440 = vpack.c.bf16 %v7408, %v7408
      %v7441 = vpack.c.bf16 %v7409, %v7409
      %v7442 = vpack.c.bf16 %v7410, %v7410
      %v7443 = vpack.c.bf16 %v7411, %v7411
      %v7444 = vpack.c.bf16 %v7412, %v7412
      %v7445 = vpack.c.bf16 %v7413, %v7413
      %v7446 = vpack.c.bf16 %v7414, %v7414
      %v7447 = vpack.c.bf16 %v7415, %v7415
      %v7448 = vpack.c.bf16 %v7416, %v7416
      %v7449 = vpack.c.bf16 %v7417, %v7417
      %v7450 = vpack.c.bf16 %v7418, %v7418
      %v7451 = vpack.c.bf16 %v7419, %v7419
      %v7452 = vpack.c.bf16 %v7420, %v7420
      %v7453 = vpack.c.bf16 %v7421, %v7421
      %v7454 = vpack.c.bf16 %v7422, %v7422
      %v7455 = vpack.c.bf16 %v7423, %v7423
      %v7456 = vpack.c.bf16 %v7424, %v7424
      %v7457 = vpack.c.bf16 %v7425, %v7425
      %v7458 = vpack.c.bf16 %v7426, %v7426
      %v7459 = vpack.c.bf16 %v7427, %v7427
      %v7460 = vpack.c.bf16 %v7428, %v7428
      %v7461 = vpack.c.bf16 %v7429, %v7429
      %v7462 = vpack.c.bf16 %v7430, %v7430
      %v7463 = vpack.c.bf16 %v7431, %v7431
      %v7464 = vpack.c.bf16 %v7432, %v7432
      %v7465 = vpack.c.bf16 %v7433, %v7433
      %v7466 = vld [vmem:[#allocation3 + $0x1] sm:$0xff]
      %v7467 = vld [vmem:[#allocation3 + $0x9] sm:$0xff]
      %v7468 = vld [vmem:[#allocation3 + $0x19] sm:$0xff]
      %v7469 = vld [vmem:[#allocation3 + $0x21] sm:$0xff]
      %v7470 = vld [vmem:[#allocation3 + $0x31] sm:$0xff]
      %v7471 = vld [vmem:[#allocation3 + $0x39] sm:$0xff]
      %v7472 = vld [vmem:[#allocation3 + $0x49] sm:$0xff]
      %v7473 = vld [vmem:[#allocation3 + $0x51] sm:$0xff]
      %v7474 = vld [vmem:[#allocation3 + $0x61] sm:$0xff]
      %v7475 = vld [vmem:[#allocation3 + $0x69] sm:$0xff]
      %v7476 = vld [vmem:[#allocation3 + $0x79] sm:$0xff]
      %v7477 = vld [vmem:[#allocation3 + $0x81] sm:$0xff]
      %v7478 = vld [vmem:[#allocation3 + $0x91] sm:$0xff]
      %v7479 = vld [vmem:[#allocation3 + $0x99] sm:$0xff]
      %v7480 = vld [vmem:[#allocation3 + $0xa9] sm:$0xff]
      %v7481 = vld [vmem:[#allocation3 + $0xb1] sm:$0xff]
      %v7482 = vld [vmem:[#allocation3 + $0xc1] sm:$0xff]
      %v7483 = vld [vmem:[#allocation3 + $0xc9] sm:$0xff]
      %v7484 = vld [vmem:[#allocation3 + $0xd9] sm:$0xff]
      %v7485 = vld [vmem:[#allocation3 + $0xe1] sm:$0xff]
      %v7486 = vld [vmem:[#allocation3 + $0xf1] sm:$0xff]
      %v7487 = vld [vmem:[#allocation3 + $0xf9] sm:$0xff]
      %v7488 = vld [vmem:[#allocation3 + $0x109] sm:$0xff]
      %v7489 = vld [vmem:[#allocation3 + $0x111] sm:$0xff]
      %v7490 = vld [vmem:[#allocation3 + $0x121] sm:$0xff]
      %v7491 = vld [vmem:[#allocation3 + $0x129] sm:$0xff]
      %v7492 = vld [vmem:[#allocation3 + $0x139] sm:$0xff]
      %v7493 = vld [vmem:[#allocation3 + $0x141] sm:$0xff]
      %v7494 = vld [vmem:[#allocation3 + $0x151] sm:$0xff]
      %v7495 = vld [vmem:[#allocation3 + $0x159] sm:$0xff]
      %v7496 = vld [vmem:[#allocation3 + $0x169] sm:$0xff]
      %v7497 = vld [vmem:[#allocation3 + $0x171] sm:$0xff]
      %v7498 = vpack.c.bf16 %v7466, %v7466
      %v7499 = vpack.c.bf16 %v7467, %v7467
      %v7500 = vpack.c.bf16 %v7468, %v7468
      %v7501 = vpack.c.bf16 %v7469, %v7469
      %v7502 = vpack.c.bf16 %v7470, %v7470
      %v7503 = vpack.c.bf16 %v7471, %v7471
      %v7504 = vpack.c.bf16 %v7472, %v7472
      %v7505 = vpack.c.bf16 %v7473, %v7473
      %v7506 = vpack.c.bf16 %v7474, %v7474
      %v7507 = vpack.c.bf16 %v7475, %v7475
      %v7508 = vpack.c.bf16 %v7476, %v7476
      %v7509 = vpack.c.bf16 %v7477, %v7477
      %v7510 = vpack.c.bf16 %v7478, %v7478
      %v7511 = vpack.c.bf16 %v7479, %v7479
      %v7512 = vpack.c.bf16 %v7480, %v7480
      %v7513 = vpack.c.bf16 %v7481, %v7481
      %v7514 = vpack.c.bf16 %v7482, %v7482
      %v7515 = vpack.c.bf16 %v7483, %v7483
      %v7516 = vpack.c.bf16 %v7484, %v7484
      %v7517 = vpack.c.bf16 %v7485, %v7485
      %v7518 = vpack.c.bf16 %v7486, %v7486
      %v7519 = vpack.c.bf16 %v7487, %v7487
      %v7520 = vpack.c.bf16 %v7488, %v7488
      %v7521 = vpack.c.bf16 %v7489, %v7489
      %v7522 = vpack.c.bf16 %v7490, %v7490
      %v7523 = vpack.c.bf16 %v7491, %v7491
      %v7524 = vpack.c.bf16 %v7492, %v7492
      %v7525 = vpack.c.bf16 %v7493, %v7493
      %v7526 = vpack.c.bf16 %v7494, %v7494
      %v7527 = vpack.c.bf16 %v7495, %v7495
      %v7528 = vpack.c.bf16 %v7496, %v7496
      %v7529 = vpack.c.bf16 %v7497, %v7497
      %v7530 = vld [vmem:[#allocation3 + $0x2] sm:$0xff]
      %v7531 = vld [vmem:[#allocation3 + $0xa] sm:$0xff]
      %v7532 = vld [vmem:[#allocation3 + $0x1a] sm:$0xff]
      %v7533 = vld [vmem:[#allocation3 + $0x22] sm:$0xff]
      %v7534 = vld [vmem:[#allocation3 + $0x32] sm:$0xff]
      %v7535 = vld [vmem:[#allocation3 + $0x3a] sm:$0xff]
      %v7536 = vld [vmem:[#allocation3 + $0x4a] sm:$0xff]
      %v7537 = vld [vmem:[#allocation3 + $0x52] sm:$0xff]
      %v7538 = vld [vmem:[#allocation3 + $0x62] sm:$0xff]
      %v7539 = vld [vmem:[#allocation3 + $0x6a] sm:$0xff]
      %v7540 = vld [vmem:[#allocation3 + $0x7a] sm:$0xff]
      %v7541 = vld [vmem:[#allocation3 + $0x82] sm:$0xff]
      %v7542 = vld [vmem:[#allocation3 + $0x92] sm:$0xff]
      %v7543 = vld [vmem:[#allocation3 + $0x9a] sm:$0xff]
      %v7544 = vld [vmem:[#allocation3 + $0xaa] sm:$0xff]
      %v7545 = vld [vmem:[#allocation3 + $0xb2] sm:$0xff]
      %v7546 = vld [vmem:[#allocation3 + $0xc2] sm:$0xff]
      %v7547 = vld [vmem:[#allocation3 + $0xca] sm:$0xff]
      %v7548 = vld [vmem:[#allocation3 + $0xda] sm:$0xff]
      %v7549 = vld [vmem:[#allocation3 + $0xe2] sm:$0xff]
      %v7550 = vld [vmem:[#allocation3 + $0xf2] sm:$0xff]
      %v7551 = vld [vmem:[#allocation3 + $0xfa] sm:$0xff]
      %v7552 = vld [vmem:[#allocation3 + $0x10a] sm:$0xff]
      %v7553 = vld [vmem:[#allocation3 + $0x112] sm:$0xff]
      %v7554 = vld [vmem:[#allocation3 + $0x122] sm:$0xff]
      %v7555 = vld [vmem:[#allocation3 + $0x12a] sm:$0xff]
      %v7556 = vld [vmem:[#allocation3 + $0x13a] sm:$0xff]
      %v7557 = vld [vmem:[#allocation3 + $0x142] sm:$0xff]
      %v7558 = vld [vmem:[#allocation3 + $0x152] sm:$0xff]
      %v7559 = vld [vmem:[#allocation3 + $0x15a] sm:$0xff]
      %v7560 = vld [vmem:[#allocation3 + $0x16a] sm:$0xff]
      %v7561 = vld [vmem:[#allocation3 + $0x172] sm:$0xff]
      %v7562 = vpack.c.bf16 %v7530, %v7530
      %v7563 = vpack.c.bf16 %v7531, %v7531
      %v7564 = vpack.c.bf16 %v7532, %v7532
      %v7565 = vpack.c.bf16 %v7533, %v7533
      %v7566 = vpack.c.bf16 %v7534, %v7534
      %v7567 = vpack.c.bf16 %v7535, %v7535
      %v7568 = vpack.c.bf16 %v7536, %v7536
      %v7569 = vpack.c.bf16 %v7537, %v7537
      %v7570 = vpack.c.bf16 %v7538, %v7538
      %v7571 = vpack.c.bf16 %v7539, %v7539
      %v7572 = vpack.c.bf16 %v7540, %v7540
      %v7573 = vpack.c.bf16 %v7541, %v7541
      %v7574 = vpack.c.bf16 %v7542, %v7542
      %v7575 = vpack.c.bf16 %v7543, %v7543
      %v7576 = vpack.c.bf16 %v7544, %v7544
      %v7577 = vpack.c.bf16 %v7545, %v7545
      %v7578 = vpack.c.bf16 %v7546, %v7546
      %v7579 = vpack.c.bf16 %v7547, %v7547
      %v7580 = vpack.c.bf16 %v7548, %v7548
      %v7581 = vpack.c.bf16 %v7549, %v7549
      %v7582 = vpack.c.bf16 %v7550, %v7550
      %v7583 = vpack.c.bf16 %v7551, %v7551
      %v7584 = vpack.c.bf16 %v7552, %v7552
      %v7585 = vpack.c.bf16 %v7553, %v7553
      %v7586 = vpack.c.bf16 %v7554, %v7554
      %v7587 = vpack.c.bf16 %v7555, %v7555
      %v7588 = vpack.c.bf16 %v7556, %v7556
      %v7589 = vpack.c.bf16 %v7557, %v7557
      %v7590 = vpack.c.bf16 %v7558, %v7558
      %v7591 = vpack.c.bf16 %v7559, %v7559
      %v7592 = vpack.c.bf16 %v7560, %v7560
      %v7593 = vpack.c.bf16 %v7561, %v7561
      %v7594 = vld [vmem:[%s2684] sm:$0xff]
      %v7595 = vld [vmem:[%s2684 + $0x8] sm:$0xff]
      %v7596 = vld [vmem:[%s2684 + $0x18] sm:$0xff]
      %v7597 = vld [vmem:[%s2684 + $0x20] sm:$0xff]
      %v7598 = vld [vmem:[%s2684 + $0x30] sm:$0xff]
      %v7599 = vld [vmem:[%s2684 + $0x38] sm:$0xff]
      %v7600 = vld [vmem:[%s2684 + $0x48] sm:$0xff]
      %v7601 = vld [vmem:[%s2684 + $0x50] sm:$0xff]
      %v7602 = vld [vmem:[%s2684 + $0x60] sm:$0xff]
      %v7603 = vld [vmem:[%s2684 + $0x68] sm:$0xff]
      %v7604 = vld [vmem:[%s2684 + $0x78] sm:$0xff]
      %v7605 = vld [vmem:[%s2684 + $0x80] sm:$0xff]
      %v7606 = vld [vmem:[%s2684 + $0x90] sm:$0xff]
      %v7607 = vld [vmem:[%s2684 + $0x98] sm:$0xff]
      %v7608 = vld [vmem:[%s2684 + $0xa8] sm:$0xff]
      %v7609 = vld [vmem:[%s2684 + $0xb0] sm:$0xff]
      %v7610 = vld [vmem:[%s2684 + $0xc0] sm:$0xff]
      %v7611 = vld [vmem:[%s2684 + $0xc8] sm:$0xff]
      %v7612 = vld [vmem:[%s2684 + $0xd8] sm:$0xff]
      %v7613 = vld [vmem:[%s2684 + $0xe0] sm:$0xff]
      %v7614 = vld [vmem:[%s2684 + $0xf0] sm:$0xff]
      %v7615 = vld [vmem:[%s2684 + $0xf8] sm:$0xff]
      %v7616 = vld [vmem:[%s2684 + $0x108] sm:$0xff]
      %v7617 = vld [vmem:[%s2684 + $0x110] sm:$0xff]
      %v7618 = vld [vmem:[%s2684 + $0x120] sm:$0xff]
      %v7619 = vld [vmem:[%s2684 + $0x128] sm:$0xff]
      %v7620 = vld [vmem:[%s2684 + $0x138] sm:$0xff]
      %v7621 = vld [vmem:[%s2684 + $0x140] sm:$0xff]
      %v7622 = vld [vmem:[%s2684 + $0x150] sm:$0xff]
      %v7623 = vld [vmem:[%s2684 + $0x158] sm:$0xff]
      %v7624 = vld [vmem:[%s2684 + $0x168] sm:$0xff]
      %v7625 = vld [vmem:[%s2684 + $0x170] sm:$0xff]
      %v7626 = vpack.c.bf16 %v7594, %v7594
      %v7627 = vpack.c.bf16 %v7595, %v7595
      %v7628 = vpack.c.bf16 %v7596, %v7596
      %v7629 = vpack.c.bf16 %v7597, %v7597
      %v7630 = vpack.c.bf16 %v7598, %v7598
      %v7631 = vpack.c.bf16 %v7599, %v7599
      %v7632 = vpack.c.bf16 %v7600, %v7600
      %v7633 = vpack.c.bf16 %v7601, %v7601
      %v7634 = vpack.c.bf16 %v7602, %v7602
      %v7635 = vpack.c.bf16 %v7603, %v7603
      %v7636 = vpack.c.bf16 %v7604, %v7604
      %v7637 = vpack.c.bf16 %v7605, %v7605
      %v7638 = vpack.c.bf16 %v7606, %v7606
      %v7639 = vpack.c.bf16 %v7607, %v7607
      %v7640 = vpack.c.bf16 %v7608, %v7608
      %v7641 = vpack.c.bf16 %v7609, %v7609
      %v7642 = vpack.c.bf16 %v7610, %v7610
      %v7643 = vpack.c.bf16 %v7611, %v7611
      %v7644 = vpack.c.bf16 %v7612, %v7612
      %v7645 = vpack.c.bf16 %v7613, %v7613
      %v7646 = vpack.c.bf16 %v7614, %v7614
      %v7647 = vpack.c.bf16 %v7615, %v7615
      %v7648 = vpack.c.bf16 %v7616, %v7616
      %v7649 = vpack.c.bf16 %v7617, %v7617
      %v7650 = vpack.c.bf16 %v7618, %v7618
      %v7651 = vpack.c.bf16 %v7619, %v7619
      %v7652 = vpack.c.bf16 %v7620, %v7620
      %v7653 = vpack.c.bf16 %v7621, %v7621
      %v7654 = vpack.c.bf16 %v7622, %v7622
      %v7655 = vpack.c.bf16 %v7623, %v7623
      %v7656 = vpack.c.bf16 %v7624, %v7624
      %v7657 = vpack.c.bf16 %v7625, %v7625
      %v7658 = vld [vmem:[%s2684 + $0x1] sm:$0xff]
      %v7659 = vld [vmem:[%s2684 + $0x9] sm:$0xff]
      %v7660 = vld [vmem:[%s2684 + $0x19] sm:$0xff]
      %v7661 = vld [vmem:[%s2684 + $0x21] sm:$0xff]
      %v7662 = vld [vmem:[%s2684 + $0x31] sm:$0xff]
      %v7663 = vld [vmem:[%s2684 + $0x39] sm:$0xff]
      %v7664 = vld [vmem:[%s2684 + $0x49] sm:$0xff]
      %v7665 = vld [vmem:[%s2684 + $0x51] sm:$0xff]
      %v7666 = vld [vmem:[%s2684 + $0x61] sm:$0xff]
      %v7667 = vld [vmem:[%s2684 + $0x69] sm:$0xff]
      %v7668 = vld [vmem:[%s2684 + $0x79] sm:$0xff]
      %v7669 = vld [vmem:[%s2684 + $0x81] sm:$0xff]
      %v7670 = vld [vmem:[%s2684 + $0x91] sm:$0xff]
      %v7671 = vld [vmem:[%s2684 + $0x99] sm:$0xff]
      %v7672 = vld [vmem:[%s2684 + $0xa9] sm:$0xff]
      %v7673 = vld [vmem:[%s2684 + $0xb1] sm:$0xff]
      %v7674 = vld [vmem:[%s2684 + $0xc1] sm:$0xff]
      %v7675 = vld [vmem:[%s2684 + $0xc9] sm:$0xff]
      %v7676 = vld [vmem:[%s2684 + $0xd9] sm:$0xff]
      %v7677 = vld [vmem:[%s2684 + $0xe1] sm:$0xff]
      %v7678 = vld [vmem:[%s2684 + $0xf1] sm:$0xff]
      %v7679 = vld [vmem:[%s2684 + $0xf9] sm:$0xff]
      %v7680 = vld [vmem:[%s2684 + $0x109] sm:$0xff]
      %v7681 = vld [vmem:[%s2684 + $0x111] sm:$0xff]
      %v7682 = vld [vmem:[%s2684 + $0x121] sm:$0xff]
      %v7683 = vld [vmem:[%s2684 + $0x129] sm:$0xff]
      %v7684 = vld [vmem:[%s2684 + $0x139] sm:$0xff]
      %v7685 = vld [vmem:[%s2684 + $0x141] sm:$0xff]
      %v7686 = vld [vmem:[%s2684 + $0x151] sm:$0xff]
      %v7687 = vld [vmem:[%s2684 + $0x159] sm:$0xff]
      %v7688 = vld [vmem:[%s2684 + $0x169] sm:$0xff]
      %v7689 = vld [vmem:[%s2684 + $0x171] sm:$0xff]
      %v7690 = vpack.c.bf16 %v7658, %v7658
      %v7691 = vpack.c.bf16 %v7659, %v7659
      %v7692 = vpack.c.bf16 %v7660, %v7660
      %v7693 = vpack.c.bf16 %v7661, %v7661
      %v7694 = vpack.c.bf16 %v7662, %v7662
      %v7695 = vpack.c.bf16 %v7663, %v7663
      %v7696 = vpack.c.bf16 %v7664, %v7664
      %v7697 = vpack.c.bf16 %v7665, %v7665
      %v7698 = vpack.c.bf16 %v7666, %v7666
      %v7699 = vpack.c.bf16 %v7667, %v7667
      %v7700 = vpack.c.bf16 %v7668, %v7668
      %v7701 = vpack.c.bf16 %v7669, %v7669
      %v7702 = vpack.c.bf16 %v7670, %v7670
      %v7703 = vpack.c.bf16 %v7671, %v7671
      %v7704 = vpack.c.bf16 %v7672, %v7672
      %v7705 = vpack.c.bf16 %v7673, %v7673
      %v7706 = vpack.c.bf16 %v7674, %v7674
      %v7707 = vpack.c.bf16 %v7675, %v7675
      %v7708 = vpack.c.bf16 %v7676, %v7676
      %v7709 = vpack.c.bf16 %v7677, %v7677
      %v7710 = vpack.c.bf16 %v7678, %v7678
      %v7711 = vpack.c.bf16 %v7679, %v7679
      %v7712 = vpack.c.bf16 %v7680, %v7680
      %v7713 = vpack.c.bf16 %v7681, %v7681
      %v7714 = vpack.c.bf16 %v7682, %v7682
      %v7715 = vpack.c.bf16 %v7683, %v7683
      %v7716 = vpack.c.bf16 %v7684, %v7684
      %v7717 = vpack.c.bf16 %v7685, %v7685
      %v7718 = vpack.c.bf16 %v7686, %v7686
      %v7719 = vpack.c.bf16 %v7687, %v7687
      %v7720 = vpack.c.bf16 %v7688, %v7688
      %v7721 = vpack.c.bf16 %v7689, %v7689
      %v7722 = vld [vmem:[%s2684 + $0x2] sm:$0xff]
      %v7723 = vld [vmem:[%s2684 + $0xa] sm:$0xff]
      %v7724 = vld [vmem:[%s2684 + $0x1a] sm:$0xff]
      %v7725 = vld [vmem:[%s2684 + $0x22] sm:$0xff]
      %v7726 = vld [vmem:[%s2684 + $0x32] sm:$0xff]
      %v7727 = vld [vmem:[%s2684 + $0x3a] sm:$0xff]
      %v7728 = vld [vmem:[%s2684 + $0x4a] sm:$0xff]
      %v7729 = vld [vmem:[%s2684 + $0x52] sm:$0xff]
      %v7730 = vld [vmem:[%s2684 + $0x62] sm:$0xff]
      %v7731 = vld [vmem:[%s2684 + $0x6a] sm:$0xff]
      %v7732 = vld [vmem:[%s2684 + $0x7a] sm:$0xff]
      %v7733 = vld [vmem:[%s2684 + $0x82] sm:$0xff]
      %v7734 = vld [vmem:[%s2684 + $0x92] sm:$0xff]
      %v7735 = vld [vmem:[%s2684 + $0x9a] sm:$0xff]
      %v7736 = vld [vmem:[%s2684 + $0xaa] sm:$0xff]
      %v7737 = vld [vmem:[%s2684 + $0xb2] sm:$0xff]
      %v7738 = vld [vmem:[%s2684 + $0xc2] sm:$0xff]
      %v7739 = vld [vmem:[%s2684 + $0xca] sm:$0xff]
      %v7740 = vld [vmem:[%s2684 + $0xda] sm:$0xff]
      %v7741 = vld [vmem:[%s2684 + $0xe2] sm:$0xff]
      %v7742 = vld [vmem:[%s2684 + $0xf2] sm:$0xff]
      %v7743 = vld [vmem:[%s2684 + $0xfa] sm:$0xff]
      %v7744 = vld [vmem:[%s2684 + $0x10a] sm:$0xff]
      %v7745 = vld [vmem:[%s2684 + $0x112] sm:$0xff]
      %v7746 = vld [vmem:[%s2684 + $0x122] sm:$0xff]
      %v7747 = vld [vmem:[%s2684 + $0x12a] sm:$0xff]
      %v7748 = vld [vmem:[%s2684 + $0x13a] sm:$0xff]
      %v7749 = vld [vmem:[%s2684 + $0x142] sm:$0xff]
      %v7750 = vld [vmem:[%s2684 + $0x152] sm:$0xff]
      %v7751 = vld [vmem:[%s2684 + $0x15a] sm:$0xff]
      %v7752 = vld [vmem:[%s2684 + $0x16a] sm:$0xff]
      %v7753 = vld [vmem:[%s2684 + $0x172] sm:$0xff]
      %v7754 = vpack.c.bf16 %v7722, %v7722
      %v7755 = vpack.c.bf16 %v7723, %v7723
      %v7756 = vpack.c.bf16 %v7724, %v7724
      %v7757 = vpack.c.bf16 %v7725, %v7725
      %v7758 = vpack.c.bf16 %v7726, %v7726
      %v7759 = vpack.c.bf16 %v7727, %v7727
      %v7760 = vpack.c.bf16 %v7728, %v7728
      %v7761 = vpack.c.bf16 %v7729, %v7729
      %v7762 = vpack.c.bf16 %v7730, %v7730
      %v7763 = vpack.c.bf16 %v7731, %v7731
      %v7764 = vpack.c.bf16 %v7732, %v7732
      %v7765 = vpack.c.bf16 %v7733, %v7733
      %v7766 = vpack.c.bf16 %v7734, %v7734
      %v7767 = vpack.c.bf16 %v7735, %v7735
      %v7768 = vpack.c.bf16 %v7736, %v7736
      %v7769 = vpack.c.bf16 %v7737, %v7737
      %v7770 = vpack.c.bf16 %v7738, %v7738
      %v7771 = vpack.c.bf16 %v7739, %v7739
      %v7772 = vpack.c.bf16 %v7740, %v7740
      %v7773 = vpack.c.bf16 %v7741, %v7741
      %v7774 = vpack.c.bf16 %v7742, %v7742
      %v7775 = vpack.c.bf16 %v7743, %v7743
      %v7776 = vpack.c.bf16 %v7744, %v7744
      %v7777 = vpack.c.bf16 %v7745, %v7745
      %v7778 = vpack.c.bf16 %v7746, %v7746
      %v7779 = vpack.c.bf16 %v7747, %v7747
      %v7780 = vpack.c.bf16 %v7748, %v7748
      %v7781 = vpack.c.bf16 %v7749, %v7749
      %v7782 = vpack.c.bf16 %v7750, %v7750
      %v7783 = vpack.c.bf16 %v7751, %v7751
      %v7784 = vpack.c.bf16 %v7752, %v7752
      %v7785 = vpack.c.bf16 %v7753, %v7753
      %v7786 = vld [vmem:[%s3101] sm:$0xff]
      %v7787 = vld [vmem:[%s3101 + $0x8] sm:$0xff]
      %v7788 = vld [vmem:[%s3101 + $0x18] sm:$0xff]
      %v7789 = vld [vmem:[%s3101 + $0x20] sm:$0xff]
      %v7790 = vld [vmem:[%s3101 + $0x30] sm:$0xff]
      %v7791 = vld [vmem:[%s3101 + $0x38] sm:$0xff]
      %v7792 = vld [vmem:[%s3101 + $0x48] sm:$0xff]
      %v7793 = vld [vmem:[%s3101 + $0x50] sm:$0xff]
      %v7794 = vld [vmem:[%s3101 + $0x60] sm:$0xff]
      %v7795 = vld [vmem:[%s3101 + $0x68] sm:$0xff]
      %v7796 = vld [vmem:[%s3101 + $0x78] sm:$0xff]
      %v7797 = vld [vmem:[%s3101 + $0x80] sm:$0xff]
      %v7798 = vld [vmem:[%s3101 + $0x90] sm:$0xff]
      %v7799 = vld [vmem:[%s3101 + $0x98] sm:$0xff]
      %v7800 = vld [vmem:[%s3101 + $0xa8] sm:$0xff]
      %v7801 = vld [vmem:[%s3101 + $0xb0] sm:$0xff]
      %v7802 = vld [vmem:[%s3101 + $0xc0] sm:$0xff]
      %v7803 = vld [vmem:[%s3101 + $0xc8] sm:$0xff]
      %v7804 = vld [vmem:[%s3101 + $0xd8] sm:$0xff]
      %v7805 = vld [vmem:[%s3101 + $0xe0] sm:$0xff]
      %v7806 = vld [vmem:[%s3101 + $0xf0] sm:$0xff]
      %v7807 = vld [vmem:[%s3101 + $0xf8] sm:$0xff]
      %v7808 = vld [vmem:[%s3101 + $0x108] sm:$0xff]
      %v7809 = vld [vmem:[%s3101 + $0x110] sm:$0xff]
      %v7810 = vld [vmem:[%s3101 + $0x120] sm:$0xff]
      %v7811 = vld [vmem:[%s3101 + $0x128] sm:$0xff]
      %v7812 = vld [vmem:[%s3101 + $0x138] sm:$0xff]
      %v7813 = vld [vmem:[%s3101 + $0x140] sm:$0xff]
      %v7814 = vld [vmem:[%s3101 + $0x150] sm:$0xff]
      %v7815 = vld [vmem:[%s3101 + $0x158] sm:$0xff]
      %v7816 = vld [vmem:[%s3101 + $0x168] sm:$0xff]
      %v7817 = vld [vmem:[%s3101 + $0x170] sm:$0xff]
      %v7818 = vpack.c.bf16 %v7786, %v7786
      %v7819 = vpack.c.bf16 %v7787, %v7787
      %v7820 = vpack.c.bf16 %v7788, %v7788
      %v7821 = vpack.c.bf16 %v7789, %v7789
      %v7822 = vpack.c.bf16 %v7790, %v7790
      %v7823 = vpack.c.bf16 %v7791, %v7791
      %v7824 = vpack.c.bf16 %v7792, %v7792
      %v7825 = vpack.c.bf16 %v7793, %v7793
      %v7826 = vpack.c.bf16 %v7794, %v7794
      %v7827 = vpack.c.bf16 %v7795, %v7795
      %v7828 = vpack.c.bf16 %v7796, %v7796
      %v7829 = vpack.c.bf16 %v7797, %v7797
      %v7830 = vpack.c.bf16 %v7798, %v7798
      %v7831 = vpack.c.bf16 %v7799, %v7799
      %v7832 = vpack.c.bf16 %v7800, %v7800
      %v7833 = vpack.c.bf16 %v7801, %v7801
      %v7834 = vpack.c.bf16 %v7802, %v7802
      %v7835 = vpack.c.bf16 %v7803, %v7803
      %v7836 = vpack.c.bf16 %v7804, %v7804
      %v7837 = vpack.c.bf16 %v7805, %v7805
      %v7838 = vpack.c.bf16 %v7806, %v7806
      %v7839 = vpack.c.bf16 %v7807, %v7807
      %v7840 = vpack.c.bf16 %v7808, %v7808
      %v7841 = vpack.c.bf16 %v7809, %v7809
      %v7842 = vpack.c.bf16 %v7810, %v7810
      %v7843 = vpack.c.bf16 %v7811, %v7811
      %v7844 = vpack.c.bf16 %v7812, %v7812
      %v7845 = vpack.c.bf16 %v7813, %v7813
      %v7846 = vpack.c.bf16 %v7814, %v7814
      %v7847 = vpack.c.bf16 %v7815, %v7815
      %v7848 = vpack.c.bf16 %v7816, %v7816
      %v7849 = vpack.c.bf16 %v7817, %v7817
      %v7850 = vld [vmem:[%s3101 + $0x1] sm:$0xff]
      %v7851 = vld [vmem:[%s3101 + $0x9] sm:$0xff]
      %v7852 = vld [vmem:[%s3101 + $0x19] sm:$0xff]
      %v7853 = vld [vmem:[%s3101 + $0x21] sm:$0xff]
      %v7854 = vld [vmem:[%s3101 + $0x31] sm:$0xff]
      %v7855 = vld [vmem:[%s3101 + $0x39] sm:$0xff]
      %v7856 = vld [vmem:[%s3101 + $0x49] sm:$0xff]
      %v7857 = vld [vmem:[%s3101 + $0x51] sm:$0xff]
      %v7858 = vld [vmem:[%s3101 + $0x61] sm:$0xff]
      %v7859 = vld [vmem:[%s3101 + $0x69] sm:$0xff]
      %v7860 = vld [vmem:[%s3101 + $0x79] sm:$0xff]
      %v7861 = vld [vmem:[%s3101 + $0x81] sm:$0xff]
      %v7862 = vld [vmem:[%s3101 + $0x91] sm:$0xff]
      %v7863 = vld [vmem:[%s3101 + $0x99] sm:$0xff]
      %v7864 = vld [vmem:[%s3101 + $0xa9] sm:$0xff]
      %v7865 = vld [vmem:[%s3101 + $0xb1] sm:$0xff]
      %v7866 = vld [vmem:[%s3101 + $0xc1] sm:$0xff]
      %v7867 = vld [vmem:[%s3101 + $0xc9] sm:$0xff]
      %v7868 = vld [vmem:[%s3101 + $0xd9] sm:$0xff]
      %v7869 = vld [vmem:[%s3101 + $0xe1] sm:$0xff]
      %v7870 = vld [vmem:[%s3101 + $0xf1] sm:$0xff]
      %v7871 = vld [vmem:[%s3101 + $0xf9] sm:$0xff]
      %v7872 = vld [vmem:[%s3101 + $0x109] sm:$0xff]
      %v7873 = vld [vmem:[%s3101 + $0x111] sm:$0xff]
      %v7874 = vld [vmem:[%s3101 + $0x121] sm:$0xff]
      %v7875 = vld [vmem:[%s3101 + $0x129] sm:$0xff]
      %v7876 = vld [vmem:[%s3101 + $0x139] sm:$0xff]
      %v7877 = vld [vmem:[%s3101 + $0x141] sm:$0xff]
      %v7878 = vld [vmem:[%s3101 + $0x151] sm:$0xff]
      %v7879 = vld [vmem:[%s3101 + $0x159] sm:$0xff]
      %v7880 = vld [vmem:[%s3101 + $0x169] sm:$0xff]
      %v7881 = vld [vmem:[%s3101 + $0x171] sm:$0xff]
      %v7882 = vpack.c.bf16 %v7850, %v7850
      %v7883 = vpack.c.bf16 %v7851, %v7851
      %v7884 = vpack.c.bf16 %v7852, %v7852
      %v7885 = vpack.c.bf16 %v7853, %v7853
      %v7886 = vpack.c.bf16 %v7854, %v7854
      %v7887 = vpack.c.bf16 %v7855, %v7855
      %v7888 = vpack.c.bf16 %v7856, %v7856
      %v7889 = vpack.c.bf16 %v7857, %v7857
      %v7890 = vpack.c.bf16 %v7858, %v7858
      %v7891 = vpack.c.bf16 %v7859, %v7859
      %v7892 = vpack.c.bf16 %v7860, %v7860
      %v7893 = vpack.c.bf16 %v7861, %v7861
      %v7894 = vpack.c.bf16 %v7862, %v7862
      %v7895 = vpack.c.bf16 %v7863, %v7863
      %v7896 = vpack.c.bf16 %v7864, %v7864
      %v7897 = vpack.c.bf16 %v7865, %v7865
      %v7898 = vpack.c.bf16 %v7866, %v7866
      %v7899 = vpack.c.bf16 %v7867, %v7867
      %v7900 = vpack.c.bf16 %v7868, %v7868
      %v7901 = vpack.c.bf16 %v7869, %v7869
      %v7902 = vpack.c.bf16 %v7870, %v7870
      %v7903 = vpack.c.bf16 %v7871, %v7871
      %v7904 = vpack.c.bf16 %v7872, %v7872
      %v7905 = vpack.c.bf16 %v7873, %v7873
      %v7906 = vpack.c.bf16 %v7874, %v7874
      %v7907 = vpack.c.bf16 %v7875, %v7875
      %v7908 = vpack.c.bf16 %v7876, %v7876
      %v7909 = vpack.c.bf16 %v7877, %v7877
      %v7910 = vpack.c.bf16 %v7878, %v7878
      %v7911 = vpack.c.bf16 %v7879, %v7879
      %v7912 = vpack.c.bf16 %v7880, %v7880
      %v7913 = vpack.c.bf16 %v7881, %v7881
      %v7914 = vld [vmem:[%s3101 + $0x2] sm:$0xff]
      %v7915 = vld [vmem:[%s3101 + $0xa] sm:$0xff]
      %v7916 = vld [vmem:[%s3101 + $0x1a] sm:$0xff]
      %v7917 = vld [vmem:[%s3101 + $0x22] sm:$0xff]
      %v7918 = vld [vmem:[%s3101 + $0x32] sm:$0xff]
      %v7919 = vld [vmem:[%s3101 + $0x3a] sm:$0xff]
      %v7920 = vld [vmem:[%s3101 + $0x4a] sm:$0xff]
      %v7921 = vld [vmem:[%s3101 + $0x52] sm:$0xff]
      %v7922 = vld [vmem:[%s3101 + $0x62] sm:$0xff]
      %v7923 = vld [vmem:[%s3101 + $0x6a] sm:$0xff]
      %v7924 = vld [vmem:[%s3101 + $0x7a] sm:$0xff]
      %v7925 = vld [vmem:[%s3101 + $0x82] sm:$0xff]
      %v7926 = vld [vmem:[%s3101 + $0x92] sm:$0xff]
      %v7927 = vld [vmem:[%s3101 + $0x9a] sm:$0xff]
      %v7928 = vld [vmem:[%s3101 + $0xaa] sm:$0xff]
      %v7929 = vld [vmem:[%s3101 + $0xb2] sm:$0xff]
      %v7930 = vld [vmem:[%s3101 + $0xc2] sm:$0xff]
      %v7931 = vld [vmem:[%s3101 + $0xca] sm:$0xff]
      %v7932 = vld [vmem:[%s3101 + $0xda] sm:$0xff]
      %v7933 = vld [vmem:[%s3101 + $0xe2] sm:$0xff]
      %v7934 = vld [vmem:[%s3101 + $0xf2] sm:$0xff]
      %v7935 = vld [vmem:[%s3101 + $0xfa] sm:$0xff]
      %v7936 = vld [vmem:[%s3101 + $0x10a] sm:$0xff]
      %v7937 = vld [vmem:[%s3101 + $0x112] sm:$0xff]
      %v7938 = vld [vmem:[%s3101 + $0x122] sm:$0xff]
      %v7939 = vld [vmem:[%s3101 + $0x12a] sm:$0xff]
      %v7940 = vld [vmem:[%s3101 + $0x13a] sm:$0xff]
      %v7941 = vld [vmem:[%s3101 + $0x142] sm:$0xff]
      %v7942 = vld [vmem:[%s3101 + $0x152] sm:$0xff]
      %v7943 = vld [vmem:[%s3101 + $0x15a] sm:$0xff]
      %v7944 = vld [vmem:[%s3101 + $0x16a] sm:$0xff]
      %v7945 = vld [vmem:[%s3101 + $0x172] sm:$0xff]
      %v7946 = vpack.c.bf16 %v7914, %v7914
      %v7947 = vpack.c.bf16 %v7915, %v7915
      %v7948 = vpack.c.bf16 %v7916, %v7916
      %v7949 = vpack.c.bf16 %v7917, %v7917
      %v7950 = vpack.c.bf16 %v7918, %v7918
      %v7951 = vpack.c.bf16 %v7919, %v7919
      %v7952 = vpack.c.bf16 %v7920, %v7920
      %v7953 = vpack.c.bf16 %v7921, %v7921
      %v7954 = vpack.c.bf16 %v7922, %v7922
      %v7955 = vpack.c.bf16 %v7923, %v7923
      %v7956 = vpack.c.bf16 %v7924, %v7924
      %v7957 = vpack.c.bf16 %v7925, %v7925
      %v7958 = vpack.c.bf16 %v7926, %v7926
      %v7959 = vpack.c.bf16 %v7927, %v7927
      %v7960 = vpack.c.bf16 %v7928, %v7928
      %v7961 = vpack.c.bf16 %v7929, %v7929
      %v7962 = vpack.c.bf16 %v7930, %v7930
      %v7963 = vpack.c.bf16 %v7931, %v7931
      %v7964 = vpack.c.bf16 %v7932, %v7932
      %v7965 = vpack.c.bf16 %v7933, %v7933
      %v7966 = vpack.c.bf16 %v7934, %v7934
      %v7967 = vpack.c.bf16 %v7935, %v7935
      %v7968 = vpack.c.bf16 %v7936, %v7936
      %v7969 = vpack.c.bf16 %v7937, %v7937
      %v7970 = vpack.c.bf16 %v7938, %v7938
      %v7971 = vpack.c.bf16 %v7939, %v7939
      %v7972 = vpack.c.bf16 %v7940, %v7940
      %v7973 = vpack.c.bf16 %v7941, %v7941
      %v7974 = vpack.c.bf16 %v7942, %v7942
      %v7975 = vpack.c.bf16 %v7943, %v7943
      %v7976 = vpack.c.bf16 %v7944, %v7944
      %v7977 = vpack.c.bf16 %v7945, %v7945
      %v8010 = vunpack.c.l.b16 %v7434
      %v8011 = vunpack.c.l.b16 %v7435
      %v8012 = vunpack.c.l.b16 %v7436
      %v8013 = vunpack.c.l.b16 %v7437
      %v8014 = vunpack.c.l.b16 %v7438
      %v8015 = vunpack.c.l.b16 %v7439
      %v8016 = vunpack.c.l.b16 %v7440
      %v8017 = vunpack.c.l.b16 %v7441
      %v8018 = vunpack.c.l.b16 %v7442
      %v8019 = vunpack.c.l.b16 %v7443
      %v8020 = vunpack.c.l.b16 %v7444
      %v8021 = vunpack.c.l.b16 %v7445
      %v8022 = vunpack.c.l.b16 %v7446
      %v8023 = vunpack.c.l.b16 %v7447
      %v8024 = vunpack.c.l.b16 %v7448
      %v8025 = vunpack.c.l.b16 %v7449
      %v8026 = vunpack.c.l.b16 %v7450
      %v8027 = vunpack.c.l.b16 %v7451
      %v8028 = vunpack.c.l.b16 %v7452
      %v8029 = vunpack.c.l.b16 %v7453
      %v8030 = vunpack.c.l.b16 %v7454
      %v8031 = vunpack.c.l.b16 %v7455
      %v8032 = vunpack.c.l.b16 %v7456
      %v8033 = vunpack.c.l.b16 %v7457
      %v8034 = vunpack.c.l.b16 %v7458
      %v8035 = vunpack.c.l.b16 %v7459
      %v8036 = vunpack.c.l.b16 %v7460
      %v8037 = vunpack.c.l.b16 %v7461
      %v8038 = vunpack.c.l.b16 %v7462
      %v8039 = vunpack.c.l.b16 %v7463
      %v8040 = vunpack.c.l.b16 %v7464
      %v8041 = vunpack.c.l.b16 %v7465
      %v8042 = vpack.c.b16 %v8011, %v8010
      %v8043 = vpack.c.b16 %v8013, %v8012
      %v8044 = vpack.c.b16 %v8015, %v8014
      %v8045 = vpack.c.b16 %v8017, %v8016
      %v8046 = vpack.c.b16 %v8019, %v8018
      %v8047 = vpack.c.b16 %v8021, %v8020
      %v8048 = vpack.c.b16 %v8023, %v8022
      %v8049 = vpack.c.b16 %v8025, %v8024
      %v8050 = vpack.c.b16 %v8027, %v8026
      %v8051 = vpack.c.b16 %v8029, %v8028
      %v8052 = vpack.c.b16 %v8031, %v8030
      %v8053 = vpack.c.b16 %v8033, %v8032
      %v8054 = vpack.c.b16 %v8035, %v8034
      %v8055 = vpack.c.b16 %v8037, %v8036
      %v8056 = vpack.c.b16 %v8039, %v8038
      %v8057 = vpack.c.b16 %v8041, %v8040
      %v8090 = vunpack.c.l.b16 %v7498
      %v8091 = vunpack.c.l.b16 %v7499
      %v8092 = vunpack.c.l.b16 %v7500
      %v8093 = vunpack.c.l.b16 %v7501
      %v8094 = vunpack.c.l.b16 %v7502
      %v8095 = vunpack.c.l.b16 %v7503
      %v8096 = vunpack.c.l.b16 %v7504
      %v8097 = vunpack.c.l.b16 %v7505
      %v8098 = vunpack.c.l.b16 %v7506
      %v8099 = vunpack.c.l.b16 %v7507
      %v8100 = vunpack.c.l.b16 %v7508
      %v8101 = vunpack.c.l.b16 %v7509
      %v8102 = vunpack.c.l.b16 %v7510
      %v8103 = vunpack.c.l.b16 %v7511
      %v8104 = vunpack.c.l.b16 %v7512
      %v8105 = vunpack.c.l.b16 %v7513
      %v8106 = vunpack.c.l.b16 %v7514
      %v8107 = vunpack.c.l.b16 %v7515
      %v8108 = vunpack.c.l.b16 %v7516
      %v8109 = vunpack.c.l.b16 %v7517
      %v8110 = vunpack.c.l.b16 %v7518
      %v8111 = vunpack.c.l.b16 %v7519
      %v8112 = vunpack.c.l.b16 %v7520
      %v8113 = vunpack.c.l.b16 %v7521
      %v8114 = vunpack.c.l.b16 %v7522
      %v8115 = vunpack.c.l.b16 %v7523
      %v8116 = vunpack.c.l.b16 %v7524
      %v8117 = vunpack.c.l.b16 %v7525
      %v8118 = vunpack.c.l.b16 %v7526
      %v8119 = vunpack.c.l.b16 %v7527
      %v8120 = vunpack.c.l.b16 %v7528
      %v8121 = vunpack.c.l.b16 %v7529
      %v8122 = vpack.c.b16 %v8091, %v8090
      %v8123 = vpack.c.b16 %v8093, %v8092
      %v8124 = vpack.c.b16 %v8095, %v8094
      %v8125 = vpack.c.b16 %v8097, %v8096
      %v8126 = vpack.c.b16 %v8099, %v8098
      %v8127 = vpack.c.b16 %v8101, %v8100
      %v8128 = vpack.c.b16 %v8103, %v8102
      %v8129 = vpack.c.b16 %v8105, %v8104
      %v8130 = vpack.c.b16 %v8107, %v8106
      %v8131 = vpack.c.b16 %v8109, %v8108
      %v8132 = vpack.c.b16 %v8111, %v8110
      %v8133 = vpack.c.b16 %v8113, %v8112
      %v8134 = vpack.c.b16 %v8115, %v8114
      %v8135 = vpack.c.b16 %v8117, %v8116
      %v8136 = vpack.c.b16 %v8119, %v8118
      %v8137 = vpack.c.b16 %v8121, %v8120
      %8138 = vrot.lane.b32.xlu0 %v8122, 32
      %v8139 = vpop.permute.xlu0 %8138
      %8140 = vrot.lane.b32.xlu0 %v8123, 32
      %v8141 = vpop.permute.xlu0 %8140
      %8142 = vrot.lane.b32.xlu0 %v8124, 32
      %v8143 = vpop.permute.xlu0 %8142
      %8144 = vrot.lane.b32.xlu0 %v8125, 32
      %v8145 = vpop.permute.xlu0 %8144
      %8146 = vrot.lane.b32.xlu0 %v8126, 32
      %v8147 = vpop.permute.xlu0 %8146
      %8148 = vrot.lane.b32.xlu0 %v8127, 32
      %v8149 = vpop.permute.xlu0 %8148
      %8150 = vrot.lane.b32.xlu0 %v8128, 32
      %v8151 = vpop.permute.xlu0 %8150
      %8152 = vrot.lane.b32.xlu0 %v8129, 32
      %v8153 = vpop.permute.xlu0 %8152
      %8154 = vrot.lane.b32.xlu0 %v8130, 32
      %v8155 = vpop.permute.xlu0 %8154
      %8156 = vrot.lane.b32.xlu0 %v8131, 32
      %v8157 = vpop.permute.xlu0 %8156
      %8158 = vrot.lane.b32.xlu0 %v8132, 32
      %v8159 = vpop.permute.xlu0 %8158
      %8160 = vrot.lane.b32.xlu0 %v8133, 32
      %v8161 = vpop.permute.xlu0 %8160
      %8162 = vrot.lane.b32.xlu0 %v8134, 32
      %v8163 = vpop.permute.xlu0 %8162
      %8164 = vrot.lane.b32.xlu0 %v8135, 32
      %v8165 = vpop.permute.xlu0 %8164
      %8166 = vrot.lane.b32.xlu0 %v8136, 32
      %v8167 = vpop.permute.xlu0 %8166
      %8168 = vrot.lane.b32.xlu0 %v8137, 32
      %v8169 = vpop.permute.xlu0 %8168
      %v8202 = vunpack.c.l.b16 %v7562
      %v8203 = vunpack.c.l.b16 %v7563
      %v8204 = vunpack.c.l.b16 %v7564
      %v8205 = vunpack.c.l.b16 %v7565
      %v8206 = vunpack.c.l.b16 %v7566
      %v8207 = vunpack.c.l.b16 %v7567
      %v8208 = vunpack.c.l.b16 %v7568
      %v8209 = vunpack.c.l.b16 %v7569
      %v8210 = vunpack.c.l.b16 %v7570
      %v8211 = vunpack.c.l.b16 %v7571
      %v8212 = vunpack.c.l.b16 %v7572
      %v8213 = vunpack.c.l.b16 %v7573
      %v8214 = vunpack.c.l.b16 %v7574
      %v8215 = vunpack.c.l.b16 %v7575
      %v8216 = vunpack.c.l.b16 %v7576
      %v8217 = vunpack.c.l.b16 %v7577
      %v8218 = vunpack.c.l.b16 %v7578
      %v8219 = vunpack.c.l.b16 %v7579
      %v8220 = vunpack.c.l.b16 %v7580
      %v8221 = vunpack.c.l.b16 %v7581
      %v8222 = vunpack.c.l.b16 %v7582
      %v8223 = vunpack.c.l.b16 %v7583
      %v8224 = vunpack.c.l.b16 %v7584
      %v8225 = vunpack.c.l.b16 %v7585
      %v8226 = vunpack.c.l.b16 %v7586
      %v8227 = vunpack.c.l.b16 %v7587
      %v8228 = vunpack.c.l.b16 %v7588
      %v8229 = vunpack.c.l.b16 %v7589
      %v8230 = vunpack.c.l.b16 %v7590
      %v8231 = vunpack.c.l.b16 %v7591
      %v8232 = vunpack.c.l.b16 %v7592
      %v8233 = vunpack.c.l.b16 %v7593
      %v8234 = vpack.c.b16 %v8203, %v8202
      %v8235 = vpack.c.b16 %v8205, %v8204
      %v8236 = vpack.c.b16 %v8207, %v8206
      %v8237 = vpack.c.b16 %v8209, %v8208
      %v8238 = vpack.c.b16 %v8211, %v8210
      %v8239 = vpack.c.b16 %v8213, %v8212
      %v8240 = vpack.c.b16 %v8215, %v8214
      %v8241 = vpack.c.b16 %v8217, %v8216
      %v8242 = vpack.c.b16 %v8219, %v8218
      %v8243 = vpack.c.b16 %v8221, %v8220
      %v8244 = vpack.c.b16 %v8223, %v8222
      %v8245 = vpack.c.b16 %v8225, %v8224
      %v8246 = vpack.c.b16 %v8227, %v8226
      %v8247 = vpack.c.b16 %v8229, %v8228
      %v8248 = vpack.c.b16 %v8231, %v8230
      %v8249 = vpack.c.b16 %v8233, %v8232
      %8250 = vrot.lane.b32.xlu0 %v8234, 64
      %v8251 = vpop.permute.xlu0 %8250
      %8252 = vrot.lane.b32.xlu0 %v8235, 64
      %v8253 = vpop.permute.xlu0 %8252
      %8254 = vrot.lane.b32.xlu0 %v8236, 64
      %v8255 = vpop.permute.xlu0 %8254
      %8256 = vrot.lane.b32.xlu0 %v8237, 64
      %v8257 = vpop.permute.xlu0 %8256
      %8258 = vrot.lane.b32.xlu0 %v8238, 64
      %v8259 = vpop.permute.xlu0 %8258
      %8260 = vrot.lane.b32.xlu0 %v8239, 64
      %v8261 = vpop.permute.xlu0 %8260
      %8262 = vrot.lane.b32.xlu0 %v8240, 64
      %v8263 = vpop.permute.xlu0 %8262
      %8264 = vrot.lane.b32.xlu0 %v8241, 64
      %v8265 = vpop.permute.xlu0 %8264
      %8266 = vrot.lane.b32.xlu0 %v8242, 64
      %v8267 = vpop.permute.xlu0 %8266
      %8268 = vrot.lane.b32.xlu0 %v8243, 64
      %v8269 = vpop.permute.xlu0 %8268
      %8270 = vrot.lane.b32.xlu0 %v8244, 64
      %v8271 = vpop.permute.xlu0 %8270
      %8272 = vrot.lane.b32.xlu0 %v8245, 64
      %v8273 = vpop.permute.xlu0 %8272
      %8274 = vrot.lane.b32.xlu0 %v8246, 64
      %v8275 = vpop.permute.xlu0 %8274
      %8276 = vrot.lane.b32.xlu0 %v8247, 64
      %v8277 = vpop.permute.xlu0 %8276
      %8278 = vrot.lane.b32.xlu0 %v8248, 64
      %v8279 = vpop.permute.xlu0 %8278
      %8280 = vrot.lane.b32.xlu0 %v8249, 64
      %v8281 = vpop.permute.xlu0 %8280
      %v8314 = vunpack.c.l.b16 %v7626
      %v8315 = vunpack.c.l.b16 %v7627
      %v8316 = vunpack.c.l.b16 %v7628
      %v8317 = vunpack.c.l.b16 %v7629
      %v8318 = vunpack.c.l.b16 %v7630
      %v8319 = vunpack.c.l.b16 %v7631
      %v8320 = vunpack.c.l.b16 %v7632
      %v8321 = vunpack.c.l.b16 %v7633
      %v8322 = vunpack.c.l.b16 %v7634
      %v8323 = vunpack.c.l.b16 %v7635
      %v8324 = vunpack.c.l.b16 %v7636
      %v8325 = vunpack.c.l.b16 %v7637
      %v8326 = vunpack.c.l.b16 %v7638
      %v8327 = vunpack.c.l.b16 %v7639
      %v8328 = vunpack.c.l.b16 %v7640
      %v8329 = vunpack.c.l.b16 %v7641
      %v8330 = vunpack.c.l.b16 %v7642
      %v8331 = vunpack.c.l.b16 %v7643
      %v8332 = vunpack.c.l.b16 %v7644
      %v8333 = vunpack.c.l.b16 %v7645
      %v8334 = vunpack.c.l.b16 %v7646
      %v8335 = vunpack.c.l.b16 %v7647
      %v8336 = vunpack.c.l.b16 %v7648
      %v8337 = vunpack.c.l.b16 %v7649
      %v8338 = vunpack.c.l.b16 %v7650
      %v8339 = vunpack.c.l.b16 %v7651
      %v8340 = vunpack.c.l.b16 %v7652
      %v8341 = vunpack.c.l.b16 %v7653
      %v8342 = vunpack.c.l.b16 %v7654
      %v8343 = vunpack.c.l.b16 %v7655
      %v8344 = vunpack.c.l.b16 %v7656
      %v8345 = vunpack.c.l.b16 %v7657
      %v8346 = vpack.c.b16 %v8315, %v8314
      %v8347 = vpack.c.b16 %v8317, %v8316
      %v8348 = vpack.c.b16 %v8319, %v8318
      %v8349 = vpack.c.b16 %v8321, %v8320
      %v8350 = vpack.c.b16 %v8323, %v8322
      %v8351 = vpack.c.b16 %v8325, %v8324
      %v8352 = vpack.c.b16 %v8327, %v8326
      %v8353 = vpack.c.b16 %v8329, %v8328
      %v8354 = vpack.c.b16 %v8331, %v8330
      %v8355 = vpack.c.b16 %v8333, %v8332
      %v8356 = vpack.c.b16 %v8335, %v8334
      %v8357 = vpack.c.b16 %v8337, %v8336
      %v8358 = vpack.c.b16 %v8339, %v8338
      %v8359 = vpack.c.b16 %v8341, %v8340
      %v8360 = vpack.c.b16 %v8343, %v8342
      %v8361 = vpack.c.b16 %v8345, %v8344
      %8362 = vrot.lane.b32.xlu0 %v8346, 96
      %v8363 = vpop.permute.xlu0 %8362
      %8364 = vrot.lane.b32.xlu0 %v8347, 96
      %v8365 = vpop.permute.xlu0 %8364
      %8366 = vrot.lane.b32.xlu0 %v8348, 96
      %v8367 = vpop.permute.xlu0 %8366
      %8368 = vrot.lane.b32.xlu0 %v8349, 96
      %v8369 = vpop.permute.xlu0 %8368
      %8370 = vrot.lane.b32.xlu0 %v8350, 96
      %v8371 = vpop.permute.xlu0 %8370
      %8372 = vrot.lane.b32.xlu0 %v8351, 96
      %v8373 = vpop.permute.xlu0 %8372
      %8374 = vrot.lane.b32.xlu0 %v8352, 96
      %v8375 = vpop.permute.xlu0 %8374
      %8376 = vrot.lane.b32.xlu0 %v8353, 96
      %v8377 = vpop.permute.xlu0 %8376
      %8378 = vrot.lane.b32.xlu0 %v8354, 96
      %v8379 = vpop.permute.xlu0 %8378
      %8380 = vrot.lane.b32.xlu0 %v8355, 96
      %v8381 = vpop.permute.xlu0 %8380
      %8382 = vrot.lane.b32.xlu0 %v8356, 96
      %v8383 = vpop.permute.xlu0 %8382
      %8384 = vrot.lane.b32.xlu0 %v8357, 96
      %v8385 = vpop.permute.xlu0 %8384
      %8386 = vrot.lane.b32.xlu0 %v8358, 96
      %v8387 = vpop.permute.xlu0 %8386
      %8388 = vrot.lane.b32.xlu0 %v8359, 96
      %v8389 = vpop.permute.xlu0 %8388
      %8390 = vrot.lane.b32.xlu0 %v8360, 96
      %v8391 = vpop.permute.xlu0 %8390
      %8392 = vrot.lane.b32.xlu0 %v8361, 96
      %v8393 = vpop.permute.xlu0 %8392
      %v8426 = vunpack.c.l.b16 %v7690
      %v8427 = vunpack.c.l.b16 %v7691
      %v8428 = vunpack.c.l.b16 %v7692
      %v8429 = vunpack.c.l.b16 %v7693
      %v8430 = vunpack.c.l.b16 %v7694
      %v8431 = vunpack.c.l.b16 %v7695
      %v8432 = vunpack.c.l.b16 %v7696
      %v8433 = vunpack.c.l.b16 %v7697
      %v8434 = vunpack.c.l.b16 %v7698
      %v8435 = vunpack.c.l.b16 %v7699
      %v8436 = vunpack.c.l.b16 %v7700
      %v8437 = vunpack.c.l.b16 %v7701
      %v8438 = vunpack.c.l.b16 %v7702
      %v8439 = vunpack.c.l.b16 %v7703
      %v8440 = vunpack.c.l.b16 %v7704
      %v8441 = vunpack.c.l.b16 %v7705
      %v8442 = vunpack.c.l.b16 %v7706
      %v8443 = vunpack.c.l.b16 %v7707
      %v8444 = vunpack.c.l.b16 %v7708
      %v8445 = vunpack.c.l.b16 %v7709
      %v8446 = vunpack.c.l.b16 %v7710
      %v8447 = vunpack.c.l.b16 %v7711
      %v8448 = vunpack.c.l.b16 %v7712
      %v8449 = vunpack.c.l.b16 %v7713
      %v8450 = vunpack.c.l.b16 %v7714
      %v8451 = vunpack.c.l.b16 %v7715
      %v8452 = vunpack.c.l.b16 %v7716
      %v8453 = vunpack.c.l.b16 %v7717
      %v8454 = vunpack.c.l.b16 %v7718
      %v8455 = vunpack.c.l.b16 %v7719
      %v8456 = vunpack.c.l.b16 %v7720
      %v8457 = vunpack.c.l.b16 %v7721
      %v8458 = vpack.c.b16 %v8427, %v8426
      %v8459 = vpack.c.b16 %v8429, %v8428
      %v8460 = vpack.c.b16 %v8431, %v8430
      %v8461 = vpack.c.b16 %v8433, %v8432
      %v8462 = vpack.c.b16 %v8435, %v8434
      %v8463 = vpack.c.b16 %v8437, %v8436
      %v8464 = vpack.c.b16 %v8439, %v8438
      %v8465 = vpack.c.b16 %v8441, %v8440
      %v8466 = vpack.c.b16 %v8443, %v8442
      %v8467 = vpack.c.b16 %v8445, %v8444
      %v8468 = vpack.c.b16 %v8447, %v8446
      %v8469 = vpack.c.b16 %v8449, %v8448
      %v8470 = vpack.c.b16 %v8451, %v8450
      %v8471 = vpack.c.b16 %v8453, %v8452
      %v8472 = vpack.c.b16 %v8455, %v8454
      %v8473 = vpack.c.b16 %v8457, %v8456
      %v8506 = vunpack.c.l.b16 %v7754
      %v8507 = vunpack.c.l.b16 %v7755
      %v8508 = vunpack.c.l.b16 %v7756
      %v8509 = vunpack.c.l.b16 %v7757
      %v8510 = vunpack.c.l.b16 %v7758
      %v8511 = vunpack.c.l.b16 %v7759
      %v8512 = vunpack.c.l.b16 %v7760
      %v8513 = vunpack.c.l.b16 %v7761
      %v8514 = vunpack.c.l.b16 %v7762
      %v8515 = vunpack.c.l.b16 %v7763
      %v8516 = vunpack.c.l.b16 %v7764
      %v8517 = vunpack.c.l.b16 %v7765
      %v8518 = vunpack.c.l.b16 %v7766
      %v8519 = vunpack.c.l.b16 %v7767
      %v8520 = vunpack.c.l.b16 %v7768
      %v8521 = vunpack.c.l.b16 %v7769
      %v8522 = vunpack.c.l.b16 %v7770
      %v8523 = vunpack.c.l.b16 %v7771
      %v8524 = vunpack.c.l.b16 %v7772
      %v8525 = vunpack.c.l.b16 %v7773
      %v8526 = vunpack.c.l.b16 %v7774
      %v8527 = vunpack.c.l.b16 %v7775
      %v8528 = vunpack.c.l.b16 %v7776
      %v8529 = vunpack.c.l.b16 %v7777
      %v8530 = vunpack.c.l.b16 %v7778
      %v8531 = vunpack.c.l.b16 %v7779
      %v8532 = vunpack.c.l.b16 %v7780
      %v8533 = vunpack.c.l.b16 %v7781
      %v8534 = vunpack.c.l.b16 %v7782
      %v8535 = vunpack.c.l.b16 %v7783
      %v8536 = vunpack.c.l.b16 %v7784
      %v8537 = vunpack.c.l.b16 %v7785
      %v8538 = vpack.c.b16 %v8507, %v8506
      %v8539 = vpack.c.b16 %v8509, %v8508
      %v8540 = vpack.c.b16 %v8511, %v8510
      %v8541 = vpack.c.b16 %v8513, %v8512
      %v8542 = vpack.c.b16 %v8515, %v8514
      %v8543 = vpack.c.b16 %v8517, %v8516
      %v8544 = vpack.c.b16 %v8519, %v8518
      %v8545 = vpack.c.b16 %v8521, %v8520
      %v8546 = vpack.c.b16 %v8523, %v8522
      %v8547 = vpack.c.b16 %v8525, %v8524
      %v8548 = vpack.c.b16 %v8527, %v8526
      %v8549 = vpack.c.b16 %v8529, %v8528
      %v8550 = vpack.c.b16 %v8531, %v8530
      %v8551 = vpack.c.b16 %v8533, %v8532
      %v8552 = vpack.c.b16 %v8535, %v8534
      %v8553 = vpack.c.b16 %v8537, %v8536
      %8554 = vrot.lane.b32.xlu0 %v8538, 32
      %v8555 = vpop.permute.xlu0 %8554
      %8556 = vrot.lane.b32.xlu0 %v8539, 32
      %v8557 = vpop.permute.xlu0 %8556
      %8558 = vrot.lane.b32.xlu0 %v8540, 32
      %v8559 = vpop.permute.xlu0 %8558
      %8560 = vrot.lane.b32.xlu0 %v8541, 32
      %v8561 = vpop.permute.xlu0 %8560
      %8562 = vrot.lane.b32.xlu0 %v8542, 32
      %v8563 = vpop.permute.xlu0 %8562
      %8564 = vrot.lane.b32.xlu0 %v8543, 32
      %v8565 = vpop.permute.xlu0 %8564
      %8566 = vrot.lane.b32.xlu0 %v8544, 32
      %v8567 = vpop.permute.xlu0 %8566
      %8568 = vrot.lane.b32.xlu0 %v8545, 32
      %v8569 = vpop.permute.xlu0 %8568
      %8570 = vrot.lane.b32.xlu0 %v8546, 32
      %v8571 = vpop.permute.xlu0 %8570
      %8572 = vrot.lane.b32.xlu0 %v8547, 32
      %v8573 = vpop.permute.xlu0 %8572
      %8574 = vrot.lane.b32.xlu0 %v8548, 32
      %v8575 = vpop.permute.xlu0 %8574
      %8576 = vrot.lane.b32.xlu0 %v8549, 32
      %v8577 = vpop.permute.xlu0 %8576
      %8578 = vrot.lane.b32.xlu0 %v8550, 32
      %v8579 = vpop.permute.xlu0 %8578
      %8580 = vrot.lane.b32.xlu0 %v8551, 32
      %v8581 = vpop.permute.xlu0 %8580
      %8582 = vrot.lane.b32.xlu0 %v8552, 32
      %v8583 = vpop.permute.xlu0 %8582
      %8584 = vrot.lane.b32.xlu0 %v8553, 32
      %v8585 = vpop.permute.xlu0 %8584
      %v8618 = vunpack.c.l.b16 %v7818
      %v8619 = vunpack.c.l.b16 %v7819
      %v8620 = vunpack.c.l.b16 %v7820
      %v8621 = vunpack.c.l.b16 %v7821
      %v8622 = vunpack.c.l.b16 %v7822
      %v8623 = vunpack.c.l.b16 %v7823
      %v8624 = vunpack.c.l.b16 %v7824
      %v8625 = vunpack.c.l.b16 %v7825
      %v8626 = vunpack.c.l.b16 %v7826
      %v8627 = vunpack.c.l.b16 %v7827
      %v8628 = vunpack.c.l.b16 %v7828
      %v8629 = vunpack.c.l.b16 %v7829
      %v8630 = vunpack.c.l.b16 %v7830
      %v8631 = vunpack.c.l.b16 %v7831
      %v8632 = vunpack.c.l.b16 %v7832
      %v8633 = vunpack.c.l.b16 %v7833
      %v8634 = vunpack.c.l.b16 %v7834
      %v8635 = vunpack.c.l.b16 %v7835
      %v8636 = vunpack.c.l.b16 %v7836
      %v8637 = vunpack.c.l.b16 %v7837
      %v8638 = vunpack.c.l.b16 %v7838
      %v8639 = vunpack.c.l.b16 %v7839
      %v8640 = vunpack.c.l.b16 %v7840
      %v8641 = vunpack.c.l.b16 %v7841
      %v8642 = vunpack.c.l.b16 %v7842
      %v8643 = vunpack.c.l.b16 %v7843
      %v8644 = vunpack.c.l.b16 %v7844
      %v8645 = vunpack.c.l.b16 %v7845
      %v8646 = vunpack.c.l.b16 %v7846
      %v8647 = vunpack.c.l.b16 %v7847
      %v8648 = vunpack.c.l.b16 %v7848
      %v8649 = vunpack.c.l.b16 %v7849
      %v8650 = vpack.c.b16 %v8619, %v8618
      %v8651 = vpack.c.b16 %v8621, %v8620
      %v8652 = vpack.c.b16 %v8623, %v8622
      %v8653 = vpack.c.b16 %v8625, %v8624
      %v8654 = vpack.c.b16 %v8627, %v8626
      %v8655 = vpack.c.b16 %v8629, %v8628
      %v8656 = vpack.c.b16 %v8631, %v8630
      %v8657 = vpack.c.b16 %v8633, %v8632
      %v8658 = vpack.c.b16 %v8635, %v8634
      %v8659 = vpack.c.b16 %v8637, %v8636
      %v8660 = vpack.c.b16 %v8639, %v8638
      %v8661 = vpack.c.b16 %v8641, %v8640
      %v8662 = vpack.c.b16 %v8643, %v8642
      %v8663 = vpack.c.b16 %v8645, %v8644
      %v8664 = vpack.c.b16 %v8647, %v8646
      %v8665 = vpack.c.b16 %v8649, %v8648
      %8666 = vrot.lane.b32.xlu0 %v8650, 64
      %v8667 = vpop.permute.xlu0 %8666
      %8668 = vrot.lane.b32.xlu0 %v8651, 64
      %v8669 = vpop.permute.xlu0 %8668
      %8670 = vrot.lane.b32.xlu0 %v8652, 64
      %v8671 = vpop.permute.xlu0 %8670
      %8672 = vrot.lane.b32.xlu0 %v8653, 64
      %v8673 = vpop.permute.xlu0 %8672
      %8674 = vrot.lane.b32.xlu0 %v8654, 64
      %v8675 = vpop.permute.xlu0 %8674
      %8676 = vrot.lane.b32.xlu0 %v8655, 64
      %v8677 = vpop.permute.xlu0 %8676
      %8678 = vrot.lane.b32.xlu0 %v8656, 64
      %v8679 = vpop.permute.xlu0 %8678
      %8680 = vrot.lane.b32.xlu0 %v8657, 64
      %v8681 = vpop.permute.xlu0 %8680
      %8682 = vrot.lane.b32.xlu0 %v8658, 64
      %v8683 = vpop.permute.xlu0 %8682
      %8684 = vrot.lane.b32.xlu0 %v8659, 64
      %v8685 = vpop.permute.xlu0 %8684
      %8686 = vrot.lane.b32.xlu0 %v8660, 64
      %v8687 = vpop.permute.xlu0 %8686
      %8688 = vrot.lane.b32.xlu0 %v8661, 64
      %v8689 = vpop.permute.xlu0 %8688
      %8690 = vrot.lane.b32.xlu0 %v8662, 64
      %v8691 = vpop.permute.xlu0 %8690
      %8692 = vrot.lane.b32.xlu0 %v8663, 64
      %v8693 = vpop.permute.xlu0 %8692
      %8694 = vrot.lane.b32.xlu0 %v8664, 64
      %v8695 = vpop.permute.xlu0 %8694
      %8696 = vrot.lane.b32.xlu0 %v8665, 64
      %v8697 = vpop.permute.xlu0 %8696
      %v8730 = vunpack.c.l.b16 %v7882
      %v8731 = vunpack.c.l.b16 %v7883
      %v8732 = vunpack.c.l.b16 %v7884
      %v8733 = vunpack.c.l.b16 %v7885
      %v8734 = vunpack.c.l.b16 %v7886
      %v8735 = vunpack.c.l.b16 %v7887
      %v8736 = vunpack.c.l.b16 %v7888
      %v8737 = vunpack.c.l.b16 %v7889
      %v8738 = vunpack.c.l.b16 %v7890
      %v8739 = vunpack.c.l.b16 %v7891
      %v8740 = vunpack.c.l.b16 %v7892
      %v8741 = vunpack.c.l.b16 %v7893
      %v8742 = vunpack.c.l.b16 %v7894
      %v8743 = vunpack.c.l.b16 %v7895
      %v8744 = vunpack.c.l.b16 %v7896
      %v8745 = vunpack.c.l.b16 %v7897
      %v8746 = vunpack.c.l.b16 %v7898
      %v8747 = vunpack.c.l.b16 %v7899
      %v8748 = vunpack.c.l.b16 %v7900
      %v8749 = vunpack.c.l.b16 %v7901
      %v8750 = vunpack.c.l.b16 %v7902
      %v8751 = vunpack.c.l.b16 %v7903
      %v8752 = vunpack.c.l.b16 %v7904
      %v8753 = vunpack.c.l.b16 %v7905
      %v8754 = vunpack.c.l.b16 %v7906
      %v8755 = vunpack.c.l.b16 %v7907
      %v8756 = vunpack.c.l.b16 %v7908
      %v8757 = vunpack.c.l.b16 %v7909
      %v8758 = vunpack.c.l.b16 %v7910
      %v8759 = vunpack.c.l.b16 %v7911
      %v8760 = vunpack.c.l.b16 %v7912
      %v8761 = vunpack.c.l.b16 %v7913
      %v8762 = vpack.c.b16 %v8731, %v8730
      %v8763 = vpack.c.b16 %v8733, %v8732
      %v8764 = vpack.c.b16 %v8735, %v8734
      %v8765 = vpack.c.b16 %v8737, %v8736
      %v8766 = vpack.c.b16 %v8739, %v8738
      %v8767 = vpack.c.b16 %v8741, %v8740
      %v8768 = vpack.c.b16 %v8743, %v8742
      %v8769 = vpack.c.b16 %v8745, %v8744
      %v8770 = vpack.c.b16 %v8747, %v8746
      %v8771 = vpack.c.b16 %v8749, %v8748
      %v8772 = vpack.c.b16 %v8751, %v8750
      %v8773 = vpack.c.b16 %v8753, %v8752
      %v8774 = vpack.c.b16 %v8755, %v8754
      %v8775 = vpack.c.b16 %v8757, %v8756
      %v8776 = vpack.c.b16 %v8759, %v8758
      %v8777 = vpack.c.b16 %v8761, %v8760
      %8778 = vrot.lane.b32.xlu0 %v8762, 96
      %v8779 = vpop.permute.xlu0 %8778
      %8780 = vrot.lane.b32.xlu0 %v8763, 96
      %v8781 = vpop.permute.xlu0 %8780
      %8782 = vrot.lane.b32.xlu0 %v8764, 96
      %v8783 = vpop.permute.xlu0 %8782
      %8784 = vrot.lane.b32.xlu0 %v8765, 96
      %v8785 = vpop.permute.xlu0 %8784
      %8786 = vrot.lane.b32.xlu0 %v8766, 96
      %v8787 = vpop.permute.xlu0 %8786
      %8788 = vrot.lane.b32.xlu0 %v8767, 96
      %v8789 = vpop.permute.xlu0 %8788
      %8790 = vrot.lane.b32.xlu0 %v8768, 96
      %v8791 = vpop.permute.xlu0 %8790
      %8792 = vrot.lane.b32.xlu0 %v8769, 96
      %v8793 = vpop.permute.xlu0 %8792
      %8794 = vrot.lane.b32.xlu0 %v8770, 96
      %v8795 = vpop.permute.xlu0 %8794
      %8796 = vrot.lane.b32.xlu0 %v8771, 96
      %v8797 = vpop.permute.xlu0 %8796
      %8798 = vrot.lane.b32.xlu0 %v8772, 96
      %v8799 = vpop.permute.xlu0 %8798
      %8800 = vrot.lane.b32.xlu0 %v8773, 96
      %v8801 = vpop.permute.xlu0 %8800
      %8802 = vrot.lane.b32.xlu0 %v8774, 96
      %v8803 = vpop.permute.xlu0 %8802
      %8804 = vrot.lane.b32.xlu0 %v8775, 96
      %v8805 = vpop.permute.xlu0 %8804
      %8806 = vrot.lane.b32.xlu0 %v8776, 96
      %v8807 = vpop.permute.xlu0 %8806
      %8808 = vrot.lane.b32.xlu0 %v8777, 96
      %v8809 = vpop.permute.xlu0 %8808
      %v8842 = vunpack.c.l.b16 %v7946
      %v8843 = vunpack.c.l.b16 %v7947
      %v8844 = vunpack.c.l.b16 %v7948
      %v8845 = vunpack.c.l.b16 %v7949
      %v8846 = vunpack.c.l.b16 %v7950
      %v8847 = vunpack.c.l.b16 %v7951
      %v8848 = vunpack.c.l.b16 %v7952
      %v8849 = vunpack.c.l.b16 %v7953
      %v8850 = vunpack.c.l.b16 %v7954
      %v8851 = vunpack.c.l.b16 %v7955
      %v8852 = vunpack.c.l.b16 %v7956
      %v8853 = vunpack.c.l.b16 %v7957
      %v8854 = vunpack.c.l.b16 %v7958
      %v8855 = vunpack.c.l.b16 %v7959
      %v8856 = vunpack.c.l.b16 %v7960
      %v8857 = vunpack.c.l.b16 %v7961
      %v8858 = vunpack.c.l.b16 %v7962
      %v8859 = vunpack.c.l.b16 %v7963
      %v8860 = vunpack.c.l.b16 %v7964
      %v8861 = vunpack.c.l.b16 %v7965
      %v8862 = vunpack.c.l.b16 %v7966
      %v8863 = vunpack.c.l.b16 %v7967
      %v8864 = vunpack.c.l.b16 %v7968
      %v8865 = vunpack.c.l.b16 %v7969
      %v8866 = vunpack.c.l.b16 %v7970
      %v8867 = vunpack.c.l.b16 %v7971
      %v8868 = vunpack.c.l.b16 %v7972
      %v8869 = vunpack.c.l.b16 %v7973
      %v8870 = vunpack.c.l.b16 %v7974
      %v8871 = vunpack.c.l.b16 %v7975
      %v8872 = vunpack.c.l.b16 %v7976
      %v8873 = vunpack.c.l.b16 %v7977
      %v8874 = vpack.c.b16 %v8843, %v8842
      %v8875 = vpack.c.b16 %v8845, %v8844
      %v8876 = vpack.c.b16 %v8847, %v8846
      %v8877 = vpack.c.b16 %v8849, %v8848
      %v8878 = vpack.c.b16 %v8851, %v8850
      %v8879 = vpack.c.b16 %v8853, %v8852
      %v8880 = vpack.c.b16 %v8855, %v8854
      %v8881 = vpack.c.b16 %v8857, %v8856
      %v8882 = vpack.c.b16 %v8859, %v8858
      %v8883 = vpack.c.b16 %v8861, %v8860
      %v8884 = vpack.c.b16 %v8863, %v8862
      %v8885 = vpack.c.b16 %v8865, %v8864
      %v8886 = vpack.c.b16 %v8867, %v8866
      %v8887 = vpack.c.b16 %v8869, %v8868
      %v8888 = vpack.c.b16 %v8871, %v8870
      %v8889 = vpack.c.b16 %v8873, %v8872
      %v8892 = vsel %vm199, %v8042, %v8139
      %v8895 = vsel %vm199, %v8043, %v8141
      %v8898 = vsel %vm199, %v8044, %v8143
      %v8901 = vsel %vm199, %v8045, %v8145
      %v8904 = vsel %vm199, %v8046, %v8147
      %v8907 = vsel %vm199, %v8047, %v8149
      %v8910 = vsel %vm199, %v8048, %v8151
      %v8913 = vsel %vm199, %v8049, %v8153
      %v8916 = vsel %vm199, %v8050, %v8155
      %v8919 = vsel %vm199, %v8051, %v8157
      %v8922 = vsel %vm199, %v8052, %v8159
      %v8925 = vsel %vm199, %v8053, %v8161
      %v8928 = vsel %vm199, %v8054, %v8163
      %v8931 = vsel %vm199, %v8055, %v8165
      %v8934 = vsel %vm199, %v8056, %v8167
      %v8937 = vsel %vm199, %v8057, %v8169
      %v8939 = vsel %vm1911, %v8892, %v8251
      %v8941 = vsel %vm1911, %v8895, %v8253
      %v8943 = vsel %vm1911, %v8898, %v8255
      %v8945 = vsel %vm1911, %v8901, %v8257
      %v8947 = vsel %vm1911, %v8904, %v8259
      %v8949 = vsel %vm1911, %v8907, %v8261
      %v8951 = vsel %vm1911, %v8910, %v8263
      %v8953 = vsel %vm1911, %v8913, %v8265
      %v8955 = vsel %vm1911, %v8916, %v8267
      %v8957 = vsel %vm1911, %v8919, %v8269
      %v8959 = vsel %vm1911, %v8922, %v8271
      %v8961 = vsel %vm1911, %v8925, %v8273
      %v8963 = vsel %vm1911, %v8928, %v8275
      %v8965 = vsel %vm1911, %v8931, %v8277
      %v8967 = vsel %vm1911, %v8934, %v8279
      %v8969 = vsel %vm1911, %v8937, %v8281
      %v8971 = vsel %vm1944, %v8939, %v8363
      %v8974 = vsel %vm1944, %v8941, %v8365
      %v8977 = vsel %vm1944, %v8943, %v8367
      %v8980 = vsel %vm1944, %v8945, %v8369
      %v8983 = vsel %vm1944, %v8947, %v8371
      %v8986 = vsel %vm1944, %v8949, %v8373
      %v8989 = vsel %vm1944, %v8951, %v8375
      %v8992 = vsel %vm1944, %v8953, %v8377
      %v8995 = vsel %vm1944, %v8955, %v8379
      %v8998 = vsel %vm1944, %v8957, %v8381
      %v9001 = vsel %vm1944, %v8959, %v8383
      %v9004 = vsel %vm1944, %v8961, %v8385
      %v9007 = vsel %vm1944, %v8963, %v8387
      %v9010 = vsel %vm1944, %v8965, %v8389
      %v9013 = vsel %vm1944, %v8967, %v8391
      %v9016 = vsel %vm1944, %v8969, %v8393
      %v9020 = vsel %vm199, %v8458, %v8555
      %v9023 = vsel %vm199, %v8459, %v8557
      %v9026 = vsel %vm199, %v8460, %v8559
      %v9029 = vsel %vm199, %v8461, %v8561
      %v9032 = vsel %vm199, %v8462, %v8563
      %v9035 = vsel %vm199, %v8463, %v8565
      %v9038 = vsel %vm199, %v8464, %v8567
      %v9041 = vsel %vm199, %v8465, %v8569
      %v9044 = vsel %vm199, %v8466, %v8571
      %v9047 = vsel %vm199, %v8467, %v8573
      %v9050 = vsel %vm199, %v8468, %v8575
      %v9053 = vsel %vm199, %v8469, %v8577
      %v9056 = vsel %vm199, %v8470, %v8579
      %v9059 = vsel %vm199, %v8471, %v8581
      %v9062 = vsel %vm199, %v8472, %v8583
      %v9065 = vsel %vm199, %v8473, %v8585
      %v9067 = vsel %vm1911, %v9020, %v8667
      %v9069 = vsel %vm1911, %v9023, %v8669
      %v9071 = vsel %vm1911, %v9026, %v8671
      %v9073 = vsel %vm1911, %v9029, %v8673
      %v9075 = vsel %vm1911, %v9032, %v8675
      %v9077 = vsel %vm1911, %v9035, %v8677
      %v9079 = vsel %vm1911, %v9038, %v8679
      %v9081 = vsel %vm1911, %v9041, %v8681
      %v9083 = vsel %vm1911, %v9044, %v8683
      %v9085 = vsel %vm1911, %v9047, %v8685
      %v9087 = vsel %vm1911, %v9050, %v8687
      %v9089 = vsel %vm1911, %v9053, %v8689
      %v9091 = vsel %vm1911, %v9056, %v8691
      %v9093 = vsel %vm1911, %v9059, %v8693
      %v9095 = vsel %vm1911, %v9062, %v8695
      %v9097 = vsel %vm1911, %v9065, %v8697
      %v9099 = vsel %vm1944, %v9067, %v8779
      %v9102 = vsel %vm1944, %v9069, %v8781
      %v9105 = vsel %vm1944, %v9071, %v8783
      %v9108 = vsel %vm1944, %v9073, %v8785
      %v9111 = vsel %vm1944, %v9075, %v8787
      %v9114 = vsel %vm1944, %v9077, %v8789
      %v9117 = vsel %vm1944, %v9079, %v8791
      %v9120 = vsel %vm1944, %v9081, %v8793
      %v9123 = vsel %vm1944, %v9083, %v8795
      %v9126 = vsel %vm1944, %v9085, %v8797
      %v9129 = vsel %vm1944, %v9087, %v8799
      %v9132 = vsel %vm1944, %v9089, %v8801
      %v9135 = vsel %vm1944, %v9091, %v8803
      %v9138 = vsel %vm1944, %v9093, %v8805
      %v9141 = vsel %vm1944, %v9095, %v8807
      %v9144 = vsel %vm1944, %v9097, %v8809
      %s9146 = scalar_lea.vmem %s1, 432
      %v9147 = vld [vmem:[%s9146] sm:$0xf]
      %v9148 = vld [vmem:[%s9146 + $0x4] sm:$0xf]
      %v9149 = vld [vmem:[%s9146 + $0x8] sm:$0xf]
      %v9150 = vld [vmem:[%s9146 + $0xc] sm:$0xf]
      %v9151 = vld [vmem:[%s9146 + $0x10] sm:$0xf]
      %v9152 = vld [vmem:[%s9146 + $0x14] sm:$0xf]
      %v9153 = vld [vmem:[%s9146 + $0x18] sm:$0xf]
      %v9154 = vld [vmem:[%s9146 + $0x1c] sm:$0xf]
      %v9155 = vld [vmem:[%s9146 + $0x20] sm:$0xf]
      %v9156 = vld [vmem:[%s9146 + $0x24] sm:$0xf]
      %v9157 = vld [vmem:[%s9146 + $0x28] sm:$0xf]
      %v9158 = vld [vmem:[%s9146 + $0x2c] sm:$0xf]
      %v9159 = vld [vmem:[%s9146 + $0x30] sm:$0xf]
      %v9160 = vld [vmem:[%s9146 + $0x34] sm:$0xf]
      %v9161 = vld [vmem:[%s9146 + $0x38] sm:$0xf]
      %v9162 = vld [vmem:[%s9146 + $0x3c] sm:$0xf]
      %v9163 = vld [vmem:[%s9146 + $0x40] sm:$0xf]
      %v9164 = vld [vmem:[%s9146 + $0x44] sm:$0xf]
      %v9165 = vld [vmem:[%s9146 + $0x48] sm:$0xf]
      %v9166 = vld [vmem:[%s9146 + $0x4c] sm:$0xf]
      %v9167 = vld [vmem:[%s9146 + $0x50] sm:$0xf]
      %v9168 = vld [vmem:[%s9146 + $0x54] sm:$0xf]
      %v9169 = vld [vmem:[%s9146 + $0x58] sm:$0xf]
      %v9170 = vld [vmem:[%s9146 + $0x5c] sm:$0xf]
      %v9171 = vld [vmem:[%s9146 + $0x60] sm:$0xf]
      %v9172 = vld [vmem:[%s9146 + $0x64] sm:$0xf]
      %v9173 = vld [vmem:[%s9146 + $0x68] sm:$0xf]
      %v9174 = vld [vmem:[%s9146 + $0x6c] sm:$0xf]
      %v9175 = vld [vmem:[%s9146 + $0x70] sm:$0xf]
      %v9176 = vld [vmem:[%s9146 + $0x74] sm:$0xf]
      %v9177 = vld [vmem:[%s9146 + $0x78] sm:$0xf]
      %v9178 = vld [vmem:[%s9146 + $0x7c] sm:$0xf]
      %v9179 = vld [vmem:[%s9146 + $0x80] sm:$0xf]
      %v9180 = vld [vmem:[%s9146 + $0x84] sm:$0xf]
      %v9181 = vld [vmem:[%s9146 + $0x88] sm:$0xf]
      %v9182 = vld [vmem:[%s9146 + $0x8c] sm:$0xf]
      %v9219 = vunpack.c.l.b16 %v9147
      %v9220 = vunpack.c.l.b16 %v9148
      %v9221 = vunpack.c.l.b16 %v9149
      %v9222 = vunpack.c.l.b16 %v9150
      %v9223 = vunpack.c.l.b16 %v9151
      %v9224 = vunpack.c.l.b16 %v9152
      %v9225 = vunpack.c.l.b16 %v9153
      %v9226 = vunpack.c.l.b16 %v9154
      %v9227 = vunpack.c.l.b16 %v9155
      %v9228 = vunpack.c.l.b16 %v9156
      %v9229 = vunpack.c.l.b16 %v9157
      %v9230 = vunpack.c.l.b16 %v9158
      %v9231 = vunpack.c.l.b16 %v9159
      %v9232 = vunpack.c.l.b16 %v9160
      %v9233 = vunpack.c.l.b16 %v9161
      %v9234 = vunpack.c.l.b16 %v9162
      %v9235 = vunpack.c.l.b16 %v9163
      %v9236 = vunpack.c.l.b16 %v9164
      %v9237 = vunpack.c.l.b16 %v9165
      %v9238 = vunpack.c.l.b16 %v9166
      %v9239 = vunpack.c.l.b16 %v9167
      %v9240 = vunpack.c.l.b16 %v9168
      %v9241 = vunpack.c.l.b16 %v9169
      %v9242 = vunpack.c.l.b16 %v9170
      %v9243 = vunpack.c.l.b16 %v9171
      %v9244 = vunpack.c.l.b16 %v9172
      %v9245 = vunpack.c.l.b16 %v9173
      %v9246 = vunpack.c.l.b16 %v9174
      %v9247 = vunpack.c.l.b16 %v9175
      %v9248 = vunpack.c.l.b16 %v9176
      %v9249 = vunpack.c.l.b16 %v9177
      %v9250 = vunpack.c.l.b16 %v9178
      %v9251 = vunpack.c.l.b16 %v9179
      %v9252 = vunpack.c.l.b16 %v9180
      %v9253 = vunpack.c.l.b16 %v9181
      %v9254 = vunpack.c.l.b16 %v9182
      %v9255 = vpack.c.b16 %v9220, %v9219
      %v9256 = vpack.c.b16 %v9222, %v9221
      %v9257 = vpack.c.b16 %v9224, %v9223
      %v9258 = vpack.c.b16 %v9226, %v9225
      %v9259 = vpack.c.b16 %v9228, %v9227
      %v9260 = vpack.c.b16 %v9230, %v9229
      %v9261 = vpack.c.b16 %v9232, %v9231
      %v9262 = vpack.c.b16 %v9234, %v9233
      %v9263 = vpack.c.b16 %v9236, %v9235
      %v9264 = vpack.c.b16 %v9238, %v9237
      %v9265 = vpack.c.b16 %v9240, %v9239
      %v9266 = vpack.c.b16 %v9242, %v9241
      %v9267 = vpack.c.b16 %v9244, %v9243
      %v9268 = vpack.c.b16 %v9246, %v9245
      %v9269 = vpack.c.b16 %v9248, %v9247
      %v9270 = vpack.c.b16 %v9250, %v9249
      %v9271 = vpack.c.b16 %v9252, %v9251
      %v9272 = vpack.c.b16 %v9254, %v9253
      %v9292 = vsel %vm199, %v8874, 0
      %v9295 = vsel %vm199, %v8875, 0
      %v9298 = vsel %vm199, %v8876, 0
      %v9301 = vsel %vm199, %v8877, 0
      %v9304 = vsel %vm199, %v8878, 0
      %v9307 = vsel %vm199, %v8879, 0
      %v9310 = vsel %vm199, %v8880, 0
      %v9313 = vsel %vm199, %v8881, 0
      %v9316 = vsel %vm199, %v8882, 0
      %v9319 = vsel %vm199, %v8883, 0
      %v9322 = vsel %vm199, %v8884, 0
      %v9325 = vsel %vm199, %v8885, 0
      %v9328 = vsel %vm199, %v8886, 0
      %v9331 = vsel %vm199, %v8887, 0
      %v9334 = vsel %vm199, %v8888, 0
      %v9337 = vsel %vm199, %v8889, 0
      %9339 = vmatpush.bf16.msra.mxu0 %v9262
      %9340 = vmatpush.bf16.msra.mxu0 %v9261
      %9341 = vmatpush.bf16.msra.mxu0 %v9260
      %9342 = vmatpush.bf16.msra.mxu0 %v9259
      %9343 = vmatpush.bf16.msra.mxu0 %v9258
      %9344 = vmatpush.bf16.msra.mxu0 %v9257
      %9345 = vmatpush.bf16.msra.mxu0 %v9256
      %9346 = vmatpush.bf16.msra.mxu0 %v9255
      %9347 = vmatmul.bf16.gmra.mxu0 %v8971
      %v9348 = vpop.f32.mrf.mxu0
      %v9349 = vadd.f32 0.0, %v9348
      %v9350 = vpop.f32.mrf.mxu0
      %v9351 = vadd.f32 0.0, %v9350
      %9352 = vmatmul.bf16.gmra.mxu0 %v8974
      %v9353 = vpop.f32.mrf.mxu0
      %v9354 = vadd.f32 0.0, %v9353
      %v9355 = vpop.f32.mrf.mxu0
      %v9356 = vadd.f32 0.0, %v9355
      %9357 = vmatmul.bf16.gmra.mxu0 %v8977
      %v9358 = vpop.f32.mrf.mxu0
      %v9359 = vadd.f32 0.0, %v9358
      %v9360 = vpop.f32.mrf.mxu0
      %v9361 = vadd.f32 0.0, %v9360
      %9362 = vmatmul.bf16.gmra.mxu0 %v8980
      %v9363 = vpop.f32.mrf.mxu0
      %v9364 = vadd.f32 0.0, %v9363
      %v9365 = vpop.f32.mrf.mxu0
      %v9366 = vadd.f32 0.0, %v9365
      %9367 = vmatmul.bf16.gmra.mxu0 %v8983
      %v9368 = vpop.f32.mrf.mxu0
      %v9369 = vadd.f32 0.0, %v9368
      %v9370 = vpop.f32.mrf.mxu0
      %v9371 = vadd.f32 0.0, %v9370
      %9372 = vmatmul.bf16.gmra.mxu0 %v8986
      %v9373 = vpop.f32.mrf.mxu0
      %v9374 = vadd.f32 0.0, %v9373
      %v9375 = vpop.f32.mrf.mxu0
      %v9376 = vadd.f32 0.0, %v9375
      %9377 = vmatmul.bf16.gmra.mxu0 %v8989
      %v9378 = vpop.f32.mrf.mxu0
      %v9379 = vadd.f32 0.0, %v9378
      %v9380 = vpop.f32.mrf.mxu0
      %v9381 = vadd.f32 0.0, %v9380
      %9382 = vmatmul.bf16.gmra.mxu0 %v8992
      %v9383 = vpop.f32.mrf.mxu0
      %v9384 = vadd.f32 0.0, %v9383
      %v9385 = vpop.f32.mrf.mxu0
      %v9386 = vadd.f32 0.0, %v9385
      %9387 = vmatmul.bf16.gmra.mxu0 %v8995
      %v9388 = vpop.f32.mrf.mxu0
      %v9389 = vadd.f32 0.0, %v9388
      %v9390 = vpop.f32.mrf.mxu0
      %v9391 = vadd.f32 0.0, %v9390
      %9392 = vmatmul.bf16.gmra.mxu0 %v8998
      %v9393 = vpop.f32.mrf.mxu0
      %v9394 = vadd.f32 0.0, %v9393
      %v9395 = vpop.f32.mrf.mxu0
      %v9396 = vadd.f32 0.0, %v9395
      %9397 = vmatmul.bf16.gmra.mxu0 %v9001
      %v9398 = vpop.f32.mrf.mxu0
      %v9399 = vadd.f32 0.0, %v9398
      %v9400 = vpop.f32.mrf.mxu0
      %v9401 = vadd.f32 0.0, %v9400
      %9402 = vmatmul.bf16.gmra.mxu0 %v9004
      %v9403 = vpop.f32.mrf.mxu0
      %v9404 = vadd.f32 0.0, %v9403
      %v9405 = vpop.f32.mrf.mxu0
      %v9406 = vadd.f32 0.0, %v9405
      %9407 = vmatmul.bf16.gmra.mxu0 %v9007
      %v9408 = vpop.f32.mrf.mxu0
      %v9409 = vadd.f32 0.0, %v9408
      %v9410 = vpop.f32.mrf.mxu0
      %v9411 = vadd.f32 0.0, %v9410
      %9412 = vmatmul.bf16.gmra.mxu0 %v9010
      %v9413 = vpop.f32.mrf.mxu0
      %v9414 = vadd.f32 0.0, %v9413
      %v9415 = vpop.f32.mrf.mxu0
      %v9416 = vadd.f32 0.0, %v9415
      %9417 = vmatmul.bf16.gmra.mxu0 %v9013
      %v9418 = vpop.f32.mrf.mxu0
      %v9419 = vadd.f32 0.0, %v9418
      %v9420 = vpop.f32.mrf.mxu0
      %v9421 = vadd.f32 0.0, %v9420
      %9422 = vmatmul.bf16.gmra.mxu0 %v9016
      %v9423 = vpop.f32.mrf.mxu0
      %v9424 = vadd.f32 0.0, %v9423
      %v9425 = vpop.f32.mrf.mxu0
      %v9426 = vadd.f32 0.0, %v9425
      %9427 = vdwg.mxu0
      %9428 = vmatpush.bf16.msra.mxu0 %v9270
      %9429 = vmatpush.bf16.msra.mxu0 %v9269
      %9430 = vmatpush.bf16.msra.mxu0 %v9268
      %9431 = vmatpush.bf16.msra.mxu0 %v9267
      %9432 = vmatpush.bf16.msra.mxu0 %v9266
      %9433 = vmatpush.bf16.msra.mxu0 %v9265
      %9434 = vmatpush.bf16.msra.mxu0 %v9264
      %9435 = vmatpush.bf16.msra.mxu0 %v9263
      %9436 = vmatmul.bf16.gmra.mxu0 %v9099
      %v9437 = vpop.f32.mrf.mxu0
      %v9438 = vadd.f32 %v9349, %v9437
      %v9439 = vpop.f32.mrf.mxu0
      %v9440 = vadd.f32 %v9351, %v9439
      %9441 = vmatmul.bf16.gmra.mxu0 %v9102
      %v9442 = vpop.f32.mrf.mxu0
      %v9443 = vadd.f32 %v9354, %v9442
      %v9444 = vpop.f32.mrf.mxu0
      %v9445 = vadd.f32 %v9356, %v9444
      %9446 = vmatmul.bf16.gmra.mxu0 %v9105
      %v9447 = vpop.f32.mrf.mxu0
      %v9448 = vadd.f32 %v9359, %v9447
      %v9449 = vpop.f32.mrf.mxu0
      %v9450 = vadd.f32 %v9361, %v9449
      %9451 = vmatmul.bf16.gmra.mxu0 %v9108
      %v9452 = vpop.f32.mrf.mxu0
      %v9453 = vadd.f32 %v9364, %v9452
      %v9454 = vpop.f32.mrf.mxu0
      %v9455 = vadd.f32 %v9366, %v9454
      %9456 = vmatmul.bf16.gmra.mxu0 %v9111
      %v9457 = vpop.f32.mrf.mxu0
      %v9458 = vadd.f32 %v9369, %v9457
      %v9459 = vpop.f32.mrf.mxu0
      %v9460 = vadd.f32 %v9371, %v9459
      %9461 = vmatmul.bf16.gmra.mxu0 %v9114
      %v9462 = vpop.f32.mrf.mxu0
      %v9463 = vadd.f32 %v9374, %v9462
      %v9464 = vpop.f32.mrf.mxu0
      %v9465 = vadd.f32 %v9376, %v9464
      %9466 = vmatmul.bf16.gmra.mxu0 %v9117
      %v9467 = vpop.f32.mrf.mxu0
      %v9468 = vadd.f32 %v9379, %v9467
      %v9469 = vpop.f32.mrf.mxu0
      %v9470 = vadd.f32 %v9381, %v9469
      %9471 = vmatmul.bf16.gmra.mxu0 %v9120
      %v9472 = vpop.f32.mrf.mxu0
      %v9473 = vadd.f32 %v9384, %v9472
      %v9474 = vpop.f32.mrf.mxu0
      %v9475 = vadd.f32 %v9386, %v9474
      %9476 = vmatmul.bf16.gmra.mxu0 %v9123
      %v9477 = vpop.f32.mrf.mxu0
      %v9478 = vadd.f32 %v9389, %v9477
      %v9479 = vpop.f32.mrf.mxu0
      %v9480 = vadd.f32 %v9391, %v9479
      %9481 = vmatmul.bf16.gmra.mxu0 %v9126
      %v9482 = vpop.f32.mrf.mxu0
      %v9483 = vadd.f32 %v9394, %v9482
      %v9484 = vpop.f32.mrf.mxu0
      %v9485 = vadd.f32 %v9396, %v9484
      %9486 = vmatmul.bf16.gmra.mxu0 %v9129
      %v9487 = vpop.f32.mrf.mxu0
      %v9488 = vadd.f32 %v9399, %v9487
      %v9489 = vpop.f32.mrf.mxu0
      %v9490 = vadd.f32 %v9401, %v9489
      %9491 = vmatmul.bf16.gmra.mxu0 %v9132
      %v9492 = vpop.f32.mrf.mxu0
      %v9493 = vadd.f32 %v9404, %v9492
      %v9494 = vpop.f32.mrf.mxu0
      %v9495 = vadd.f32 %v9406, %v9494
      %9496 = vmatmul.bf16.gmra.mxu0 %v9135
      %v9497 = vpop.f32.mrf.mxu0
      %v9498 = vadd.f32 %v9409, %v9497
      %v9499 = vpop.f32.mrf.mxu0
      %v9500 = vadd.f32 %v9411, %v9499
      %9501 = vmatmul.bf16.gmra.mxu0 %v9138
      %v9502 = vpop.f32.mrf.mxu0
      %v9503 = vadd.f32 %v9414, %v9502
      %v9504 = vpop.f32.mrf.mxu0
      %v9505 = vadd.f32 %v9416, %v9504
      %9506 = vmatmul.bf16.gmra.mxu0 %v9141
      %v9507 = vpop.f32.mrf.mxu0
      %v9508 = vadd.f32 %v9419, %v9507
      %v9509 = vpop.f32.mrf.mxu0
      %v9510 = vadd.f32 %v9421, %v9509
      %9511 = vmatmul.bf16.gmra.mxu0 %v9144
      %v9512 = vpop.f32.mrf.mxu0
      %v9513 = vadd.f32 %v9424, %v9512
      %v9514 = vpop.f32.mrf.mxu0
      %v9515 = vadd.f32 %v9426, %v9514
      %9516 = vdwg.mxu0
      %9517 = vmatpush.bf16.msra.mxu0 0
      %9518 = vmatpush.bf16.msra.mxu0 0
      %9519 = vmatpush.bf16.msra.mxu0 0
      %9520 = vmatpush.bf16.msra.mxu0 0
      %9521 = vmatpush.bf16.msra.mxu0 0
      %9522 = vmatpush.bf16.msra.mxu0 0
      %9523 = vmatpush.bf16.msra.mxu0 %v9272
      %9524 = vmatpush.bf16.msra.mxu0 %v9271
      %9525 = vmatmul.bf16.gmra.mxu0 %v9292
      %v9526 = vpop.f32.mrf.mxu0
      %v9527 = vadd.f32 %v9438, %v9526
      %v9528 = vpop.f32.mrf.mxu0
      %v9529 = vadd.f32 %v9440, %v9528
      %9530 = vmatmul.bf16.gmra.mxu0 %v9295
      %v9531 = vpop.f32.mrf.mxu0
      %v9532 = vadd.f32 %v9443, %v9531
      %v9533 = vpop.f32.mrf.mxu0
      %v9534 = vadd.f32 %v9445, %v9533
      %9535 = vmatmul.bf16.gmra.mxu0 %v9298
      %v9536 = vpop.f32.mrf.mxu0
      %v9537 = vadd.f32 %v9448, %v9536
      %v9538 = vpop.f32.mrf.mxu0
      %v9539 = vadd.f32 %v9450, %v9538
      %9540 = vmatmul.bf16.gmra.mxu0 %v9301
      %v9541 = vpop.f32.mrf.mxu0
      %v9542 = vadd.f32 %v9453, %v9541
      %v9543 = vpop.f32.mrf.mxu0
      %v9544 = vadd.f32 %v9455, %v9543
      %9545 = vmatmul.bf16.gmra.mxu0 %v9304
      %v9546 = vpop.f32.mrf.mxu0
      %v9547 = vadd.f32 %v9458, %v9546
      %v9548 = vpop.f32.mrf.mxu0
      %v9549 = vadd.f32 %v9460, %v9548
      %9550 = vmatmul.bf16.gmra.mxu0 %v9307
      %v9551 = vpop.f32.mrf.mxu0
      %v9552 = vadd.f32 %v9463, %v9551
      %v9553 = vpop.f32.mrf.mxu0
      %v9554 = vadd.f32 %v9465, %v9553
      %9555 = vmatmul.bf16.gmra.mxu0 %v9310
      %v9556 = vpop.f32.mrf.mxu0
      %v9557 = vadd.f32 %v9468, %v9556
      %v9558 = vpop.f32.mrf.mxu0
      %v9559 = vadd.f32 %v9470, %v9558
      %9560 = vmatmul.bf16.gmra.mxu0 %v9313
      %v9561 = vpop.f32.mrf.mxu0
      %v9562 = vadd.f32 %v9473, %v9561
      %v9563 = vpop.f32.mrf.mxu0
      %v9564 = vadd.f32 %v9475, %v9563
      %9565 = vmatmul.bf16.gmra.mxu0 %v9316
      %v9566 = vpop.f32.mrf.mxu0
      %v9567 = vadd.f32 %v9478, %v9566
      %v9568 = vpop.f32.mrf.mxu0
      %v9569 = vadd.f32 %v9480, %v9568
      %9570 = vmatmul.bf16.gmra.mxu0 %v9319
      %v9571 = vpop.f32.mrf.mxu0
      %v9572 = vadd.f32 %v9483, %v9571
      %v9573 = vpop.f32.mrf.mxu0
      %v9574 = vadd.f32 %v9485, %v9573
      %9575 = vmatmul.bf16.gmra.mxu0 %v9322
      %v9576 = vpop.f32.mrf.mxu0
      %v9577 = vadd.f32 %v9488, %v9576
      %v9578 = vpop.f32.mrf.mxu0
      %v9579 = vadd.f32 %v9490, %v9578
      %9580 = vmatmul.bf16.gmra.mxu0 %v9325
      %v9581 = vpop.f32.mrf.mxu0
      %v9582 = vadd.f32 %v9493, %v9581
      %v9583 = vpop.f32.mrf.mxu0
      %v9584 = vadd.f32 %v9495, %v9583
      %9585 = vmatmul.bf16.gmra.mxu0 %v9328
      %v9586 = vpop.f32.mrf.mxu0
      %v9587 = vadd.f32 %v9498, %v9586
      %v9588 = vpop.f32.mrf.mxu0
      %v9589 = vadd.f32 %v9500, %v9588
      %9590 = vmatmul.bf16.gmra.mxu0 %v9331
      %v9591 = vpop.f32.mrf.mxu0
      %v9592 = vadd.f32 %v9503, %v9591
      %v9593 = vpop.f32.mrf.mxu0
      %v9594 = vadd.f32 %v9505, %v9593
      %9595 = vmatmul.bf16.gmra.mxu0 %v9334
      %v9596 = vpop.f32.mrf.mxu0
      %v9597 = vadd.f32 %v9508, %v9596
      %v9598 = vpop.f32.mrf.mxu0
      %v9599 = vadd.f32 %v9510, %v9598
      %9600 = vmatmul.bf16.gmra.mxu0 %v9337
      %v9601 = vpop.f32.mrf.mxu0
      %v9602 = vadd.f32 %v9513, %v9601
      %v9603 = vpop.f32.mrf.mxu0
      %v9604 = vadd.f32 %v9515, %v9603
      %9605 = vdwg.mxu0
      %s9606 = scalar_lea.vmem %s2, 3
      %v9607 = vld [vmem:[%s9606] sm:$0x1]
      %v9609 = vperm.slane %v9607, 0
      %v9611 = vmul.f32 %v9527, %v9609
      %v9612 = vmul.f32 %v9529, %v9609
      %v9613 = vmul.f32 %v9532, %v9609
      %v9614 = vmul.f32 %v9534, %v9609
      %v9615 = vmul.f32 %v9537, %v9609
      %v9616 = vmul.f32 %v9539, %v9609
      %v9617 = vmul.f32 %v9542, %v9609
      %v9618 = vmul.f32 %v9544, %v9609
      %v9619 = vmul.f32 %v9547, %v9609
      %v9620 = vmul.f32 %v9549, %v9609
      %v9621 = vmul.f32 %v9552, %v9609
      %v9622 = vmul.f32 %v9554, %v9609
      %v9623 = vmul.f32 %v9557, %v9609
      %v9624 = vmul.f32 %v9559, %v9609
      %v9625 = vmul.f32 %v9562, %v9609
      %v9626 = vmul.f32 %v9564, %v9609
      %v9627 = vmul.f32 %v9567, %v9609
      %v9628 = vmul.f32 %v9569, %v9609
      %v9629 = vmul.f32 %v9572, %v9609
      %v9630 = vmul.f32 %v9574, %v9609
      %v9631 = vmul.f32 %v9577, %v9609
      %v9632 = vmul.f32 %v9579, %v9609
      %v9633 = vmul.f32 %v9582, %v9609
      %v9634 = vmul.f32 %v9584, %v9609
      %v9635 = vmul.f32 %v9587, %v9609
      %v9636 = vmul.f32 %v9589, %v9609
      %v9637 = vmul.f32 %v9592, %v9609
      %v9638 = vmul.f32 %v9594, %v9609
      %v9639 = vmul.f32 %v9597, %v9609
      %v9640 = vmul.f32 %v9599, %v9609
      %v9641 = vmul.f32 %v9602, %v9609
      %v9642 = vmul.f32 %v9604, %v9609
      %s9643 = scalar_lea.vmem %s3, 3
      %v9644 = vld [vmem:[%s9643] sm:$0x1]
      %v9646 = vperm.slane %v9644, 0
      %v9648 = vadd.f32 %v9611, %v9646
      %v9649 = vadd.f32 %v9612, %v9646
      %v9650 = vadd.f32 %v9613, %v9646
      %v9651 = vadd.f32 %v9614, %v9646
      %v9652 = vadd.f32 %v9615, %v9646
      %v9653 = vadd.f32 %v9616, %v9646
      %v9654 = vadd.f32 %v9617, %v9646
      %v9655 = vadd.f32 %v9618, %v9646
      %v9656 = vadd.f32 %v9619, %v9646
      %v9657 = vadd.f32 %v9620, %v9646
      %v9658 = vadd.f32 %v9621, %v9646
      %v9659 = vadd.f32 %v9622, %v9646
      %v9660 = vadd.f32 %v9623, %v9646
      %v9661 = vadd.f32 %v9624, %v9646
      %v9662 = vadd.f32 %v9625, %v9646
      %v9663 = vadd.f32 %v9626, %v9646
      %v9664 = vadd.f32 %v9627, %v9646
      %v9665 = vadd.f32 %v9628, %v9646
      %v9666 = vadd.f32 %v9629, %v9646
      %v9667 = vadd.f32 %v9630, %v9646
      %v9668 = vadd.f32 %v9631, %v9646
      %v9669 = vadd.f32 %v9632, %v9646
      %v9670 = vadd.f32 %v9633, %v9646
      %v9671 = vadd.f32 %v9634, %v9646
      %v9672 = vadd.f32 %v9635, %v9646
      %v9673 = vadd.f32 %v9636, %v9646
      %v9674 = vadd.f32 %v9637, %v9646
      %v9675 = vadd.f32 %v9638, %v9646
      %v9676 = vadd.f32 %v9639, %v9646
      %v9677 = vadd.f32 %v9640, %v9646
      %v9678 = vadd.f32 %v9641, %v9646
      %v9679 = vadd.f32 %v9642, %v9646
      %9680 = vst.msk [vmem:[%s197] sm:$0xff] %vm199, %v9648
      %9681 = vst.msk [vmem:[%s197 + $0x8] sm:$0xff] %vm199, %v9649
      %9682 = vst.msk [vmem:[%s197 + $0x10] sm:$0xff] %vm199, %v9650
      %9683 = vst.msk [vmem:[%s197 + $0x18] sm:$0xff] %vm199, %v9651
      %9684 = vst.msk [vmem:[%s197 + $0x20] sm:$0xff] %vm199, %v9652
      %9685 = vst.msk [vmem:[%s197 + $0x28] sm:$0xff] %vm199, %v9653
      %9686 = vst.msk [vmem:[%s197 + $0x30] sm:$0xff] %vm199, %v9654
      %9687 = vst.msk [vmem:[%s197 + $0x38] sm:$0xff] %vm199, %v9655
      %9688 = vst.msk [vmem:[%s197 + $0x40] sm:$0xff] %vm199, %v9656
      %9689 = vst.msk [vmem:[%s197 + $0x48] sm:$0xff] %vm199, %v9657
      %9690 = vst.msk [vmem:[%s197 + $0x50] sm:$0xff] %vm199, %v9658
      %9691 = vst.msk [vmem:[%s197 + $0x58] sm:$0xff] %vm199, %v9659
      %9692 = vst.msk [vmem:[%s197 + $0x60] sm:$0xff] %vm199, %v9660
      %9693 = vst.msk [vmem:[%s197 + $0x68] sm:$0xff] %vm199, %v9661
      %9694 = vst.msk [vmem:[%s197 + $0x70] sm:$0xff] %vm199, %v9662
      %9695 = vst.msk [vmem:[%s197 + $0x78] sm:$0xff] %vm199, %v9663
      %9696 = vst.msk [vmem:[%s197 + $0x80] sm:$0xff] %vm199, %v9664
      %9697 = vst.msk [vmem:[%s197 + $0x88] sm:$0xff] %vm199, %v9665
      %9698 = vst.msk [vmem:[%s197 + $0x90] sm:$0xff] %vm199, %v9666
      %9699 = vst.msk [vmem:[%s197 + $0x98] sm:$0xff] %vm199, %v9667
      %9700 = vst.msk [vmem:[%s197 + $0xa0] sm:$0xff] %vm199, %v9668
      %9701 = vst.msk [vmem:[%s197 + $0xa8] sm:$0xff] %vm199, %v9669
      %9702 = vst.msk [vmem:[%s197 + $0xb0] sm:$0xff] %vm199, %v9670
      %9703 = vst.msk [vmem:[%s197 + $0xb8] sm:$0xff] %vm199, %v9671
      %9704 = vst.msk [vmem:[%s197 + $0xc0] sm:$0xff] %vm199, %v9672
      %9705 = vst.msk [vmem:[%s197 + $0xc8] sm:$0xff] %vm199, %v9673
      %9706 = vst.msk [vmem:[%s197 + $0xd0] sm:$0xff] %vm199, %v9674
      %9707 = vst.msk [vmem:[%s197 + $0xd8] sm:$0xff] %vm199, %v9675
      %9708 = vst.msk [vmem:[%s197 + $0xe0] sm:$0xff] %vm199, %v9676
      %9709 = vst.msk [vmem:[%s197 + $0xe8] sm:$0xff] %vm199, %v9677
      %9710 = vst.msk [vmem:[%s197 + $0xf0] sm:$0xff] %vm199, %v9678
      %9711 = vst.msk [vmem:[%s197 + $0xf8] sm:$0xff] %vm199, %v9679
      %p9712 = scmp.lt.s32.totalorder %s15, 1
      %s9713 = scalar_select %p9712, %s15, 1
      %s9714 = smul.addr %s9713, 32
      %s9715 = smul.addr %s9714, 8
      %s9716 = scalar_lea.vmem %s4, %s9715
      // Predicated region
      $region37: #{dncnn_forward.2} parent=35 // pred_check
        %p9717 = pneg %p122
      $region38: #{dncnn_forward.2} parent=35 // pred_check_branch
        %9719 = sbr.rel (%p9717) target = $region40
      $region39: #{dncnn_forward.2} parent=35 // pred_region
        _
      $region40: #{dncnn_forward.2} parent=35 // pred_fallthru
        _
    $region36: #{dncnn_forward.2} parent=5 // pred_fallthru
      _
    %p9720 = scmp.le.s32.totalorder 2, %s10
    // Predicated region
    $region41: #{dncnn_forward.2} parent=5 // pred_check
      %p9721 = pneg %p9720
    $region42: #{dncnn_forward.2} parent=5 // pred_check_branch
      %9723 = sbr.rel (%p9721) target = $region44
    $region43: #{dncnn_forward.2} parent=5 // pred_region
      %s9724 = ssub.s32 %s10, 2
      // Predicated region
      $region45: #{dncnn_forward.2} parent=43 // pred_check
        %p9725 = pneg %p128
      $region46: #{dncnn_forward.2} parent=43 // pred_check_branch
        %9727 = sbr.rel (%p9725) target = $region48
      $region47: #{dncnn_forward.2} parent=43 // pred_region
        %p9728 = scmp.lt.s32.totalorder %s16, 1
        %s9729 = scalar_select %p9728, %s16, 1
        %s9730 = smul.addr %s9729, 32
        %s9731 = smul.addr %s9730, 8
        %s9732 = scalar_lea.vmem %s4, %s9731
      $region48: #{dncnn_forward.2} parent=43 // pred_fallthru
        _
    $region44: #{dncnn_forward.2} parent=5 // pred_fallthru
      _
  $region6: #{dncnn_forward.2} parent=0 // loop_footer
    %s14 = sadd.s32 1, %s10
  $region7: #{dncnn_forward.2} parent=0 // loop_footer_branch
    %9 = sbr.rel target = $region3
  $region8: #{dncnn_forward.2} parent=0 // loop_exit
    _

</llo_original>
